<compile_context>
chip_gen: v7x
topology: tpu7x:2x2x1
jax: 0.10.0
libtpu: 0.0.40
codegen_flags: <defaults>
</compile_context>

<pallas_src>
import functools

import jax
import jax.numpy as jnp
from jax import lax
from jax.experimental import pallas as pl
from jax.experimental.pallas import tpu as pltpu


# --------------------------------------------------------------------------
# Shared conv tile: 9 accumulated (M, Cin) @ (Cin, Cout) MXU matmuls
# --------------------------------------------------------------------------
def _conv_tile_f32(xt_ref, w_ref, *, dilate, tile_h, w_out, cin):
    """xt_ref: (tile_h + 2d, W + 2d, Cin) halo'd, zero-padded input row tile.
       w_ref : (9, Cin, Cout) per-tap weights.
       returns f32 (tile_h * W, Cout) conv accumulator (no bias)."""
    d = dilate
    m = tile_h * w_out
    acc = None
    for k in range(9):
        ky, kx = divmod(k, 3)
        tap = xt_ref[ky * d: ky * d + tile_h, kx * d: kx * d + w_out, :]
        tap = tap.reshape(m, cin)                       # layout-preserving merge
        part = jnp.dot(tap, w_ref[k], preferred_element_type=jnp.float32)
        acc = part if acc is None else acc + part
    return acc


# --------------------------------------------------------------------------
# Pass 1: per-tile centred BN partial sums (tiny HBM writes, no conv output)
# --------------------------------------------------------------------------
def _conv_stats_kernel(xt_ref, w_ref, stats_ref, *, dilate, tile_h, w_out, cin):
    m = tile_h * w_out
    acc = _conv_tile_f32(xt_ref, w_ref, dilate=dilate, tile_h=tile_h,
                         w_out=w_out, cin=cin)                      # (M, Cout) f32
    # Reductions over the M rows on the MXU (frees XLU/VPU slots).
    ones_row = jnp.ones((1, m), jnp.float32)
    s = jnp.dot(ones_row, acc, preferred_element_type=jnp.float32)  # (1, Cout) sum
    centered = acc - s * (1.0 / m)                                  # tile-centred
    m2 = jnp.dot(ones_row, centered * centered,
                 preferred_element_type=jnp.float32)                # (1, Cout) M2
    stats_ref[...] = jnp.concatenate([s, m2], axis=0)               # (2, Cout)


# --------------------------------------------------------------------------
# Pass 2: recompute conv tile, normalize with global batch stats, ReLU
# --------------------------------------------------------------------------
def _conv_bn_relu_kernel(xt_ref, w_ref, scale_ref, shift_ref, out_ref, *,
                         dilate, tile_h, w_out, cin):
    acc = _conv_tile_f32(xt_ref, w_ref, dilate=dilate, tile_h=tile_h,
                         w_out=w_out, cin=cin)                      # (M, Cout) f32
    y = jnp.maximum(acc * scale_ref[...] + shift_ref[...], 0.0)
    out_ref[...] = y.reshape(tile_h, w_out, -1).astype(out_ref.dtype)


# --------------------------------------------------------------------------
# Wrapper: NCHW in / NCHW out, matching the PyTorch module
# --------------------------------------------------------------------------
def rebnconv_pallas(x_nchw, weight_oihw, bias, gamma, beta, *, dilate=1, eps=1e-5):
    # Conv bias cancels exactly under training-mode BN mean subtraction
    # (valid only for batch statistics, NOT for eval-mode running stats).
    del bias

    N, Cin, H, W = x_nchw.shape
    Cout = weight_oihw.shape[0]
    d = int(dilate)
    Hp, Wp = H + 2 * d, W + 2 * d

    # MXU operand dtype: keep bf16 native (2x MXU throughput, half VMEM/DMA);
    # everything else runs f32 (e.g. v5e has no bf16 VPU anyway).
    mm_dtype = jnp.bfloat16 if x_nchw.dtype == jnp.bfloat16 else jnp.float32
    in_isz = jnp.dtype(mm_dtype).itemsize
    out_isz = jnp.dtype(x_nchw.dtype).itemsize

    # ---- VMEM-aware tiling (v7x has 64 MiB, v5e/v6e 128 MiB) ----
    try:
        vmem_cap = int(pltpu.get_tpu_info().vmem_capacity_bytes)
    except Exception:
        vmem_cap = 128 * 1024 * 1024
    vmem_limit = min(vmem_cap * 3 // 4, 100 * 1024 * 1024)
    tile_budget = vmem_limit * 2 // 3

    def tile_bytes(th):
        m = th * W
        return (2 * (th + 2 * d) * Wp * Cin * in_isz    # input block (double-buffered)
                + 2 * th * W * Cout * out_isz           # output block (double-buffered)
                + 2 * 9 * Cin * Cout * in_isz           # weight block (double-buffered)
                + m * Cin * in_isz                      # one im2col tap temporary
                + 4 * m * Cout * 4                      # f32 acc + elementwise temps
                + 1024)

    tile_h = 1
    for th in range(H, 0, -1):                          # largest divisor of H that fits
        if H % th == 0 and tile_bytes(th) <= tile_budget:
            tile_h = th
            break
    n_ht = H // tile_h

    # ---- XLA glue: layout, zero pad, per-tap weights ----
    x_nhwc = jnp.transpose(x_nchw, (0, 2, 3, 1)).astype(mm_dtype)
    xpad = jnp.pad(x_nhwc, ((0, 0), (d, d), (d, d), (0, 0)))
    w9 = jnp.transpose(weight_oihw, (2, 3, 1, 0)).reshape(9, Cin, Cout).astype(mm_dtype)

    if n_ht == 1:
        # Whole padded image per grid step: no halo duplication, no gather.
        x_in = xpad
        x_spec = pl.BlockSpec((None, Hp, Wp, Cin), lambda n, t: (n, 0, 0, 0))
    else:
        # TODO(synk): replace this halo gather with manual overlapping-window DMA
        # (memory_space=pl.ANY + pltpu.make_async_copy) so images exceeding the
        # VMEM budget also avoid the duplicated HBM copy of the input.
        row_idx = (jnp.arange(n_ht)[:, None] * tile_h
                   + jnp.arange(tile_h + 2 * d)[None, :])
        x_in = jnp.take(xpad, row_idx, axis=1)          # (N, n_ht, th+2d, Wp, Cin)
        x_spec = pl.BlockSpec((None, None, tile_h + 2 * d, Wp, Cin),
                              lambda n, t: (n, t, 0, 0, 0))

    w_spec = pl.BlockSpec((9, Cin, Cout), lambda n, t: (0, 0, 0))
    grid = (N, n_ht)
    cparams = pltpu.CompilerParams(
        dimension_semantics=("parallel", "parallel"),
        vmem_limit_bytes=int(vmem_limit),
    )
    kern_kwargs = dict(dilate=d, tile_h=tile_h, w_out=W, cin=Cin)

    conv_flops = 2 * N * H * W * 9 * Cin * Cout
    x_bytes = int(x_in.size) * in_isz
    w_bytes = int(w9.size) * in_isz

    # ---------------- Pass 1: conv recompute + centred BN partials ----------------
    stats = pl.pallas_call(
        functools.partial(_conv_stats_kernel, **kern_kwargs),
        out_shape=jax.ShapeDtypeStruct((N, n_ht, 2, Cout), jnp.float32),
        grid=grid,
        in_specs=[x_spec, w_spec],
        out_specs=pl.BlockSpec((None, None, 2, Cout), lambda n, t: (n, t, 0, 0)),
        compiler_params=cparams,
        cost_estimate=pl.CostEstimate(
            flops=conv_flops + 4 * N * H * W * Cout, transcendentals=0,
            bytes_accessed=x_bytes + w_bytes + N * n_ht * 2 * Cout * 4),
    )(x_in, w9)

    # ------- Exact Chan / parallel-Welford combine of per-tile partials (tiny) -------
    m_tile = jnp.float32(tile_h * W)
    total = jnp.float32(N * H * W)
    s_t = stats[:, :, 0, :]                              # (N, n_ht, Cout) per-tile sums
    m2_t = stats[:, :, 1, :]                             # per-tile centred sum-of-squares
    mean = jnp.sum(s_t, axis=(0, 1)) / total
    tile_mean = s_t / m_tile
    m2 = (jnp.sum(m2_t, axis=(0, 1))
          + jnp.sum(m_tile * (tile_mean - mean) ** 2, axis=(0, 1)))
    var = m2 / total                                     # biased, training-mode BN
    inv = lax.rsqrt(var + eps)
    g32 = gamma.astype(jnp.float32)
    scale = (g32 * inv).reshape(1, Cout)
    shift = (beta.astype(jnp.float32) - mean * g32 * inv).reshape(1, Cout)

    # ---------------- Pass 2: conv recompute + normalize + ReLU ----------------
    out_nhwc = pl.pallas_call(
        functools.partial(_conv_bn_relu_kernel, **kern_kwargs),
        out_shape=jax.ShapeDtypeStruct((N, H, W, Cout), x_nchw.dtype),
        grid=grid,
        in_specs=[x_spec, w_spec,
                  pl.BlockSpec((1, Cout), lambda n, t: (0, 0)),
                  pl.BlockSpec((1, Cout), lambda n, t: (0, 0))],
        out_specs=pl.BlockSpec((None, tile_h, W, Cout), lambda n, t: (n, t, 0, 0)),
        compiler_params=cparams,
        cost_estimate=pl.CostEstimate(
            flops=conv_flops + 2 * N * H * W * Cout, transcendentals=0,
            bytes_accessed=x_bytes + w_bytes + N * H * W * Cout * out_isz),
    )(x_in, w9, scale, shift)

    # TODO(synk): emit NCHW directly from Pass 2 (in-kernel transpose of the tile)
    # to also drop this final XLA transpose of the (true-Cout-width) output.
    return jnp.transpose(out_nhwc, (0, 3, 1, 2))


# --------------------------------------------------------------------------
# Pure-JAX reference (conv + bias + training-mode BN + ReLU) for validation
# --------------------------------------------------------------------------
def rebnconv_reference(x_nchw, weight_oihw, bias, gamma, beta, *, dilate=1, eps=1e-5):
    conv = lax.conv_general_dilated(
        x_nchw.astype(jnp.float32), weight_oihw.astype(jnp.float32),
        window_strides=(1, 1),
        padding=((dilate, dilate), (dilate, dilate)),
        rhs_dilation=(dilate, dilate),
        dimension_numbers=("NCHW", "OIHW", "NCHW"),
    ) + bias.astype(jnp.float32)[None, :, None, None]
    mean = jnp.mean(conv, axis=(0, 2, 3), keepdims=True)
    var = jnp.mean((conv - mean) ** 2, axis=(0, 2, 3), keepdims=True)
    y = (conv - mean) * lax.rsqrt(var + eps) \
        * gamma[None, :, None, None] + beta[None, :, None, None]
    return jnp.maximum(y, 0.0).astype(x_nchw.dtype)


if __name__ == "__main__":
    key = jax.random.PRNGKey(0)
    k_x, k_w, k_b, k_g, k_be = jax.random.split(key, 5)

    # Small shapes consistent with the module: batch=2, in_ch=4, out_ch=8, 16x16.
    N, Cin, Cout, H, W = 2, 4, 8, 16, 16
    dilate = 2

    x = jax.random.normal(k_x, (N, Cin, H, W), jnp.float32)
    weight = jax.random.normal(k_w, (Cout, Cin, 3, 3), jnp.float32) * 0.1
    bias = jax.random.normal(k_b, (Cout,), jnp.float32) * 0.05
    gamma = 1.0 + 0.1 * jax.random.normal(k_g, (Cout,), jnp.float32)
    beta = 0.1 * jax.random.normal(k_be, (Cout,), jnp.float32)

    fn = jax.jit(functools.partial(rebnconv_pallas, dilate=dilate))
    out = jax.block_until_ready(fn(x, weight, bias, gamma, beta))

    ref = rebnconv_reference(x, weight, bias, gamma, beta, dilate=dilate)
    assert out.shape == (N, Cout, H, W)
    assert jnp.allclose(out, ref, atol=1e-4, rtol=1e-4), "mismatch vs reference"

    print("KERNEL_OK")
</pallas_src>

<mosaic_0001>
module attributes {stable_mosaic.version = 11 : i64} {
  func.func @_conv_stats_kernel(%arg0: i32, %arg1: i32, %arg2: memref<1x20x20x4xf32, #tpu.memory_space<vmem>>, %arg3: memref<9x4x8xf32, #tpu.memory_space<vmem>>, %arg4: memref<1x1x2x8xf32, #tpu.memory_space<vmem>>) attributes {dimension_semantics = [#tpu.dimension_semantics<parallel>, #tpu.dimension_semantics<parallel>], iteration_bounds = array<i64: 2, 1>, scalar_prefetch = 0 : i64, scratch_operands = 0 : i64, tpu.core_type = #tpu.core_type<tc>, window_params = [{transform_indices = @transform_0, window_bounds = array<i64: 1, 20, 20, 4>}, {pipeline_mode = #tpu.pipeline_mode<synchronous>, transform_indices = @transform_1, window_bounds = array<i64: 9, 4, 8>}, {transform_indices = @transform_2, window_bounds = array<i64: 1, 1, 2, 8>}]} {
    %c0 = arith.constant 0 : index
    %c0_0 = arith.constant 0 : index
    %c0_1 = arith.constant 0 : index
    %c0_2 = arith.constant 0 : index
    %0 = vector.load %arg2[%c0, %c0_0, %c0_1, %c0_2] : memref<1x20x20x4xf32, #tpu.memory_space<vmem>>, vector<1x16x16x4xf32>
    %1 = vector.shape_cast %0 : vector<1x16x16x4xf32> to vector<16x16x4xf32>
    %2 = vector.shape_cast %1 : vector<16x16x4xf32> to vector<256x4xf32>
    %c0_3 = arith.constant 0 : index
    %c0_4 = arith.constant 0 : index
    %c0_5 = arith.constant 0 : index
    %3 = vector.load %arg3[%c0_3, %c0_4, %c0_5] : memref<9x4x8xf32, #tpu.memory_space<vmem>>, vector<1x4x8xf32>
    %4 = vector.shape_cast %3 : vector<1x4x8xf32> to vector<4x8xf32>
    %cst = arith.constant dense<0.000000e+00> : vector<256x8xf32>
    %5 = tpu.matmul %2, %4, %cst {dimension_numbers = #tpu.dot_dimension_numbers<[1], [0], [0], [1], [0, 0, 1, 1], [], []>} : vector<256x4xf32>, vector<4x8xf32>, vector<256x8xf32> -> vector<256x8xf32>
    %c0_6 = arith.constant 0 : index
    %c0_7 = arith.constant 0 : index
    %c2 = arith.constant 2 : index
    %c0_8 = arith.constant 0 : index
    %6 = vector.load %arg2[%c0_6, %c0_7, %c2, %c0_8] : memref<1x20x20x4xf32, #tpu.memory_space<vmem>>, vector<1x16x16x4xf32>
    %7 = vector.shape_cast %6 : vector<1x16x16x4xf32> to vector<16x16x4xf32>
    %8 = vector.shape_cast %7 : vector<16x16x4xf32> to vector<256x4xf32>
    %c1 = arith.constant 1 : index
    %c0_9 = arith.constant 0 : index
    %c0_10 = arith.constant 0 : index
    %9 = vector.load %arg3[%c1, %c0_9, %c0_10] : memref<9x4x8xf32, #tpu.memory_space<vmem>>, vector<1x4x8xf32>
    %10 = vector.shape_cast %9 : vector<1x4x8xf32> to vector<4x8xf32>
    %cst_11 = arith.constant dense<0.000000e+00> : vector<256x8xf32>
    %11 = tpu.matmul %8, %10, %cst_11 {dimension_numbers = #tpu.dot_dimension_numbers<[1], [0], [0], [1], [0, 0, 1, 1], [], []>} : vector<256x4xf32>, vector<4x8xf32>, vector<256x8xf32> -> vector<256x8xf32>
    %12 = arith.addf %5, %11 : vector<256x8xf32>
    %c0_12 = arith.constant 0 : index
    %c0_13 = arith.constant 0 : index
    %c4 = arith.constant 4 : index
    %c0_14 = arith.constant 0 : index
    %13 = vector.load %arg2[%c0_12, %c0_13, %c4, %c0_14] : memref<1x20x20x4xf32, #tpu.memory_space<vmem>>, vector<1x16x16x4xf32>
    %14 = vector.shape_cast %13 : vector<1x16x16x4xf32> to vector<16x16x4xf32>
    %15 = vector.shape_cast %14 : vector<16x16x4xf32> to vector<256x4xf32>
    %c2_15 = arith.constant 2 : index
    %c0_16 = arith.constant 0 : index
    %c0_17 = arith.constant 0 : index
    %16 = vector.load %arg3[%c2_15, %c0_16, %c0_17] : memref<9x4x8xf32, #tpu.memory_space<vmem>>, vector<1x4x8xf32>
    %17 = vector.shape_cast %16 : vector<1x4x8xf32> to vector<4x8xf32>
    %cst_18 = arith.constant dense<0.000000e+00> : vector<256x8xf32>
    %18 = tpu.matmul %15, %17, %cst_18 {dimension_numbers = #tpu.dot_dimension_numbers<[1], [0], [0], [1], [0, 0, 1, 1], [], []>} : vector<256x4xf32>, vector<4x8xf32>, vector<256x8xf32> -> vector<256x8xf32>
    %19 = arith.addf %12, %18 : vector<256x8xf32>
    %c0_19 = arith.constant 0 : index
    %c2_20 = arith.constant 2 : index
    %c0_21 = arith.constant 0 : index
    %c0_22 = arith.constant 0 : index
    %20 = vector.load %arg2[%c0_19, %c2_20, %c0_21, %c0_22] : memref<1x20x20x4xf32, #tpu.memory_space<vmem>>, vector<1x16x16x4xf32>
    %21 = vector.shape_cast %20 : vector<1x16x16x4xf32> to vector<16x16x4xf32>
    %22 = vector.shape_cast %21 : vector<16x16x4xf32> to vector<256x4xf32>
    %c3 = arith.constant 3 : index
    %c0_23 = arith.constant 0 : index
    %c0_24 = arith.constant 0 : index
    %23 = vector.load %arg3[%c3, %c0_23, %c0_24] : memref<9x4x8xf32, #tpu.memory_space<vmem>>, vector<1x4x8xf32>
    %24 = vector.shape_cast %23 : vector<1x4x8xf32> to vector<4x8xf32>
    %cst_25 = arith.constant dense<0.000000e+00> : vector<256x8xf32>
    %25 = tpu.matmul %22, %24, %cst_25 {dimension_numbers = #tpu.dot_dimension_numbers<[1], [0], [0], [1], [0, 0, 1, 1], [], []>} : vector<256x4xf32>, vector<4x8xf32>, vector<256x8xf32> -> vector<256x8xf32>
    %26 = arith.addf %19, %25 : vector<256x8xf32>
    %c0_26 = arith.constant 0 : index
    %c2_27 = arith.constant 2 : index
    %c2_28 = arith.constant 2 : index
    %c0_29 = arith.constant 0 : index
    %27 = vector.load %arg2[%c0_26, %c2_27, %c2_28, %c0_29] : memref<1x20x20x4xf32, #tpu.memory_space<vmem>>, vector<1x16x16x4xf32>
    %28 = vector.shape_cast %27 : vector<1x16x16x4xf32> to vector<16x16x4xf32>
    %29 = vector.shape_cast %28 : vector<16x16x4xf32> to vector<256x4xf32>
    %c4_30 = arith.constant 4 : index
    %c0_31 = arith.constant 0 : index
    %c0_32 = arith.constant 0 : index
    %30 = vector.load %arg3[%c4_30, %c0_31, %c0_32] : memref<9x4x8xf32, #tpu.memory_space<vmem>>, vector<1x4x8xf32>
    %31 = vector.shape_cast %30 : vector<1x4x8xf32> to vector<4x8xf32>
    %cst_33 = arith.constant dense<0.000000e+00> : vector<256x8xf32>
    %32 = tpu.matmul %29, %31, %cst_33 {dimension_numbers = #tpu.dot_dimension_numbers<[1], [0], [0], [1], [0, 0, 1, 1], [], []>} : vector<256x4xf32>, vector<4x8xf32>, vector<256x8xf32> -> vector<256x8xf32>
    %33 = arith.addf %26, %32 : vector<256x8xf32>
    %c0_34 = arith.constant 0 : index
    %c2_35 = arith.constant 2 : index
    %c4_36 = arith.constant 4 : index
    %c0_37 = arith.constant 0 : index
    %34 = vector.load %arg2[%c0_34, %c2_35, %c4_36, %c0_37] : memref<1x20x20x4xf32, #tpu.memory_space<vmem>>, vector<1x16x16x4xf32>
    %35 = vector.shape_cast %34 : vector<1x16x16x4xf32> to vector<16x16x4xf32>
    %36 = vector.shape_cast %35 : vector<16x16x4xf32> to vector<256x4xf32>
    %c5 = arith.constant 5 : index
    %c0_38 = arith.constant 0 : index
    %c0_39 = arith.constant 0 : index
    %37 = vector.load %arg3[%c5, %c0_38, %c0_39] : memref<9x4x8xf32, #tpu.memory_space<vmem>>, vector<1x4x8xf32>
    %38 = vector.shape_cast %37 : vector<1x4x8xf32> to vector<4x8xf32>
    %cst_40 = arith.constant dense<0.000000e+00> : vector<256x8xf32>
    %39 = tpu.matmul %36, %38, %cst_40 {dimension_numbers = #tpu.dot_dimension_numbers<[1], [0], [0], [1], [0, 0, 1, 1], [], []>} : vector<256x4xf32>, vector<4x8xf32>, vector<256x8xf32> -> vector<256x8xf32>
    %40 = arith.addf %33, %39 : vector<256x8xf32>
    %c0_41 = arith.constant 0 : index
    %c4_42 = arith.constant 4 : index
    %c0_43 = arith.constant 0 : index
    %c0_44 = arith.constant 0 : index
    %41 = vector.load %arg2[%c0_41, %c4_42, %c0_43, %c0_44] : memref<1x20x20x4xf32, #tpu.memory_space<vmem>>, vector<1x16x16x4xf32>
    %42 = vector.shape_cast %41 : vector<1x16x16x4xf32> to vector<16x16x4xf32>
    %43 = vector.shape_cast %42 : vector<16x16x4xf32> to vector<256x4xf32>
    %c6 = arith.constant 6 : index
    %c0_45 = arith.constant 0 : index
    %c0_46 = arith.constant 0 : index
    %44 = vector.load %arg3[%c6, %c0_45, %c0_46] : memref<9x4x8xf32, #tpu.memory_space<vmem>>, vector<1x4x8xf32>
    %45 = vector.shape_cast %44 : vector<1x4x8xf32> to vector<4x8xf32>
    %cst_47 = arith.constant dense<0.000000e+00> : vector<256x8xf32>
    %46 = tpu.matmul %43, %45, %cst_47 {dimension_numbers = #tpu.dot_dimension_numbers<[1], [0], [0], [1], [0, 0, 1, 1], [], []>} : vector<256x4xf32>, vector<4x8xf32>, vector<256x8xf32> -> vector<256x8xf32>
    %47 = arith.addf %40, %46 : vector<256x8xf32>
    %c0_48 = arith.constant 0 : index
    %c4_49 = arith.constant 4 : index
    %c2_50 = arith.constant 2 : index
    %c0_51 = arith.constant 0 : index
    %48 = vector.load %arg2[%c0_48, %c4_49, %c2_50, %c0_51] : memref<1x20x20x4xf32, #tpu.memory_space<vmem>>, vector<1x16x16x4xf32>
    %49 = vector.shape_cast %48 : vector<1x16x16x4xf32> to vector<16x16x4xf32>
    %50 = vector.shape_cast %49 : vector<16x16x4xf32> to vector<256x4xf32>
    %c7 = arith.constant 7 : index
    %c0_52 = arith.constant 0 : index
    %c0_53 = arith.constant 0 : index
    %51 = vector.load %arg3[%c7, %c0_52, %c0_53] : memref<9x4x8xf32, #tpu.memory_space<vmem>>, vector<1x4x8xf32>
    %52 = vector.shape_cast %51 : vector<1x4x8xf32> to vector<4x8xf32>
    %cst_54 = arith.constant dense<0.000000e+00> : vector<256x8xf32>
    %53 = tpu.matmul %50, %52, %cst_54 {dimension_numbers = #tpu.dot_dimension_numbers<[1], [0], [0], [1], [0, 0, 1, 1], [], []>} : vector<256x4xf32>, vector<4x8xf32>, vector<256x8xf32> -> vector<256x8xf32>
    %54 = arith.addf %47, %53 : vector<256x8xf32>
    %c0_55 = arith.constant 0 : index
    %c4_56 = arith.constant 4 : index
    %c4_57 = arith.constant 4 : index
    %c0_58 = arith.constant 0 : index
    %55 = vector.load %arg2[%c0_55, %c4_56, %c4_57, %c0_58] : memref<1x20x20x4xf32, #tpu.memory_space<vmem>>, vector<1x16x16x4xf32>
    %56 = vector.shape_cast %55 : vector<1x16x16x4xf32> to vector<16x16x4xf32>
    %57 = vector.shape_cast %56 : vector<16x16x4xf32> to vector<256x4xf32>
    %c8 = arith.constant 8 : index
    %c0_59 = arith.constant 0 : index
    %c0_60 = arith.constant 0 : index
    %58 = vector.load %arg3[%c8, %c0_59, %c0_60] : memref<9x4x8xf32, #tpu.memory_space<vmem>>, vector<1x4x8xf32>
    %59 = vector.shape_cast %58 : vector<1x4x8xf32> to vector<4x8xf32>
    %cst_61 = arith.constant dense<0.000000e+00> : vector<256x8xf32>
    %60 = tpu.matmul %57, %59, %cst_61 {dimension_numbers = #tpu.dot_dimension_numbers<[1], [0], [0], [1], [0, 0, 1, 1], [], []>} : vector<256x4xf32>, vector<4x8xf32>, vector<256x8xf32> -> vector<256x8xf32>
    %61 = arith.addf %54, %60 : vector<256x8xf32>
    %cst_62 = arith.constant 1.000000e+00 : f32
    %62 = vector.broadcast %cst_62 : f32 to vector<1x256xf32>
    %cst_63 = arith.constant dense<0.000000e+00> : vector<1x8xf32>
    %63 = tpu.matmul %62, %61, %cst_63 {dimension_numbers = #tpu.dot_dimension_numbers<[1], [0], [0], [1], [0, 0, 1, 1], [], []>} : vector<1x256xf32>, vector<256x8xf32>, vector<1x8xf32> -> vector<1x8xf32>
    %cst_64 = arith.constant 3.906250e-03 : f32
    %64 = vector.broadcast %cst_64 : f32 to vector<1x8xf32>
    %65 = arith.mulf %63, %64 : vector<1x8xf32>
    %66 = vector.broadcast %65 : vector<1x8xf32> to vector<256x8xf32>
    %67 = arith.subf %61, %66 : vector<256x8xf32>
    %68 = arith.mulf %67, %67 : vector<256x8xf32>
    %cst_65 = arith.constant dense<0.000000e+00> : vector<1x8xf32>
    %69 = tpu.matmul %62, %68, %cst_65 {dimension_numbers = #tpu.dot_dimension_numbers<[1], [0], [0], [1], [0, 0, 1, 1], [], []>} : vector<1x256xf32>, vector<256x8xf32>, vector<1x8xf32> -> vector<1x8xf32>
    %70 = tpu.concatenate %63, %69 in 0 : vector<1x8xf32>, vector<1x8xf32> -> vector<2x8xf32>
    %c0_66 = arith.constant 0 : index
    %c0_67 = arith.constant 0 : index
    %c0_68 = arith.constant 0 : index
    %c0_69 = arith.constant 0 : index
    %71 = vector.load %arg4[%c0_66, %c0_67, %c0_68, %c0_69] : memref<1x1x2x8xf32, #tpu.memory_space<vmem>>, vector<1x1x2x8xf32>
    %72 = vector.shape_cast %71 : vector<1x1x2x8xf32> to vector<2x8xf32>
    %73 = vector.shape_cast %70 : vector<2x8xf32> to vector<1x1x2x8xf32>
    tpu.vector_store %arg4[%c0_66, %c0_67, %c0_68, %c0_69], %73 {strides = array<i32>} : memref<1x1x2x8xf32, #tpu.memory_space<vmem>>, vector<1x1x2x8xf32>,
    return
  }
  func.func @transform_0(%arg0: i32, %arg1: i32) -> (i32, i32, i32, i32) {
    %c0_i32 = arith.constant 0 : i32
    %c0_i32_0 = arith.constant 0 : i32
    %c0_i32_1 = arith.constant 0 : i32
    %c0_i32_2 = arith.constant 0 : i32
    return %arg0, %c0_i32, %c0_i32_0, %c0_i32_1 : i32, i32, i32, i32
  }
  func.func @transform_1(%arg0: i32, %arg1: i32) -> (i32, i32, i32) {
    %c0_i32 = arith.constant 0 : i32
    %c0_i32_0 = arith.constant 0 : i32
    %c0_i32_1 = arith.constant 0 : i32
    %c0_i32_2 = arith.constant 0 : i32
    return %c0_i32, %c0_i32_0, %c0_i32_1 : i32, i32, i32
  }
  func.func @transform_2(%arg0: i32, %arg1: i32) -> (i32, i32, i32, i32) {
    %c0_i32 = arith.constant 0 : i32
    %c0_i32_0 = arith.constant 0 : i32
    %c0_i32_1 = arith.constant 0 : i32
    return %arg0, %arg1, %c0_i32, %c0_i32_0 : i32, i32, i32, i32
  }
}

module attributes {stable_mosaic.version = 11 : i64} {
  func.func @_conv_bn_relu_kernel(%arg0: i32, %arg1: i32, %arg2: memref<1x20x20x4xf32, #tpu.memory_space<vmem>>, %arg3: memref<9x4x8xf32, #tpu.memory_space<vmem>>, %arg4: memref<1x8xf32, #tpu.memory_space<vmem>>, %arg5: memref<1x8xf32, #tpu.memory_space<vmem>>, %arg6: memref<1x16x16x8xf32, #tpu.memory_space<vmem>>) attributes {dimension_semantics = [#tpu.dimension_semantics<parallel>, #tpu.dimension_semantics<parallel>], iteration_bounds = array<i64: 2, 1>, scalar_prefetch = 0 : i64, scratch_operands = 0 : i64, tpu.core_type = #tpu.core_type<tc>, window_params = [{transform_indices = @transform_0, window_bounds = array<i64: 1, 20, 20, 4>}, {pipeline_mode = #tpu.pipeline_mode<synchronous>, transform_indices = @transform_1, window_bounds = array<i64: 9, 4, 8>}, {pipeline_mode = #tpu.pipeline_mode<synchronous>, transform_indices = @transform_2, window_bounds = array<i64: 1, 8>}, {pipeline_mode = #tpu.pipeline_mode<synchronous>, transform_indices = @transform_3, window_bounds = array<i64: 1, 8>}, {transform_indices = @transform_4, window_bounds = array<i64: 1, 16, 16, 8>}]} {
    %c0 = arith.constant 0 : index
    %c0_0 = arith.constant 0 : index
    %c0_1 = arith.constant 0 : index
    %c0_2 = arith.constant 0 : index
    %0 = vector.load %arg2[%c0, %c0_0, %c0_1, %c0_2] : memref<1x20x20x4xf32, #tpu.memory_space<vmem>>, vector<1x16x16x4xf32>
    %1 = vector.shape_cast %0 : vector<1x16x16x4xf32> to vector<16x16x4xf32>
    %2 = vector.shape_cast %1 : vector<16x16x4xf32> to vector<256x4xf32>
    %c0_3 = arith.constant 0 : index
    %c0_4 = arith.constant 0 : index
    %c0_5 = arith.constant 0 : index
    %3 = vector.load %arg3[%c0_3, %c0_4, %c0_5] : memref<9x4x8xf32, #tpu.memory_space<vmem>>, vector<1x4x8xf32>
    %4 = vector.shape_cast %3 : vector<1x4x8xf32> to vector<4x8xf32>
    %cst = arith.constant dense<0.000000e+00> : vector<256x8xf32>
    %5 = tpu.matmul %2, %4, %cst {dimension_numbers = #tpu.dot_dimension_numbers<[1], [0], [0], [1], [0, 0, 1, 1], [], []>} : vector<256x4xf32>, vector<4x8xf32>, vector<256x8xf32> -> vector<256x8xf32>
    %c0_6 = arith.constant 0 : index
    %c0_7 = arith.constant 0 : index
    %c2 = arith.constant 2 : index
    %c0_8 = arith.constant 0 : index
    %6 = vector.load %arg2[%c0_6, %c0_7, %c2, %c0_8] : memref<1x20x20x4xf32, #tpu.memory_space<vmem>>, vector<1x16x16x4xf32>
    %7 = vector.shape_cast %6 : vector<1x16x16x4xf32> to vector<16x16x4xf32>
    %8 = vector.shape_cast %7 : vector<16x16x4xf32> to vector<256x4xf32>
    %c1 = arith.constant 1 : index
    %c0_9 = arith.constant 0 : index
    %c0_10 = arith.constant 0 : index
    %9 = vector.load %arg3[%c1, %c0_9, %c0_10] : memref<9x4x8xf32, #tpu.memory_space<vmem>>, vector<1x4x8xf32>
    %10 = vector.shape_cast %9 : vector<1x4x8xf32> to vector<4x8xf32>
    %cst_11 = arith.constant dense<0.000000e+00> : vector<256x8xf32>
    %11 = tpu.matmul %8, %10, %cst_11 {dimension_numbers = #tpu.dot_dimension_numbers<[1], [0], [0], [1], [0, 0, 1, 1], [], []>} : vector<256x4xf32>, vector<4x8xf32>, vector<256x8xf32> -> vector<256x8xf32>
    %12 = arith.addf %5, %11 : vector<256x8xf32>
    %c0_12 = arith.constant 0 : index
    %c0_13 = arith.constant 0 : index
    %c4 = arith.constant 4 : index
    %c0_14 = arith.constant 0 : index
    %13 = vector.load %arg2[%c0_12, %c0_13, %c4, %c0_14] : memref<1x20x20x4xf32, #tpu.memory_space<vmem>>, vector<1x16x16x4xf32>
    %14 = vector.shape_cast %13 : vector<1x16x16x4xf32> to vector<16x16x4xf32>
    %15 = vector.shape_cast %14 : vector<16x16x4xf32> to vector<256x4xf32>
    %c2_15 = arith.constant 2 : index
    %c0_16 = arith.constant 0 : index
    %c0_17 = arith.constant 0 : index
    %16 = vector.load %arg3[%c2_15, %c0_16, %c0_17] : memref<9x4x8xf32, #tpu.memory_space<vmem>>, vector<1x4x8xf32>
    %17 = vector.shape_cast %16 : vector<1x4x8xf32> to vector<4x8xf32>
    %cst_18 = arith.constant dense<0.000000e+00> : vector<256x8xf32>
    %18 = tpu.matmul %15, %17, %cst_18 {dimension_numbers = #tpu.dot_dimension_numbers<[1], [0], [0], [1], [0, 0, 1, 1], [], []>} : vector<256x4xf32>, vector<4x8xf32>, vector<256x8xf32> -> vector<256x8xf32>
    %19 = arith.addf %12, %18 : vector<256x8xf32>
    %c0_19 = arith.constant 0 : index
    %c2_20 = arith.constant 2 : index
    %c0_21 = arith.constant 0 : index
    %c0_22 = arith.constant 0 : index
    %20 = vector.load %arg2[%c0_19, %c2_20, %c0_21, %c0_22] : memref<1x20x20x4xf32, #tpu.memory_space<vmem>>, vector<1x16x16x4xf32>
    %21 = vector.shape_cast %20 : vector<1x16x16x4xf32> to vector<16x16x4xf32>
    %22 = vector.shape_cast %21 : vector<16x16x4xf32> to vector<256x4xf32>
    %c3 = arith.constant 3 : index
    %c0_23 = arith.constant 0 : index
    %c0_24 = arith.constant 0 : index
    %23 = vector.load %arg3[%c3, %c0_23, %c0_24] : memref<9x4x8xf32, #tpu.memory_space<vmem>>, vector<1x4x8xf32>
    %24 = vector.shape_cast %23 : vector<1x4x8xf32> to vector<4x8xf32>
    %cst_25 = arith.constant dense<0.000000e+00> : vector<256x8xf32>
    %25 = tpu.matmul %22, %24, %cst_25 {dimension_numbers = #tpu.dot_dimension_numbers<[1], [0], [0], [1], [0, 0, 1, 1], [], []>} : vector<256x4xf32>, vector<4x8xf32>, vector<256x8xf32> -> vector<256x8xf32>
    %26 = arith.addf %19, %25 : vector<256x8xf32>
    %c0_26 = arith.constant 0 : index
    %c2_27 = arith.constant 2 : index
    %c2_28 = arith.constant 2 : index
    %c0_29 = arith.constant 0 : index
    %27 = vector.load %arg2[%c0_26, %c2_27, %c2_28, %c0_29] : memref<1x20x20x4xf32, #tpu.memory_space<vmem>>, vector<1x16x16x4xf32>
    %28 = vector.shape_cast %27 : vector<1x16x16x4xf32> to vector<16x16x4xf32>
    %29 = vector.shape_cast %28 : vector<16x16x4xf32> to vector<256x4xf32>
    %c4_30 = arith.constant 4 : index
    %c0_31 = arith.constant 0 : index
    %c0_32 = arith.constant 0 : index
    %30 = vector.load %arg3[%c4_30, %c0_31, %c0_32] : memref<9x4x8xf32, #tpu.memory_space<vmem>>, vector<1x4x8xf32>
    %31 = vector.shape_cast %30 : vector<1x4x8xf32> to vector<4x8xf32>
    %cst_33 = arith.constant dense<0.000000e+00> : vector<256x8xf32>
    %32 = tpu.matmul %29, %31, %cst_33 {dimension_numbers = #tpu.dot_dimension_numbers<[1], [0], [0], [1], [0, 0, 1, 1], [], []>} : vector<256x4xf32>, vector<4x8xf32>, vector<256x8xf32> -> vector<256x8xf32>
    %33 = arith.addf %26, %32 : vector<256x8xf32>
    %c0_34 = arith.constant 0 : index
    %c2_35 = arith.constant 2 : index
    %c4_36 = arith.constant 4 : index
    %c0_37 = arith.constant 0 : index
    %34 = vector.load %arg2[%c0_34, %c2_35, %c4_36, %c0_37] : memref<1x20x20x4xf32, #tpu.memory_space<vmem>>, vector<1x16x16x4xf32>
    %35 = vector.shape_cast %34 : vector<1x16x16x4xf32> to vector<16x16x4xf32>
    %36 = vector.shape_cast %35 : vector<16x16x4xf32> to vector<256x4xf32>
    %c5 = arith.constant 5 : index
    %c0_38 = arith.constant 0 : index
    %c0_39 = arith.constant 0 : index
    %37 = vector.load %arg3[%c5, %c0_38, %c0_39] : memref<9x4x8xf32, #tpu.memory_space<vmem>>, vector<1x4x8xf32>
    %38 = vector.shape_cast %37 : vector<1x4x8xf32> to vector<4x8xf32>
    %cst_40 = arith.constant dense<0.000000e+00> : vector<256x8xf32>
    %39 = tpu.matmul %36, %38, %cst_40 {dimension_numbers = #tpu.dot_dimension_numbers<[1], [0], [0], [1], [0, 0, 1, 1], [], []>} : vector<256x4xf32>, vector<4x8xf32>, vector<256x8xf32> -> vector<256x8xf32>
    %40 = arith.addf %33, %39 : vector<256x8xf32>
    %c0_41 = arith.constant 0 : index
    %c4_42 = arith.constant 4 : index
    %c0_43 = arith.constant 0 : index
    %c0_44 = arith.constant 0 : index
    %41 = vector.load %arg2[%c0_41, %c4_42, %c0_43, %c0_44] : memref<1x20x20x4xf32, #tpu.memory_space<vmem>>, vector<1x16x16x4xf32>
    %42 = vector.shape_cast %41 : vector<1x16x16x4xf32> to vector<16x16x4xf32>
    %43 = vector.shape_cast %42 : vector<16x16x4xf32> to vector<256x4xf32>
    %c6 = arith.constant 6 : index
    %c0_45 = arith.constant 0 : index
    %c0_46 = arith.constant 0 : index
    %44 = vector.load %arg3[%c6, %c0_45, %c0_46] : memref<9x4x8xf32, #tpu.memory_space<vmem>>, vector<1x4x8xf32>
    %45 = vector.shape_cast %44 : vector<1x4x8xf32> to vector<4x8xf32>
    %cst_47 = arith.constant dense<0.000000e+00> : vector<256x8xf32>
    %46 = tpu.matmul %43, %45, %cst_47 {dimension_numbers = #tpu.dot_dimension_numbers<[1], [0], [0], [1], [0, 0, 1, 1], [], []>} : vector<256x4xf32>, vector<4x8xf32>, vector<256x8xf32> -> vector<256x8xf32>
    %47 = arith.addf %40, %46 : vector<256x8xf32>
    %c0_48 = arith.constant 0 : index
    %c4_49 = arith.constant 4 : index
    %c2_50 = arith.constant 2 : index
    %c0_51 = arith.constant 0 : index
    %48 = vector.load %arg2[%c0_48, %c4_49, %c2_50, %c0_51] : memref<1x20x20x4xf32, #tpu.memory_space<vmem>>, vector<1x16x16x4xf32>
    %49 = vector.shape_cast %48 : vector<1x16x16x4xf32> to vector<16x16x4xf32>
    %50 = vector.shape_cast %49 : vector<16x16x4xf32> to vector<256x4xf32>
    %c7 = arith.constant 7 : index
    %c0_52 = arith.constant 0 : index
    %c0_53 = arith.constant 0 : index
    %51 = vector.load %arg3[%c7, %c0_52, %c0_53] : memref<9x4x8xf32, #tpu.memory_space<vmem>>, vector<1x4x8xf32>
    %52 = vector.shape_cast %51 : vector<1x4x8xf32> to vector<4x8xf32>
    %cst_54 = arith.constant dense<0.000000e+00> : vector<256x8xf32>
    %53 = tpu.matmul %50, %52, %cst_54 {dimension_numbers = #tpu.dot_dimension_numbers<[1], [0], [0], [1], [0, 0, 1, 1], [], []>} : vector<256x4xf32>, vector<4x8xf32>, vector<256x8xf32> -> vector<256x8xf32>
    %54 = arith.addf %47, %53 : vector<256x8xf32>
    %c0_55 = arith.constant 0 : index
    %c4_56 = arith.constant 4 : index
    %c4_57 = arith.constant 4 : index
    %c0_58 = arith.constant 0 : index
    %55 = vector.load %arg2[%c0_55, %c4_56, %c4_57, %c0_58] : memref<1x20x20x4xf32, #tpu.memory_space<vmem>>, vector<1x16x16x4xf32>
    %56 = vector.shape_cast %55 : vector<1x16x16x4xf32> to vector<16x16x4xf32>
    %57 = vector.shape_cast %56 : vector<16x16x4xf32> to vector<256x4xf32>
    %c8 = arith.constant 8 : index
    %c0_59 = arith.constant 0 : index
    %c0_60 = arith.constant 0 : index
    %58 = vector.load %arg3[%c8, %c0_59, %c0_60] : memref<9x4x8xf32, #tpu.memory_space<vmem>>, vector<1x4x8xf32>
    %59 = vector.shape_cast %58 : vector<1x4x8xf32> to vector<4x8xf32>
    %cst_61 = arith.constant dense<0.000000e+00> : vector<256x8xf32>
    %60 = tpu.matmul %57, %59, %cst_61 {dimension_numbers = #tpu.dot_dimension_numbers<[1], [0], [0], [1], [0, 0, 1, 1], [], []>} : vector<256x4xf32>, vector<4x8xf32>, vector<256x8xf32> -> vector<256x8xf32>
    %61 = arith.addf %54, %60 : vector<256x8xf32>
    %c0_62 = arith.constant 0 : index
    %c0_63 = arith.constant 0 : index
    %62 = vector.load %arg4[%c0_62, %c0_63] : memref<1x8xf32, #tpu.memory_space<vmem>>, vector<1x8xf32>
    %63 = vector.broadcast %62 : vector<1x8xf32> to vector<256x8xf32>
    %64 = arith.mulf %61, %63 : vector<256x8xf32>
    %c0_64 = arith.constant 0 : index
    %c0_65 = arith.constant 0 : index
    %65 = vector.load %arg5[%c0_64, %c0_65] : memref<1x8xf32, #tpu.memory_space<vmem>>, vector<1x8xf32>
    %66 = vector.broadcast %65 : vector<1x8xf32> to vector<256x8xf32>
    %67 = arith.addf %64, %66 : vector<256x8xf32>
    %cst_66 = arith.constant 0.000000e+00 : f32
    %68 = vector.broadcast %cst_66 : f32 to vector<256x8xf32>
    %69 = arith.maximumf %67, %68 : vector<256x8xf32>
    %70 = vector.shape_cast %69 : vector<256x8xf32> to vector<16x16x8xf32>
    %c0_67 = arith.constant 0 : index
    %c0_68 = arith.constant 0 : index
    %c0_69 = arith.constant 0 : index
    %c0_70 = arith.constant 0 : index
    %71 = vector.load %arg6[%c0_67, %c0_68, %c0_69, %c0_70] : memref<1x16x16x8xf32, #tpu.memory_space<vmem>>, vector<1x16x16x8xf32>
    %72 = vector.shape_cast %71 : vector<1x16x16x8xf32> to vector<16x16x8xf32>
    %73 = vector.shape_cast %70 : vector<16x16x8xf32> to vector<1x16x16x8xf32>
    tpu.vector_store %arg6[%c0_67, %c0_68, %c0_69, %c0_70], %73 {strides = array<i32>} : memref<1x16x16x8xf32, #tpu.memory_space<vmem>>, vector<1x16x16x8xf32>,
    return
  }
  func.func @transform_0(%arg0: i32, %arg1: i32) -> (i32, i32, i32, i32) {
    %c0_i32 = arith.constant 0 : i32
    %c0_i32_0 = arith.constant 0 : i32
    %c0_i32_1 = arith.constant 0 : i32
    %c0_i32_2 = arith.constant 0 : i32
    return %arg0, %c0_i32, %c0_i32_0, %c0_i32_1 : i32, i32, i32, i32
  }
  func.func @transform_1(%arg0: i32, %arg1: i32) -> (i32, i32, i32) {
    %c0_i32 = arith.constant 0 : i32
    %c0_i32_0 = arith.constant 0 : i32
    %c0_i32_1 = arith.constant 0 : i32
    %c0_i32_2 = arith.constant 0 : i32
    return %c0_i32, %c0_i32_0, %c0_i32_1 : i32, i32, i32
  }
  func.func @transform_2(%arg0: i32, %arg1: i32) -> (i32, i32) {
    %c0_i32 = arith.constant 0 : i32
    %c0_i32_0 = arith.constant 0 : i32
    %c0_i32_1 = arith.constant 0 : i32
    return %c0_i32, %c0_i32_0 : i32, i32
  }
  func.func @transform_3(%arg0: i32, %arg1: i32) -> (i32, i32) {
    %c0_i32 = arith.constant 0 : i32
    %c0_i32_0 = arith.constant 0 : i32
    %c0_i32_1 = arith.constant 0 : i32
    return %c0_i32, %c0_i32_0 : i32, i32
  }
  func.func @transform_4(%arg0: i32, %arg1: i32) -> (i32, i32, i32, i32) {
    %c0_i32 = arith.constant 0 : i32
    %c0_i32_0 = arith.constant 0 : i32
    %c0_i32_1 = arith.constant 0 : i32
    return %arg0, %arg1, %c0_i32, %c0_i32_0 : i32, i32, i32, i32
  }
}

</mosaic_0001>

<llo_original>
// kernel: rebnconv_pallas.2
$region0: #{rebnconv_pallas.2}
  #allocation0 [shape = 'u32[]', space=smem, size = 0x4, offset = 0x4, fixed_abs, tag = 'smem constant byte address 0x4 - core index']
  #allocation1 [shape = 'u32[144,128]{1,0:T(1,128)}', space=vmem, size = 0x12000, scoped, tag = 'internal scratch']
  %s0 = inlined_call_operand.hbm [shape: f32[2,20,20,4], index: 0, kind: input, shape index: {}]
  %s1 = inlined_call_operand.hbm [shape: f32[9,4,8], index: 1, kind: input, shape index: {}]
  %s2 = inlined_call_operand.hbm [shape: f32[2,1,2,8], index: 2, kind: output, shape index: {}]
  %s3 = sld [smem:[#allocation0]]
  $region49: #{rebnconv_pallas.2} parent=0
    _
  %s5 = ssub.s32 1, %s3
  %s6 = scalar_select 0, %s5, %s3
  $region1: #{rebnconv_pallas.2} parent=0
    #allocation2 [shape = 'u8[491520]{0}', space=vmem, size = 0x78000, scoped, tag = 'input window, operand 0']
    #allocation3 [shape = 's32[2]{0}', space=sflag, size = 0x8, scoped, tag = 'scoped memory for rebnconv_pallas.2']
    #allocation4 [shape = 's32[2]{0}', space=sflag, size = 0x8, scoped, tag = 'scoped memory for rebnconv_pallas.2']
    #allocation5 [shape = 'u8[18432]{0}', space=vmem, size = 0x4800, scoped, tag = 'input window, operand 1, single buffered']
    #allocation6 [shape = 's32[1]{0}', space=sflag, size = 0x4, scoped, tag = 'scoped memory for rebnconv_pallas.2']
    #allocation7 [shape = 'u8[2048]{0}', space=vmem, size = 0x800, scoped, tag = 'output window, operand 0']
    %7 = vsyncpa [#allocation3], 0
    %s8 = scalar_lea.sflag [#allocation3], 1
    %9 = vsyncpa %s8, 0
    %10 = vsyncpa [#allocation6], 0
    %11 = vsyncpa [#allocation4], 0
    %s12 = scalar_lea.sflag [#allocation4], 1
    %13 = vsyncpa %s12, 0
    loop: start=0, step=1, limit=4
    $region2: #{rebnconv_pallas.2} parent=1 // loop_pre_header
      _
    $region3: #{rebnconv_pallas.2} parent=1 // loop_header
      %s15 = sphi 0, %s19
      %p16 = scmp.ge.s32.totalorder %s15, 4
      %s22 = sphi 0, %s34
      %s23 = sphi 0, %s30
      %s24 = sphi 0, %s22
      %s25 = sphi 0, %s23
      %s26 = sphi 0, %s24
      %s27 = sphi 0, %s25
      %s37 = sphi 0, %s39
      %s40 = sphi 0, %s37
      %s41 = sphi 0, %s40
      %s57 = sphi 0, %s41
      %s61 = sphi 0, %s61
      %s63 = sphi 0, %s61
      %s64 = sphi 0, %s63
      %s78 = sphi 0, %s64
      %s86 = sphi 0, %s88
      %s89 = sphi 0, %s86
      %s90 = sphi 0, %s89
      %s106 = sphi 0, %s90
    $region4: #{rebnconv_pallas.2} parent=1 // loop_header_branch
      %18 = sbr.rel (%p16) target = $region8
    $region5: #{rebnconv_pallas.2} parent=1 // loop_body
      %s20 = ssub.s32 %s15, 1
      %s21 = ssub.s32 %s15, 2
      %s28 = sadd.s32 1, %s23
      %p29 = scmp.ge.s32.totalorder %s28, 1
      %s30 = scalar_select %p29, 0, %s28
      %s31 = sadd.s32 1, %s22
      %s32 = scalar_select %p29, %s31, %s22
      %p33 = scmp.ge.s32.totalorder %s32, 2
      %s34 = scalar_select %p33, 0, %s32
      %s35 = ssub.s32 %s22, %s34
      %p36 = scmp.eq.s32.totalorder %s35, 0
      %s38 = sadd.s32 %s37, 1
      %s39 = scalar_select %p36, %s37, %s38
      %p42 = pneg %p36
      %p43 = scmp.eq.s32.totalorder %s15, 1
      %p44 = por %p42, %p43
      %p45 = scmp.ne.s32.totalorder %s37, %s40
      %p46 = scmp.eq.s32.totalorder %s15, 0
      %p47 = por %p45, %p46
      %p48 = scmp.ne.s32.totalorder %s37, %s40
      %p49 = scmp.eq.s32.totalorder %s20, 1
      %p50 = por %p48, %p49
      %p51 = scmp.ne.s32.totalorder %s40, %s41
      %p52 = scmp.eq.s32.totalorder %s20, 0
      %p53 = por %p51, %p52
      %p54 = scmp.ne.s32.totalorder %s40, %s41
      %p55 = scmp.eq.s32.totalorder %s21, 1
      %p56 = por %p54, %p55
      %p58 = scmp.ne.s32.totalorder %s41, %s57
      %p59 = scmp.eq.s32.totalorder %s21, 0
      %p60 = por %p58, %p59
      %s62 = sadd.s32 %s61, 1
      %p65 = scmp.eq.s32.totalorder %s15, 1
      %p66 = scmp.ne.s32.totalorder %s61, %s63
      %p67 = scmp.eq.s32.totalorder %s15, 0
      %p68 = por %p66, %p67
      %p69 = scmp.ne.s32.totalorder %s61, %s63
      %p70 = scmp.eq.s32.totalorder %s20, 1
      %p71 = por %p69, %p70
      %p72 = scmp.ne.s32.totalorder %s63, %s64
      %p73 = scmp.eq.s32.totalorder %s20, 0
      %p74 = por %p72, %p73
      %p75 = scmp.ne.s32.totalorder %s63, %s64
      %p76 = scmp.eq.s32.totalorder %s21, 1
      %p77 = por %p75, %p76
      %p79 = scmp.ne.s32.totalorder %s64, %s78
      %p80 = scmp.eq.s32.totalorder %s21, 0
      %p81 = por %p79, %p80
      %s82 = ssub.s32 %s22, %s34
      %s83 = ssub.s32 %s23, %s30
      %s84 = sor.u32 %s82, %s83
      %p85 = scmp.eq.s32.totalorder %s84, 0
      %s87 = sadd.s32 %s86, 1
      %s88 = scalar_select %p85, %s86, %s87
      %p91 = pneg %p85
      %p92 = scmp.eq.s32.totalorder %s15, 1
      %p93 = por %p91, %p92
      %p94 = scmp.ne.s32.totalorder %s86, %s89
      %p95 = scmp.eq.s32.totalorder %s15, 0
      %p96 = por %p94, %p95
      %p97 = scmp.ne.s32.totalorder %s86, %s89
      %p98 = scmp.eq.s32.totalorder %s20, 1
      %p99 = por %p97, %p98
      %p100 = scmp.ne.s32.totalorder %s89, %s90
      %p101 = scmp.eq.s32.totalorder %s20, 0
      %p102 = por %p100, %p101
      %p103 = scmp.ne.s32.totalorder %s89, %s90
      %p104 = scmp.eq.s32.totalorder %s21, 1
      %p105 = por %p103, %p104
      %p107 = scmp.ne.s32.totalorder %s90, %s106
      %p108 = scmp.eq.s32.totalorder %s21, 0
      %p109 = por %p107, %p108
      %p110 = scmp.le.s32.totalorder 1, %s15
      %p111 = scmp.lt.s32.totalorder %s15, 3
      %p112 = pnand %p110, %p111
      %p113 = pneg %p112
      // Predicated region
      $region9: #{rebnconv_pallas.2} parent=5 // pred_check
        _
      $region10: #{rebnconv_pallas.2} parent=5 // pred_check_branch
        %115 = sbr.rel (%p112) target = $region12
      $region11: #{rebnconv_pallas.2} parent=5 // pred_region
        %s116 = ssub.s32 %s15, 1
        // Predicated region
        $region13: #{rebnconv_pallas.2} parent=11 // pred_check
          %p117 = pneg %p74
        $region14: #{rebnconv_pallas.2} parent=11 // pred_check_branch
          %119 = sbr.rel (%p117) target = $region16
        $region15: #{rebnconv_pallas.2} parent=11 // pred_region
          %s121 = ssub.s32 576, 576
          %122 = vsyncadd [#allocation6], %s121
          %s123 = sshll.u32 [#allocation5], 4
          %s124 = int_to_ptr.vmem [resolvable:$true] %s123
          %129 = dma.hbm_to_vmem [thread:$0]  %s1, 576, %s124, [#allocation6], 64, 64, 4
        $region16: #{rebnconv_pallas.2} parent=11 // pred_fallthru
          _
      $region12: #{rebnconv_pallas.2} parent=5 // pred_fallthru
        _
      %p130 = scmp.lt.s32.totalorder %s15, 2
      // Predicated region
      $region17: #{rebnconv_pallas.2} parent=5 // pred_check
        %p131 = pneg %p130
      $region18: #{rebnconv_pallas.2} parent=5 // pred_check_branch
        %133 = sbr.rel (%p131) target = $region20
      $region19: #{rebnconv_pallas.2} parent=5 // pred_region
        // Predicated region
        $region21: #{rebnconv_pallas.2} parent=19 // pred_check
          %p134 = pneg %p47
        $region22: #{rebnconv_pallas.2} parent=19 // pred_check_branch
          %136 = sbr.rel (%p134) target = $region24
        $region23: #{rebnconv_pallas.2} parent=19 // pred_region
          %s137 = sand.u32 %s37, 1
          %s138 = scalar_lea.sflag [#allocation3], %s137
          %s139 = sand.u32 %s37, 1
          %s140 = smul.addr %s139, 480
          %s141 = scalar_lea.vmem [#allocation2], %s140
          %s143 = ssub.s32 7680, 7680
          %144 = vsyncadd %s138, %s143
          %s145 = smul.addr %s22, 60
          %s146 = smul.addr %s145, 128
          %s147 = scalar_lea.hbm %s0, %s146
          %s148 = sshll.u32 %s141, 4
          %s149 = int_to_ptr.vmem [resolvable:$true] %s148
          %154 = dma.hbm_to_vmem [thread:$0]  %s147, 7680, %s149, %s138, 128, 128, 8
        $region24: #{rebnconv_pallas.2} parent=19 // pred_fallthru
          _
      $region20: #{rebnconv_pallas.2} parent=5 // pred_fallthru
        _
      %p155 = scmp.le.s32.totalorder 1, %s15
      %p156 = scmp.lt.s32.totalorder %s15, 3
      %p157 = pnand %p155, %p156
      %p158 = pneg %p157
      // Predicated region
      $region25: #{rebnconv_pallas.2} parent=5 // pred_check
        _
      $region26: #{rebnconv_pallas.2} parent=5 // pred_check_branch
        %160 = sbr.rel (%p157) target = $region28
      $region27: #{rebnconv_pallas.2} parent=5 // pred_region
        %s161 = ssub.s32 %s15, 1
        %s162 = sand.u32 %s40, 1
        %s163 = scalar_lea.sflag [#allocation3], %s162
        %s164 = sand.u32 %s40, 1
        %s165 = smul.addr %s164, 480
        %s166 = scalar_lea.vmem [#allocation2], %s165
        // Predicated region
        $region29: #{rebnconv_pallas.2} parent=27 // pred_check
          %p167 = pneg %p53
        $region30: #{rebnconv_pallas.2} parent=27 // pred_check_branch
          %169 = sbr.rel (%p167) target = $region32
        $region31: #{rebnconv_pallas.2} parent=27 // pred_region
          %170 = dma.done %s163, 7680
        $region32: #{rebnconv_pallas.2} parent=27 // pred_fallthru
          _
        // Predicated region
        $region33: #{rebnconv_pallas.2} parent=27 // pred_check
          %p171 = pneg %p74
        $region34: #{rebnconv_pallas.2} parent=27 // pred_check_branch
          %173 = sbr.rel (%p171) target = $region36
        $region35: #{rebnconv_pallas.2} parent=27 // pred_region
          %174 = dma.done [#allocation6], 576
        $region36: #{rebnconv_pallas.2} parent=27 // pred_fallthru
          _
        %s175 = sand.u32 %s40, 1
        %s176 = scalar_lea.sflag [#allocation3], %s175
        %s177 = sand.u32 %s40, 1
        %s178 = smul.addr %s177, 480
        %s179 = scalar_lea.vmem [#allocation2], %s178
        %p180 = pneg %p53
        %p181 = pneg %p50
        %p182 = pneg %p74
        %p183 = pneg %p71
        %p184 = pneg %p102
        %p185 = pneg %p99
        %s186 = sand.u32 %s89, 1
        %s187 = scalar_lea.sflag [#allocation4], %s186
        %s188 = sand.u32 %s89, 1
        %s189 = smul.addr %s188, 2
        %s190 = scalar_lea.vmem [#allocation7], %s189
        %v191 = vld [vmem:[%s166] sm:$0xff]
        %v192 = vld [vmem:[%s166 + $0x8] sm:$0xff]
        %v193 = vld [vmem:[%s166 + $0x18] sm:$0xff]
        %v194 = vld [vmem:[%s166 + $0x20] sm:$0xff]
        %v195 = vld [vmem:[%s166 + $0x30] sm:$0xff]
        %v196 = vld [vmem:[%s166 + $0x38] sm:$0xff]
        %v197 = vld [vmem:[%s166 + $0x48] sm:$0xff]
        %v198 = vld [vmem:[%s166 + $0x50] sm:$0xff]
        %v199 = vld [vmem:[%s166 + $0x60] sm:$0xff]
        %v200 = vld [vmem:[%s166 + $0x68] sm:$0xff]
        %v201 = vld [vmem:[%s166 + $0x78] sm:$0xff]
        %v202 = vld [vmem:[%s166 + $0x80] sm:$0xff]
        %v203 = vld [vmem:[%s166 + $0x90] sm:$0xff]
        %v204 = vld [vmem:[%s166 + $0x98] sm:$0xff]
        %v205 = vld [vmem:[%s166 + $0xa8] sm:$0xff]
        %v206 = vld [vmem:[%s166 + $0xb0] sm:$0xff]
        %v207 = vld [vmem:[%s166 + $0xc0] sm:$0xff]
        %v208 = vld [vmem:[%s166 + $0xc8] sm:$0xff]
        %v209 = vld [vmem:[%s166 + $0xd8] sm:$0xff]
        %v210 = vld [vmem:[%s166 + $0xe0] sm:$0xff]
        %v211 = vld [vmem:[%s166 + $0xf0] sm:$0xff]
        %v212 = vld [vmem:[%s166 + $0xf8] sm:$0xff]
        %v213 = vld [vmem:[%s166 + $0x108] sm:$0xff]
        %v214 = vld [vmem:[%s166 + $0x110] sm:$0xff]
        %v215 = vld [vmem:[%s166 + $0x120] sm:$0xff]
        %v216 = vld [vmem:[%s166 + $0x128] sm:$0xff]
        %v217 = vld [vmem:[%s166 + $0x138] sm:$0xff]
        %v218 = vld [vmem:[%s166 + $0x140] sm:$0xff]
        %v219 = vld [vmem:[%s166 + $0x150] sm:$0xff]
        %v220 = vld [vmem:[%s166 + $0x158] sm:$0xff]
        %v221 = vld [vmem:[%s166 + $0x168] sm:$0xff]
        %v222 = vld [vmem:[%s166 + $0x170] sm:$0xff]
        %v223 = vld [vmem:[#allocation5] sm:$0xf]
        %v224 = vld [vmem:[%s166 + $0x2] sm:$0xff]
        %v225 = vld [vmem:[%s166 + $0xa] sm:$0xff]
        %v226 = vld [vmem:[%s166 + $0x1a] sm:$0xff]
        %v227 = vld [vmem:[%s166 + $0x22] sm:$0xff]
        %v228 = vld [vmem:[%s166 + $0x32] sm:$0xff]
        %v229 = vld [vmem:[%s166 + $0x3a] sm:$0xff]
        %v230 = vld [vmem:[%s166 + $0x4a] sm:$0xff]
        %v231 = vld [vmem:[%s166 + $0x52] sm:$0xff]
        %v232 = vld [vmem:[%s166 + $0x62] sm:$0xff]
        %v233 = vld [vmem:[%s166 + $0x6a] sm:$0xff]
        %v234 = vld [vmem:[%s166 + $0x7a] sm:$0xff]
        %v235 = vld [vmem:[%s166 + $0x82] sm:$0xff]
        %v236 = vld [vmem:[%s166 + $0x92] sm:$0xff]
        %v237 = vld [vmem:[%s166 + $0x9a] sm:$0xff]
        %v238 = vld [vmem:[%s166 + $0xaa] sm:$0xff]
        %v239 = vld [vmem:[%s166 + $0xb2] sm:$0xff]
        %v240 = vld [vmem:[%s166 + $0xc2] sm:$0xff]
        %v241 = vld [vmem:[%s166 + $0xca] sm:$0xff]
        %v242 = vld [vmem:[%s166 + $0xda] sm:$0xff]
        %v243 = vld [vmem:[%s166 + $0xe2] sm:$0xff]
        %v244 = vld [vmem:[%s166 + $0xf2] sm:$0xff]
        %v245 = vld [vmem:[%s166 + $0xfa] sm:$0xff]
        %v246 = vld [vmem:[%s166 + $0x10a] sm:$0xff]
        %v247 = vld [vmem:[%s166 + $0x112] sm:$0xff]
        %v248 = vld [vmem:[%s166 + $0x122] sm:$0xff]
        %v249 = vld [vmem:[%s166 + $0x12a] sm:$0xff]
        %v250 = vld [vmem:[%s166 + $0x13a] sm:$0xff]
        %v251 = vld [vmem:[%s166 + $0x142] sm:$0xff]
        %v252 = vld [vmem:[%s166 + $0x152] sm:$0xff]
        %v253 = vld [vmem:[%s166 + $0x15a] sm:$0xff]
        %v254 = vld [vmem:[%s166 + $0x16a] sm:$0xff]
        %v255 = vld [vmem:[%s166 + $0x172] sm:$0xff]
        %s256 = scalar_lea.vmem [#allocation5], 4
        %v257 = vld [vmem:[%s256] sm:$0xf]
        %vm258 = vcmask 31744
        %v260 = vsel %vm258, %v224, 0
        %v263 = vsel %vm258, %v225, 0
        %v266 = vsel %vm258, %v226, 0
        %v269 = vsel %vm258, %v227, 0
        %v272 = vsel %vm258, %v228, 0
        %v275 = vsel %vm258, %v229, 0
        %v278 = vsel %vm258, %v230, 0
        %v281 = vsel %vm258, %v231, 0
        %v284 = vsel %vm258, %v232, 0
        %v287 = vsel %vm258, %v233, 0
        %v290 = vsel %vm258, %v234, 0
        %v293 = vsel %vm258, %v235, 0
        %v296 = vsel %vm258, %v236, 0
        %v299 = vsel %vm258, %v237, 0
        %v302 = vsel %vm258, %v238, 0
        %v305 = vsel %vm258, %v239, 0
        %v308 = vsel %vm258, %v240, 0
        %v311 = vsel %vm258, %v241, 0
        %v314 = vsel %vm258, %v242, 0
        %v317 = vsel %vm258, %v243, 0
        %v320 = vsel %vm258, %v244, 0
        %v323 = vsel %vm258, %v245, 0
        %v326 = vsel %vm258, %v246, 0
        %v329 = vsel %vm258, %v247, 0
        %v332 = vsel %vm258, %v248, 0
        %v335 = vsel %vm258, %v249, 0
        %v338 = vsel %vm258, %v250, 0
        %v341 = vsel %vm258, %v251, 0
        %v344 = vsel %vm258, %v252, 0
        %v347 = vsel %vm258, %v253, 0
        %v350 = vsel %vm258, %v254, 0
        %v353 = vsel %vm258, %v255, 0
        %vm355 = vcmask 1043456
        %v357 = vsel %vm355, %v257, 0
        %359 = vmatprep.subr.mxu0 0.0
        %360 = vmatpush1.msra.mxu0 %v357
        %361 = vmatprep.subr.mxu0 0.0
        %362 = vmatpush1.msra.mxu0 0.0
        %363 = vmatprep.subr.mxu0 0.0
        %364 = vmatpush1.msra.mxu0 0.0
        %365 = vmatprep.subr.mxu0 0.0
        %366 = vmatpush1.msra.mxu0 0.0
        %367 = vmatprep.subr.mxu0 0.0
        %368 = vmatpush1.msra.mxu0 0.0
        %369 = vmatprep.subr.mxu0 0.0
        %370 = vmatpush1.msra.mxu0 0.0
        %371 = vmatprep.subr.mxu0 0.0
        %372 = vmatpush1.msra.mxu0 0.0
        %373 = vmatprep.subr.mxu0 0.0
        %374 = vmatpush1.msra.mxu0 0.0
        %375 = vmatprep.subr.mxu0 0.0
        %376 = vmatpush1.msra.mxu0 0.0
        %377 = vmatprep.subr.mxu0 0.0
        %378 = vmatpush1.msra.mxu0 0.0
        %379 = vmatprep.subr.mxu0 0.0
        %380 = vmatpush1.msra.mxu0 0.0
        %381 = vmatprep.subr.mxu0 0.0
        %382 = vmatpush1.msra.mxu0 0.0
        %383 = vmatprep.subr.mxu0 0.0
        %384 = vmatpush1.msra.mxu0 0.0
        %385 = vmatprep.subr.mxu0 0.0
        %386 = vmatpush1.msra.mxu0 0.0
        %387 = vmatprep.subr.mxu0 0.0
        %388 = vmatpush1.msra.mxu0 0.0
        %389 = vmatprep.subr.mxu0 0.0
        %390 = vmatpush1.msra.mxu0 0.0
        %391 = vmatprep.subr.mxu0 0.0
        %392 = vmatpush1.msra.mxu0 0.0
        %393 = vmatprep.subr.mxu0 0.0
        %394 = vmatpush1.msra.mxu0 0.0
        %395 = vmatprep.subr.mxu0 0.0
        %396 = vmatpush1.msra.mxu0 0.0
        %397 = vmatprep.subr.mxu0 0.0
        %398 = vmatpush1.msra.mxu0 0.0
        %399 = vmatprep.subr.mxu0 0.0
        %400 = vmatpush1.msra.mxu0 0.0
        %401 = vmatprep.subr.mxu0 0.0
        %402 = vmatpush1.msra.mxu0 0.0
        %403 = vmatprep.subr.mxu0 0.0
        %404 = vmatpush1.msra.mxu0 0.0
        %405 = vmatprep.subr.mxu0 0.0
        %406 = vmatpush1.msra.mxu0 0.0
        %407 = vmatprep.subr.mxu0 0.0
        %408 = vmatpush1.msra.mxu0 0.0
        %409 = vmatprep.subr.mxu0 0.0
        %410 = vmatpush1.msra.mxu0 0.0
        %411 = vmatprep.subr.mxu0 0.0
        %412 = vmatpush1.msra.mxu0 0.0
        %413 = vmatprep.subr.mxu0 0.0
        %414 = vmatpush1.msra.mxu0 0.0
        %415 = vmatprep.subr.mxu0 0.0
        %416 = vmatpush1.msra.mxu0 0.0
        %417 = vmatprep.subr.mxu0 0.0
        %418 = vmatpush1.msra.mxu0 0.0
        %419 = vmatprep.subr.mxu0 0.0
        %420 = vmatpush1.msra.mxu0 0.0
        %421 = vmatprep.subr.mxu0 0.0
        %422 = vmatpush1.msra.mxu0 0.0
        %423 = vmatprep.mubr.f32.mxu0 0.0
        %424 = vmatmul.mubr.f32.gmra.mrb[0].mxu0 %v260
        %v425 = vpop.f32.mrb[0].mxu0
        %v426 = vadd.f32 0.0, %v425
        %v427 = vpop.f32.mrb[0].mxu0
        %428 = vmatprep.mubr.f32.mxu0 0.0
        %429 = vmatmul.mubr.f32.gmra.mrb[0].mxu0 %v263
        %v430 = vpop.f32.mrb[0].mxu0
        %v431 = vadd.f32 0.0, %v430
        %v432 = vpop.f32.mrb[0].mxu0
        %433 = vmatprep.mubr.f32.mxu0 0.0
        %434 = vmatmul.mubr.f32.gmra.mrb[0].mxu0 %v266
        %v435 = vpop.f32.mrb[0].mxu0
        %v436 = vadd.f32 0.0, %v435
        %v437 = vpop.f32.mrb[0].mxu0
        %438 = vmatprep.mubr.f32.mxu0 0.0
        %439 = vmatmul.mubr.f32.gmra.mrb[0].mxu0 %v269
        %v440 = vpop.f32.mrb[0].mxu0
        %v441 = vadd.f32 0.0, %v440
        %v442 = vpop.f32.mrb[0].mxu0
        %443 = vmatprep.mubr.f32.mxu0 0.0
        %444 = vmatmul.mubr.f32.gmra.mrb[0].mxu0 %v272
        %v445 = vpop.f32.mrb[0].mxu0
        %v446 = vadd.f32 0.0, %v445
        %v447 = vpop.f32.mrb[0].mxu0
        %448 = vmatprep.mubr.f32.mxu0 0.0
        %449 = vmatmul.mubr.f32.gmra.mrb[0].mxu0 %v275
        %v450 = vpop.f32.mrb[0].mxu0
        %v451 = vadd.f32 0.0, %v450
        %v452 = vpop.f32.mrb[0].mxu0
        %453 = vmatprep.mubr.f32.mxu0 0.0
        %454 = vmatmul.mubr.f32.gmra.mrb[0].mxu0 %v278
        %v455 = vpop.f32.mrb[0].mxu0
        %v456 = vadd.f32 0.0, %v455
        %v457 = vpop.f32.mrb[0].mxu0
        %458 = vmatprep.mubr.f32.mxu0 0.0
        %459 = vmatmul.mubr.f32.gmra.mrb[0].mxu0 %v281
        %v460 = vpop.f32.mrb[0].mxu0
        %v461 = vadd.f32 0.0, %v460
        %v462 = vpop.f32.mrb[0].mxu0
        %463 = vmatprep.mubr.f32.mxu0 0.0
        %464 = vmatmul.mubr.f32.gmra.mrb[0].mxu0 %v284
        %v465 = vpop.f32.mrb[0].mxu0
        %v466 = vadd.f32 0.0, %v465
        %v467 = vpop.f32.mrb[0].mxu0
        %468 = vmatprep.mubr.f32.mxu0 0.0
        %469 = vmatmul.mubr.f32.gmra.mrb[0].mxu0 %v287
        %v470 = vpop.f32.mrb[0].mxu0
        %v471 = vadd.f32 0.0, %v470
        %v472 = vpop.f32.mrb[0].mxu0
        %473 = vmatprep.mubr.f32.mxu0 0.0
        %474 = vmatmul.mubr.f32.gmra.mrb[0].mxu0 %v290
        %v475 = vpop.f32.mrb[0].mxu0
        %v476 = vadd.f32 0.0, %v475
        %v477 = vpop.f32.mrb[0].mxu0
        %478 = vmatprep.mubr.f32.mxu0 0.0
        %479 = vmatmul.mubr.f32.gmra.mrb[0].mxu0 %v293
        %v480 = vpop.f32.mrb[0].mxu0
        %v481 = vadd.f32 0.0, %v480
        %v482 = vpop.f32.mrb[0].mxu0
        %483 = vmatprep.mubr.f32.mxu0 0.0
        %484 = vmatmul.mubr.f32.gmra.mrb[0].mxu0 %v296
        %v485 = vpop.f32.mrb[0].mxu0
        %v486 = vadd.f32 0.0, %v485
        %v487 = vpop.f32.mrb[0].mxu0
        %488 = vmatprep.mubr.f32.mxu0 0.0
        %489 = vmatmul.mubr.f32.gmra.mrb[0].mxu0 %v299
        %v490 = vpop.f32.mrb[0].mxu0
        %v491 = vadd.f32 0.0, %v490
        %v492 = vpop.f32.mrb[0].mxu0
        %493 = vmatprep.mubr.f32.mxu0 0.0
        %494 = vmatmul.mubr.f32.gmra.mrb[0].mxu0 %v302
        %v495 = vpop.f32.mrb[0].mxu0
        %v496 = vadd.f32 0.0, %v495
        %v497 = vpop.f32.mrb[0].mxu0
        %498 = vmatprep.mubr.f32.mxu0 0.0
        %499 = vmatmul.mubr.f32.gmra.mrb[0].mxu0 %v305
        %v500 = vpop.f32.mrb[0].mxu0
        %v501 = vadd.f32 0.0, %v500
        %v502 = vpop.f32.mrb[0].mxu0
        %503 = vmatprep.mubr.f32.mxu0 0.0
        %504 = vmatmul.mubr.f32.gmra.mrb[0].mxu0 %v308
        %v505 = vpop.f32.mrb[0].mxu0
        %v506 = vadd.f32 0.0, %v505
        %v507 = vpop.f32.mrb[0].mxu0
        %508 = vmatprep.mubr.f32.mxu0 0.0
        %509 = vmatmul.mubr.f32.gmra.mrb[0].mxu0 %v311
        %v510 = vpop.f32.mrb[0].mxu0
        %v511 = vadd.f32 0.0, %v510
        %v512 = vpop.f32.mrb[0].mxu0
        %513 = vmatprep.mubr.f32.mxu0 0.0
        %514 = vmatmul.mubr.f32.gmra.mrb[0].mxu0 %v314
        %v515 = vpop.f32.mrb[0].mxu0
        %v516 = vadd.f32 0.0, %v515
        %v517 = vpop.f32.mrb[0].mxu0
        %518 = vmatprep.mubr.f32.mxu0 0.0
        %519 = vmatmul.mubr.f32.gmra.mrb[0].mxu0 %v317
        %v520 = vpop.f32.mrb[0].mxu0
        %v521 = vadd.f32 0.0, %v520
        %v522 = vpop.f32.mrb[0].mxu0
        %523 = vmatprep.mubr.f32.mxu0 0.0
        %524 = vmatmul.mubr.f32.gmra.mrb[0].mxu0 %v320
        %v525 = vpop.f32.mrb[0].mxu0
        %v526 = vadd.f32 0.0, %v525
        %v527 = vpop.f32.mrb[0].mxu0
        %528 = vmatprep.mubr.f32.mxu0 0.0
        %529 = vmatmul.mubr.f32.gmra.mrb[0].mxu0 %v323
        %v530 = vpop.f32.mrb[0].mxu0
        %v531 = vadd.f32 0.0, %v530
        %v532 = vpop.f32.mrb[0].mxu0
        %533 = vmatprep.mubr.f32.mxu0 0.0
        %534 = vmatmul.mubr.f32.gmra.mrb[0].mxu0 %v326
        %v535 = vpop.f32.mrb[0].mxu0
        %v536 = vadd.f32 0.0, %v535
        %v537 = vpop.f32.mrb[0].mxu0
        %538 = vmatprep.mubr.f32.mxu0 0.0
        %539 = vmatmul.mubr.f32.gmra.mrb[0].mxu0 %v329
        %v540 = vpop.f32.mrb[0].mxu0
        %v541 = vadd.f32 0.0, %v540
        %v542 = vpop.f32.mrb[0].mxu0
        %543 = vmatprep.mubr.f32.mxu0 0.0
        %544 = vmatmul.mubr.f32.gmra.mrb[0].mxu0 %v332
        %v545 = vpop.f32.mrb[0].mxu0
        %v546 = vadd.f32 0.0, %v545
        %v547 = vpop.f32.mrb[0].mxu0
        %548 = vmatprep.mubr.f32.mxu0 0.0
        %549 = vmatmul.mubr.f32.gmra.mrb[0].mxu0 %v335
        %v550 = vpop.f32.mrb[0].mxu0
        %v551 = vadd.f32 0.0, %v550
        %v552 = vpop.f32.mrb[0].mxu0
        %553 = vmatprep.mubr.f32.mxu0 0.0
        %554 = vmatmul.mubr.f32.gmra.mrb[0].mxu0 %v338
        %v555 = vpop.f32.mrb[0].mxu0
        %v556 = vadd.f32 0.0, %v555
        %v557 = vpop.f32.mrb[0].mxu0
        %558 = vmatprep.mubr.f32.mxu0 0.0
        %559 = vmatmul.mubr.f32.gmra.mrb[0].mxu0 %v341
        %v560 = vpop.f32.mrb[0].mxu0
        %v561 = vadd.f32 0.0, %v560
        %v562 = vpop.f32.mrb[0].mxu0
        %563 = vmatprep.mubr.f32.mxu0 0.0
        %564 = vmatmul.mubr.f32.gmra.mrb[0].mxu0 %v344
        %v565 = vpop.f32.mrb[0].mxu0
        %v566 = vadd.f32 0.0, %v565
        %v567 = vpop.f32.mrb[0].mxu0
        %568 = vmatprep.mubr.f32.mxu0 0.0
        %569 = vmatmul.mubr.f32.gmra.mrb[0].mxu0 %v347
        %v570 = vpop.f32.mrb[0].mxu0
        %v571 = vadd.f32 0.0, %v570
        %v572 = vpop.f32.mrb[0].mxu0
        %573 = vmatprep.mubr.f32.mxu0 0.0
        %574 = vmatmul.mubr.f32.gmra.mrb[0].mxu0 %v350
        %v575 = vpop.f32.mrb[0].mxu0
        %v576 = vadd.f32 0.0, %v575
        %v577 = vpop.f32.mrb[0].mxu0
        %578 = vmatprep.mubr.f32.mxu0 0.0
        %579 = vmatmul.mubr.f32.gmra.mrb[0].mxu0 %v353
        %v580 = vpop.f32.mrb[0].mxu0
        %v581 = vadd.f32 0.0, %v580
        %v582 = vpop.f32.mrb[0].mxu0
        %583 = vdwg.mxu0
        %v585 = vsel %vm258, %v191, 0
        %v588 = vsel %vm258, %v192, 0
        %v591 = vsel %vm258, %v193, 0
        %v594 = vsel %vm258, %v194, 0
        %v597 = vsel %vm258, %v195, 0
        %v600 = vsel %vm258, %v196, 0
        %v603 = vsel %vm258, %v197, 0
        %v606 = vsel %vm258, %v198, 0
        %v609 = vsel %vm258, %v199, 0
        %v612 = vsel %vm258, %v200, 0
        %v615 = vsel %vm258, %v201, 0
        %v618 = vsel %vm258, %v202, 0
        %v621 = vsel %vm258, %v203, 0
        %v624 = vsel %vm258, %v204, 0
        %v627 = vsel %vm258, %v205, 0
        %v630 = vsel %vm258, %v206, 0
        %v633 = vsel %vm258, %v207, 0
        %v636 = vsel %vm258, %v208, 0
        %v639 = vsel %vm258, %v209, 0
        %v642 = vsel %vm258, %v210, 0
        %v645 = vsel %vm258, %v211, 0
        %v648 = vsel %vm258, %v212, 0
        %v651 = vsel %vm258, %v213, 0
        %v654 = vsel %vm258, %v214, 0
        %v657 = vsel %vm258, %v215, 0
        %v660 = vsel %vm258, %v216, 0
        %v663 = vsel %vm258, %v217, 0
        %v666 = vsel %vm258, %v218, 0
        %v669 = vsel %vm258, %v219, 0
        %v672 = vsel %vm258, %v220, 0
        %v675 = vsel %vm258, %v221, 0
        %v678 = vsel %vm258, %v222, 0
        %v681 = vsel %vm355, %v223, 0
        %683 = vmatprep.subr.mxu0 0.0
        %684 = vmatpush1.msra.mxu0 %v681
        %685 = vmatprep.subr.mxu0 0.0
        %686 = vmatpush1.msra.mxu0 0.0
        %687 = vmatprep.subr.mxu0 0.0
        %688 = vmatpush1.msra.mxu0 0.0
        %689 = vmatprep.subr.mxu0 0.0
        %690 = vmatpush1.msra.mxu0 0.0
        %691 = vmatprep.subr.mxu0 0.0
        %692 = vmatpush1.msra.mxu0 0.0
        %693 = vmatprep.subr.mxu0 0.0
        %694 = vmatpush1.msra.mxu0 0.0
        %695 = vmatprep.subr.mxu0 0.0
        %696 = vmatpush1.msra.mxu0 0.0
        %697 = vmatprep.subr.mxu0 0.0
        %698 = vmatpush1.msra.mxu0 0.0
        %699 = vmatprep.subr.mxu0 0.0
        %700 = vmatpush1.msra.mxu0 0.0
        %701 = vmatprep.subr.mxu0 0.0
        %702 = vmatpush1.msra.mxu0 0.0
        %703 = vmatprep.subr.mxu0 0.0
        %704 = vmatpush1.msra.mxu0 0.0
        %705 = vmatprep.subr.mxu0 0.0
        %706 = vmatpush1.msra.mxu0 0.0
        %707 = vmatprep.subr.mxu0 0.0
        %708 = vmatpush1.msra.mxu0 0.0
        %709 = vmatprep.subr.mxu0 0.0
        %710 = vmatpush1.msra.mxu0 0.0
        %711 = vmatprep.subr.mxu0 0.0
        %712 = vmatpush1.msra.mxu0 0.0
        %713 = vmatprep.subr.mxu0 0.0
        %714 = vmatpush1.msra.mxu0 0.0
        %715 = vmatprep.subr.mxu0 0.0
        %716 = vmatpush1.msra.mxu0 0.0
        %717 = vmatprep.subr.mxu0 0.0
        %718 = vmatpush1.msra.mxu0 0.0
        %719 = vmatprep.subr.mxu0 0.0
        %720 = vmatpush1.msra.mxu0 0.0
        %721 = vmatprep.subr.mxu0 0.0
        %722 = vmatpush1.msra.mxu0 0.0
        %723 = vmatprep.subr.mxu0 0.0
        %724 = vmatpush1.msra.mxu0 0.0
        %725 = vmatprep.subr.mxu0 0.0
        %726 = vmatpush1.msra.mxu0 0.0
        %727 = vmatprep.subr.mxu0 0.0
        %728 = vmatpush1.msra.mxu0 0.0
        %729 = vmatprep.subr.mxu0 0.0
        %730 = vmatpush1.msra.mxu0 0.0
        %731 = vmatprep.subr.mxu0 0.0
        %732 = vmatpush1.msra.mxu0 0.0
        %733 = vmatprep.subr.mxu0 0.0
        %734 = vmatpush1.msra.mxu0 0.0
        %735 = vmatprep.subr.mxu0 0.0
        %736 = vmatpush1.msra.mxu0 0.0
        %737 = vmatprep.subr.mxu0 0.0
        %738 = vmatpush1.msra.mxu0 0.0
        %739 = vmatprep.subr.mxu0 0.0
        %740 = vmatpush1.msra.mxu0 0.0
        %741 = vmatprep.subr.mxu0 0.0
        %742 = vmatpush1.msra.mxu0 0.0
        %743 = vmatprep.subr.mxu0 0.0
        %744 = vmatpush1.msra.mxu0 0.0
        %745 = vmatprep.subr.mxu0 0.0
        %746 = vmatpush1.msra.mxu0 0.0
        %747 = vmatprep.mubr.f32.mxu0 0.0
        %748 = vmatmul.mubr.f32.gmra.mrb[0].mxu0 %v585
        %v749 = vpop.f32.mrb[0].mxu0
        %v750 = vadd.f32 %v426, %v749
        %v751 = vpop.f32.mrb[0].mxu0
        %752 = vmatprep.mubr.f32.mxu0 0.0
        %753 = vmatmul.mubr.f32.gmra.mrb[0].mxu0 %v588
        %v754 = vpop.f32.mrb[0].mxu0
        %v755 = vadd.f32 %v431, %v754
        %v756 = vpop.f32.mrb[0].mxu0
        %757 = vmatprep.mubr.f32.mxu0 0.0
        %758 = vmatmul.mubr.f32.gmra.mrb[0].mxu0 %v591
        %v759 = vpop.f32.mrb[0].mxu0
        %v760 = vadd.f32 %v436, %v759
        %v761 = vpop.f32.mrb[0].mxu0
        %762 = vmatprep.mubr.f32.mxu0 0.0
        %763 = vmatmul.mubr.f32.gmra.mrb[0].mxu0 %v594
        %v764 = vpop.f32.mrb[0].mxu0
        %v765 = vadd.f32 %v441, %v764
        %v766 = vpop.f32.mrb[0].mxu0
        %767 = vmatprep.mubr.f32.mxu0 0.0
        %768 = vmatmul.mubr.f32.gmra.mrb[0].mxu0 %v597
        %v769 = vpop.f32.mrb[0].mxu0
        %v770 = vadd.f32 %v446, %v769
        %v771 = vpop.f32.mrb[0].mxu0
        %772 = vmatprep.mubr.f32.mxu0 0.0
        %773 = vmatmul.mubr.f32.gmra.mrb[0].mxu0 %v600
        %v774 = vpop.f32.mrb[0].mxu0
        %v775 = vadd.f32 %v451, %v774
        %v776 = vpop.f32.mrb[0].mxu0
        %777 = vmatprep.mubr.f32.mxu0 0.0
        %778 = vmatmul.mubr.f32.gmra.mrb[0].mxu0 %v603
        %v779 = vpop.f32.mrb[0].mxu0
        %v780 = vadd.f32 %v456, %v779
        %v781 = vpop.f32.mrb[0].mxu0
        %782 = vmatprep.mubr.f32.mxu0 0.0
        %783 = vmatmul.mubr.f32.gmra.mrb[0].mxu0 %v606
        %v784 = vpop.f32.mrb[0].mxu0
        %v785 = vadd.f32 %v461, %v784
        %v786 = vpop.f32.mrb[0].mxu0
        %787 = vmatprep.mubr.f32.mxu0 0.0
        %788 = vmatmul.mubr.f32.gmra.mrb[0].mxu0 %v609
        %v789 = vpop.f32.mrb[0].mxu0
        %v790 = vadd.f32 %v466, %v789
        %v791 = vpop.f32.mrb[0].mxu0
        %792 = vmatprep.mubr.f32.mxu0 0.0
        %793 = vmatmul.mubr.f32.gmra.mrb[0].mxu0 %v612
        %v794 = vpop.f32.mrb[0].mxu0
        %v795 = vadd.f32 %v471, %v794
        %v796 = vpop.f32.mrb[0].mxu0
        %797 = vmatprep.mubr.f32.mxu0 0.0
        %798 = vmatmul.mubr.f32.gmra.mrb[0].mxu0 %v615
        %v799 = vpop.f32.mrb[0].mxu0
        %v800 = vadd.f32 %v476, %v799
        %v801 = vpop.f32.mrb[0].mxu0
        %802 = vmatprep.mubr.f32.mxu0 0.0
        %803 = vmatmul.mubr.f32.gmra.mrb[0].mxu0 %v618
        %v804 = vpop.f32.mrb[0].mxu0
        %v805 = vadd.f32 %v481, %v804
        %v806 = vpop.f32.mrb[0].mxu0
        %807 = vmatprep.mubr.f32.mxu0 0.0
        %808 = vmatmul.mubr.f32.gmra.mrb[0].mxu0 %v621
        %v809 = vpop.f32.mrb[0].mxu0
        %v810 = vadd.f32 %v486, %v809
        %v811 = vpop.f32.mrb[0].mxu0
        %812 = vmatprep.mubr.f32.mxu0 0.0
        %813 = vmatmul.mubr.f32.gmra.mrb[0].mxu0 %v624
        %v814 = vpop.f32.mrb[0].mxu0
        %v815 = vadd.f32 %v491, %v814
        %v816 = vpop.f32.mrb[0].mxu0
        %817 = vmatprep.mubr.f32.mxu0 0.0
        %818 = vmatmul.mubr.f32.gmra.mrb[0].mxu0 %v627
        %v819 = vpop.f32.mrb[0].mxu0
        %v820 = vadd.f32 %v496, %v819
        %v821 = vpop.f32.mrb[0].mxu0
        %822 = vmatprep.mubr.f32.mxu0 0.0
        %823 = vmatmul.mubr.f32.gmra.mrb[0].mxu0 %v630
        %v824 = vpop.f32.mrb[0].mxu0
        %v825 = vadd.f32 %v501, %v824
        %v826 = vpop.f32.mrb[0].mxu0
        %827 = vmatprep.mubr.f32.mxu0 0.0
        %828 = vmatmul.mubr.f32.gmra.mrb[0].mxu0 %v633
        %v829 = vpop.f32.mrb[0].mxu0
        %v830 = vadd.f32 %v506, %v829
        %v831 = vpop.f32.mrb[0].mxu0
        %832 = vmatprep.mubr.f32.mxu0 0.0
        %833 = vmatmul.mubr.f32.gmra.mrb[0].mxu0 %v636
        %v834 = vpop.f32.mrb[0].mxu0
        %v835 = vadd.f32 %v511, %v834
        %v836 = vpop.f32.mrb[0].mxu0
        %837 = vmatprep.mubr.f32.mxu0 0.0
        %838 = vmatmul.mubr.f32.gmra.mrb[0].mxu0 %v639
        %v839 = vpop.f32.mrb[0].mxu0
        %v840 = vadd.f32 %v516, %v839
        %v841 = vpop.f32.mrb[0].mxu0
        %842 = vmatprep.mubr.f32.mxu0 0.0
        %843 = vmatmul.mubr.f32.gmra.mrb[0].mxu0 %v642
        %v844 = vpop.f32.mrb[0].mxu0
        %v845 = vadd.f32 %v521, %v844
        %v846 = vpop.f32.mrb[0].mxu0
        %847 = vmatprep.mubr.f32.mxu0 0.0
        %848 = vmatmul.mubr.f32.gmra.mrb[0].mxu0 %v645
        %v849 = vpop.f32.mrb[0].mxu0
        %v850 = vadd.f32 %v526, %v849
        %v851 = vpop.f32.mrb[0].mxu0
        %852 = vmatprep.mubr.f32.mxu0 0.0
        %853 = vmatmul.mubr.f32.gmra.mrb[0].mxu0 %v648
        %v854 = vpop.f32.mrb[0].mxu0
        %v855 = vadd.f32 %v531, %v854
        %v856 = vpop.f32.mrb[0].mxu0
        %857 = vmatprep.mubr.f32.mxu0 0.0
        %858 = vmatmul.mubr.f32.gmra.mrb[0].mxu0 %v651
        %v859 = vpop.f32.mrb[0].mxu0
        %v860 = vadd.f32 %v536, %v859
        %v861 = vpop.f32.mrb[0].mxu0
        %862 = vmatprep.mubr.f32.mxu0 0.0
        %863 = vmatmul.mubr.f32.gmra.mrb[0].mxu0 %v654
        %v864 = vpop.f32.mrb[0].mxu0
        %v865 = vadd.f32 %v541, %v864
        %v866 = vpop.f32.mrb[0].mxu0
        %867 = vmatprep.mubr.f32.mxu0 0.0
        %868 = vmatmul.mubr.f32.gmra.mrb[0].mxu0 %v657
        %v869 = vpop.f32.mrb[0].mxu0
        %v870 = vadd.f32 %v546, %v869
        %v871 = vpop.f32.mrb[0].mxu0
        %872 = vmatprep.mubr.f32.mxu0 0.0
        %873 = vmatmul.mubr.f32.gmra.mrb[0].mxu0 %v660
        %v874 = vpop.f32.mrb[0].mxu0
        %v875 = vadd.f32 %v551, %v874
        %v876 = vpop.f32.mrb[0].mxu0
        %877 = vmatprep.mubr.f32.mxu0 0.0
        %878 = vmatmul.mubr.f32.gmra.mrb[0].mxu0 %v663
        %v879 = vpop.f32.mrb[0].mxu0
        %v880 = vadd.f32 %v556, %v879
        %v881 = vpop.f32.mrb[0].mxu0
        %882 = vmatprep.mubr.f32.mxu0 0.0
        %883 = vmatmul.mubr.f32.gmra.mrb[0].mxu0 %v666
        %v884 = vpop.f32.mrb[0].mxu0
        %v885 = vadd.f32 %v561, %v884
        %v886 = vpop.f32.mrb[0].mxu0
        %887 = vmatprep.mubr.f32.mxu0 0.0
        %888 = vmatmul.mubr.f32.gmra.mrb[0].mxu0 %v669
        %v889 = vpop.f32.mrb[0].mxu0
        %v890 = vadd.f32 %v566, %v889
        %v891 = vpop.f32.mrb[0].mxu0
        %892 = vmatprep.mubr.f32.mxu0 0.0
        %893 = vmatmul.mubr.f32.gmra.mrb[0].mxu0 %v672
        %v894 = vpop.f32.mrb[0].mxu0
        %v895 = vadd.f32 %v571, %v894
        %v896 = vpop.f32.mrb[0].mxu0
        %897 = vmatprep.mubr.f32.mxu0 0.0
        %898 = vmatmul.mubr.f32.gmra.mrb[0].mxu0 %v675
        %v899 = vpop.f32.mrb[0].mxu0
        %v900 = vadd.f32 %v576, %v899
        %v901 = vpop.f32.mrb[0].mxu0
        %902 = vmatprep.mubr.f32.mxu0 0.0
        %903 = vmatmul.mubr.f32.gmra.mrb[0].mxu0 %v678
        %v904 = vpop.f32.mrb[0].mxu0
        %v905 = vadd.f32 %v581, %v904
        %v906 = vpop.f32.mrb[0].mxu0
        %907 = vdwg.mxu0
        %v908 = vld [vmem:[%s166 + $0x4] sm:$0xff]
        %v909 = vld [vmem:[%s166 + $0xc] sm:$0xff]
        %v910 = vld [vmem:[%s166 + $0x1c] sm:$0xff]
        %v911 = vld [vmem:[%s166 + $0x24] sm:$0xff]
        %v912 = vld [vmem:[%s166 + $0x34] sm:$0xff]
        %v913 = vld [vmem:[%s166 + $0x3c] sm:$0xff]
        %v914 = vld [vmem:[%s166 + $0x4c] sm:$0xff]
        %v915 = vld [vmem:[%s166 + $0x54] sm:$0xff]
        %v916 = vld [vmem:[%s166 + $0x64] sm:$0xff]
        %v917 = vld [vmem:[%s166 + $0x6c] sm:$0xff]
        %v918 = vld [vmem:[%s166 + $0x7c] sm:$0xff]
        %v919 = vld [vmem:[%s166 + $0x84] sm:$0xff]
        %v920 = vld [vmem:[%s166 + $0x94] sm:$0xff]
        %v921 = vld [vmem:[%s166 + $0x9c] sm:$0xff]
        %v922 = vld [vmem:[%s166 + $0xac] sm:$0xff]
        %v923 = vld [vmem:[%s166 + $0xb4] sm:$0xff]
        %v924 = vld [vmem:[%s166 + $0xc4] sm:$0xff]
        %v925 = vld [vmem:[%s166 + $0xcc] sm:$0xff]
        %v926 = vld [vmem:[%s166 + $0xdc] sm:$0xff]
        %v927 = vld [vmem:[%s166 + $0xe4] sm:$0xff]
        %v928 = vld [vmem:[%s166 + $0xf4] sm:$0xff]
        %v929 = vld [vmem:[%s166 + $0xfc] sm:$0xff]
        %v930 = vld [vmem:[%s166 + $0x10c] sm:$0xff]
        %v931 = vld [vmem:[%s166 + $0x114] sm:$0xff]
        %v932 = vld [vmem:[%s166 + $0x124] sm:$0xff]
        %v933 = vld [vmem:[%s166 + $0x12c] sm:$0xff]
        %v934 = vld [vmem:[%s166 + $0x13c] sm:$0xff]
        %v935 = vld [vmem:[%s166 + $0x144] sm:$0xff]
        %v936 = vld [vmem:[%s166 + $0x154] sm:$0xff]
        %v937 = vld [vmem:[%s166 + $0x15c] sm:$0xff]
        %v938 = vld [vmem:[%s166 + $0x16c] sm:$0xff]
        %v939 = vld [vmem:[%s166 + $0x174] sm:$0xff]
        %s940 = scalar_lea.vmem [#allocation5], 8
        %v941 = vld [vmem:[%s940] sm:$0xf]
        %v943 = vsel %vm258, %v908, 0
        %v946 = vsel %vm258, %v909, 0
        %v949 = vsel %vm258, %v910, 0
        %v952 = vsel %vm258, %v911, 0
        %v955 = vsel %vm258, %v912, 0
        %v958 = vsel %vm258, %v913, 0
        %v961 = vsel %vm258, %v914, 0
        %v964 = vsel %vm258, %v915, 0
        %v967 = vsel %vm258, %v916, 0
        %v970 = vsel %vm258, %v917, 0
        %v973 = vsel %vm258, %v918, 0
        %v976 = vsel %vm258, %v919, 0
        %v979 = vsel %vm258, %v920, 0
        %v982 = vsel %vm258, %v921, 0
        %v985 = vsel %vm258, %v922, 0
        %v988 = vsel %vm258, %v923, 0
        %v991 = vsel %vm258, %v924, 0
        %v994 = vsel %vm258, %v925, 0
        %v997 = vsel %vm258, %v926, 0
        %v1000 = vsel %vm258, %v927, 0
        %v1003 = vsel %vm258, %v928, 0
        %v1006 = vsel %vm258, %v929, 0
        %v1009 = vsel %vm258, %v930, 0
        %v1012 = vsel %vm258, %v931, 0
        %v1015 = vsel %vm258, %v932, 0
        %v1018 = vsel %vm258, %v933, 0
        %v1021 = vsel %vm258, %v934, 0
        %v1024 = vsel %vm258, %v935, 0
        %v1027 = vsel %vm258, %v936, 0
        %v1030 = vsel %vm258, %v937, 0
        %v1033 = vsel %vm258, %v938, 0
        %v1036 = vsel %vm258, %v939, 0
        %v1039 = vsel %vm355, %v941, 0
        %1041 = vmatprep.subr.mxu0 0.0
        %1042 = vmatpush1.msra.mxu0 %v1039
        %1043 = vmatprep.subr.mxu0 0.0
        %1044 = vmatpush1.msra.mxu0 0.0
        %1045 = vmatprep.subr.mxu0 0.0
        %1046 = vmatpush1.msra.mxu0 0.0
        %1047 = vmatprep.subr.mxu0 0.0
        %1048 = vmatpush1.msra.mxu0 0.0
        %1049 = vmatprep.subr.mxu0 0.0
        %1050 = vmatpush1.msra.mxu0 0.0
        %1051 = vmatprep.subr.mxu0 0.0
        %1052 = vmatpush1.msra.mxu0 0.0
        %1053 = vmatprep.subr.mxu0 0.0
        %1054 = vmatpush1.msra.mxu0 0.0
        %1055 = vmatprep.subr.mxu0 0.0
        %1056 = vmatpush1.msra.mxu0 0.0
        %1057 = vmatprep.subr.mxu0 0.0
        %1058 = vmatpush1.msra.mxu0 0.0
        %1059 = vmatprep.subr.mxu0 0.0
        %1060 = vmatpush1.msra.mxu0 0.0
        %1061 = vmatprep.subr.mxu0 0.0
        %1062 = vmatpush1.msra.mxu0 0.0
        %1063 = vmatprep.subr.mxu0 0.0
        %1064 = vmatpush1.msra.mxu0 0.0
        %1065 = vmatprep.subr.mxu0 0.0
        %1066 = vmatpush1.msra.mxu0 0.0
        %1067 = vmatprep.subr.mxu0 0.0
        %1068 = vmatpush1.msra.mxu0 0.0
        %1069 = vmatprep.subr.mxu0 0.0
        %1070 = vmatpush1.msra.mxu0 0.0
        %1071 = vmatprep.subr.mxu0 0.0
        %1072 = vmatpush1.msra.mxu0 0.0
        %1073 = vmatprep.subr.mxu0 0.0
        %1074 = vmatpush1.msra.mxu0 0.0
        %1075 = vmatprep.subr.mxu0 0.0
        %1076 = vmatpush1.msra.mxu0 0.0
        %1077 = vmatprep.subr.mxu0 0.0
        %1078 = vmatpush1.msra.mxu0 0.0
        %1079 = vmatprep.subr.mxu0 0.0
        %1080 = vmatpush1.msra.mxu0 0.0
        %1081 = vmatprep.subr.mxu0 0.0
        %1082 = vmatpush1.msra.mxu0 0.0
        %1083 = vmatprep.subr.mxu0 0.0
        %1084 = vmatpush1.msra.mxu0 0.0
        %1085 = vmatprep.subr.mxu0 0.0
        %1086 = vmatpush1.msra.mxu0 0.0
        %1087 = vmatprep.subr.mxu0 0.0
        %1088 = vmatpush1.msra.mxu0 0.0
        %1089 = vmatprep.subr.mxu0 0.0
        %1090 = vmatpush1.msra.mxu0 0.0
        %1091 = vmatprep.subr.mxu0 0.0
        %1092 = vmatpush1.msra.mxu0 0.0
        %1093 = vmatprep.subr.mxu0 0.0
        %1094 = vmatpush1.msra.mxu0 0.0
        %1095 = vmatprep.subr.mxu0 0.0
        %1096 = vmatpush1.msra.mxu0 0.0
        %1097 = vmatprep.subr.mxu0 0.0
        %1098 = vmatpush1.msra.mxu0 0.0
        %1099 = vmatprep.subr.mxu0 0.0
        %1100 = vmatpush1.msra.mxu0 0.0
        %1101 = vmatprep.subr.mxu0 0.0
        %1102 = vmatpush1.msra.mxu0 0.0
        %1103 = vmatprep.subr.mxu0 0.0
        %1104 = vmatpush1.msra.mxu0 0.0
        %1105 = vmatprep.mubr.f32.mxu0 0.0
        %1106 = vmatmul.mubr.f32.gmra.mrb[0].mxu0 %v943
        %v1107 = vpop.f32.mrb[0].mxu0
        %v1108 = vadd.f32 0.0, %v1107
        %v1109 = vpop.f32.mrb[0].mxu0
        %1110 = vmatprep.mubr.f32.mxu0 0.0
        %1111 = vmatmul.mubr.f32.gmra.mrb[0].mxu0 %v946
        %v1112 = vpop.f32.mrb[0].mxu0
        %v1113 = vadd.f32 0.0, %v1112
        %v1114 = vpop.f32.mrb[0].mxu0
        %1115 = vmatprep.mubr.f32.mxu0 0.0
        %1116 = vmatmul.mubr.f32.gmra.mrb[0].mxu0 %v949
        %v1117 = vpop.f32.mrb[0].mxu0
        %v1118 = vadd.f32 0.0, %v1117
        %v1119 = vpop.f32.mrb[0].mxu0
        %1120 = vmatprep.mubr.f32.mxu0 0.0
        %1121 = vmatmul.mubr.f32.gmra.mrb[0].mxu0 %v952
        %v1122 = vpop.f32.mrb[0].mxu0
        %v1123 = vadd.f32 0.0, %v1122
        %v1124 = vpop.f32.mrb[0].mxu0
        %1125 = vmatprep.mubr.f32.mxu0 0.0
        %1126 = vmatmul.mubr.f32.gmra.mrb[0].mxu0 %v955
        %v1127 = vpop.f32.mrb[0].mxu0
        %v1128 = vadd.f32 0.0, %v1127
        %v1129 = vpop.f32.mrb[0].mxu0
        %1130 = vmatprep.mubr.f32.mxu0 0.0
        %1131 = vmatmul.mubr.f32.gmra.mrb[0].mxu0 %v958
        %v1132 = vpop.f32.mrb[0].mxu0
        %v1133 = vadd.f32 0.0, %v1132
        %v1134 = vpop.f32.mrb[0].mxu0
        %1135 = vmatprep.mubr.f32.mxu0 0.0
        %1136 = vmatmul.mubr.f32.gmra.mrb[0].mxu0 %v961
        %v1137 = vpop.f32.mrb[0].mxu0
        %v1138 = vadd.f32 0.0, %v1137
        %v1139 = vpop.f32.mrb[0].mxu0
        %1140 = vmatprep.mubr.f32.mxu0 0.0
        %1141 = vmatmul.mubr.f32.gmra.mrb[0].mxu0 %v964
        %v1142 = vpop.f32.mrb[0].mxu0
        %v1143 = vadd.f32 0.0, %v1142
        %v1144 = vpop.f32.mrb[0].mxu0
        %1145 = vmatprep.mubr.f32.mxu0 0.0
        %1146 = vmatmul.mubr.f32.gmra.mrb[0].mxu0 %v967
        %v1147 = vpop.f32.mrb[0].mxu0
        %v1148 = vadd.f32 0.0, %v1147
        %v1149 = vpop.f32.mrb[0].mxu0
        %1150 = vmatprep.mubr.f32.mxu0 0.0
        %1151 = vmatmul.mubr.f32.gmra.mrb[0].mxu0 %v970
        %v1152 = vpop.f32.mrb[0].mxu0
        %v1153 = vadd.f32 0.0, %v1152
        %v1154 = vpop.f32.mrb[0].mxu0
        %1155 = vmatprep.mubr.f32.mxu0 0.0
        %1156 = vmatmul.mubr.f32.gmra.mrb[0].mxu0 %v973
        %v1157 = vpop.f32.mrb[0].mxu0
        %v1158 = vadd.f32 0.0, %v1157
        %v1159 = vpop.f32.mrb[0].mxu0
        %1160 = vmatprep.mubr.f32.mxu0 0.0
        %1161 = vmatmul.mubr.f32.gmra.mrb[0].mxu0 %v976
        %v1162 = vpop.f32.mrb[0].mxu0
        %v1163 = vadd.f32 0.0, %v1162
        %v1164 = vpop.f32.mrb[0].mxu0
        %1165 = vmatprep.mubr.f32.mxu0 0.0
        %1166 = vmatmul.mubr.f32.gmra.mrb[0].mxu0 %v979
        %v1167 = vpop.f32.mrb[0].mxu0
        %v1168 = vadd.f32 0.0, %v1167
        %v1169 = vpop.f32.mrb[0].mxu0
        %1170 = vmatprep.mubr.f32.mxu0 0.0
        %1171 = vmatmul.mubr.f32.gmra.mrb[0].mxu0 %v982
        %v1172 = vpop.f32.mrb[0].mxu0
        %v1173 = vadd.f32 0.0, %v1172
        %v1174 = vpop.f32.mrb[0].mxu0
        %1175 = vmatprep.mubr.f32.mxu0 0.0
        %1176 = vmatmul.mubr.f32.gmra.mrb[0].mxu0 %v985
        %v1177 = vpop.f32.mrb[0].mxu0
        %v1178 = vadd.f32 0.0, %v1177
        %v1179 = vpop.f32.mrb[0].mxu0
        %1180 = vmatprep.mubr.f32.mxu0 0.0
        %1181 = vmatmul.mubr.f32.gmra.mrb[0].mxu0 %v988
        %v1182 = vpop.f32.mrb[0].mxu0
        %v1183 = vadd.f32 0.0, %v1182
        %v1184 = vpop.f32.mrb[0].mxu0
        %1185 = vmatprep.mubr.f32.mxu0 0.0
        %1186 = vmatmul.mubr.f32.gmra.mrb[0].mxu0 %v991
        %v1187 = vpop.f32.mrb[0].mxu0
        %v1188 = vadd.f32 0.0, %v1187
        %v1189 = vpop.f32.mrb[0].mxu0
        %1190 = vmatprep.mubr.f32.mxu0 0.0
        %1191 = vmatmul.mubr.f32.gmra.mrb[0].mxu0 %v994
        %v1192 = vpop.f32.mrb[0].mxu0
        %v1193 = vadd.f32 0.0, %v1192
        %v1194 = vpop.f32.mrb[0].mxu0
        %1195 = vmatprep.mubr.f32.mxu0 0.0
        %1196 = vmatmul.mubr.f32.gmra.mrb[0].mxu0 %v997
        %v1197 = vpop.f32.mrb[0].mxu0
        %v1198 = vadd.f32 0.0, %v1197
        %v1199 = vpop.f32.mrb[0].mxu0
        %1200 = vmatprep.mubr.f32.mxu0 0.0
        %1201 = vmatmul.mubr.f32.gmra.mrb[0].mxu0 %v1000
        %v1202 = vpop.f32.mrb[0].mxu0
        %v1203 = vadd.f32 0.0, %v1202
        %v1204 = vpop.f32.mrb[0].mxu0
        %1205 = vmatprep.mubr.f32.mxu0 0.0
        %1206 = vmatmul.mubr.f32.gmra.mrb[0].mxu0 %v1003
        %v1207 = vpop.f32.mrb[0].mxu0
        %v1208 = vadd.f32 0.0, %v1207
        %v1209 = vpop.f32.mrb[0].mxu0
        %1210 = vmatprep.mubr.f32.mxu0 0.0
        %1211 = vmatmul.mubr.f32.gmra.mrb[0].mxu0 %v1006
        %v1212 = vpop.f32.mrb[0].mxu0
        %v1213 = vadd.f32 0.0, %v1212
        %v1214 = vpop.f32.mrb[0].mxu0
        %1215 = vmatprep.mubr.f32.mxu0 0.0
        %1216 = vmatmul.mubr.f32.gmra.mrb[0].mxu0 %v1009
        %v1217 = vpop.f32.mrb[0].mxu0
        %v1218 = vadd.f32 0.0, %v1217
        %v1219 = vpop.f32.mrb[0].mxu0
        %1220 = vmatprep.mubr.f32.mxu0 0.0
        %1221 = vmatmul.mubr.f32.gmra.mrb[0].mxu0 %v1012
        %v1222 = vpop.f32.mrb[0].mxu0
        %v1223 = vadd.f32 0.0, %v1222
        %v1224 = vpop.f32.mrb[0].mxu0
        %1225 = vmatprep.mubr.f32.mxu0 0.0
        %1226 = vmatmul.mubr.f32.gmra.mrb[0].mxu0 %v1015
        %v1227 = vpop.f32.mrb[0].mxu0
        %v1228 = vadd.f32 0.0, %v1227
        %v1229 = vpop.f32.mrb[0].mxu0
        %1230 = vmatprep.mubr.f32.mxu0 0.0
        %1231 = vmatmul.mubr.f32.gmra.mrb[0].mxu0 %v1018
        %v1232 = vpop.f32.mrb[0].mxu0
        %v1233 = vadd.f32 0.0, %v1232
        %v1234 = vpop.f32.mrb[0].mxu0
        %1235 = vmatprep.mubr.f32.mxu0 0.0
        %1236 = vmatmul.mubr.f32.gmra.mrb[0].mxu0 %v1021
        %v1237 = vpop.f32.mrb[0].mxu0
        %v1238 = vadd.f32 0.0, %v1237
        %v1239 = vpop.f32.mrb[0].mxu0
        %1240 = vmatprep.mubr.f32.mxu0 0.0
        %1241 = vmatmul.mubr.f32.gmra.mrb[0].mxu0 %v1024
        %v1242 = vpop.f32.mrb[0].mxu0
        %v1243 = vadd.f32 0.0, %v1242
        %v1244 = vpop.f32.mrb[0].mxu0
        %1245 = vmatprep.mubr.f32.mxu0 0.0
        %1246 = vmatmul.mubr.f32.gmra.mrb[0].mxu0 %v1027
        %v1247 = vpop.f32.mrb[0].mxu0
        %v1248 = vadd.f32 0.0, %v1247
        %v1249 = vpop.f32.mrb[0].mxu0
        %1250 = vmatprep.mubr.f32.mxu0 0.0
        %1251 = vmatmul.mubr.f32.gmra.mrb[0].mxu0 %v1030
        %v1252 = vpop.f32.mrb[0].mxu0
        %v1253 = vadd.f32 0.0, %v1252
        %v1254 = vpop.f32.mrb[0].mxu0
        %1255 = vmatprep.mubr.f32.mxu0 0.0
        %1256 = vmatmul.mubr.f32.gmra.mrb[0].mxu0 %v1033
        %v1257 = vpop.f32.mrb[0].mxu0
        %v1258 = vadd.f32 0.0, %v1257
        %v1259 = vpop.f32.mrb[0].mxu0
        %1260 = vmatprep.mubr.f32.mxu0 0.0
        %1261 = vmatmul.mubr.f32.gmra.mrb[0].mxu0 %v1036
        %v1262 = vpop.f32.mrb[0].mxu0
        %v1263 = vadd.f32 0.0, %v1262
        %v1264 = vpop.f32.mrb[0].mxu0
        %1265 = vdwg.mxu0
        %v1266 = vadd.f32 %v750, %v1108
        %v1267 = vadd.f32 %v755, %v1113
        %v1268 = vadd.f32 %v760, %v1118
        %v1269 = vadd.f32 %v765, %v1123
        %v1270 = vadd.f32 %v770, %v1128
        %v1271 = vadd.f32 %v775, %v1133
        %v1272 = vadd.f32 %v780, %v1138
        %v1273 = vadd.f32 %v785, %v1143
        %v1274 = vadd.f32 %v790, %v1148
        %v1275 = vadd.f32 %v795, %v1153
        %v1276 = vadd.f32 %v800, %v1158
        %v1277 = vadd.f32 %v805, %v1163
        %v1278 = vadd.f32 %v810, %v1168
        %v1279 = vadd.f32 %v815, %v1173
        %v1280 = vadd.f32 %v820, %v1178
        %v1281 = vadd.f32 %v825, %v1183
        %v1282 = vadd.f32 %v830, %v1188
        %v1283 = vadd.f32 %v835, %v1193
        %v1284 = vadd.f32 %v840, %v1198
        %v1285 = vadd.f32 %v845, %v1203
        %v1286 = vadd.f32 %v850, %v1208
        %v1287 = vadd.f32 %v855, %v1213
        %v1288 = vadd.f32 %v860, %v1218
        %v1289 = vadd.f32 %v865, %v1223
        %v1290 = vadd.f32 %v870, %v1228
        %v1291 = vadd.f32 %v875, %v1233
        %v1292 = vadd.f32 %v880, %v1238
        %v1293 = vadd.f32 %v885, %v1243
        %v1294 = vadd.f32 %v890, %v1248
        %v1295 = vadd.f32 %v895, %v1253
        %v1296 = vadd.f32 %v900, %v1258
        %v1297 = vadd.f32 %v905, %v1263
        %s1298 = scalar_lea.vmem %s166, 48 [#allocation2]
        %v1299 = vld [vmem:[%s1298] sm:$0xff]
        %v1300 = vld [vmem:[%s1298 + $0x8] sm:$0xff]
        %v1301 = vld [vmem:[%s1298 + $0x18] sm:$0xff]
        %v1302 = vld [vmem:[%s1298 + $0x20] sm:$0xff]
        %v1303 = vld [vmem:[%s1298 + $0x30] sm:$0xff]
        %v1304 = vld [vmem:[%s1298 + $0x38] sm:$0xff]
        %v1305 = vld [vmem:[%s1298 + $0x48] sm:$0xff]
        %v1306 = vld [vmem:[%s1298 + $0x50] sm:$0xff]
        %v1307 = vld [vmem:[%s1298 + $0x60] sm:$0xff]
        %v1308 = vld [vmem:[%s1298 + $0x68] sm:$0xff]
        %v1309 = vld [vmem:[%s1298 + $0x78] sm:$0xff]
        %v1310 = vld [vmem:[%s1298 + $0x80] sm:$0xff]
        %v1311 = vld [vmem:[%s1298 + $0x90] sm:$0xff]
        %v1312 = vld [vmem:[%s1298 + $0x98] sm:$0xff]
        %v1313 = vld [vmem:[%s1298 + $0xa8] sm:$0xff]
        %v1314 = vld [vmem:[%s1298 + $0xb0] sm:$0xff]
        %v1315 = vld [vmem:[%s1298 + $0xc0] sm:$0xff]
        %v1316 = vld [vmem:[%s1298 + $0xc8] sm:$0xff]
        %v1317 = vld [vmem:[%s1298 + $0xd8] sm:$0xff]
        %v1318 = vld [vmem:[%s1298 + $0xe0] sm:$0xff]
        %v1319 = vld [vmem:[%s1298 + $0xf0] sm:$0xff]
        %v1320 = vld [vmem:[%s1298 + $0xf8] sm:$0xff]
        %v1321 = vld [vmem:[%s1298 + $0x108] sm:$0xff]
        %v1322 = vld [vmem:[%s1298 + $0x110] sm:$0xff]
        %v1323 = vld [vmem:[%s1298 + $0x120] sm:$0xff]
        %v1324 = vld [vmem:[%s1298 + $0x128] sm:$0xff]
        %v1325 = vld [vmem:[%s1298 + $0x138] sm:$0xff]
        %v1326 = vld [vmem:[%s1298 + $0x140] sm:$0xff]
        %v1327 = vld [vmem:[%s1298 + $0x150] sm:$0xff]
        %v1328 = vld [vmem:[%s1298 + $0x158] sm:$0xff]
        %v1329 = vld [vmem:[%s1298 + $0x168] sm:$0xff]
        %v1330 = vld [vmem:[%s1298 + $0x170] sm:$0xff]
        %s1331 = scalar_lea.vmem [#allocation5], 12
        %v1332 = vld [vmem:[%s1331] sm:$0xf]
        %v1334 = vsel %vm258, %v1299, 0
        %v1337 = vsel %vm258, %v1300, 0
        %v1340 = vsel %vm258, %v1301, 0
        %v1343 = vsel %vm258, %v1302, 0
        %v1346 = vsel %vm258, %v1303, 0
        %v1349 = vsel %vm258, %v1304, 0
        %v1352 = vsel %vm258, %v1305, 0
        %v1355 = vsel %vm258, %v1306, 0
        %v1358 = vsel %vm258, %v1307, 0
        %v1361 = vsel %vm258, %v1308, 0
        %v1364 = vsel %vm258, %v1309, 0
        %v1367 = vsel %vm258, %v1310, 0
        %v1370 = vsel %vm258, %v1311, 0
        %v1373 = vsel %vm258, %v1312, 0
        %v1376 = vsel %vm258, %v1313, 0
        %v1379 = vsel %vm258, %v1314, 0
        %v1382 = vsel %vm258, %v1315, 0
        %v1385 = vsel %vm258, %v1316, 0
        %v1388 = vsel %vm258, %v1317, 0
        %v1391 = vsel %vm258, %v1318, 0
        %v1394 = vsel %vm258, %v1319, 0
        %v1397 = vsel %vm258, %v1320, 0
        %v1400 = vsel %vm258, %v1321, 0
        %v1403 = vsel %vm258, %v1322, 0
        %v1406 = vsel %vm258, %v1323, 0
        %v1409 = vsel %vm258, %v1324, 0
        %v1412 = vsel %vm258, %v1325, 0
        %v1415 = vsel %vm258, %v1326, 0
        %v1418 = vsel %vm258, %v1327, 0
        %v1421 = vsel %vm258, %v1328, 0
        %v1424 = vsel %vm258, %v1329, 0
        %v1427 = vsel %vm258, %v1330, 0
        %v1430 = vsel %vm355, %v1332, 0
        %1432 = vmatprep.subr.mxu0 0.0
        %1433 = vmatpush1.msra.mxu0 %v1430
        %1434 = vmatprep.subr.mxu0 0.0
        %1435 = vmatpush1.msra.mxu0 0.0
        %1436 = vmatprep.subr.mxu0 0.0
        %1437 = vmatpush1.msra.mxu0 0.0
        %1438 = vmatprep.subr.mxu0 0.0
        %1439 = vmatpush1.msra.mxu0 0.0
        %1440 = vmatprep.subr.mxu0 0.0
        %1441 = vmatpush1.msra.mxu0 0.0
        %1442 = vmatprep.subr.mxu0 0.0
        %1443 = vmatpush1.msra.mxu0 0.0
        %1444 = vmatprep.subr.mxu0 0.0
        %1445 = vmatpush1.msra.mxu0 0.0
        %1446 = vmatprep.subr.mxu0 0.0
        %1447 = vmatpush1.msra.mxu0 0.0
        %1448 = vmatprep.subr.mxu0 0.0
        %1449 = vmatpush1.msra.mxu0 0.0
        %1450 = vmatprep.subr.mxu0 0.0
        %1451 = vmatpush1.msra.mxu0 0.0
        %1452 = vmatprep.subr.mxu0 0.0
        %1453 = vmatpush1.msra.mxu0 0.0
        %1454 = vmatprep.subr.mxu0 0.0
        %1455 = vmatpush1.msra.mxu0 0.0
        %1456 = vmatprep.subr.mxu0 0.0
        %1457 = vmatpush1.msra.mxu0 0.0
        %1458 = vmatprep.subr.mxu0 0.0
        %1459 = vmatpush1.msra.mxu0 0.0
        %1460 = vmatprep.subr.mxu0 0.0
        %1461 = vmatpush1.msra.mxu0 0.0
        %1462 = vmatprep.subr.mxu0 0.0
        %1463 = vmatpush1.msra.mxu0 0.0
        %1464 = vmatprep.subr.mxu0 0.0
        %1465 = vmatpush1.msra.mxu0 0.0
        %1466 = vmatprep.subr.mxu0 0.0
        %1467 = vmatpush1.msra.mxu0 0.0
        %1468 = vmatprep.subr.mxu0 0.0
        %1469 = vmatpush1.msra.mxu0 0.0
        %1470 = vmatprep.subr.mxu0 0.0
        %1471 = vmatpush1.msra.mxu0 0.0
        %1472 = vmatprep.subr.mxu0 0.0
        %1473 = vmatpush1.msra.mxu0 0.0
        %1474 = vmatprep.subr.mxu0 0.0
        %1475 = vmatpush1.msra.mxu0 0.0
        %1476 = vmatprep.subr.mxu0 0.0
        %1477 = vmatpush1.msra.mxu0 0.0
        %1478 = vmatprep.subr.mxu0 0.0
        %1479 = vmatpush1.msra.mxu0 0.0
        %1480 = vmatprep.subr.mxu0 0.0
        %1481 = vmatpush1.msra.mxu0 0.0
        %1482 = vmatprep.subr.mxu0 0.0
        %1483 = vmatpush1.msra.mxu0 0.0
        %1484 = vmatprep.subr.mxu0 0.0
        %1485 = vmatpush1.msra.mxu0 0.0
        %1486 = vmatprep.subr.mxu0 0.0
        %1487 = vmatpush1.msra.mxu0 0.0
        %1488 = vmatprep.subr.mxu0 0.0
        %1489 = vmatpush1.msra.mxu0 0.0
        %1490 = vmatprep.subr.mxu0 0.0
        %1491 = vmatpush1.msra.mxu0 0.0
        %1492 = vmatprep.subr.mxu0 0.0
        %1493 = vmatpush1.msra.mxu0 0.0
        %1494 = vmatprep.subr.mxu0 0.0
        %1495 = vmatpush1.msra.mxu0 0.0
        %1496 = vmatprep.mubr.f32.mxu0 0.0
        %1497 = vmatmul.mubr.f32.gmra.mrb[0].mxu0 %v1334
        %v1498 = vpop.f32.mrb[0].mxu0
        %v1499 = vadd.f32 0.0, %v1498
        %v1500 = vpop.f32.mrb[0].mxu0
        %1501 = vmatprep.mubr.f32.mxu0 0.0
        %1502 = vmatmul.mubr.f32.gmra.mrb[0].mxu0 %v1337
        %v1503 = vpop.f32.mrb[0].mxu0
        %v1504 = vadd.f32 0.0, %v1503
        %v1505 = vpop.f32.mrb[0].mxu0
        %1506 = vmatprep.mubr.f32.mxu0 0.0
        %1507 = vmatmul.mubr.f32.gmra.mrb[0].mxu0 %v1340
        %v1508 = vpop.f32.mrb[0].mxu0
        %v1509 = vadd.f32 0.0, %v1508
        %v1510 = vpop.f32.mrb[0].mxu0
        %1511 = vmatprep.mubr.f32.mxu0 0.0
        %1512 = vmatmul.mubr.f32.gmra.mrb[0].mxu0 %v1343
        %v1513 = vpop.f32.mrb[0].mxu0
        %v1514 = vadd.f32 0.0, %v1513
        %v1515 = vpop.f32.mrb[0].mxu0
        %1516 = vmatprep.mubr.f32.mxu0 0.0
        %1517 = vmatmul.mubr.f32.gmra.mrb[0].mxu0 %v1346
        %v1518 = vpop.f32.mrb[0].mxu0
        %v1519 = vadd.f32 0.0, %v1518
        %v1520 = vpop.f32.mrb[0].mxu0
        %1521 = vmatprep.mubr.f32.mxu0 0.0
        %1522 = vmatmul.mubr.f32.gmra.mrb[0].mxu0 %v1349
        %v1523 = vpop.f32.mrb[0].mxu0
        %v1524 = vadd.f32 0.0, %v1523
        %v1525 = vpop.f32.mrb[0].mxu0
        %1526 = vmatprep.mubr.f32.mxu0 0.0
        %1527 = vmatmul.mubr.f32.gmra.mrb[0].mxu0 %v1352
        %v1528 = vpop.f32.mrb[0].mxu0
        %v1529 = vadd.f32 0.0, %v1528
        %v1530 = vpop.f32.mrb[0].mxu0
        %1531 = vmatprep.mubr.f32.mxu0 0.0
        %1532 = vmatmul.mubr.f32.gmra.mrb[0].mxu0 %v1355
        %v1533 = vpop.f32.mrb[0].mxu0
        %v1534 = vadd.f32 0.0, %v1533
        %v1535 = vpop.f32.mrb[0].mxu0
        %1536 = vmatprep.mubr.f32.mxu0 0.0
        %1537 = vmatmul.mubr.f32.gmra.mrb[0].mxu0 %v1358
        %v1538 = vpop.f32.mrb[0].mxu0
        %v1539 = vadd.f32 0.0, %v1538
        %v1540 = vpop.f32.mrb[0].mxu0
        %1541 = vmatprep.mubr.f32.mxu0 0.0
        %1542 = vmatmul.mubr.f32.gmra.mrb[0].mxu0 %v1361
        %v1543 = vpop.f32.mrb[0].mxu0
        %v1544 = vadd.f32 0.0, %v1543
        %v1545 = vpop.f32.mrb[0].mxu0
        %1546 = vmatprep.mubr.f32.mxu0 0.0
        %1547 = vmatmul.mubr.f32.gmra.mrb[0].mxu0 %v1364
        %v1548 = vpop.f32.mrb[0].mxu0
        %v1549 = vadd.f32 0.0, %v1548
        %v1550 = vpop.f32.mrb[0].mxu0
        %1551 = vmatprep.mubr.f32.mxu0 0.0
        %1552 = vmatmul.mubr.f32.gmra.mrb[0].mxu0 %v1367
        %v1553 = vpop.f32.mrb[0].mxu0
        %v1554 = vadd.f32 0.0, %v1553
        %v1555 = vpop.f32.mrb[0].mxu0
        %1556 = vmatprep.mubr.f32.mxu0 0.0
        %1557 = vmatmul.mubr.f32.gmra.mrb[0].mxu0 %v1370
        %v1558 = vpop.f32.mrb[0].mxu0
        %v1559 = vadd.f32 0.0, %v1558
        %v1560 = vpop.f32.mrb[0].mxu0
        %1561 = vmatprep.mubr.f32.mxu0 0.0
        %1562 = vmatmul.mubr.f32.gmra.mrb[0].mxu0 %v1373
        %v1563 = vpop.f32.mrb[0].mxu0
        %v1564 = vadd.f32 0.0, %v1563
        %v1565 = vpop.f32.mrb[0].mxu0
        %1566 = vmatprep.mubr.f32.mxu0 0.0
        %1567 = vmatmul.mubr.f32.gmra.mrb[0].mxu0 %v1376
        %v1568 = vpop.f32.mrb[0].mxu0
        %v1569 = vadd.f32 0.0, %v1568
        %v1570 = vpop.f32.mrb[0].mxu0
        %1571 = vmatprep.mubr.f32.mxu0 0.0
        %1572 = vmatmul.mubr.f32.gmra.mrb[0].mxu0 %v1379
        %v1573 = vpop.f32.mrb[0].mxu0
        %v1574 = vadd.f32 0.0, %v1573
        %v1575 = vpop.f32.mrb[0].mxu0
        %1576 = vmatprep.mubr.f32.mxu0 0.0
        %1577 = vmatmul.mubr.f32.gmra.mrb[0].mxu0 %v1382
        %v1578 = vpop.f32.mrb[0].mxu0
        %v1579 = vadd.f32 0.0, %v1578
        %v1580 = vpop.f32.mrb[0].mxu0
        %1581 = vmatprep.mubr.f32.mxu0 0.0
        %1582 = vmatmul.mubr.f32.gmra.mrb[0].mxu0 %v1385
        %v1583 = vpop.f32.mrb[0].mxu0
        %v1584 = vadd.f32 0.0, %v1583
        %v1585 = vpop.f32.mrb[0].mxu0
        %1586 = vmatprep.mubr.f32.mxu0 0.0
        %1587 = vmatmul.mubr.f32.gmra.mrb[0].mxu0 %v1388
        %v1588 = vpop.f32.mrb[0].mxu0
        %v1589 = vadd.f32 0.0, %v1588
        %v1590 = vpop.f32.mrb[0].mxu0
        %1591 = vmatprep.mubr.f32.mxu0 0.0
        %1592 = vmatmul.mubr.f32.gmra.mrb[0].mxu0 %v1391
        %v1593 = vpop.f32.mrb[0].mxu0
        %v1594 = vadd.f32 0.0, %v1593
        %v1595 = vpop.f32.mrb[0].mxu0
        %1596 = vmatprep.mubr.f32.mxu0 0.0
        %1597 = vmatmul.mubr.f32.gmra.mrb[0].mxu0 %v1394
        %v1598 = vpop.f32.mrb[0].mxu0
        %v1599 = vadd.f32 0.0, %v1598
        %v1600 = vpop.f32.mrb[0].mxu0
        %1601 = vmatprep.mubr.f32.mxu0 0.0
        %1602 = vmatmul.mubr.f32.gmra.mrb[0].mxu0 %v1397
        %v1603 = vpop.f32.mrb[0].mxu0
        %v1604 = vadd.f32 0.0, %v1603
        %v1605 = vpop.f32.mrb[0].mxu0
        %1606 = vmatprep.mubr.f32.mxu0 0.0
        %1607 = vmatmul.mubr.f32.gmra.mrb[0].mxu0 %v1400
        %v1608 = vpop.f32.mrb[0].mxu0
        %v1609 = vadd.f32 0.0, %v1608
        %v1610 = vpop.f32.mrb[0].mxu0
        %1611 = vmatprep.mubr.f32.mxu0 0.0
        %1612 = vmatmul.mubr.f32.gmra.mrb[0].mxu0 %v1403
        %v1613 = vpop.f32.mrb[0].mxu0
        %v1614 = vadd.f32 0.0, %v1613
        %v1615 = vpop.f32.mrb[0].mxu0
        %1616 = vmatprep.mubr.f32.mxu0 0.0
        %1617 = vmatmul.mubr.f32.gmra.mrb[0].mxu0 %v1406
        %v1618 = vpop.f32.mrb[0].mxu0
        %v1619 = vadd.f32 0.0, %v1618
        %v1620 = vpop.f32.mrb[0].mxu0
        %1621 = vmatprep.mubr.f32.mxu0 0.0
        %1622 = vmatmul.mubr.f32.gmra.mrb[0].mxu0 %v1409
        %v1623 = vpop.f32.mrb[0].mxu0
        %v1624 = vadd.f32 0.0, %v1623
        %v1625 = vpop.f32.mrb[0].mxu0
        %1626 = vmatprep.mubr.f32.mxu0 0.0
        %1627 = vmatmul.mubr.f32.gmra.mrb[0].mxu0 %v1412
        %v1628 = vpop.f32.mrb[0].mxu0
        %v1629 = vadd.f32 0.0, %v1628
        %v1630 = vpop.f32.mrb[0].mxu0
        %1631 = vmatprep.mubr.f32.mxu0 0.0
        %1632 = vmatmul.mubr.f32.gmra.mrb[0].mxu0 %v1415
        %v1633 = vpop.f32.mrb[0].mxu0
        %v1634 = vadd.f32 0.0, %v1633
        %v1635 = vpop.f32.mrb[0].mxu0
        %1636 = vmatprep.mubr.f32.mxu0 0.0
        %1637 = vmatmul.mubr.f32.gmra.mrb[0].mxu0 %v1418
        %v1638 = vpop.f32.mrb[0].mxu0
        %v1639 = vadd.f32 0.0, %v1638
        %v1640 = vpop.f32.mrb[0].mxu0
        %1641 = vmatprep.mubr.f32.mxu0 0.0
        %1642 = vmatmul.mubr.f32.gmra.mrb[0].mxu0 %v1421
        %v1643 = vpop.f32.mrb[0].mxu0
        %v1644 = vadd.f32 0.0, %v1643
        %v1645 = vpop.f32.mrb[0].mxu0
        %1646 = vmatprep.mubr.f32.mxu0 0.0
        %1647 = vmatmul.mubr.f32.gmra.mrb[0].mxu0 %v1424
        %v1648 = vpop.f32.mrb[0].mxu0
        %v1649 = vadd.f32 0.0, %v1648
        %v1650 = vpop.f32.mrb[0].mxu0
        %1651 = vmatprep.mubr.f32.mxu0 0.0
        %1652 = vmatmul.mubr.f32.gmra.mrb[0].mxu0 %v1427
        %v1653 = vpop.f32.mrb[0].mxu0
        %v1654 = vadd.f32 0.0, %v1653
        %v1655 = vpop.f32.mrb[0].mxu0
        %1656 = vdwg.mxu0
        %v1657 = vadd.f32 %v1266, %v1499
        %v1658 = vadd.f32 %v1267, %v1504
        %v1659 = vadd.f32 %v1268, %v1509
        %v1660 = vadd.f32 %v1269, %v1514
        %v1661 = vadd.f32 %v1270, %v1519
        %v1662 = vadd.f32 %v1271, %v1524
        %v1663 = vadd.f32 %v1272, %v1529
        %v1664 = vadd.f32 %v1273, %v1534
        %v1665 = vadd.f32 %v1274, %v1539
        %v1666 = vadd.f32 %v1275, %v1544
        %v1667 = vadd.f32 %v1276, %v1549
        %v1668 = vadd.f32 %v1277, %v1554
        %v1669 = vadd.f32 %v1278, %v1559
        %v1670 = vadd.f32 %v1279, %v1564
        %v1671 = vadd.f32 %v1280, %v1569
        %v1672 = vadd.f32 %v1281, %v1574
        %v1673 = vadd.f32 %v1282, %v1579
        %v1674 = vadd.f32 %v1283, %v1584
        %v1675 = vadd.f32 %v1284, %v1589
        %v1676 = vadd.f32 %v1285, %v1594
        %v1677 = vadd.f32 %v1286, %v1599
        %v1678 = vadd.f32 %v1287, %v1604
        %v1679 = vadd.f32 %v1288, %v1609
        %v1680 = vadd.f32 %v1289, %v1614
        %v1681 = vadd.f32 %v1290, %v1619
        %v1682 = vadd.f32 %v1291, %v1624
        %v1683 = vadd.f32 %v1292, %v1629
        %v1684 = vadd.f32 %v1293, %v1634
        %v1685 = vadd.f32 %v1294, %v1639
        %v1686 = vadd.f32 %v1295, %v1644
        %v1687 = vadd.f32 %v1296, %v1649
        %v1688 = vadd.f32 %v1297, %v1654
        %v1689 = vld [vmem:[%s1298 + $0x2] sm:$0xff]
        %v1690 = vld [vmem:[%s1298 + $0xa] sm:$0xff]
        %v1691 = vld [vmem:[%s1298 + $0x1a] sm:$0xff]
        %v1692 = vld [vmem:[%s1298 + $0x22] sm:$0xff]
        %v1693 = vld [vmem:[%s1298 + $0x32] sm:$0xff]
        %v1694 = vld [vmem:[%s1298 + $0x3a] sm:$0xff]
        %v1695 = vld [vmem:[%s1298 + $0x4a] sm:$0xff]
        %v1696 = vld [vmem:[%s1298 + $0x52] sm:$0xff]
        %v1697 = vld [vmem:[%s1298 + $0x62] sm:$0xff]
        %v1698 = vld [vmem:[%s1298 + $0x6a] sm:$0xff]
        %v1699 = vld [vmem:[%s1298 + $0x7a] sm:$0xff]
        %v1700 = vld [vmem:[%s1298 + $0x82] sm:$0xff]
        %v1701 = vld [vmem:[%s1298 + $0x92] sm:$0xff]
        %v1702 = vld [vmem:[%s1298 + $0x9a] sm:$0xff]
        %v1703 = vld [vmem:[%s1298 + $0xaa] sm:$0xff]
        %v1704 = vld [vmem:[%s1298 + $0xb2] sm:$0xff]
        %v1705 = vld [vmem:[%s1298 + $0xc2] sm:$0xff]
        %v1706 = vld [vmem:[%s1298 + $0xca] sm:$0xff]
        %v1707 = vld [vmem:[%s1298 + $0xda] sm:$0xff]
        %v1708 = vld [vmem:[%s1298 + $0xe2] sm:$0xff]
        %v1709 = vld [vmem:[%s1298 + $0xf2] sm:$0xff]
        %v1710 = vld [vmem:[%s1298 + $0xfa] sm:$0xff]
        %v1711 = vld [vmem:[%s1298 + $0x10a] sm:$0xff]
        %v1712 = vld [vmem:[%s1298 + $0x112] sm:$0xff]
        %v1713 = vld [vmem:[%s1298 + $0x122] sm:$0xff]
        %v1714 = vld [vmem:[%s1298 + $0x12a] sm:$0xff]
        %v1715 = vld [vmem:[%s1298 + $0x13a] sm:$0xff]
        %v1716 = vld [vmem:[%s1298 + $0x142] sm:$0xff]
        %v1717 = vld [vmem:[%s1298 + $0x152] sm:$0xff]
        %v1718 = vld [vmem:[%s1298 + $0x15a] sm:$0xff]
        %v1719 = vld [vmem:[%s1298 + $0x16a] sm:$0xff]
        %v1720 = vld [vmem:[%s1298 + $0x172] sm:$0xff]
        %s1721 = scalar_lea.vmem [#allocation5], 16
        %v1722 = vld [vmem:[%s1721] sm:$0xf]
        %v1724 = vsel %vm258, %v1689, 0
        %v1727 = vsel %vm258, %v1690, 0
        %v1730 = vsel %vm258, %v1691, 0
        %v1733 = vsel %vm258, %v1692, 0
        %v1736 = vsel %vm258, %v1693, 0
        %v1739 = vsel %vm258, %v1694, 0
        %v1742 = vsel %vm258, %v1695, 0
        %v1745 = vsel %vm258, %v1696, 0
        %v1748 = vsel %vm258, %v1697, 0
        %v1751 = vsel %vm258, %v1698, 0
        %v1754 = vsel %vm258, %v1699, 0
        %v1757 = vsel %vm258, %v1700, 0
        %v1760 = vsel %vm258, %v1701, 0
        %v1763 = vsel %vm258, %v1702, 0
        %v1766 = vsel %vm258, %v1703, 0
        %v1769 = vsel %vm258, %v1704, 0
        %v1772 = vsel %vm258, %v1705, 0
        %v1775 = vsel %vm258, %v1706, 0
        %v1778 = vsel %vm258, %v1707, 0
        %v1781 = vsel %vm258, %v1708, 0
        %v1784 = vsel %vm258, %v1709, 0
        %v1787 = vsel %vm258, %v1710, 0
        %v1790 = vsel %vm258, %v1711, 0
        %v1793 = vsel %vm258, %v1712, 0
        %v1796 = vsel %vm258, %v1713, 0
        %v1799 = vsel %vm258, %v1714, 0
        %v1802 = vsel %vm258, %v1715, 0
        %v1805 = vsel %vm258, %v1716, 0
        %v1808 = vsel %vm258, %v1717, 0
        %v1811 = vsel %vm258, %v1718, 0
        %v1814 = vsel %vm258, %v1719, 0
        %v1817 = vsel %vm258, %v1720, 0
        %v1820 = vsel %vm355, %v1722, 0
        %1822 = vmatprep.subr.mxu0 0.0
        %1823 = vmatpush1.msra.mxu0 %v1820
        %1824 = vmatprep.subr.mxu0 0.0
        %1825 = vmatpush1.msra.mxu0 0.0
        %1826 = vmatprep.subr.mxu0 0.0
        %1827 = vmatpush1.msra.mxu0 0.0
        %1828 = vmatprep.subr.mxu0 0.0
        %1829 = vmatpush1.msra.mxu0 0.0
        %1830 = vmatprep.subr.mxu0 0.0
        %1831 = vmatpush1.msra.mxu0 0.0
        %1832 = vmatprep.subr.mxu0 0.0
        %1833 = vmatpush1.msra.mxu0 0.0
        %1834 = vmatprep.subr.mxu0 0.0
        %1835 = vmatpush1.msra.mxu0 0.0
        %1836 = vmatprep.subr.mxu0 0.0
        %1837 = vmatpush1.msra.mxu0 0.0
        %1838 = vmatprep.subr.mxu0 0.0
        %1839 = vmatpush1.msra.mxu0 0.0
        %1840 = vmatprep.subr.mxu0 0.0
        %1841 = vmatpush1.msra.mxu0 0.0
        %1842 = vmatprep.subr.mxu0 0.0
        %1843 = vmatpush1.msra.mxu0 0.0
        %1844 = vmatprep.subr.mxu0 0.0
        %1845 = vmatpush1.msra.mxu0 0.0
        %1846 = vmatprep.subr.mxu0 0.0
        %1847 = vmatpush1.msra.mxu0 0.0
        %1848 = vmatprep.subr.mxu0 0.0
        %1849 = vmatpush1.msra.mxu0 0.0
        %1850 = vmatprep.subr.mxu0 0.0
        %1851 = vmatpush1.msra.mxu0 0.0
        %1852 = vmatprep.subr.mxu0 0.0
        %1853 = vmatpush1.msra.mxu0 0.0
        %1854 = vmatprep.subr.mxu0 0.0
        %1855 = vmatpush1.msra.mxu0 0.0
        %1856 = vmatprep.subr.mxu0 0.0
        %1857 = vmatpush1.msra.mxu0 0.0
        %1858 = vmatprep.subr.mxu0 0.0
        %1859 = vmatpush1.msra.mxu0 0.0
        %1860 = vmatprep.subr.mxu0 0.0
        %1861 = vmatpush1.msra.mxu0 0.0
        %1862 = vmatprep.subr.mxu0 0.0
        %1863 = vmatpush1.msra.mxu0 0.0
        %1864 = vmatprep.subr.mxu0 0.0
        %1865 = vmatpush1.msra.mxu0 0.0
        %1866 = vmatprep.subr.mxu0 0.0
        %1867 = vmatpush1.msra.mxu0 0.0
        %1868 = vmatprep.subr.mxu0 0.0
        %1869 = vmatpush1.msra.mxu0 0.0
        %1870 = vmatprep.subr.mxu0 0.0
        %1871 = vmatpush1.msra.mxu0 0.0
        %1872 = vmatprep.subr.mxu0 0.0
        %1873 = vmatpush1.msra.mxu0 0.0
        %1874 = vmatprep.subr.mxu0 0.0
        %1875 = vmatpush1.msra.mxu0 0.0
        %1876 = vmatprep.subr.mxu0 0.0
        %1877 = vmatpush1.msra.mxu0 0.0
        %1878 = vmatprep.subr.mxu0 0.0
        %1879 = vmatpush1.msra.mxu0 0.0
        %1880 = vmatprep.subr.mxu0 0.0
        %1881 = vmatpush1.msra.mxu0 0.0
        %1882 = vmatprep.subr.mxu0 0.0
        %1883 = vmatpush1.msra.mxu0 0.0
        %1884 = vmatprep.subr.mxu0 0.0
        %1885 = vmatpush1.msra.mxu0 0.0
        %1886 = vmatprep.mubr.f32.mxu0 0.0
        %1887 = vmatmul.mubr.f32.gmra.mrb[0].mxu0 %v1724
        %v1888 = vpop.f32.mrb[0].mxu0
        %v1889 = vadd.f32 0.0, %v1888
        %v1890 = vpop.f32.mrb[0].mxu0
        %1891 = vmatprep.mubr.f32.mxu0 0.0
        %1892 = vmatmul.mubr.f32.gmra.mrb[0].mxu0 %v1727
        %v1893 = vpop.f32.mrb[0].mxu0
        %v1894 = vadd.f32 0.0, %v1893
        %v1895 = vpop.f32.mrb[0].mxu0
        %1896 = vmatprep.mubr.f32.mxu0 0.0
        %1897 = vmatmul.mubr.f32.gmra.mrb[0].mxu0 %v1730
        %v1898 = vpop.f32.mrb[0].mxu0
        %v1899 = vadd.f32 0.0, %v1898
        %v1900 = vpop.f32.mrb[0].mxu0
        %1901 = vmatprep.mubr.f32.mxu0 0.0
        %1902 = vmatmul.mubr.f32.gmra.mrb[0].mxu0 %v1733
        %v1903 = vpop.f32.mrb[0].mxu0
        %v1904 = vadd.f32 0.0, %v1903
        %v1905 = vpop.f32.mrb[0].mxu0
        %1906 = vmatprep.mubr.f32.mxu0 0.0
        %1907 = vmatmul.mubr.f32.gmra.mrb[0].mxu0 %v1736
        %v1908 = vpop.f32.mrb[0].mxu0
        %v1909 = vadd.f32 0.0, %v1908
        %v1910 = vpop.f32.mrb[0].mxu0
        %1911 = vmatprep.mubr.f32.mxu0 0.0
        %1912 = vmatmul.mubr.f32.gmra.mrb[0].mxu0 %v1739
        %v1913 = vpop.f32.mrb[0].mxu0
        %v1914 = vadd.f32 0.0, %v1913
        %v1915 = vpop.f32.mrb[0].mxu0
        %1916 = vmatprep.mubr.f32.mxu0 0.0
        %1917 = vmatmul.mubr.f32.gmra.mrb[0].mxu0 %v1742
        %v1918 = vpop.f32.mrb[0].mxu0
        %v1919 = vadd.f32 0.0, %v1918
        %v1920 = vpop.f32.mrb[0].mxu0
        %1921 = vmatprep.mubr.f32.mxu0 0.0
        %1922 = vmatmul.mubr.f32.gmra.mrb[0].mxu0 %v1745
        %v1923 = vpop.f32.mrb[0].mxu0
        %v1924 = vadd.f32 0.0, %v1923
        %v1925 = vpop.f32.mrb[0].mxu0
        %1926 = vmatprep.mubr.f32.mxu0 0.0
        %1927 = vmatmul.mubr.f32.gmra.mrb[0].mxu0 %v1748
        %v1928 = vpop.f32.mrb[0].mxu0
        %v1929 = vadd.f32 0.0, %v1928
        %v1930 = vpop.f32.mrb[0].mxu0
        %1931 = vmatprep.mubr.f32.mxu0 0.0
        %1932 = vmatmul.mubr.f32.gmra.mrb[0].mxu0 %v1751
        %v1933 = vpop.f32.mrb[0].mxu0
        %v1934 = vadd.f32 0.0, %v1933
        %v1935 = vpop.f32.mrb[0].mxu0
        %1936 = vmatprep.mubr.f32.mxu0 0.0
        %1937 = vmatmul.mubr.f32.gmra.mrb[0].mxu0 %v1754
        %v1938 = vpop.f32.mrb[0].mxu0
        %v1939 = vadd.f32 0.0, %v1938
        %v1940 = vpop.f32.mrb[0].mxu0
        %1941 = vmatprep.mubr.f32.mxu0 0.0
        %1942 = vmatmul.mubr.f32.gmra.mrb[0].mxu0 %v1757
        %v1943 = vpop.f32.mrb[0].mxu0
        %v1944 = vadd.f32 0.0, %v1943
        %v1945 = vpop.f32.mrb[0].mxu0
        %1946 = vmatprep.mubr.f32.mxu0 0.0
        %1947 = vmatmul.mubr.f32.gmra.mrb[0].mxu0 %v1760
        %v1948 = vpop.f32.mrb[0].mxu0
        %v1949 = vadd.f32 0.0, %v1948
        %v1950 = vpop.f32.mrb[0].mxu0
        %1951 = vmatprep.mubr.f32.mxu0 0.0
        %1952 = vmatmul.mubr.f32.gmra.mrb[0].mxu0 %v1763
        %v1953 = vpop.f32.mrb[0].mxu0
        %v1954 = vadd.f32 0.0, %v1953
        %v1955 = vpop.f32.mrb[0].mxu0
        %1956 = vmatprep.mubr.f32.mxu0 0.0
        %1957 = vmatmul.mubr.f32.gmra.mrb[0].mxu0 %v1766
        %v1958 = vpop.f32.mrb[0].mxu0
        %v1959 = vadd.f32 0.0, %v1958
        %v1960 = vpop.f32.mrb[0].mxu0
        %1961 = vmatprep.mubr.f32.mxu0 0.0
        %1962 = vmatmul.mubr.f32.gmra.mrb[0].mxu0 %v1769
        %v1963 = vpop.f32.mrb[0].mxu0
        %v1964 = vadd.f32 0.0, %v1963
        %v1965 = vpop.f32.mrb[0].mxu0
        %1966 = vmatprep.mubr.f32.mxu0 0.0
        %1967 = vmatmul.mubr.f32.gmra.mrb[0].mxu0 %v1772
        %v1968 = vpop.f32.mrb[0].mxu0
        %v1969 = vadd.f32 0.0, %v1968
        %v1970 = vpop.f32.mrb[0].mxu0
        %1971 = vmatprep.mubr.f32.mxu0 0.0
        %1972 = vmatmul.mubr.f32.gmra.mrb[0].mxu0 %v1775
        %v1973 = vpop.f32.mrb[0].mxu0
        %v1974 = vadd.f32 0.0, %v1973
        %v1975 = vpop.f32.mrb[0].mxu0
        %1976 = vmatprep.mubr.f32.mxu0 0.0
        %1977 = vmatmul.mubr.f32.gmra.mrb[0].mxu0 %v1778
        %v1978 = vpop.f32.mrb[0].mxu0
        %v1979 = vadd.f32 0.0, %v1978
        %v1980 = vpop.f32.mrb[0].mxu0
        %1981 = vmatprep.mubr.f32.mxu0 0.0
        %1982 = vmatmul.mubr.f32.gmra.mrb[0].mxu0 %v1781
        %v1983 = vpop.f32.mrb[0].mxu0
        %v1984 = vadd.f32 0.0, %v1983
        %v1985 = vpop.f32.mrb[0].mxu0
        %1986 = vmatprep.mubr.f32.mxu0 0.0
        %1987 = vmatmul.mubr.f32.gmra.mrb[0].mxu0 %v1784
        %v1988 = vpop.f32.mrb[0].mxu0
        %v1989 = vadd.f32 0.0, %v1988
        %v1990 = vpop.f32.mrb[0].mxu0
        %1991 = vmatprep.mubr.f32.mxu0 0.0
        %1992 = vmatmul.mubr.f32.gmra.mrb[0].mxu0 %v1787
        %v1993 = vpop.f32.mrb[0].mxu0
        %v1994 = vadd.f32 0.0, %v1993
        %v1995 = vpop.f32.mrb[0].mxu0
        %1996 = vmatprep.mubr.f32.mxu0 0.0
        %1997 = vmatmul.mubr.f32.gmra.mrb[0].mxu0 %v1790
        %v1998 = vpop.f32.mrb[0].mxu0
        %v1999 = vadd.f32 0.0, %v1998
        %v2000 = vpop.f32.mrb[0].mxu0
        %2001 = vmatprep.mubr.f32.mxu0 0.0
        %2002 = vmatmul.mubr.f32.gmra.mrb[0].mxu0 %v1793
        %v2003 = vpop.f32.mrb[0].mxu0
        %v2004 = vadd.f32 0.0, %v2003
        %v2005 = vpop.f32.mrb[0].mxu0
        %2006 = vmatprep.mubr.f32.mxu0 0.0
        %2007 = vmatmul.mubr.f32.gmra.mrb[0].mxu0 %v1796
        %v2008 = vpop.f32.mrb[0].mxu0
        %v2009 = vadd.f32 0.0, %v2008
        %v2010 = vpop.f32.mrb[0].mxu0
        %2011 = vmatprep.mubr.f32.mxu0 0.0
        %2012 = vmatmul.mubr.f32.gmra.mrb[0].mxu0 %v1799
        %v2013 = vpop.f32.mrb[0].mxu0
        %v2014 = vadd.f32 0.0, %v2013
        %v2015 = vpop.f32.mrb[0].mxu0
        %2016 = vmatprep.mubr.f32.mxu0 0.0
        %2017 = vmatmul.mubr.f32.gmra.mrb[0].mxu0 %v1802
        %v2018 = vpop.f32.mrb[0].mxu0
        %v2019 = vadd.f32 0.0, %v2018
        %v2020 = vpop.f32.mrb[0].mxu0
        %2021 = vmatprep.mubr.f32.mxu0 0.0
        %2022 = vmatmul.mubr.f32.gmra.mrb[0].mxu0 %v1805
        %v2023 = vpop.f32.mrb[0].mxu0
        %v2024 = vadd.f32 0.0, %v2023
        %v2025 = vpop.f32.mrb[0].mxu0
        %2026 = vmatprep.mubr.f32.mxu0 0.0
        %2027 = vmatmul.mubr.f32.gmra.mrb[0].mxu0 %v1808
        %v2028 = vpop.f32.mrb[0].mxu0
        %v2029 = vadd.f32 0.0, %v2028
        %v2030 = vpop.f32.mrb[0].mxu0
        %2031 = vmatprep.mubr.f32.mxu0 0.0
        %2032 = vmatmul.mubr.f32.gmra.mrb[0].mxu0 %v1811
        %v2033 = vpop.f32.mrb[0].mxu0
        %v2034 = vadd.f32 0.0, %v2033
        %v2035 = vpop.f32.mrb[0].mxu0
        %2036 = vmatprep.mubr.f32.mxu0 0.0
        %2037 = vmatmul.mubr.f32.gmra.mrb[0].mxu0 %v1814
        %v2038 = vpop.f32.mrb[0].mxu0
        %v2039 = vadd.f32 0.0, %v2038
        %v2040 = vpop.f32.mrb[0].mxu0
        %2041 = vmatprep.mubr.f32.mxu0 0.0
        %2042 = vmatmul.mubr.f32.gmra.mrb[0].mxu0 %v1817
        %v2043 = vpop.f32.mrb[0].mxu0
        %v2044 = vadd.f32 0.0, %v2043
        %v2045 = vpop.f32.mrb[0].mxu0
        %2046 = vdwg.mxu0
        %v2047 = vadd.f32 %v1657, %v1889
        %v2048 = vadd.f32 %v1658, %v1894
        %v2049 = vadd.f32 %v1659, %v1899
        %v2050 = vadd.f32 %v1660, %v1904
        %v2051 = vadd.f32 %v1661, %v1909
        %v2052 = vadd.f32 %v1662, %v1914
        %v2053 = vadd.f32 %v1663, %v1919
        %v2054 = vadd.f32 %v1664, %v1924
        %v2055 = vadd.f32 %v1665, %v1929
        %v2056 = vadd.f32 %v1666, %v1934
        %v2057 = vadd.f32 %v1667, %v1939
        %v2058 = vadd.f32 %v1668, %v1944
        %v2059 = vadd.f32 %v1669, %v1949
        %v2060 = vadd.f32 %v1670, %v1954
        %v2061 = vadd.f32 %v1671, %v1959
        %v2062 = vadd.f32 %v1672, %v1964
        %v2063 = vadd.f32 %v1673, %v1969
        %v2064 = vadd.f32 %v1674, %v1974
        %v2065 = vadd.f32 %v1675, %v1979
        %v2066 = vadd.f32 %v1676, %v1984
        %v2067 = vadd.f32 %v1677, %v1989
        %v2068 = vadd.f32 %v1678, %v1994
        %v2069 = vadd.f32 %v1679, %v1999
        %v2070 = vadd.f32 %v1680, %v2004
        %v2071 = vadd.f32 %v1681, %v2009
        %v2072 = vadd.f32 %v1682, %v2014
        %v2073 = vadd.f32 %v1683, %v2019
        %v2074 = vadd.f32 %v1684, %v2024
        %v2075 = vadd.f32 %v1685, %v2029
        %v2076 = vadd.f32 %v1686, %v2034
        %v2077 = vadd.f32 %v1687, %v2039
        %v2078 = vadd.f32 %v1688, %v2044
        %v2079 = vld [vmem:[%s1298 + $0x4] sm:$0xff]
        %v2080 = vld [vmem:[%s1298 + $0xc] sm:$0xff]
        %v2081 = vld [vmem:[%s1298 + $0x1c] sm:$0xff]
        %v2082 = vld [vmem:[%s1298 + $0x24] sm:$0xff]
        %v2083 = vld [vmem:[%s1298 + $0x34] sm:$0xff]
        %v2084 = vld [vmem:[%s1298 + $0x3c] sm:$0xff]
        %v2085 = vld [vmem:[%s1298 + $0x4c] sm:$0xff]
        %v2086 = vld [vmem:[%s1298 + $0x54] sm:$0xff]
        %v2087 = vld [vmem:[%s1298 + $0x64] sm:$0xff]
        %v2088 = vld [vmem:[%s1298 + $0x6c] sm:$0xff]
        %v2089 = vld [vmem:[%s1298 + $0x7c] sm:$0xff]
        %v2090 = vld [vmem:[%s1298 + $0x84] sm:$0xff]
        %v2091 = vld [vmem:[%s1298 + $0x94] sm:$0xff]
        %v2092 = vld [vmem:[%s1298 + $0x9c] sm:$0xff]
        %v2093 = vld [vmem:[%s1298 + $0xac] sm:$0xff]
        %v2094 = vld [vmem:[%s1298 + $0xb4] sm:$0xff]
        %v2095 = vld [vmem:[%s1298 + $0xc4] sm:$0xff]
        %v2096 = vld [vmem:[%s1298 + $0xcc] sm:$0xff]
        %v2097 = vld [vmem:[%s1298 + $0xdc] sm:$0xff]
        %v2098 = vld [vmem:[%s1298 + $0xe4] sm:$0xff]
        %v2099 = vld [vmem:[%s1298 + $0xf4] sm:$0xff]
        %v2100 = vld [vmem:[%s1298 + $0xfc] sm:$0xff]
        %v2101 = vld [vmem:[%s1298 + $0x10c] sm:$0xff]
        %v2102 = vld [vmem:[%s1298 + $0x114] sm:$0xff]
        %v2103 = vld [vmem:[%s1298 + $0x124] sm:$0xff]
        %v2104 = vld [vmem:[%s1298 + $0x12c] sm:$0xff]
        %v2105 = vld [vmem:[%s1298 + $0x13c] sm:$0xff]
        %v2106 = vld [vmem:[%s1298 + $0x144] sm:$0xff]
        %v2107 = vld [vmem:[%s1298 + $0x154] sm:$0xff]
        %v2108 = vld [vmem:[%s1298 + $0x15c] sm:$0xff]
        %v2109 = vld [vmem:[%s1298 + $0x16c] sm:$0xff]
        %v2110 = vld [vmem:[%s1298 + $0x174] sm:$0xff]
        %s2111 = scalar_lea.vmem [#allocation5], 20
        %v2112 = vld [vmem:[%s2111] sm:$0xf]
        %v2114 = vsel %vm258, %v2079, 0
        %v2117 = vsel %vm258, %v2080, 0
        %v2120 = vsel %vm258, %v2081, 0
        %v2123 = vsel %vm258, %v2082, 0
        %v2126 = vsel %vm258, %v2083, 0
        %v2129 = vsel %vm258, %v2084, 0
        %v2132 = vsel %vm258, %v2085, 0
        %v2135 = vsel %vm258, %v2086, 0
        %v2138 = vsel %vm258, %v2087, 0
        %v2141 = vsel %vm258, %v2088, 0
        %v2144 = vsel %vm258, %v2089, 0
        %v2147 = vsel %vm258, %v2090, 0
        %v2150 = vsel %vm258, %v2091, 0
        %v2153 = vsel %vm258, %v2092, 0
        %v2156 = vsel %vm258, %v2093, 0
        %v2159 = vsel %vm258, %v2094, 0
        %v2162 = vsel %vm258, %v2095, 0
        %v2165 = vsel %vm258, %v2096, 0
        %v2168 = vsel %vm258, %v2097, 0
        %v2171 = vsel %vm258, %v2098, 0
        %v2174 = vsel %vm258, %v2099, 0
        %v2177 = vsel %vm258, %v2100, 0
        %v2180 = vsel %vm258, %v2101, 0
        %v2183 = vsel %vm258, %v2102, 0
        %v2186 = vsel %vm258, %v2103, 0
        %v2189 = vsel %vm258, %v2104, 0
        %v2192 = vsel %vm258, %v2105, 0
        %v2195 = vsel %vm258, %v2106, 0
        %v2198 = vsel %vm258, %v2107, 0
        %v2201 = vsel %vm258, %v2108, 0
        %v2204 = vsel %vm258, %v2109, 0
        %v2207 = vsel %vm258, %v2110, 0
        %v2210 = vsel %vm355, %v2112, 0
        %2212 = vmatprep.subr.mxu0 0.0
        %2213 = vmatpush1.msra.mxu0 %v2210
        %2214 = vmatprep.subr.mxu0 0.0
        %2215 = vmatpush1.msra.mxu0 0.0
        %2216 = vmatprep.subr.mxu0 0.0
        %2217 = vmatpush1.msra.mxu0 0.0
        %2218 = vmatprep.subr.mxu0 0.0
        %2219 = vmatpush1.msra.mxu0 0.0
        %2220 = vmatprep.subr.mxu0 0.0
        %2221 = vmatpush1.msra.mxu0 0.0
        %2222 = vmatprep.subr.mxu0 0.0
        %2223 = vmatpush1.msra.mxu0 0.0
        %2224 = vmatprep.subr.mxu0 0.0
        %2225 = vmatpush1.msra.mxu0 0.0
        %2226 = vmatprep.subr.mxu0 0.0
        %2227 = vmatpush1.msra.mxu0 0.0
        %2228 = vmatprep.subr.mxu0 0.0
        %2229 = vmatpush1.msra.mxu0 0.0
        %2230 = vmatprep.subr.mxu0 0.0
        %2231 = vmatpush1.msra.mxu0 0.0
        %2232 = vmatprep.subr.mxu0 0.0
        %2233 = vmatpush1.msra.mxu0 0.0
        %2234 = vmatprep.subr.mxu0 0.0
        %2235 = vmatpush1.msra.mxu0 0.0
        %2236 = vmatprep.subr.mxu0 0.0
        %2237 = vmatpush1.msra.mxu0 0.0
        %2238 = vmatprep.subr.mxu0 0.0
        %2239 = vmatpush1.msra.mxu0 0.0
        %2240 = vmatprep.subr.mxu0 0.0
        %2241 = vmatpush1.msra.mxu0 0.0
        %2242 = vmatprep.subr.mxu0 0.0
        %2243 = vmatpush1.msra.mxu0 0.0
        %2244 = vmatprep.subr.mxu0 0.0
        %2245 = vmatpush1.msra.mxu0 0.0
        %2246 = vmatprep.subr.mxu0 0.0
        %2247 = vmatpush1.msra.mxu0 0.0
        %2248 = vmatprep.subr.mxu0 0.0
        %2249 = vmatpush1.msra.mxu0 0.0
        %2250 = vmatprep.subr.mxu0 0.0
        %2251 = vmatpush1.msra.mxu0 0.0
        %2252 = vmatprep.subr.mxu0 0.0
        %2253 = vmatpush1.msra.mxu0 0.0
        %2254 = vmatprep.subr.mxu0 0.0
        %2255 = vmatpush1.msra.mxu0 0.0
        %2256 = vmatprep.subr.mxu0 0.0
        %2257 = vmatpush1.msra.mxu0 0.0
        %2258 = vmatprep.subr.mxu0 0.0
        %2259 = vmatpush1.msra.mxu0 0.0
        %2260 = vmatprep.subr.mxu0 0.0
        %2261 = vmatpush1.msra.mxu0 0.0
        %2262 = vmatprep.subr.mxu0 0.0
        %2263 = vmatpush1.msra.mxu0 0.0
        %2264 = vmatprep.subr.mxu0 0.0
        %2265 = vmatpush1.msra.mxu0 0.0
        %2266 = vmatprep.subr.mxu0 0.0
        %2267 = vmatpush1.msra.mxu0 0.0
        %2268 = vmatprep.subr.mxu0 0.0
        %2269 = vmatpush1.msra.mxu0 0.0
        %2270 = vmatprep.subr.mxu0 0.0
        %2271 = vmatpush1.msra.mxu0 0.0
        %2272 = vmatprep.subr.mxu0 0.0
        %2273 = vmatpush1.msra.mxu0 0.0
        %2274 = vmatprep.subr.mxu0 0.0
        %2275 = vmatpush1.msra.mxu0 0.0
        %2276 = vmatprep.mubr.f32.mxu0 0.0
        %2277 = vmatmul.mubr.f32.gmra.mrb[0].mxu0 %v2114
        %v2278 = vpop.f32.mrb[0].mxu0
        %v2279 = vadd.f32 0.0, %v2278
        %v2280 = vpop.f32.mrb[0].mxu0
        %2281 = vmatprep.mubr.f32.mxu0 0.0
        %2282 = vmatmul.mubr.f32.gmra.mrb[0].mxu0 %v2117
        %v2283 = vpop.f32.mrb[0].mxu0
        %v2284 = vadd.f32 0.0, %v2283
        %v2285 = vpop.f32.mrb[0].mxu0
        %2286 = vmatprep.mubr.f32.mxu0 0.0
        %2287 = vmatmul.mubr.f32.gmra.mrb[0].mxu0 %v2120
        %v2288 = vpop.f32.mrb[0].mxu0
        %v2289 = vadd.f32 0.0, %v2288
        %v2290 = vpop.f32.mrb[0].mxu0
        %2291 = vmatprep.mubr.f32.mxu0 0.0
        %2292 = vmatmul.mubr.f32.gmra.mrb[0].mxu0 %v2123
        %v2293 = vpop.f32.mrb[0].mxu0
        %v2294 = vadd.f32 0.0, %v2293
        %v2295 = vpop.f32.mrb[0].mxu0
        %2296 = vmatprep.mubr.f32.mxu0 0.0
        %2297 = vmatmul.mubr.f32.gmra.mrb[0].mxu0 %v2126
        %v2298 = vpop.f32.mrb[0].mxu0
        %v2299 = vadd.f32 0.0, %v2298
        %v2300 = vpop.f32.mrb[0].mxu0
        %2301 = vmatprep.mubr.f32.mxu0 0.0
        %2302 = vmatmul.mubr.f32.gmra.mrb[0].mxu0 %v2129
        %v2303 = vpop.f32.mrb[0].mxu0
        %v2304 = vadd.f32 0.0, %v2303
        %v2305 = vpop.f32.mrb[0].mxu0
        %2306 = vmatprep.mubr.f32.mxu0 0.0
        %2307 = vmatmul.mubr.f32.gmra.mrb[0].mxu0 %v2132
        %v2308 = vpop.f32.mrb[0].mxu0
        %v2309 = vadd.f32 0.0, %v2308
        %v2310 = vpop.f32.mrb[0].mxu0
        %2311 = vmatprep.mubr.f32.mxu0 0.0
        %2312 = vmatmul.mubr.f32.gmra.mrb[0].mxu0 %v2135
        %v2313 = vpop.f32.mrb[0].mxu0
        %v2314 = vadd.f32 0.0, %v2313
        %v2315 = vpop.f32.mrb[0].mxu0
        %2316 = vmatprep.mubr.f32.mxu0 0.0
        %2317 = vmatmul.mubr.f32.gmra.mrb[0].mxu0 %v2138
        %v2318 = vpop.f32.mrb[0].mxu0
        %v2319 = vadd.f32 0.0, %v2318
        %v2320 = vpop.f32.mrb[0].mxu0
        %2321 = vmatprep.mubr.f32.mxu0 0.0
        %2322 = vmatmul.mubr.f32.gmra.mrb[0].mxu0 %v2141
        %v2323 = vpop.f32.mrb[0].mxu0
        %v2324 = vadd.f32 0.0, %v2323
        %v2325 = vpop.f32.mrb[0].mxu0
        %2326 = vmatprep.mubr.f32.mxu0 0.0
        %2327 = vmatmul.mubr.f32.gmra.mrb[0].mxu0 %v2144
        %v2328 = vpop.f32.mrb[0].mxu0
        %v2329 = vadd.f32 0.0, %v2328
        %v2330 = vpop.f32.mrb[0].mxu0
        %2331 = vmatprep.mubr.f32.mxu0 0.0
        %2332 = vmatmul.mubr.f32.gmra.mrb[0].mxu0 %v2147
        %v2333 = vpop.f32.mrb[0].mxu0
        %v2334 = vadd.f32 0.0, %v2333
        %v2335 = vpop.f32.mrb[0].mxu0
        %2336 = vmatprep.mubr.f32.mxu0 0.0
        %2337 = vmatmul.mubr.f32.gmra.mrb[0].mxu0 %v2150
        %v2338 = vpop.f32.mrb[0].mxu0
        %v2339 = vadd.f32 0.0, %v2338
        %v2340 = vpop.f32.mrb[0].mxu0
        %2341 = vmatprep.mubr.f32.mxu0 0.0
        %2342 = vmatmul.mubr.f32.gmra.mrb[0].mxu0 %v2153
        %v2343 = vpop.f32.mrb[0].mxu0
        %v2344 = vadd.f32 0.0, %v2343
        %v2345 = vpop.f32.mrb[0].mxu0
        %2346 = vmatprep.mubr.f32.mxu0 0.0
        %2347 = vmatmul.mubr.f32.gmra.mrb[0].mxu0 %v2156
        %v2348 = vpop.f32.mrb[0].mxu0
        %v2349 = vadd.f32 0.0, %v2348
        %v2350 = vpop.f32.mrb[0].mxu0
        %2351 = vmatprep.mubr.f32.mxu0 0.0
        %2352 = vmatmul.mubr.f32.gmra.mrb[0].mxu0 %v2159
        %v2353 = vpop.f32.mrb[0].mxu0
        %v2354 = vadd.f32 0.0, %v2353
        %v2355 = vpop.f32.mrb[0].mxu0
        %2356 = vmatprep.mubr.f32.mxu0 0.0
        %2357 = vmatmul.mubr.f32.gmra.mrb[0].mxu0 %v2162
        %v2358 = vpop.f32.mrb[0].mxu0
        %v2359 = vadd.f32 0.0, %v2358
        %v2360 = vpop.f32.mrb[0].mxu0
        %2361 = vmatprep.mubr.f32.mxu0 0.0
        %2362 = vmatmul.mubr.f32.gmra.mrb[0].mxu0 %v2165
        %v2363 = vpop.f32.mrb[0].mxu0
        %v2364 = vadd.f32 0.0, %v2363
        %v2365 = vpop.f32.mrb[0].mxu0
        %2366 = vmatprep.mubr.f32.mxu0 0.0
        %2367 = vmatmul.mubr.f32.gmra.mrb[0].mxu0 %v2168
        %v2368 = vpop.f32.mrb[0].mxu0
        %v2369 = vadd.f32 0.0, %v2368
        %v2370 = vpop.f32.mrb[0].mxu0
        %2371 = vmatprep.mubr.f32.mxu0 0.0
        %2372 = vmatmul.mubr.f32.gmra.mrb[0].mxu0 %v2171
        %v2373 = vpop.f32.mrb[0].mxu0
        %v2374 = vadd.f32 0.0, %v2373
        %v2375 = vpop.f32.mrb[0].mxu0
        %2376 = vmatprep.mubr.f32.mxu0 0.0
        %2377 = vmatmul.mubr.f32.gmra.mrb[0].mxu0 %v2174
        %v2378 = vpop.f32.mrb[0].mxu0
        %v2379 = vadd.f32 0.0, %v2378
        %v2380 = vpop.f32.mrb[0].mxu0
        %2381 = vmatprep.mubr.f32.mxu0 0.0
        %2382 = vmatmul.mubr.f32.gmra.mrb[0].mxu0 %v2177
        %v2383 = vpop.f32.mrb[0].mxu0
        %v2384 = vadd.f32 0.0, %v2383
        %v2385 = vpop.f32.mrb[0].mxu0
        %2386 = vmatprep.mubr.f32.mxu0 0.0
        %2387 = vmatmul.mubr.f32.gmra.mrb[0].mxu0 %v2180
        %v2388 = vpop.f32.mrb[0].mxu0
        %v2389 = vadd.f32 0.0, %v2388
        %v2390 = vpop.f32.mrb[0].mxu0
        %2391 = vmatprep.mubr.f32.mxu0 0.0
        %2392 = vmatmul.mubr.f32.gmra.mrb[0].mxu0 %v2183
        %v2393 = vpop.f32.mrb[0].mxu0
        %v2394 = vadd.f32 0.0, %v2393
        %v2395 = vpop.f32.mrb[0].mxu0
        %2396 = vmatprep.mubr.f32.mxu0 0.0
        %2397 = vmatmul.mubr.f32.gmra.mrb[0].mxu0 %v2186
        %v2398 = vpop.f32.mrb[0].mxu0
        %v2399 = vadd.f32 0.0, %v2398
        %v2400 = vpop.f32.mrb[0].mxu0
        %2401 = vmatprep.mubr.f32.mxu0 0.0
        %2402 = vmatmul.mubr.f32.gmra.mrb[0].mxu0 %v2189
        %v2403 = vpop.f32.mrb[0].mxu0
        %v2404 = vadd.f32 0.0, %v2403
        %v2405 = vpop.f32.mrb[0].mxu0
        %2406 = vmatprep.mubr.f32.mxu0 0.0
        %2407 = vmatmul.mubr.f32.gmra.mrb[0].mxu0 %v2192
        %v2408 = vpop.f32.mrb[0].mxu0
        %v2409 = vadd.f32 0.0, %v2408
        %v2410 = vpop.f32.mrb[0].mxu0
        %2411 = vmatprep.mubr.f32.mxu0 0.0
        %2412 = vmatmul.mubr.f32.gmra.mrb[0].mxu0 %v2195
        %v2413 = vpop.f32.mrb[0].mxu0
        %v2414 = vadd.f32 0.0, %v2413
        %v2415 = vpop.f32.mrb[0].mxu0
        %2416 = vmatprep.mubr.f32.mxu0 0.0
        %2417 = vmatmul.mubr.f32.gmra.mrb[0].mxu0 %v2198
        %v2418 = vpop.f32.mrb[0].mxu0
        %v2419 = vadd.f32 0.0, %v2418
        %v2420 = vpop.f32.mrb[0].mxu0
        %2421 = vmatprep.mubr.f32.mxu0 0.0
        %2422 = vmatmul.mubr.f32.gmra.mrb[0].mxu0 %v2201
        %v2423 = vpop.f32.mrb[0].mxu0
        %v2424 = vadd.f32 0.0, %v2423
        %v2425 = vpop.f32.mrb[0].mxu0
        %2426 = vmatprep.mubr.f32.mxu0 0.0
        %2427 = vmatmul.mubr.f32.gmra.mrb[0].mxu0 %v2204
        %v2428 = vpop.f32.mrb[0].mxu0
        %v2429 = vadd.f32 0.0, %v2428
        %v2430 = vpop.f32.mrb[0].mxu0
        %2431 = vmatprep.mubr.f32.mxu0 0.0
        %2432 = vmatmul.mubr.f32.gmra.mrb[0].mxu0 %v2207
        %v2433 = vpop.f32.mrb[0].mxu0
        %v2434 = vadd.f32 0.0, %v2433
        %v2435 = vpop.f32.mrb[0].mxu0
        %2436 = vdwg.mxu0
        %v2437 = vadd.f32 %v2047, %v2279
        %v2438 = vadd.f32 %v2048, %v2284
        %v2439 = vadd.f32 %v2049, %v2289
        %v2440 = vadd.f32 %v2050, %v2294
        %v2441 = vadd.f32 %v2051, %v2299
        %v2442 = vadd.f32 %v2052, %v2304
        %v2443 = vadd.f32 %v2053, %v2309
        %v2444 = vadd.f32 %v2054, %v2314
        %v2445 = vadd.f32 %v2055, %v2319
        %v2446 = vadd.f32 %v2056, %v2324
        %v2447 = vadd.f32 %v2057, %v2329
        %v2448 = vadd.f32 %v2058, %v2334
        %v2449 = vadd.f32 %v2059, %v2339
        %v2450 = vadd.f32 %v2060, %v2344
        %v2451 = vadd.f32 %v2061, %v2349
        %v2452 = vadd.f32 %v2062, %v2354
        %v2453 = vadd.f32 %v2063, %v2359
        %v2454 = vadd.f32 %v2064, %v2364
        %v2455 = vadd.f32 %v2065, %v2369
        %v2456 = vadd.f32 %v2066, %v2374
        %v2457 = vadd.f32 %v2067, %v2379
        %v2458 = vadd.f32 %v2068, %v2384
        %v2459 = vadd.f32 %v2069, %v2389
        %v2460 = vadd.f32 %v2070, %v2394
        %v2461 = vadd.f32 %v2071, %v2399
        %v2462 = vadd.f32 %v2072, %v2404
        %v2463 = vadd.f32 %v2073, %v2409
        %v2464 = vadd.f32 %v2074, %v2414
        %v2465 = vadd.f32 %v2075, %v2419
        %v2466 = vadd.f32 %v2076, %v2424
        %v2467 = vadd.f32 %v2077, %v2429
        %v2468 = vadd.f32 %v2078, %v2434
        %s2469 = scalar_lea.vmem %s166, 96 [#allocation2]
        %v2470 = vld [vmem:[%s2469] sm:$0xff]
        %v2471 = vld [vmem:[%s2469 + $0x8] sm:$0xff]
        %v2472 = vld [vmem:[%s2469 + $0x18] sm:$0xff]
        %v2473 = vld [vmem:[%s2469 + $0x20] sm:$0xff]
        %v2474 = vld [vmem:[%s2469 + $0x30] sm:$0xff]
        %v2475 = vld [vmem:[%s2469 + $0x38] sm:$0xff]
        %v2476 = vld [vmem:[%s2469 + $0x48] sm:$0xff]
        %v2477 = vld [vmem:[%s2469 + $0x50] sm:$0xff]
        %v2478 = vld [vmem:[%s2469 + $0x60] sm:$0xff]
        %v2479 = vld [vmem:[%s2469 + $0x68] sm:$0xff]
        %v2480 = vld [vmem:[%s2469 + $0x78] sm:$0xff]
        %v2481 = vld [vmem:[%s2469 + $0x80] sm:$0xff]
        %v2482 = vld [vmem:[%s2469 + $0x90] sm:$0xff]
        %v2483 = vld [vmem:[%s2469 + $0x98] sm:$0xff]
        %v2484 = vld [vmem:[%s2469 + $0xa8] sm:$0xff]
        %v2485 = vld [vmem:[%s2469 + $0xb0] sm:$0xff]
        %v2486 = vld [vmem:[%s2469 + $0xc0] sm:$0xff]
        %v2487 = vld [vmem:[%s2469 + $0xc8] sm:$0xff]
        %v2488 = vld [vmem:[%s2469 + $0xd8] sm:$0xff]
        %v2489 = vld [vmem:[%s2469 + $0xe0] sm:$0xff]
        %v2490 = vld [vmem:[%s2469 + $0xf0] sm:$0xff]
        %v2491 = vld [vmem:[%s2469 + $0xf8] sm:$0xff]
        %v2492 = vld [vmem:[%s2469 + $0x108] sm:$0xff]
        %v2493 = vld [vmem:[%s2469 + $0x110] sm:$0xff]
        %v2494 = vld [vmem:[%s2469 + $0x120] sm:$0xff]
        %v2495 = vld [vmem:[%s2469 + $0x128] sm:$0xff]
        %v2496 = vld [vmem:[%s2469 + $0x138] sm:$0xff]
        %v2497 = vld [vmem:[%s2469 + $0x140] sm:$0xff]
        %v2498 = vld [vmem:[%s2469 + $0x150] sm:$0xff]
        %v2499 = vld [vmem:[%s2469 + $0x158] sm:$0xff]
        %v2500 = vld [vmem:[%s2469 + $0x168] sm:$0xff]
        %v2501 = vld [vmem:[%s2469 + $0x170] sm:$0xff]
        %s2502 = scalar_lea.vmem [#allocation5], 24
        %v2503 = vld [vmem:[%s2502] sm:$0xf]
        %v2505 = vsel %vm258, %v2470, 0
        %v2508 = vsel %vm258, %v2471, 0
        %v2511 = vsel %vm258, %v2472, 0
        %v2514 = vsel %vm258, %v2473, 0
        %v2517 = vsel %vm258, %v2474, 0
        %v2520 = vsel %vm258, %v2475, 0
        %v2523 = vsel %vm258, %v2476, 0
        %v2526 = vsel %vm258, %v2477, 0
        %v2529 = vsel %vm258, %v2478, 0
        %v2532 = vsel %vm258, %v2479, 0
        %v2535 = vsel %vm258, %v2480, 0
        %v2538 = vsel %vm258, %v2481, 0
        %v2541 = vsel %vm258, %v2482, 0
        %v2544 = vsel %vm258, %v2483, 0
        %v2547 = vsel %vm258, %v2484, 0
        %v2550 = vsel %vm258, %v2485, 0
        %v2553 = vsel %vm258, %v2486, 0
        %v2556 = vsel %vm258, %v2487, 0
        %v2559 = vsel %vm258, %v2488, 0
        %v2562 = vsel %vm258, %v2489, 0
        %v2565 = vsel %vm258, %v2490, 0
        %v2568 = vsel %vm258, %v2491, 0
        %v2571 = vsel %vm258, %v2492, 0
        %v2574 = vsel %vm258, %v2493, 0
        %v2577 = vsel %vm258, %v2494, 0
        %v2580 = vsel %vm258, %v2495, 0
        %v2583 = vsel %vm258, %v2496, 0
        %v2586 = vsel %vm258, %v2497, 0
        %v2589 = vsel %vm258, %v2498, 0
        %v2592 = vsel %vm258, %v2499, 0
        %v2595 = vsel %vm258, %v2500, 0
        %v2598 = vsel %vm258, %v2501, 0
        %v2601 = vsel %vm355, %v2503, 0
        %2603 = vmatprep.subr.mxu0 0.0
        %2604 = vmatpush1.msra.mxu0 %v2601
        %2605 = vmatprep.subr.mxu0 0.0
        %2606 = vmatpush1.msra.mxu0 0.0
        %2607 = vmatprep.subr.mxu0 0.0
        %2608 = vmatpush1.msra.mxu0 0.0
        %2609 = vmatprep.subr.mxu0 0.0
        %2610 = vmatpush1.msra.mxu0 0.0
        %2611 = vmatprep.subr.mxu0 0.0
        %2612 = vmatpush1.msra.mxu0 0.0
        %2613 = vmatprep.subr.mxu0 0.0
        %2614 = vmatpush1.msra.mxu0 0.0
        %2615 = vmatprep.subr.mxu0 0.0
        %2616 = vmatpush1.msra.mxu0 0.0
        %2617 = vmatprep.subr.mxu0 0.0
        %2618 = vmatpush1.msra.mxu0 0.0
        %2619 = vmatprep.subr.mxu0 0.0
        %2620 = vmatpush1.msra.mxu0 0.0
        %2621 = vmatprep.subr.mxu0 0.0
        %2622 = vmatpush1.msra.mxu0 0.0
        %2623 = vmatprep.subr.mxu0 0.0
        %2624 = vmatpush1.msra.mxu0 0.0
        %2625 = vmatprep.subr.mxu0 0.0
        %2626 = vmatpush1.msra.mxu0 0.0
        %2627 = vmatprep.subr.mxu0 0.0
        %2628 = vmatpush1.msra.mxu0 0.0
        %2629 = vmatprep.subr.mxu0 0.0
        %2630 = vmatpush1.msra.mxu0 0.0
        %2631 = vmatprep.subr.mxu0 0.0
        %2632 = vmatpush1.msra.mxu0 0.0
        %2633 = vmatprep.subr.mxu0 0.0
        %2634 = vmatpush1.msra.mxu0 0.0
        %2635 = vmatprep.subr.mxu0 0.0
        %2636 = vmatpush1.msra.mxu0 0.0
        %2637 = vmatprep.subr.mxu0 0.0
        %2638 = vmatpush1.msra.mxu0 0.0
        %2639 = vmatprep.subr.mxu0 0.0
        %2640 = vmatpush1.msra.mxu0 0.0
        %2641 = vmatprep.subr.mxu0 0.0
        %2642 = vmatpush1.msra.mxu0 0.0
        %2643 = vmatprep.subr.mxu0 0.0
        %2644 = vmatpush1.msra.mxu0 0.0
        %2645 = vmatprep.subr.mxu0 0.0
        %2646 = vmatpush1.msra.mxu0 0.0
        %2647 = vmatprep.subr.mxu0 0.0
        %2648 = vmatpush1.msra.mxu0 0.0
        %2649 = vmatprep.subr.mxu0 0.0
        %2650 = vmatpush1.msra.mxu0 0.0
        %2651 = vmatprep.subr.mxu0 0.0
        %2652 = vmatpush1.msra.mxu0 0.0
        %2653 = vmatprep.subr.mxu0 0.0
        %2654 = vmatpush1.msra.mxu0 0.0
        %2655 = vmatprep.subr.mxu0 0.0
        %2656 = vmatpush1.msra.mxu0 0.0
        %2657 = vmatprep.subr.mxu0 0.0
        %2658 = vmatpush1.msra.mxu0 0.0
        %2659 = vmatprep.subr.mxu0 0.0
        %2660 = vmatpush1.msra.mxu0 0.0
        %2661 = vmatprep.subr.mxu0 0.0
        %2662 = vmatpush1.msra.mxu0 0.0
        %2663 = vmatprep.subr.mxu0 0.0
        %2664 = vmatpush1.msra.mxu0 0.0
        %2665 = vmatprep.subr.mxu0 0.0
        %2666 = vmatpush1.msra.mxu0 0.0
        %2667 = vmatprep.mubr.f32.mxu0 0.0
        %2668 = vmatmul.mubr.f32.gmra.mrb[0].mxu0 %v2505
        %v2669 = vpop.f32.mrb[0].mxu0
        %v2670 = vadd.f32 0.0, %v2669
        %v2671 = vpop.f32.mrb[0].mxu0
        %2672 = vmatprep.mubr.f32.mxu0 0.0
        %2673 = vmatmul.mubr.f32.gmra.mrb[0].mxu0 %v2508
        %v2674 = vpop.f32.mrb[0].mxu0
        %v2675 = vadd.f32 0.0, %v2674
        %v2676 = vpop.f32.mrb[0].mxu0
        %2677 = vmatprep.mubr.f32.mxu0 0.0
        %2678 = vmatmul.mubr.f32.gmra.mrb[0].mxu0 %v2511
        %v2679 = vpop.f32.mrb[0].mxu0
        %v2680 = vadd.f32 0.0, %v2679
        %v2681 = vpop.f32.mrb[0].mxu0
        %2682 = vmatprep.mubr.f32.mxu0 0.0
        %2683 = vmatmul.mubr.f32.gmra.mrb[0].mxu0 %v2514
        %v2684 = vpop.f32.mrb[0].mxu0
        %v2685 = vadd.f32 0.0, %v2684
        %v2686 = vpop.f32.mrb[0].mxu0
        %2687 = vmatprep.mubr.f32.mxu0 0.0
        %2688 = vmatmul.mubr.f32.gmra.mrb[0].mxu0 %v2517
        %v2689 = vpop.f32.mrb[0].mxu0
        %v2690 = vadd.f32 0.0, %v2689
        %v2691 = vpop.f32.mrb[0].mxu0
        %2692 = vmatprep.mubr.f32.mxu0 0.0
        %2693 = vmatmul.mubr.f32.gmra.mrb[0].mxu0 %v2520
        %v2694 = vpop.f32.mrb[0].mxu0
        %v2695 = vadd.f32 0.0, %v2694
        %v2696 = vpop.f32.mrb[0].mxu0
        %2697 = vmatprep.mubr.f32.mxu0 0.0
        %2698 = vmatmul.mubr.f32.gmra.mrb[0].mxu0 %v2523
        %v2699 = vpop.f32.mrb[0].mxu0
        %v2700 = vadd.f32 0.0, %v2699
        %v2701 = vpop.f32.mrb[0].mxu0
        %2702 = vmatprep.mubr.f32.mxu0 0.0
        %2703 = vmatmul.mubr.f32.gmra.mrb[0].mxu0 %v2526
        %v2704 = vpop.f32.mrb[0].mxu0
        %v2705 = vadd.f32 0.0, %v2704
        %v2706 = vpop.f32.mrb[0].mxu0
        %2707 = vmatprep.mubr.f32.mxu0 0.0
        %2708 = vmatmul.mubr.f32.gmra.mrb[0].mxu0 %v2529
        %v2709 = vpop.f32.mrb[0].mxu0
        %v2710 = vadd.f32 0.0, %v2709
        %v2711 = vpop.f32.mrb[0].mxu0
        %2712 = vmatprep.mubr.f32.mxu0 0.0
        %2713 = vmatmul.mubr.f32.gmra.mrb[0].mxu0 %v2532
        %v2714 = vpop.f32.mrb[0].mxu0
        %v2715 = vadd.f32 0.0, %v2714
        %v2716 = vpop.f32.mrb[0].mxu0
        %2717 = vmatprep.mubr.f32.mxu0 0.0
        %2718 = vmatmul.mubr.f32.gmra.mrb[0].mxu0 %v2535
        %v2719 = vpop.f32.mrb[0].mxu0
        %v2720 = vadd.f32 0.0, %v2719
        %v2721 = vpop.f32.mrb[0].mxu0
        %2722 = vmatprep.mubr.f32.mxu0 0.0
        %2723 = vmatmul.mubr.f32.gmra.mrb[0].mxu0 %v2538
        %v2724 = vpop.f32.mrb[0].mxu0
        %v2725 = vadd.f32 0.0, %v2724
        %v2726 = vpop.f32.mrb[0].mxu0
        %2727 = vmatprep.mubr.f32.mxu0 0.0
        %2728 = vmatmul.mubr.f32.gmra.mrb[0].mxu0 %v2541
        %v2729 = vpop.f32.mrb[0].mxu0
        %v2730 = vadd.f32 0.0, %v2729
        %v2731 = vpop.f32.mrb[0].mxu0
        %2732 = vmatprep.mubr.f32.mxu0 0.0
        %2733 = vmatmul.mubr.f32.gmra.mrb[0].mxu0 %v2544
        %v2734 = vpop.f32.mrb[0].mxu0
        %v2735 = vadd.f32 0.0, %v2734
        %v2736 = vpop.f32.mrb[0].mxu0
        %2737 = vmatprep.mubr.f32.mxu0 0.0
        %2738 = vmatmul.mubr.f32.gmra.mrb[0].mxu0 %v2547
        %v2739 = vpop.f32.mrb[0].mxu0
        %v2740 = vadd.f32 0.0, %v2739
        %v2741 = vpop.f32.mrb[0].mxu0
        %2742 = vmatprep.mubr.f32.mxu0 0.0
        %2743 = vmatmul.mubr.f32.gmra.mrb[0].mxu0 %v2550
        %v2744 = vpop.f32.mrb[0].mxu0
        %v2745 = vadd.f32 0.0, %v2744
        %v2746 = vpop.f32.mrb[0].mxu0
        %2747 = vmatprep.mubr.f32.mxu0 0.0
        %2748 = vmatmul.mubr.f32.gmra.mrb[0].mxu0 %v2553
        %v2749 = vpop.f32.mrb[0].mxu0
        %v2750 = vadd.f32 0.0, %v2749
        %v2751 = vpop.f32.mrb[0].mxu0
        %2752 = vmatprep.mubr.f32.mxu0 0.0
        %2753 = vmatmul.mubr.f32.gmra.mrb[0].mxu0 %v2556
        %v2754 = vpop.f32.mrb[0].mxu0
        %v2755 = vadd.f32 0.0, %v2754
        %v2756 = vpop.f32.mrb[0].mxu0
        %2757 = vmatprep.mubr.f32.mxu0 0.0
        %2758 = vmatmul.mubr.f32.gmra.mrb[0].mxu0 %v2559
        %v2759 = vpop.f32.mrb[0].mxu0
        %v2760 = vadd.f32 0.0, %v2759
        %v2761 = vpop.f32.mrb[0].mxu0
        %2762 = vmatprep.mubr.f32.mxu0 0.0
        %2763 = vmatmul.mubr.f32.gmra.mrb[0].mxu0 %v2562
        %v2764 = vpop.f32.mrb[0].mxu0
        %v2765 = vadd.f32 0.0, %v2764
        %v2766 = vpop.f32.mrb[0].mxu0
        %2767 = vmatprep.mubr.f32.mxu0 0.0
        %2768 = vmatmul.mubr.f32.gmra.mrb[0].mxu0 %v2565
        %v2769 = vpop.f32.mrb[0].mxu0
        %v2770 = vadd.f32 0.0, %v2769
        %v2771 = vpop.f32.mrb[0].mxu0
        %2772 = vmatprep.mubr.f32.mxu0 0.0
        %2773 = vmatmul.mubr.f32.gmra.mrb[0].mxu0 %v2568
        %v2774 = vpop.f32.mrb[0].mxu0
        %v2775 = vadd.f32 0.0, %v2774
        %v2776 = vpop.f32.mrb[0].mxu0
        %2777 = vmatprep.mubr.f32.mxu0 0.0
        %2778 = vmatmul.mubr.f32.gmra.mrb[0].mxu0 %v2571
        %v2779 = vpop.f32.mrb[0].mxu0
        %v2780 = vadd.f32 0.0, %v2779
        %v2781 = vpop.f32.mrb[0].mxu0
        %2782 = vmatprep.mubr.f32.mxu0 0.0
        %2783 = vmatmul.mubr.f32.gmra.mrb[0].mxu0 %v2574
        %v2784 = vpop.f32.mrb[0].mxu0
        %v2785 = vadd.f32 0.0, %v2784
        %v2786 = vpop.f32.mrb[0].mxu0
        %2787 = vmatprep.mubr.f32.mxu0 0.0
        %2788 = vmatmul.mubr.f32.gmra.mrb[0].mxu0 %v2577
        %v2789 = vpop.f32.mrb[0].mxu0
        %v2790 = vadd.f32 0.0, %v2789
        %v2791 = vpop.f32.mrb[0].mxu0
        %2792 = vmatprep.mubr.f32.mxu0 0.0
        %2793 = vmatmul.mubr.f32.gmra.mrb[0].mxu0 %v2580
        %v2794 = vpop.f32.mrb[0].mxu0
        %v2795 = vadd.f32 0.0, %v2794
        %v2796 = vpop.f32.mrb[0].mxu0
        %2797 = vmatprep.mubr.f32.mxu0 0.0
        %2798 = vmatmul.mubr.f32.gmra.mrb[0].mxu0 %v2583
        %v2799 = vpop.f32.mrb[0].mxu0
        %v2800 = vadd.f32 0.0, %v2799
        %v2801 = vpop.f32.mrb[0].mxu0
        %2802 = vmatprep.mubr.f32.mxu0 0.0
        %2803 = vmatmul.mubr.f32.gmra.mrb[0].mxu0 %v2586
        %v2804 = vpop.f32.mrb[0].mxu0
        %v2805 = vadd.f32 0.0, %v2804
        %v2806 = vpop.f32.mrb[0].mxu0
        %2807 = vmatprep.mubr.f32.mxu0 0.0
        %2808 = vmatmul.mubr.f32.gmra.mrb[0].mxu0 %v2589
        %v2809 = vpop.f32.mrb[0].mxu0
        %v2810 = vadd.f32 0.0, %v2809
        %v2811 = vpop.f32.mrb[0].mxu0
        %2812 = vmatprep.mubr.f32.mxu0 0.0
        %2813 = vmatmul.mubr.f32.gmra.mrb[0].mxu0 %v2592
        %v2814 = vpop.f32.mrb[0].mxu0
        %v2815 = vadd.f32 0.0, %v2814
        %v2816 = vpop.f32.mrb[0].mxu0
        %2817 = vmatprep.mubr.f32.mxu0 0.0
        %2818 = vmatmul.mubr.f32.gmra.mrb[0].mxu0 %v2595
        %v2819 = vpop.f32.mrb[0].mxu0
        %v2820 = vadd.f32 0.0, %v2819
        %v2821 = vpop.f32.mrb[0].mxu0
        %2822 = vmatprep.mubr.f32.mxu0 0.0
        %2823 = vmatmul.mubr.f32.gmra.mrb[0].mxu0 %v2598
        %v2824 = vpop.f32.mrb[0].mxu0
        %v2825 = vadd.f32 0.0, %v2824
        %v2826 = vpop.f32.mrb[0].mxu0
        %2827 = vdwg.mxu0
        %v2828 = vadd.f32 %v2437, %v2670
        %v2829 = vadd.f32 %v2438, %v2675
        %v2830 = vadd.f32 %v2439, %v2680
        %v2831 = vadd.f32 %v2440, %v2685
        %v2832 = vadd.f32 %v2441, %v2690
        %v2833 = vadd.f32 %v2442, %v2695
        %v2834 = vadd.f32 %v2443, %v2700
        %v2835 = vadd.f32 %v2444, %v2705
        %v2836 = vadd.f32 %v2445, %v2710
        %v2837 = vadd.f32 %v2446, %v2715
        %v2838 = vadd.f32 %v2447, %v2720
        %v2839 = vadd.f32 %v2448, %v2725
        %v2840 = vadd.f32 %v2449, %v2730
        %v2841 = vadd.f32 %v2450, %v2735
        %v2842 = vadd.f32 %v2451, %v2740
        %v2843 = vadd.f32 %v2452, %v2745
        %v2844 = vadd.f32 %v2453, %v2750
        %v2845 = vadd.f32 %v2454, %v2755
        %v2846 = vadd.f32 %v2455, %v2760
        %v2847 = vadd.f32 %v2456, %v2765
        %v2848 = vadd.f32 %v2457, %v2770
        %v2849 = vadd.f32 %v2458, %v2775
        %v2850 = vadd.f32 %v2459, %v2780
        %v2851 = vadd.f32 %v2460, %v2785
        %v2852 = vadd.f32 %v2461, %v2790
        %v2853 = vadd.f32 %v2462, %v2795
        %v2854 = vadd.f32 %v2463, %v2800
        %v2855 = vadd.f32 %v2464, %v2805
        %v2856 = vadd.f32 %v2465, %v2810
        %v2857 = vadd.f32 %v2466, %v2815
        %v2858 = vadd.f32 %v2467, %v2820
        %v2859 = vadd.f32 %v2468, %v2825
        %v2860 = vld [vmem:[%s2469 + $0x2] sm:$0xff]
        %v2861 = vld [vmem:[%s2469 + $0xa] sm:$0xff]
        %v2862 = vld [vmem:[%s2469 + $0x1a] sm:$0xff]
        %v2863 = vld [vmem:[%s2469 + $0x22] sm:$0xff]
        %v2864 = vld [vmem:[%s2469 + $0x32] sm:$0xff]
        %v2865 = vld [vmem:[%s2469 + $0x3a] sm:$0xff]
        %v2866 = vld [vmem:[%s2469 + $0x4a] sm:$0xff]
        %v2867 = vld [vmem:[%s2469 + $0x52] sm:$0xff]
        %v2868 = vld [vmem:[%s2469 + $0x62] sm:$0xff]
        %v2869 = vld [vmem:[%s2469 + $0x6a] sm:$0xff]
        %v2870 = vld [vmem:[%s2469 + $0x7a] sm:$0xff]
        %v2871 = vld [vmem:[%s2469 + $0x82] sm:$0xff]
        %v2872 = vld [vmem:[%s2469 + $0x92] sm:$0xff]
        %v2873 = vld [vmem:[%s2469 + $0x9a] sm:$0xff]
        %v2874 = vld [vmem:[%s2469 + $0xaa] sm:$0xff]
        %v2875 = vld [vmem:[%s2469 + $0xb2] sm:$0xff]
        %v2876 = vld [vmem:[%s2469 + $0xc2] sm:$0xff]
        %v2877 = vld [vmem:[%s2469 + $0xca] sm:$0xff]
        %v2878 = vld [vmem:[%s2469 + $0xda] sm:$0xff]
        %v2879 = vld [vmem:[%s2469 + $0xe2] sm:$0xff]
        %v2880 = vld [vmem:[%s2469 + $0xf2] sm:$0xff]
        %v2881 = vld [vmem:[%s2469 + $0xfa] sm:$0xff]
        %v2882 = vld [vmem:[%s2469 + $0x10a] sm:$0xff]
        %v2883 = vld [vmem:[%s2469 + $0x112] sm:$0xff]
        %v2884 = vld [vmem:[%s2469 + $0x122] sm:$0xff]
        %v2885 = vld [vmem:[%s2469 + $0x12a] sm:$0xff]
        %v2886 = vld [vmem:[%s2469 + $0x13a] sm:$0xff]
        %v2887 = vld [vmem:[%s2469 + $0x142] sm:$0xff]
        %v2888 = vld [vmem:[%s2469 + $0x152] sm:$0xff]
        %v2889 = vld [vmem:[%s2469 + $0x15a] sm:$0xff]
        %v2890 = vld [vmem:[%s2469 + $0x16a] sm:$0xff]
        %v2891 = vld [vmem:[%s2469 + $0x172] sm:$0xff]
        %s2892 = scalar_lea.vmem [#allocation5], 28
        %v2893 = vld [vmem:[%s2892] sm:$0xf]
        %v2895 = vsel %vm258, %v2860, 0
        %v2898 = vsel %vm258, %v2861, 0
        %v2901 = vsel %vm258, %v2862, 0
        %v2904 = vsel %vm258, %v2863, 0
        %v2907 = vsel %vm258, %v2864, 0
        %v2910 = vsel %vm258, %v2865, 0
        %v2913 = vsel %vm258, %v2866, 0
        %v2916 = vsel %vm258, %v2867, 0
        %v2919 = vsel %vm258, %v2868, 0
        %v2922 = vsel %vm258, %v2869, 0
        %v2925 = vsel %vm258, %v2870, 0
        %v2928 = vsel %vm258, %v2871, 0
        %v2931 = vsel %vm258, %v2872, 0
        %v2934 = vsel %vm258, %v2873, 0
        %v2937 = vsel %vm258, %v2874, 0
        %v2940 = vsel %vm258, %v2875, 0
        %v2943 = vsel %vm258, %v2876, 0
        %v2946 = vsel %vm258, %v2877, 0
        %v2949 = vsel %vm258, %v2878, 0
        %v2952 = vsel %vm258, %v2879, 0
        %v2955 = vsel %vm258, %v2880, 0
        %v2958 = vsel %vm258, %v2881, 0
        %v2961 = vsel %vm258, %v2882, 0
        %v2964 = vsel %vm258, %v2883, 0
        %v2967 = vsel %vm258, %v2884, 0
        %v2970 = vsel %vm258, %v2885, 0
        %v2973 = vsel %vm258, %v2886, 0
        %v2976 = vsel %vm258, %v2887, 0
        %v2979 = vsel %vm258, %v2888, 0
        %v2982 = vsel %vm258, %v2889, 0
        %v2985 = vsel %vm258, %v2890, 0
        %v2988 = vsel %vm258, %v2891, 0
        %v2991 = vsel %vm355, %v2893, 0
        %2993 = vmatprep.subr.mxu0 0.0
        %2994 = vmatpush1.msra.mxu0 %v2991
        %2995 = vmatprep.subr.mxu0 0.0
        %2996 = vmatpush1.msra.mxu0 0.0
        %2997 = vmatprep.subr.mxu0 0.0
        %2998 = vmatpush1.msra.mxu0 0.0
        %2999 = vmatprep.subr.mxu0 0.0
        %3000 = vmatpush1.msra.mxu0 0.0
        %3001 = vmatprep.subr.mxu0 0.0
        %3002 = vmatpush1.msra.mxu0 0.0
        %3003 = vmatprep.subr.mxu0 0.0
        %3004 = vmatpush1.msra.mxu0 0.0
        %3005 = vmatprep.subr.mxu0 0.0
        %3006 = vmatpush1.msra.mxu0 0.0
        %3007 = vmatprep.subr.mxu0 0.0
        %3008 = vmatpush1.msra.mxu0 0.0
        %3009 = vmatprep.subr.mxu0 0.0
        %3010 = vmatpush1.msra.mxu0 0.0
        %3011 = vmatprep.subr.mxu0 0.0
        %3012 = vmatpush1.msra.mxu0 0.0
        %3013 = vmatprep.subr.mxu0 0.0
        %3014 = vmatpush1.msra.mxu0 0.0
        %3015 = vmatprep.subr.mxu0 0.0
        %3016 = vmatpush1.msra.mxu0 0.0
        %3017 = vmatprep.subr.mxu0 0.0
        %3018 = vmatpush1.msra.mxu0 0.0
        %3019 = vmatprep.subr.mxu0 0.0
        %3020 = vmatpush1.msra.mxu0 0.0
        %3021 = vmatprep.subr.mxu0 0.0
        %3022 = vmatpush1.msra.mxu0 0.0
        %3023 = vmatprep.subr.mxu0 0.0
        %3024 = vmatpush1.msra.mxu0 0.0
        %3025 = vmatprep.subr.mxu0 0.0
        %3026 = vmatpush1.msra.mxu0 0.0
        %3027 = vmatprep.subr.mxu0 0.0
        %3028 = vmatpush1.msra.mxu0 0.0
        %3029 = vmatprep.subr.mxu0 0.0
        %3030 = vmatpush1.msra.mxu0 0.0
        %3031 = vmatprep.subr.mxu0 0.0
        %3032 = vmatpush1.msra.mxu0 0.0
        %3033 = vmatprep.subr.mxu0 0.0
        %3034 = vmatpush1.msra.mxu0 0.0
        %3035 = vmatprep.subr.mxu0 0.0
        %3036 = vmatpush1.msra.mxu0 0.0
        %3037 = vmatprep.subr.mxu0 0.0
        %3038 = vmatpush1.msra.mxu0 0.0
        %3039 = vmatprep.subr.mxu0 0.0
        %3040 = vmatpush1.msra.mxu0 0.0
        %3041 = vmatprep.subr.mxu0 0.0
        %3042 = vmatpush1.msra.mxu0 0.0
        %3043 = vmatprep.subr.mxu0 0.0
        %3044 = vmatpush1.msra.mxu0 0.0
        %3045 = vmatprep.subr.mxu0 0.0
        %3046 = vmatpush1.msra.mxu0 0.0
        %3047 = vmatprep.subr.mxu0 0.0
        %3048 = vmatpush1.msra.mxu0 0.0
        %3049 = vmatprep.subr.mxu0 0.0
        %3050 = vmatpush1.msra.mxu0 0.0
        %3051 = vmatprep.subr.mxu0 0.0
        %3052 = vmatpush1.msra.mxu0 0.0
        %3053 = vmatprep.subr.mxu0 0.0
        %3054 = vmatpush1.msra.mxu0 0.0
        %3055 = vmatprep.subr.mxu0 0.0
        %3056 = vmatpush1.msra.mxu0 0.0
        %3057 = vmatprep.mubr.f32.mxu0 0.0
        %3058 = vmatmul.mubr.f32.gmra.mrb[0].mxu0 %v2895
        %v3059 = vpop.f32.mrb[0].mxu0
        %v3060 = vadd.f32 0.0, %v3059
        %v3061 = vpop.f32.mrb[0].mxu0
        %3062 = vmatprep.mubr.f32.mxu0 0.0
        %3063 = vmatmul.mubr.f32.gmra.mrb[0].mxu0 %v2898
        %v3064 = vpop.f32.mrb[0].mxu0
        %v3065 = vadd.f32 0.0, %v3064
        %v3066 = vpop.f32.mrb[0].mxu0
        %3067 = vmatprep.mubr.f32.mxu0 0.0
        %3068 = vmatmul.mubr.f32.gmra.mrb[0].mxu0 %v2901
        %v3069 = vpop.f32.mrb[0].mxu0
        %v3070 = vadd.f32 0.0, %v3069
        %v3071 = vpop.f32.mrb[0].mxu0
        %3072 = vmatprep.mubr.f32.mxu0 0.0
        %3073 = vmatmul.mubr.f32.gmra.mrb[0].mxu0 %v2904
        %v3074 = vpop.f32.mrb[0].mxu0
        %v3075 = vadd.f32 0.0, %v3074
        %v3076 = vpop.f32.mrb[0].mxu0
        %3077 = vmatprep.mubr.f32.mxu0 0.0
        %3078 = vmatmul.mubr.f32.gmra.mrb[0].mxu0 %v2907
        %v3079 = vpop.f32.mrb[0].mxu0
        %v3080 = vadd.f32 0.0, %v3079
        %v3081 = vpop.f32.mrb[0].mxu0
        %3082 = vmatprep.mubr.f32.mxu0 0.0
        %3083 = vmatmul.mubr.f32.gmra.mrb[0].mxu0 %v2910
        %v3084 = vpop.f32.mrb[0].mxu0
        %v3085 = vadd.f32 0.0, %v3084
        %v3086 = vpop.f32.mrb[0].mxu0
        %3087 = vmatprep.mubr.f32.mxu0 0.0
        %3088 = vmatmul.mubr.f32.gmra.mrb[0].mxu0 %v2913
        %v3089 = vpop.f32.mrb[0].mxu0
        %v3090 = vadd.f32 0.0, %v3089
        %v3091 = vpop.f32.mrb[0].mxu0
        %3092 = vmatprep.mubr.f32.mxu0 0.0
        %3093 = vmatmul.mubr.f32.gmra.mrb[0].mxu0 %v2916
        %v3094 = vpop.f32.mrb[0].mxu0
        %v3095 = vadd.f32 0.0, %v3094
        %v3096 = vpop.f32.mrb[0].mxu0
        %3097 = vmatprep.mubr.f32.mxu0 0.0
        %3098 = vmatmul.mubr.f32.gmra.mrb[0].mxu0 %v2919
        %v3099 = vpop.f32.mrb[0].mxu0
        %v3100 = vadd.f32 0.0, %v3099
        %v3101 = vpop.f32.mrb[0].mxu0
        %3102 = vmatprep.mubr.f32.mxu0 0.0
        %3103 = vmatmul.mubr.f32.gmra.mrb[0].mxu0 %v2922
        %v3104 = vpop.f32.mrb[0].mxu0
        %v3105 = vadd.f32 0.0, %v3104
        %v3106 = vpop.f32.mrb[0].mxu0
        %3107 = vmatprep.mubr.f32.mxu0 0.0
        %3108 = vmatmul.mubr.f32.gmra.mrb[0].mxu0 %v2925
        %v3109 = vpop.f32.mrb[0].mxu0
        %v3110 = vadd.f32 0.0, %v3109
        %v3111 = vpop.f32.mrb[0].mxu0
        %3112 = vmatprep.mubr.f32.mxu0 0.0
        %3113 = vmatmul.mubr.f32.gmra.mrb[0].mxu0 %v2928
        %v3114 = vpop.f32.mrb[0].mxu0
        %v3115 = vadd.f32 0.0, %v3114
        %v3116 = vpop.f32.mrb[0].mxu0
        %3117 = vmatprep.mubr.f32.mxu0 0.0
        %3118 = vmatmul.mubr.f32.gmra.mrb[0].mxu0 %v2931
        %v3119 = vpop.f32.mrb[0].mxu0
        %v3120 = vadd.f32 0.0, %v3119
        %v3121 = vpop.f32.mrb[0].mxu0
        %3122 = vmatprep.mubr.f32.mxu0 0.0
        %3123 = vmatmul.mubr.f32.gmra.mrb[0].mxu0 %v2934
        %v3124 = vpop.f32.mrb[0].mxu0
        %v3125 = vadd.f32 0.0, %v3124
        %v3126 = vpop.f32.mrb[0].mxu0
        %3127 = vmatprep.mubr.f32.mxu0 0.0
        %3128 = vmatmul.mubr.f32.gmra.mrb[0].mxu0 %v2937
        %v3129 = vpop.f32.mrb[0].mxu0
        %v3130 = vadd.f32 0.0, %v3129
        %v3131 = vpop.f32.mrb[0].mxu0
        %3132 = vmatprep.mubr.f32.mxu0 0.0
        %3133 = vmatmul.mubr.f32.gmra.mrb[0].mxu0 %v2940
        %v3134 = vpop.f32.mrb[0].mxu0
        %v3135 = vadd.f32 0.0, %v3134
        %v3136 = vpop.f32.mrb[0].mxu0
        %3137 = vmatprep.mubr.f32.mxu0 0.0
        %3138 = vmatmul.mubr.f32.gmra.mrb[0].mxu0 %v2943
        %v3139 = vpop.f32.mrb[0].mxu0
        %v3140 = vadd.f32 0.0, %v3139
        %v3141 = vpop.f32.mrb[0].mxu0
        %3142 = vmatprep.mubr.f32.mxu0 0.0
        %3143 = vmatmul.mubr.f32.gmra.mrb[0].mxu0 %v2946
        %v3144 = vpop.f32.mrb[0].mxu0
        %v3145 = vadd.f32 0.0, %v3144
        %v3146 = vpop.f32.mrb[0].mxu0
        %3147 = vmatprep.mubr.f32.mxu0 0.0
        %3148 = vmatmul.mubr.f32.gmra.mrb[0].mxu0 %v2949
        %v3149 = vpop.f32.mrb[0].mxu0
        %v3150 = vadd.f32 0.0, %v3149
        %v3151 = vpop.f32.mrb[0].mxu0
        %3152 = vmatprep.mubr.f32.mxu0 0.0
        %3153 = vmatmul.mubr.f32.gmra.mrb[0].mxu0 %v2952
        %v3154 = vpop.f32.mrb[0].mxu0
        %v3155 = vadd.f32 0.0, %v3154
        %v3156 = vpop.f32.mrb[0].mxu0
        %3157 = vmatprep.mubr.f32.mxu0 0.0
        %3158 = vmatmul.mubr.f32.gmra.mrb[0].mxu0 %v2955
        %v3159 = vpop.f32.mrb[0].mxu0
        %v3160 = vadd.f32 0.0, %v3159
        %v3161 = vpop.f32.mrb[0].mxu0
        %3162 = vmatprep.mubr.f32.mxu0 0.0
        %3163 = vmatmul.mubr.f32.gmra.mrb[0].mxu0 %v2958
        %v3164 = vpop.f32.mrb[0].mxu0
        %v3165 = vadd.f32 0.0, %v3164
        %v3166 = vpop.f32.mrb[0].mxu0
        %3167 = vmatprep.mubr.f32.mxu0 0.0
        %3168 = vmatmul.mubr.f32.gmra.mrb[0].mxu0 %v2961
        %v3169 = vpop.f32.mrb[0].mxu0
        %v3170 = vadd.f32 0.0, %v3169
        %v3171 = vpop.f32.mrb[0].mxu0
        %3172 = vmatprep.mubr.f32.mxu0 0.0
        %3173 = vmatmul.mubr.f32.gmra.mrb[0].mxu0 %v2964
        %v3174 = vpop.f32.mrb[0].mxu0
        %v3175 = vadd.f32 0.0, %v3174
        %v3176 = vpop.f32.mrb[0].mxu0
        %3177 = vmatprep.mubr.f32.mxu0 0.0
        %3178 = vmatmul.mubr.f32.gmra.mrb[0].mxu0 %v2967
        %v3179 = vpop.f32.mrb[0].mxu0
        %v3180 = vadd.f32 0.0, %v3179
        %v3181 = vpop.f32.mrb[0].mxu0
        %3182 = vmatprep.mubr.f32.mxu0 0.0
        %3183 = vmatmul.mubr.f32.gmra.mrb[0].mxu0 %v2970
        %v3184 = vpop.f32.mrb[0].mxu0
        %v3185 = vadd.f32 0.0, %v3184
        %v3186 = vpop.f32.mrb[0].mxu0
        %3187 = vmatprep.mubr.f32.mxu0 0.0
        %3188 = vmatmul.mubr.f32.gmra.mrb[0].mxu0 %v2973
        %v3189 = vpop.f32.mrb[0].mxu0
        %v3190 = vadd.f32 0.0, %v3189
        %v3191 = vpop.f32.mrb[0].mxu0
        %3192 = vmatprep.mubr.f32.mxu0 0.0
        %3193 = vmatmul.mubr.f32.gmra.mrb[0].mxu0 %v2976
        %v3194 = vpop.f32.mrb[0].mxu0
        %v3195 = vadd.f32 0.0, %v3194
        %v3196 = vpop.f32.mrb[0].mxu0
        %3197 = vmatprep.mubr.f32.mxu0 0.0
        %3198 = vmatmul.mubr.f32.gmra.mrb[0].mxu0 %v2979
        %v3199 = vpop.f32.mrb[0].mxu0
        %v3200 = vadd.f32 0.0, %v3199
        %v3201 = vpop.f32.mrb[0].mxu0
        %3202 = vmatprep.mubr.f32.mxu0 0.0
        %3203 = vmatmul.mubr.f32.gmra.mrb[0].mxu0 %v2982
        %v3204 = vpop.f32.mrb[0].mxu0
        %v3205 = vadd.f32 0.0, %v3204
        %v3206 = vpop.f32.mrb[0].mxu0
        %3207 = vmatprep.mubr.f32.mxu0 0.0
        %3208 = vmatmul.mubr.f32.gmra.mrb[0].mxu0 %v2985
        %v3209 = vpop.f32.mrb[0].mxu0
        %v3210 = vadd.f32 0.0, %v3209
        %v3211 = vpop.f32.mrb[0].mxu0
        %3212 = vmatprep.mubr.f32.mxu0 0.0
        %3213 = vmatmul.mubr.f32.gmra.mrb[0].mxu0 %v2988
        %v3214 = vpop.f32.mrb[0].mxu0
        %v3215 = vadd.f32 0.0, %v3214
        %v3216 = vpop.f32.mrb[0].mxu0
        %3217 = vdwg.mxu0
        %v3218 = vadd.f32 %v2828, %v3060
        %v3219 = vadd.f32 %v2829, %v3065
        %v3220 = vadd.f32 %v2830, %v3070
        %v3221 = vadd.f32 %v2831, %v3075
        %v3222 = vadd.f32 %v2832, %v3080
        %v3223 = vadd.f32 %v2833, %v3085
        %v3224 = vadd.f32 %v2834, %v3090
        %v3225 = vadd.f32 %v2835, %v3095
        %v3226 = vadd.f32 %v2836, %v3100
        %v3227 = vadd.f32 %v2837, %v3105
        %v3228 = vadd.f32 %v2838, %v3110
        %v3229 = vadd.f32 %v2839, %v3115
        %v3230 = vadd.f32 %v2840, %v3120
        %v3231 = vadd.f32 %v2841, %v3125
        %v3232 = vadd.f32 %v2842, %v3130
        %v3233 = vadd.f32 %v2843, %v3135
        %v3234 = vadd.f32 %v2844, %v3140
        %v3235 = vadd.f32 %v2845, %v3145
        %v3236 = vadd.f32 %v2846, %v3150
        %v3237 = vadd.f32 %v2847, %v3155
        %v3238 = vadd.f32 %v2848, %v3160
        %v3239 = vadd.f32 %v2849, %v3165
        %v3240 = vadd.f32 %v2850, %v3170
        %v3241 = vadd.f32 %v2851, %v3175
        %v3242 = vadd.f32 %v2852, %v3180
        %v3243 = vadd.f32 %v2853, %v3185
        %v3244 = vadd.f32 %v2854, %v3190
        %v3245 = vadd.f32 %v2855, %v3195
        %v3246 = vadd.f32 %v2856, %v3200
        %v3247 = vadd.f32 %v2857, %v3205
        %v3248 = vadd.f32 %v2858, %v3210
        %v3249 = vadd.f32 %v2859, %v3215
        %v3250 = vld [vmem:[%s2469 + $0x4] sm:$0xff]
        %v3251 = vld [vmem:[%s2469 + $0xc] sm:$0xff]
        %v3252 = vld [vmem:[%s2469 + $0x1c] sm:$0xff]
        %v3253 = vld [vmem:[%s2469 + $0x24] sm:$0xff]
        %v3254 = vld [vmem:[%s2469 + $0x34] sm:$0xff]
        %v3255 = vld [vmem:[%s2469 + $0x3c] sm:$0xff]
        %v3256 = vld [vmem:[%s2469 + $0x4c] sm:$0xff]
        %v3257 = vld [vmem:[%s2469 + $0x54] sm:$0xff]
        %v3258 = vld [vmem:[%s2469 + $0x64] sm:$0xff]
        %v3259 = vld [vmem:[%s2469 + $0x6c] sm:$0xff]
        %v3260 = vld [vmem:[%s2469 + $0x7c] sm:$0xff]
        %v3261 = vld [vmem:[%s2469 + $0x84] sm:$0xff]
        %v3262 = vld [vmem:[%s2469 + $0x94] sm:$0xff]
        %v3263 = vld [vmem:[%s2469 + $0x9c] sm:$0xff]
        %v3264 = vld [vmem:[%s2469 + $0xac] sm:$0xff]
        %v3265 = vld [vmem:[%s2469 + $0xb4] sm:$0xff]
        %v3266 = vld [vmem:[%s2469 + $0xc4] sm:$0xff]
        %v3267 = vld [vmem:[%s2469 + $0xcc] sm:$0xff]
        %v3268 = vld [vmem:[%s2469 + $0xdc] sm:$0xff]
        %v3269 = vld [vmem:[%s2469 + $0xe4] sm:$0xff]
        %v3270 = vld [vmem:[%s2469 + $0xf4] sm:$0xff]
        %v3271 = vld [vmem:[%s2469 + $0xfc] sm:$0xff]
        %v3272 = vld [vmem:[%s2469 + $0x10c] sm:$0xff]
        %v3273 = vld [vmem:[%s2469 + $0x114] sm:$0xff]
        %v3274 = vld [vmem:[%s2469 + $0x124] sm:$0xff]
        %v3275 = vld [vmem:[%s2469 + $0x12c] sm:$0xff]
        %v3276 = vld [vmem:[%s2469 + $0x13c] sm:$0xff]
        %v3277 = vld [vmem:[%s2469 + $0x144] sm:$0xff]
        %v3278 = vld [vmem:[%s2469 + $0x154] sm:$0xff]
        %v3279 = vld [vmem:[%s2469 + $0x15c] sm:$0xff]
        %v3280 = vld [vmem:[%s2469 + $0x16c] sm:$0xff]
        %v3281 = vld [vmem:[%s2469 + $0x174] sm:$0xff]
        %s3282 = scalar_lea.vmem [#allocation5], 32
        %v3283 = vld [vmem:[%s3282] sm:$0xf]
        %v3285 = vsel %vm258, %v3250, 0
        %v3288 = vsel %vm258, %v3251, 0
        %v3291 = vsel %vm258, %v3252, 0
        %v3294 = vsel %vm258, %v3253, 0
        %v3297 = vsel %vm258, %v3254, 0
        %v3300 = vsel %vm258, %v3255, 0
        %v3303 = vsel %vm258, %v3256, 0
        %v3306 = vsel %vm258, %v3257, 0
        %v3309 = vsel %vm258, %v3258, 0
        %v3312 = vsel %vm258, %v3259, 0
        %v3315 = vsel %vm258, %v3260, 0
        %v3318 = vsel %vm258, %v3261, 0
        %v3321 = vsel %vm258, %v3262, 0
        %v3324 = vsel %vm258, %v3263, 0
        %v3327 = vsel %vm258, %v3264, 0
        %v3330 = vsel %vm258, %v3265, 0
        %v3333 = vsel %vm258, %v3266, 0
        %v3336 = vsel %vm258, %v3267, 0
        %v3339 = vsel %vm258, %v3268, 0
        %v3342 = vsel %vm258, %v3269, 0
        %v3345 = vsel %vm258, %v3270, 0
        %v3348 = vsel %vm258, %v3271, 0
        %v3351 = vsel %vm258, %v3272, 0
        %v3354 = vsel %vm258, %v3273, 0
        %v3357 = vsel %vm258, %v3274, 0
        %v3360 = vsel %vm258, %v3275, 0
        %v3363 = vsel %vm258, %v3276, 0
        %v3366 = vsel %vm258, %v3277, 0
        %v3369 = vsel %vm258, %v3278, 0
        %v3372 = vsel %vm258, %v3279, 0
        %v3375 = vsel %vm258, %v3280, 0
        %v3378 = vsel %vm258, %v3281, 0
        %v3381 = vsel %vm355, %v3283, 0
        %3383 = vmatprep.subr.mxu0 0.0
        %3384 = vmatpush1.msra.mxu0 %v3381
        %3385 = vmatprep.subr.mxu0 0.0
        %3386 = vmatpush1.msra.mxu0 0.0
        %3387 = vmatprep.subr.mxu0 0.0
        %3388 = vmatpush1.msra.mxu0 0.0
        %3389 = vmatprep.subr.mxu0 0.0
        %3390 = vmatpush1.msra.mxu0 0.0
        %3391 = vmatprep.subr.mxu0 0.0
        %3392 = vmatpush1.msra.mxu0 0.0
        %3393 = vmatprep.subr.mxu0 0.0
        %3394 = vmatpush1.msra.mxu0 0.0
        %3395 = vmatprep.subr.mxu0 0.0
        %3396 = vmatpush1.msra.mxu0 0.0
        %3397 = vmatprep.subr.mxu0 0.0
        %3398 = vmatpush1.msra.mxu0 0.0
        %3399 = vmatprep.subr.mxu0 0.0
        %3400 = vmatpush1.msra.mxu0 0.0
        %3401 = vmatprep.subr.mxu0 0.0
        %3402 = vmatpush1.msra.mxu0 0.0
        %3403 = vmatprep.subr.mxu0 0.0
        %3404 = vmatpush1.msra.mxu0 0.0
        %3405 = vmatprep.subr.mxu0 0.0
        %3406 = vmatpush1.msra.mxu0 0.0
        %3407 = vmatprep.subr.mxu0 0.0
        %3408 = vmatpush1.msra.mxu0 0.0
        %3409 = vmatprep.subr.mxu0 0.0
        %3410 = vmatpush1.msra.mxu0 0.0
        %3411 = vmatprep.subr.mxu0 0.0
        %3412 = vmatpush1.msra.mxu0 0.0
        %3413 = vmatprep.subr.mxu0 0.0
        %3414 = vmatpush1.msra.mxu0 0.0
        %3415 = vmatprep.subr.mxu0 0.0
        %3416 = vmatpush1.msra.mxu0 0.0
        %3417 = vmatprep.subr.mxu0 0.0
        %3418 = vmatpush1.msra.mxu0 0.0
        %3419 = vmatprep.subr.mxu0 0.0
        %3420 = vmatpush1.msra.mxu0 0.0
        %3421 = vmatprep.subr.mxu0 0.0
        %3422 = vmatpush1.msra.mxu0 0.0
        %3423 = vmatprep.subr.mxu0 0.0
        %3424 = vmatpush1.msra.mxu0 0.0
        %3425 = vmatprep.subr.mxu0 0.0
        %3426 = vmatpush1.msra.mxu0 0.0
        %3427 = vmatprep.subr.mxu0 0.0
        %3428 = vmatpush1.msra.mxu0 0.0
        %3429 = vmatprep.subr.mxu0 0.0
        %3430 = vmatpush1.msra.mxu0 0.0
        %3431 = vmatprep.subr.mxu0 0.0
        %3432 = vmatpush1.msra.mxu0 0.0
        %3433 = vmatprep.subr.mxu0 0.0
        %3434 = vmatpush1.msra.mxu0 0.0
        %3435 = vmatprep.subr.mxu0 0.0
        %3436 = vmatpush1.msra.mxu0 0.0
        %3437 = vmatprep.subr.mxu0 0.0
        %3438 = vmatpush1.msra.mxu0 0.0
        %3439 = vmatprep.subr.mxu0 0.0
        %3440 = vmatpush1.msra.mxu0 0.0
        %3441 = vmatprep.subr.mxu0 0.0
        %3442 = vmatpush1.msra.mxu0 0.0
        %3443 = vmatprep.subr.mxu0 0.0
        %3444 = vmatpush1.msra.mxu0 0.0
        %3445 = vmatprep.subr.mxu0 0.0
        %3446 = vmatpush1.msra.mxu0 0.0
        %3447 = vmatprep.mubr.f32.mxu0 0.0
        %3448 = vmatmul.mubr.f32.gmra.mrb[0].mxu0 %v3285
        %v3449 = vpop.f32.mrb[0].mxu0
        %v3450 = vadd.f32 0.0, %v3449
        %v3451 = vpop.f32.mrb[0].mxu0
        %3452 = vmatprep.mubr.f32.mxu0 0.0
        %3453 = vmatmul.mubr.f32.gmra.mrb[0].mxu0 %v3288
        %v3454 = vpop.f32.mrb[0].mxu0
        %v3455 = vadd.f32 0.0, %v3454
        %v3456 = vpop.f32.mrb[0].mxu0
        %3457 = vmatprep.mubr.f32.mxu0 0.0
        %3458 = vmatmul.mubr.f32.gmra.mrb[0].mxu0 %v3291
        %v3459 = vpop.f32.mrb[0].mxu0
        %v3460 = vadd.f32 0.0, %v3459
        %v3461 = vpop.f32.mrb[0].mxu0
        %3462 = vmatprep.mubr.f32.mxu0 0.0
        %3463 = vmatmul.mubr.f32.gmra.mrb[0].mxu0 %v3294
        %v3464 = vpop.f32.mrb[0].mxu0
        %v3465 = vadd.f32 0.0, %v3464
        %v3466 = vpop.f32.mrb[0].mxu0
        %3467 = vmatprep.mubr.f32.mxu0 0.0
        %3468 = vmatmul.mubr.f32.gmra.mrb[0].mxu0 %v3297
        %v3469 = vpop.f32.mrb[0].mxu0
        %v3470 = vadd.f32 0.0, %v3469
        %v3471 = vpop.f32.mrb[0].mxu0
        %3472 = vmatprep.mubr.f32.mxu0 0.0
        %3473 = vmatmul.mubr.f32.gmra.mrb[0].mxu0 %v3300
        %v3474 = vpop.f32.mrb[0].mxu0
        %v3475 = vadd.f32 0.0, %v3474
        %v3476 = vpop.f32.mrb[0].mxu0
        %3477 = vmatprep.mubr.f32.mxu0 0.0
        %3478 = vmatmul.mubr.f32.gmra.mrb[0].mxu0 %v3303
        %v3479 = vpop.f32.mrb[0].mxu0
        %v3480 = vadd.f32 0.0, %v3479
        %v3481 = vpop.f32.mrb[0].mxu0
        %3482 = vmatprep.mubr.f32.mxu0 0.0
        %3483 = vmatmul.mubr.f32.gmra.mrb[0].mxu0 %v3306
        %v3484 = vpop.f32.mrb[0].mxu0
        %v3485 = vadd.f32 0.0, %v3484
        %v3486 = vpop.f32.mrb[0].mxu0
        %3487 = vmatprep.mubr.f32.mxu0 0.0
        %3488 = vmatmul.mubr.f32.gmra.mrb[0].mxu0 %v3309
        %v3489 = vpop.f32.mrb[0].mxu0
        %v3490 = vadd.f32 0.0, %v3489
        %v3491 = vpop.f32.mrb[0].mxu0
        %3492 = vmatprep.mubr.f32.mxu0 0.0
        %3493 = vmatmul.mubr.f32.gmra.mrb[0].mxu0 %v3312
        %v3494 = vpop.f32.mrb[0].mxu0
        %v3495 = vadd.f32 0.0, %v3494
        %v3496 = vpop.f32.mrb[0].mxu0
        %3497 = vmatprep.mubr.f32.mxu0 0.0
        %3498 = vmatmul.mubr.f32.gmra.mrb[0].mxu0 %v3315
        %v3499 = vpop.f32.mrb[0].mxu0
        %v3500 = vadd.f32 0.0, %v3499
        %v3501 = vpop.f32.mrb[0].mxu0
        %3502 = vmatprep.mubr.f32.mxu0 0.0
        %3503 = vmatmul.mubr.f32.gmra.mrb[0].mxu0 %v3318
        %v3504 = vpop.f32.mrb[0].mxu0
        %v3505 = vadd.f32 0.0, %v3504
        %v3506 = vpop.f32.mrb[0].mxu0
        %3507 = vmatprep.mubr.f32.mxu0 0.0
        %3508 = vmatmul.mubr.f32.gmra.mrb[0].mxu0 %v3321
        %v3509 = vpop.f32.mrb[0].mxu0
        %v3510 = vadd.f32 0.0, %v3509
        %v3511 = vpop.f32.mrb[0].mxu0
        %3512 = vmatprep.mubr.f32.mxu0 0.0
        %3513 = vmatmul.mubr.f32.gmra.mrb[0].mxu0 %v3324
        %v3514 = vpop.f32.mrb[0].mxu0
        %v3515 = vadd.f32 0.0, %v3514
        %v3516 = vpop.f32.mrb[0].mxu0
        %3517 = vmatprep.mubr.f32.mxu0 0.0
        %3518 = vmatmul.mubr.f32.gmra.mrb[0].mxu0 %v3327
        %v3519 = vpop.f32.mrb[0].mxu0
        %v3520 = vadd.f32 0.0, %v3519
        %v3521 = vpop.f32.mrb[0].mxu0
        %3522 = vmatprep.mubr.f32.mxu0 0.0
        %3523 = vmatmul.mubr.f32.gmra.mrb[0].mxu0 %v3330
        %v3524 = vpop.f32.mrb[0].mxu0
        %v3525 = vadd.f32 0.0, %v3524
        %v3526 = vpop.f32.mrb[0].mxu0
        %3527 = vmatprep.mubr.f32.mxu0 0.0
        %3528 = vmatmul.mubr.f32.gmra.mrb[0].mxu0 %v3333
        %v3529 = vpop.f32.mrb[0].mxu0
        %v3530 = vadd.f32 0.0, %v3529
        %v3531 = vpop.f32.mrb[0].mxu0
        %3532 = vmatprep.mubr.f32.mxu0 0.0
        %3533 = vmatmul.mubr.f32.gmra.mrb[0].mxu0 %v3336
        %v3534 = vpop.f32.mrb[0].mxu0
        %v3535 = vadd.f32 0.0, %v3534
        %v3536 = vpop.f32.mrb[0].mxu0
        %3537 = vmatprep.mubr.f32.mxu0 0.0
        %3538 = vmatmul.mubr.f32.gmra.mrb[0].mxu0 %v3339
        %v3539 = vpop.f32.mrb[0].mxu0
        %v3540 = vadd.f32 0.0, %v3539
        %v3541 = vpop.f32.mrb[0].mxu0
        %3542 = vmatprep.mubr.f32.mxu0 0.0
        %3543 = vmatmul.mubr.f32.gmra.mrb[0].mxu0 %v3342
        %v3544 = vpop.f32.mrb[0].mxu0
        %v3545 = vadd.f32 0.0, %v3544
        %v3546 = vpop.f32.mrb[0].mxu0
        %3547 = vmatprep.mubr.f32.mxu0 0.0
        %3548 = vmatmul.mubr.f32.gmra.mrb[0].mxu0 %v3345
        %v3549 = vpop.f32.mrb[0].mxu0
        %v3550 = vadd.f32 0.0, %v3549
        %v3551 = vpop.f32.mrb[0].mxu0
        %3552 = vmatprep.mubr.f32.mxu0 0.0
        %3553 = vmatmul.mubr.f32.gmra.mrb[0].mxu0 %v3348
        %v3554 = vpop.f32.mrb[0].mxu0
        %v3555 = vadd.f32 0.0, %v3554
        %v3556 = vpop.f32.mrb[0].mxu0
        %3557 = vmatprep.mubr.f32.mxu0 0.0
        %3558 = vmatmul.mubr.f32.gmra.mrb[0].mxu0 %v3351
        %v3559 = vpop.f32.mrb[0].mxu0
        %v3560 = vadd.f32 0.0, %v3559
        %v3561 = vpop.f32.mrb[0].mxu0
        %3562 = vmatprep.mubr.f32.mxu0 0.0
        %3563 = vmatmul.mubr.f32.gmra.mrb[0].mxu0 %v3354
        %v3564 = vpop.f32.mrb[0].mxu0
        %v3565 = vadd.f32 0.0, %v3564
        %v3566 = vpop.f32.mrb[0].mxu0
        %3567 = vmatprep.mubr.f32.mxu0 0.0
        %3568 = vmatmul.mubr.f32.gmra.mrb[0].mxu0 %v3357
        %v3569 = vpop.f32.mrb[0].mxu0
        %v3570 = vadd.f32 0.0, %v3569
        %v3571 = vpop.f32.mrb[0].mxu0
        %3572 = vmatprep.mubr.f32.mxu0 0.0
        %3573 = vmatmul.mubr.f32.gmra.mrb[0].mxu0 %v3360
        %v3574 = vpop.f32.mrb[0].mxu0
        %v3575 = vadd.f32 0.0, %v3574
        %v3576 = vpop.f32.mrb[0].mxu0
        %3577 = vmatprep.mubr.f32.mxu0 0.0
        %3578 = vmatmul.mubr.f32.gmra.mrb[0].mxu0 %v3363
        %v3579 = vpop.f32.mrb[0].mxu0
        %v3580 = vadd.f32 0.0, %v3579
        %v3581 = vpop.f32.mrb[0].mxu0
        %3582 = vmatprep.mubr.f32.mxu0 0.0
        %3583 = vmatmul.mubr.f32.gmra.mrb[0].mxu0 %v3366
        %v3584 = vpop.f32.mrb[0].mxu0
        %v3585 = vadd.f32 0.0, %v3584
        %v3586 = vpop.f32.mrb[0].mxu0
        %3587 = vmatprep.mubr.f32.mxu0 0.0
        %3588 = vmatmul.mubr.f32.gmra.mrb[0].mxu0 %v3369
        %v3589 = vpop.f32.mrb[0].mxu0
        %v3590 = vadd.f32 0.0, %v3589
        %v3591 = vpop.f32.mrb[0].mxu0
        %3592 = vmatprep.mubr.f32.mxu0 0.0
        %3593 = vmatmul.mubr.f32.gmra.mrb[0].mxu0 %v3372
        %v3594 = vpop.f32.mrb[0].mxu0
        %v3595 = vadd.f32 0.0, %v3594
        %v3596 = vpop.f32.mrb[0].mxu0
        %3597 = vmatprep.mubr.f32.mxu0 0.0
        %3598 = vmatmul.mubr.f32.gmra.mrb[0].mxu0 %v3375
        %v3599 = vpop.f32.mrb[0].mxu0
        %v3600 = vadd.f32 0.0, %v3599
        %v3601 = vpop.f32.mrb[0].mxu0
        %3602 = vmatprep.mubr.f32.mxu0 0.0
        %3603 = vmatmul.mubr.f32.gmra.mrb[0].mxu0 %v3378
        %v3604 = vpop.f32.mrb[0].mxu0
        %v3605 = vadd.f32 0.0, %v3604
        %v3606 = vpop.f32.mrb[0].mxu0
        %3607 = vdwg.mxu0
        %v3608 = vadd.f32 %v3218, %v3450
        %v3609 = vadd.f32 %v3219, %v3455
        %v3610 = vadd.f32 %v3220, %v3460
        %v3611 = vadd.f32 %v3221, %v3465
        %v3612 = vadd.f32 %v3222, %v3470
        %v3613 = vadd.f32 %v3223, %v3475
        %v3614 = vadd.f32 %v3224, %v3480
        %v3615 = vadd.f32 %v3225, %v3485
        %v3616 = vadd.f32 %v3226, %v3490
        %v3617 = vadd.f32 %v3227, %v3495
        %v3618 = vadd.f32 %v3228, %v3500
        %v3619 = vadd.f32 %v3229, %v3505
        %v3620 = vadd.f32 %v3230, %v3510
        %v3621 = vadd.f32 %v3231, %v3515
        %v3622 = vadd.f32 %v3232, %v3520
        %v3623 = vadd.f32 %v3233, %v3525
        %v3624 = vadd.f32 %v3234, %v3530
        %v3625 = vadd.f32 %v3235, %v3535
        %v3626 = vadd.f32 %v3236, %v3540
        %v3627 = vadd.f32 %v3237, %v3545
        %v3628 = vadd.f32 %v3238, %v3550
        %v3629 = vadd.f32 %v3239, %v3555
        %v3630 = vadd.f32 %v3240, %v3560
        %v3631 = vadd.f32 %v3241, %v3565
        %v3632 = vadd.f32 %v3242, %v3570
        %v3633 = vadd.f32 %v3243, %v3575
        %v3634 = vadd.f32 %v3244, %v3580
        %v3635 = vadd.f32 %v3245, %v3585
        %v3636 = vadd.f32 %v3246, %v3590
        %v3637 = vadd.f32 %v3247, %v3595
        %v3638 = vadd.f32 %v3248, %v3600
        %v3639 = vadd.f32 %v3249, %v3605
        %3640 = vmatprep.subr.mxu0 0.0
        %3641 = vmatpush1.msra.mxu0 %v3608
        %3642 = vmatprep.subr.mxu0 0.0
        %3643 = vmatpush1.msra.mxu0 %v3609
        %3644 = vmatprep.subr.mxu0 0.0
        %3645 = vmatpush1.msra.mxu0 %v3610
        %3646 = vmatprep.subr.mxu0 0.0
        %3647 = vmatpush1.msra.mxu0 %v3611
        %3648 = vmatprep.subr.mxu0 0.0
        %3649 = vmatpush1.msra.mxu0 %v3612
        %3650 = vmatprep.subr.mxu0 0.0
        %3651 = vmatpush1.msra.mxu0 %v3613
        %3652 = vmatprep.subr.mxu0 0.0
        %3653 = vmatpush1.msra.mxu0 %v3614
        %3654 = vmatprep.subr.mxu0 0.0
        %3655 = vmatpush1.msra.mxu0 %v3615
        %3656 = vmatprep.subr.mxu0 0.0
        %3657 = vmatpush1.msra.mxu0 %v3616
        %3658 = vmatprep.subr.mxu0 0.0
        %3659 = vmatpush1.msra.mxu0 %v3617
        %3660 = vmatprep.subr.mxu0 0.0
        %3661 = vmatpush1.msra.mxu0 %v3618
        %3662 = vmatprep.subr.mxu0 0.0
        %3663 = vmatpush1.msra.mxu0 %v3619
        %3664 = vmatprep.subr.mxu0 0.0
        %3665 = vmatpush1.msra.mxu0 %v3620
        %3666 = vmatprep.subr.mxu0 0.0
        %3667 = vmatpush1.msra.mxu0 %v3621
        %3668 = vmatprep.subr.mxu0 0.0
        %3669 = vmatpush1.msra.mxu0 %v3622
        %3670 = vmatprep.subr.mxu0 0.0
        %3671 = vmatpush1.msra.mxu0 %v3623
        %3672 = vmatprep.subr.mxu0 0.0
        %3673 = vmatpush1.msra.mxu0 %v3624
        %3674 = vmatprep.subr.mxu0 0.0
        %3675 = vmatpush1.msra.mxu0 %v3625
        %3676 = vmatprep.subr.mxu0 0.0
        %3677 = vmatpush1.msra.mxu0 %v3626
        %3678 = vmatprep.subr.mxu0 0.0
        %3679 = vmatpush1.msra.mxu0 %v3627
        %3680 = vmatprep.subr.mxu0 0.0
        %3681 = vmatpush1.msra.mxu0 %v3628
        %3682 = vmatprep.subr.mxu0 0.0
        %3683 = vmatpush1.msra.mxu0 %v3629
        %3684 = vmatprep.subr.mxu0 0.0
        %3685 = vmatpush1.msra.mxu0 %v3630
        %3686 = vmatprep.subr.mxu0 0.0
        %3687 = vmatpush1.msra.mxu0 %v3631
        %3688 = vmatprep.subr.mxu0 0.0
        %3689 = vmatpush1.msra.mxu0 %v3632
        %3690 = vmatprep.subr.mxu0 0.0
        %3691 = vmatpush1.msra.mxu0 %v3633
        %3692 = vmatprep.subr.mxu0 0.0
        %3693 = vmatpush1.msra.mxu0 %v3634
        %3694 = vmatprep.subr.mxu0 0.0
        %3695 = vmatpush1.msra.mxu0 %v3635
        %3696 = vmatprep.subr.mxu0 0.0
        %3697 = vmatpush1.msra.mxu0 %v3636
        %3698 = vmatprep.subr.mxu0 0.0
        %3699 = vmatpush1.msra.mxu0 %v3637
        %3700 = vmatprep.subr.mxu0 0.0
        %3701 = vmatpush1.msra.mxu0 %v3638
        %3702 = vmatprep.subr.mxu0 0.0
        %3703 = vmatpush1.msra.mxu0 %v3639
        %3704 = vmatprep.mubr.f32.mxu0 1.0
        %3705 = vmatmul.mubr.f32.gmra.mrb[0].mxu0 1.0
        %v3706 = vpop.f32.mrb[0].mxu0
        %v3707 = vadd.f32 0.0, %v3706
        %v3708 = vpop.f32.mrb[0].mxu0
        %3709 = vdwg.mxu0
        %v3710 = vmul.f32 %v3707, 0.00390625
        %v3711 = vlaneseq
        %v3712 = vshrl.u32 %v3711, 7
        %v3713 = vsub.s32 0, %v3712
        %v3714 = vrot.slane %v3710, %v3713
        %v3715 = vsub.f32 %v3608, %v3714
        %v3716 = vsub.f32 %v3609, %v3714
        %v3717 = vsub.f32 %v3610, %v3714
        %v3718 = vsub.f32 %v3611, %v3714
        %v3719 = vsub.f32 %v3612, %v3714
        %v3720 = vsub.f32 %v3613, %v3714
        %v3721 = vsub.f32 %v3614, %v3714
        %v3722 = vsub.f32 %v3615, %v3714
        %v3723 = vsub.f32 %v3616, %v3714
        %v3724 = vsub.f32 %v3617, %v3714
        %v3725 = vsub.f32 %v3618, %v3714
        %v3726 = vsub.f32 %v3619, %v3714
        %v3727 = vsub.f32 %v3620, %v3714
        %v3728 = vsub.f32 %v3621, %v3714
        %v3729 = vsub.f32 %v3622, %v3714
        %v3730 = vsub.f32 %v3623, %v3714
        %v3731 = vsub.f32 %v3624, %v3714
        %v3732 = vsub.f32 %v3625, %v3714
        %v3733 = vsub.f32 %v3626, %v3714
        %v3734 = vsub.f32 %v3627, %v3714
        %v3735 = vsub.f32 %v3628, %v3714
        %v3736 = vsub.f32 %v3629, %v3714
        %v3737 = vsub.f32 %v3630, %v3714
        %v3738 = vsub.f32 %v3631, %v3714
        %v3739 = vsub.f32 %v3632, %v3714
        %v3740 = vsub.f32 %v3633, %v3714
        %v3741 = vsub.f32 %v3634, %v3714
        %v3742 = vsub.f32 %v3635, %v3714
        %v3743 = vsub.f32 %v3636, %v3714
        %v3744 = vsub.f32 %v3637, %v3714
        %v3745 = vsub.f32 %v3638, %v3714
        %v3746 = vsub.f32 %v3639, %v3714
        %v3747 = vmul.f32 %v3715, %v3715
        %v3748 = vmul.f32 %v3716, %v3716
        %v3749 = vmul.f32 %v3717, %v3717
        %v3750 = vmul.f32 %v3718, %v3718
        %v3751 = vmul.f32 %v3719, %v3719
        %v3752 = vmul.f32 %v3720, %v3720
        %v3753 = vmul.f32 %v3721, %v3721
        %v3754 = vmul.f32 %v3722, %v3722
        %v3755 = vmul.f32 %v3723, %v3723
        %v3756 = vmul.f32 %v3724, %v3724
        %v3757 = vmul.f32 %v3725, %v3725
        %v3758 = vmul.f32 %v3726, %v3726
        %v3759 = vmul.f32 %v3727, %v3727
        %v3760 = vmul.f32 %v3728, %v3728
        %v3761 = vmul.f32 %v3729, %v3729
        %v3762 = vmul.f32 %v3730, %v3730
        %v3763 = vmul.f32 %v3731, %v3731
        %v3764 = vmul.f32 %v3732, %v3732
        %v3765 = vmul.f32 %v3733, %v3733
        %v3766 = vmul.f32 %v3734, %v3734
        %v3767 = vmul.f32 %v3735, %v3735
        %v3768 = vmul.f32 %v3736, %v3736
        %v3769 = vmul.f32 %v3737, %v3737
        %v3770 = vmul.f32 %v3738, %v3738
        %v3771 = vmul.f32 %v3739, %v3739
        %v3772 = vmul.f32 %v3740, %v3740
        %v3773 = vmul.f32 %v3741, %v3741
        %v3774 = vmul.f32 %v3742, %v3742
        %v3775 = vmul.f32 %v3743, %v3743
        %v3776 = vmul.f32 %v3744, %v3744
        %v3777 = vmul.f32 %v3745, %v3745
        %v3778 = vmul.f32 %v3746, %v3746
        %3779 = vmatprep.subr.mxu0 0.0
        %3780 = vmatpush1.msra.mxu0 %v3747
        %3781 = vmatprep.subr.mxu0 0.0
        %3782 = vmatpush1.msra.mxu0 %v3748
        %3783 = vmatprep.subr.mxu0 0.0
        %3784 = vmatpush1.msra.mxu0 %v3749
        %3785 = vmatprep.subr.mxu0 0.0
        %3786 = vmatpush1.msra.mxu0 %v3750
        %3787 = vmatprep.subr.mxu0 0.0
        %3788 = vmatpush1.msra.mxu0 %v3751
        %3789 = vmatprep.subr.mxu0 0.0
        %3790 = vmatpush1.msra.mxu0 %v3752
        %3791 = vmatprep.subr.mxu0 0.0
        %3792 = vmatpush1.msra.mxu0 %v3753
        %3793 = vmatprep.subr.mxu0 0.0
        %3794 = vmatpush1.msra.mxu0 %v3754
        %3795 = vmatprep.subr.mxu0 0.0
        %3796 = vmatpush1.msra.mxu0 %v3755
        %3797 = vmatprep.subr.mxu0 0.0
        %3798 = vmatpush1.msra.mxu0 %v3756
        %3799 = vmatprep.subr.mxu0 0.0
        %3800 = vmatpush1.msra.mxu0 %v3757
        %3801 = vmatprep.subr.mxu0 0.0
        %3802 = vmatpush1.msra.mxu0 %v3758
        %3803 = vmatprep.subr.mxu0 0.0
        %3804 = vmatpush1.msra.mxu0 %v3759
        %3805 = vmatprep.subr.mxu0 0.0
        %3806 = vmatpush1.msra.mxu0 %v3760
        %3807 = vmatprep.subr.mxu0 0.0
        %3808 = vmatpush1.msra.mxu0 %v3761
        %3809 = vmatprep.subr.mxu0 0.0
        %3810 = vmatpush1.msra.mxu0 %v3762
        %3811 = vmatprep.subr.mxu0 0.0
        %3812 = vmatpush1.msra.mxu0 %v3763
        %3813 = vmatprep.subr.mxu0 0.0
        %3814 = vmatpush1.msra.mxu0 %v3764
        %3815 = vmatprep.subr.mxu0 0.0
        %3816 = vmatpush1.msra.mxu0 %v3765
        %3817 = vmatprep.subr.mxu0 0.0
        %3818 = vmatpush1.msra.mxu0 %v3766
        %3819 = vmatprep.subr.mxu0 0.0
        %3820 = vmatpush1.msra.mxu0 %v3767
        %3821 = vmatprep.subr.mxu0 0.0
        %3822 = vmatpush1.msra.mxu0 %v3768
        %3823 = vmatprep.subr.mxu0 0.0
        %3824 = vmatpush1.msra.mxu0 %v3769
        %3825 = vmatprep.subr.mxu0 0.0
        %3826 = vmatpush1.msra.mxu0 %v3770
        %3827 = vmatprep.subr.mxu0 0.0
        %3828 = vmatpush1.msra.mxu0 %v3771
        %3829 = vmatprep.subr.mxu0 0.0
        %3830 = vmatpush1.msra.mxu0 %v3772
        %3831 = vmatprep.subr.mxu0 0.0
        %3832 = vmatpush1.msra.mxu0 %v3773
        %3833 = vmatprep.subr.mxu0 0.0
        %3834 = vmatpush1.msra.mxu0 %v3774
        %3835 = vmatprep.subr.mxu0 0.0
        %3836 = vmatpush1.msra.mxu0 %v3775
        %3837 = vmatprep.subr.mxu0 0.0
        %3838 = vmatpush1.msra.mxu0 %v3776
        %3839 = vmatprep.subr.mxu0 0.0
        %3840 = vmatpush1.msra.mxu0 %v3777
        %3841 = vmatprep.subr.mxu0 0.0
        %3842 = vmatpush1.msra.mxu0 %v3778
        %3843 = vmatprep.mubr.f32.mxu0 1.0
        %3844 = vmatmul.mubr.f32.gmra.mrb[0].mxu0 1.0
        %v3845 = vpop.f32.mrb[0].mxu0
        %v3846 = vadd.f32 0.0, %v3845
        %v3847 = vpop.f32.mrb[0].mxu0
        %3848 = vdwg.mxu0
        %v3850 = vrot.slane %v3846, 7
        %vm3852 = vcmask 1040384
        %v3853 = vsel %vm3852, %v3707, %v3850
        %vm3854 = vcmask 58368
        %3855 = vst.msk [vmem:[%s190] sm:$0x3] %vm3854, %v3853
        %s3856 = sand.u32 %s89, 1
        %s3857 = scalar_lea.sflag [#allocation4], %s3856
        %s3858 = sand.u32 %s89, 1
        %s3859 = smul.addr %s3858, 2
        %s3860 = scalar_lea.vmem [#allocation7], %s3859
        // Predicated region
        $region37: #{rebnconv_pallas.2} parent=27 // pred_check
          %p3861 = pneg %p99
        $region38: #{rebnconv_pallas.2} parent=27 // pred_check_branch
          %3863 = sbr.rel (%p3861) target = $region40
        $region39: #{rebnconv_pallas.2} parent=27 // pred_region
          %s3865 = ssub.s32 32, 32
          %3866 = vsyncadd %s3857, %s3865
          %s3867 = sadd.s32 %s25, %s24
          %s3868 = smul.addr %s3867, 32
          %s3869 = scalar_lea.hbm %s2, %s3868
          %s3871 = sshll.u32 %s3860, 4
          %s3872 = int_to_ptr.vmem [resolvable:$true] %s3871
          %3874 = dma.vmem_to_hbm [thread:$0]  %s3872, 32, %s3869, %s3857
        $region40: #{rebnconv_pallas.2} parent=27 // pred_fallthru
          _
      $region28: #{rebnconv_pallas.2} parent=5 // pred_fallthru
        _
      %p3875 = scmp.le.s32.totalorder 2, %s15
      // Predicated region
      $region41: #{rebnconv_pallas.2} parent=5 // pred_check
        %p3876 = pneg %p3875
      $region42: #{rebnconv_pallas.2} parent=5 // pred_check_branch
        %3878 = sbr.rel (%p3876) target = $region44
      $region43: #{rebnconv_pallas.2} parent=5 // pred_region
        %s3879 = ssub.s32 %s15, 2
        // Predicated region
        $region45: #{rebnconv_pallas.2} parent=43 // pred_check
          %p3880 = pneg %p105
        $region46: #{rebnconv_pallas.2} parent=43 // pred_check_branch
          %3882 = sbr.rel (%p3880) target = $region48
        $region47: #{rebnconv_pallas.2} parent=43 // pred_region
          %s3883 = sand.u32 %s90, 1
          %s3884 = scalar_lea.sflag [#allocation4], %s3883
          %s3885 = sand.u32 %s90, 1
          %s3886 = smul.addr %s3885, 2
          %s3887 = scalar_lea.vmem [#allocation7], %s3886
          %3888 = dma.done %s3884, 32
        $region48: #{rebnconv_pallas.2} parent=43 // pred_fallthru
          _
      $region44: #{rebnconv_pallas.2} parent=5 // pred_fallthru
        _
    $region6: #{rebnconv_pallas.2} parent=1 // loop_footer
      %s19 = sadd.s32 1, %s15
    $region7: #{rebnconv_pallas.2} parent=1 // loop_footer_branch
      %14 = sbr.rel target = $region3
    $region8: #{rebnconv_pallas.2} parent=1 // loop_exit
      _
    %3889 = vsyncpa [#allocation3], 1
    %s3890 = scalar_lea.sflag [#allocation3], 1
    %3891 = vsyncpa %s3890, 1
    %3892 = vsyncpa [#allocation6], 1
    %3893 = vsyncpa [#allocation4], 1
    %s3894 = scalar_lea.sflag [#allocation4], 1
    %3895 = vsyncpa %s3894, 1

// kernel: rebnconv_pallas.3
$region0: #{rebnconv_pallas.3}
  #allocation0 [shape = 'u32[]', space=smem, size = 0x4, offset = 0x4, fixed_abs, tag = 'smem constant byte address 0x4 - core index']
  #allocation1 [shape = 'u32[144,128]{1,0:T(1,128)}', space=vmem, size = 0x12000, scoped, tag = 'internal scratch']
  %s0 = inlined_call_operand.hbm [shape: f32[2,20,20,4], index: 0, kind: input, shape index: {}]
  %s1 = inlined_call_operand.hbm [shape: f32[9,4,8], index: 1, kind: input, shape index: {}]
  %s2 = inlined_call_operand.hbm [shape: f32[1,8], index: 2, kind: input, shape index: {}]
  %s3 = inlined_call_operand.hbm [shape: f32[1,8], index: 3, kind: input, shape index: {}]
  %s4 = inlined_call_operand.hbm [shape: f32[2,16,16,8], index: 4, kind: output, shape index: {}]
  %s5 = sld [smem:[#allocation0]]
  $region65: #{rebnconv_pallas.3} parent=0
    _
  %s7 = ssub.s32 1, %s5
  %s8 = scalar_select 0, %s7, %s5
  $region1: #{rebnconv_pallas.3} parent=0
    #allocation2 [shape = 'u8[491520]{0}', space=vmem, size = 0x78000, scoped, tag = 'input window, operand 0']
    #allocation3 [shape = 's32[2]{0}', space=sflag, size = 0x8, scoped, tag = 'scoped memory for rebnconv_pallas.3']
    #allocation4 [shape = 's32[2]{0}', space=sflag, size = 0x8, scoped, tag = 'scoped memory for rebnconv_pallas.3']
    #allocation5 [shape = 'u8[18432]{0}', space=vmem, size = 0x4800, scoped, tag = 'input window, operand 1, single buffered']
    #allocation6 [shape = 's32[1]{0}', space=sflag, size = 0x4, scoped, tag = 'scoped memory for rebnconv_pallas.3']
    #allocation7 [shape = 'u8[512]{0}', space=vmem, size = 0x400, scoped, tag = 'input window, operand 2, single buffered']
    #allocation8 [shape = 'u8[512]{0}', space=vmem, size = 0x400, scoped, tag = 'input window, operand 3, single buffered']
    #allocation9 [shape = 's32[1]{0}', space=sflag, size = 0x4, scoped, tag = 'scoped memory for rebnconv_pallas.3']
    #allocation10 [shape = 'u8[262144]{0}', space=vmem, size = 0x40000, scoped, tag = 'output window, operand 0']
    %9 = vsyncpa [#allocation3], 0
    %s10 = scalar_lea.sflag [#allocation3], 1
    %11 = vsyncpa %s10, 0
    %12 = vsyncpa [#allocation6], 0
    %13 = vsyncpa [#allocation9], 0
    %14 = vsyncpa [#allocation4], 0
    %s15 = scalar_lea.sflag [#allocation4], 1
    %16 = vsyncpa %s15, 0
    loop: start=0, step=1, limit=4
    $region2: #{rebnconv_pallas.3} parent=1 // loop_pre_header
      _
    $region3: #{rebnconv_pallas.3} parent=1 // loop_header
      %s18 = sphi 0, %s22
      %p19 = scmp.ge.s32.totalorder %s18, 4
      %s25 = sphi 0, %s37
      %s26 = sphi 0, %s33
      %s27 = sphi 0, %s25
      %s28 = sphi 0, %s26
      %s29 = sphi 0, %s27
      %s30 = sphi 0, %s28
      %s40 = sphi 0, %s42
      %s43 = sphi 0, %s40
      %s44 = sphi 0, %s43
      %s60 = sphi 0, %s44
      %s64 = sphi 0, %s64
      %s66 = sphi 0, %s64
      %s67 = sphi 0, %s66
      %s81 = sphi 0, %s67
      %s85 = sphi 0, %s85
      %s87 = sphi 0, %s85
      %s88 = sphi 0, %s87
      %s102 = sphi 0, %s88
      %s106 = sphi 0, %s106
      %s108 = sphi 0, %s106
      %s109 = sphi 0, %s108
      %s123 = sphi 0, %s109
      %s131 = sphi 0, %s133
      %s134 = sphi 0, %s131
      %s135 = sphi 0, %s134
      %s151 = sphi 0, %s135
    $region4: #{rebnconv_pallas.3} parent=1 // loop_header_branch
      %21 = sbr.rel (%p19) target = $region8
    $region5: #{rebnconv_pallas.3} parent=1 // loop_body
      %s23 = ssub.s32 %s18, 1
      %s24 = ssub.s32 %s18, 2
      %s31 = sadd.s32 1, %s26
      %p32 = scmp.ge.s32.totalorder %s31, 1
      %s33 = scalar_select %p32, 0, %s31
      %s34 = sadd.s32 1, %s25
      %s35 = scalar_select %p32, %s34, %s25
      %p36 = scmp.ge.s32.totalorder %s35, 2
      %s37 = scalar_select %p36, 0, %s35
      %s38 = ssub.s32 %s25, %s37
      %p39 = scmp.eq.s32.totalorder %s38, 0
      %s41 = sadd.s32 %s40, 1
      %s42 = scalar_select %p39, %s40, %s41
      %p45 = pneg %p39
      %p46 = scmp.eq.s32.totalorder %s18, 1
      %p47 = por %p45, %p46
      %p48 = scmp.ne.s32.totalorder %s40, %s43
      %p49 = scmp.eq.s32.totalorder %s18, 0
      %p50 = por %p48, %p49
      %p51 = scmp.ne.s32.totalorder %s40, %s43
      %p52 = scmp.eq.s32.totalorder %s23, 1
      %p53 = por %p51, %p52
      %p54 = scmp.ne.s32.totalorder %s43, %s44
      %p55 = scmp.eq.s32.totalorder %s23, 0
      %p56 = por %p54, %p55
      %p57 = scmp.ne.s32.totalorder %s43, %s44
      %p58 = scmp.eq.s32.totalorder %s24, 1
      %p59 = por %p57, %p58
      %p61 = scmp.ne.s32.totalorder %s44, %s60
      %p62 = scmp.eq.s32.totalorder %s24, 0
      %p63 = por %p61, %p62
      %s65 = sadd.s32 %s64, 1
      %p68 = scmp.eq.s32.totalorder %s18, 1
      %p69 = scmp.ne.s32.totalorder %s64, %s66
      %p70 = scmp.eq.s32.totalorder %s18, 0
      %p71 = por %p69, %p70
      %p72 = scmp.ne.s32.totalorder %s64, %s66
      %p73 = scmp.eq.s32.totalorder %s23, 1
      %p74 = por %p72, %p73
      %p75 = scmp.ne.s32.totalorder %s66, %s67
      %p76 = scmp.eq.s32.totalorder %s23, 0
      %p77 = por %p75, %p76
      %p78 = scmp.ne.s32.totalorder %s66, %s67
      %p79 = scmp.eq.s32.totalorder %s24, 1
      %p80 = por %p78, %p79
      %p82 = scmp.ne.s32.totalorder %s67, %s81
      %p83 = scmp.eq.s32.totalorder %s24, 0
      %p84 = por %p82, %p83
      %s86 = sadd.s32 %s85, 1
      %p89 = scmp.eq.s32.totalorder %s18, 1
      %p90 = scmp.ne.s32.totalorder %s85, %s87
      %p91 = scmp.eq.s32.totalorder %s18, 0
      %p92 = por %p90, %p91
      %p93 = scmp.ne.s32.totalorder %s85, %s87
      %p94 = scmp.eq.s32.totalorder %s23, 1
      %p95 = por %p93, %p94
      %p96 = scmp.ne.s32.totalorder %s87, %s88
      %p97 = scmp.eq.s32.totalorder %s23, 0
      %p98 = por %p96, %p97
      %p99 = scmp.ne.s32.totalorder %s87, %s88
      %p100 = scmp.eq.s32.totalorder %s24, 1
      %p101 = por %p99, %p100
      %p103 = scmp.ne.s32.totalorder %s88, %s102
      %p104 = scmp.eq.s32.totalorder %s24, 0
      %p105 = por %p103, %p104
      %s107 = sadd.s32 %s106, 1
      %p110 = scmp.eq.s32.totalorder %s18, 1
      %p111 = scmp.ne.s32.totalorder %s106, %s108
      %p112 = scmp.eq.s32.totalorder %s18, 0
      %p113 = por %p111, %p112
      %p114 = scmp.ne.s32.totalorder %s106, %s108
      %p115 = scmp.eq.s32.totalorder %s23, 1
      %p116 = por %p114, %p115
      %p117 = scmp.ne.s32.totalorder %s108, %s109
      %p118 = scmp.eq.s32.totalorder %s23, 0
      %p119 = por %p117, %p118
      %p120 = scmp.ne.s32.totalorder %s108, %s109
      %p121 = scmp.eq.s32.totalorder %s24, 1
      %p122 = por %p120, %p121
      %p124 = scmp.ne.s32.totalorder %s109, %s123
      %p125 = scmp.eq.s32.totalorder %s24, 0
      %p126 = por %p124, %p125
      %s127 = ssub.s32 %s25, %s37
      %s128 = ssub.s32 %s26, %s33
      %s129 = sor.u32 %s127, %s128
      %p130 = scmp.eq.s32.totalorder %s129, 0
      %s132 = sadd.s32 %s131, 1
      %s133 = scalar_select %p130, %s131, %s132
      %p136 = pneg %p130
      %p137 = scmp.eq.s32.totalorder %s18, 1
      %p138 = por %p136, %p137
      %p139 = scmp.ne.s32.totalorder %s131, %s134
      %p140 = scmp.eq.s32.totalorder %s18, 0
      %p141 = por %p139, %p140
      %p142 = scmp.ne.s32.totalorder %s131, %s134
      %p143 = scmp.eq.s32.totalorder %s23, 1
      %p144 = por %p142, %p143
      %p145 = scmp.ne.s32.totalorder %s134, %s135
      %p146 = scmp.eq.s32.totalorder %s23, 0
      %p147 = por %p145, %p146
      %p148 = scmp.ne.s32.totalorder %s134, %s135
      %p149 = scmp.eq.s32.totalorder %s24, 1
      %p150 = por %p148, %p149
      %p152 = scmp.ne.s32.totalorder %s135, %s151
      %p153 = scmp.eq.s32.totalorder %s24, 0
      %p154 = por %p152, %p153
      %p155 = scmp.le.s32.totalorder 1, %s18
      %p156 = scmp.lt.s32.totalorder %s18, 3
      %p157 = pnand %p155, %p156
      %p158 = pneg %p157
      // Predicated region
      $region9: #{rebnconv_pallas.3} parent=5 // pred_check
        _
      $region10: #{rebnconv_pallas.3} parent=5 // pred_check_branch
        %160 = sbr.rel (%p157) target = $region12
      $region11: #{rebnconv_pallas.3} parent=5 // pred_region
        %s161 = ssub.s32 %s18, 1
        // Predicated region
        $region13: #{rebnconv_pallas.3} parent=11 // pred_check
          %p162 = pneg %p77
        $region14: #{rebnconv_pallas.3} parent=11 // pred_check_branch
          %164 = sbr.rel (%p162) target = $region16
        $region15: #{rebnconv_pallas.3} parent=11 // pred_region
          %s166 = ssub.s32 576, 576
          %167 = vsyncadd [#allocation6], %s166
          %s168 = sshll.u32 [#allocation5], 4
          %s169 = int_to_ptr.vmem [resolvable:$true] %s168
          %174 = dma.hbm_to_vmem [thread:$0]  %s1, 576, %s169, [#allocation6], 64, 64, 4
        $region16: #{rebnconv_pallas.3} parent=11 // pred_fallthru
          _
        // Predicated region
        $region17: #{rebnconv_pallas.3} parent=11 // pred_check
          %p175 = pneg %p98
        $region18: #{rebnconv_pallas.3} parent=11 // pred_check_branch
          %177 = sbr.rel (%p175) target = $region20
        $region19: #{rebnconv_pallas.3} parent=11 // pred_region
          %s179 = ssub.s32 16, 16
          %180 = vsyncadd [#allocation6], %s179
          %s182 = sshll.u32 [#allocation7], 4
          %s183 = int_to_ptr.vmem [resolvable:$true] %s182
          %185 = dma.hbm_to_vmem [thread:$0]  %s2, 16, %s183, [#allocation6]
        $region20: #{rebnconv_pallas.3} parent=11 // pred_fallthru
          _
        // Predicated region
        $region21: #{rebnconv_pallas.3} parent=11 // pred_check
          %p186 = pneg %p119
        $region22: #{rebnconv_pallas.3} parent=11 // pred_check_branch
          %188 = sbr.rel (%p186) target = $region24
        $region23: #{rebnconv_pallas.3} parent=11 // pred_region
          %s190 = ssub.s32 16, 16
          %191 = vsyncadd [#allocation9], %s190
          %s193 = sshll.u32 [#allocation8], 4
          %s194 = int_to_ptr.vmem [resolvable:$true] %s193
          %196 = dma.hbm_to_vmem [thread:$0]  %s3, 16, %s194, [#allocation9]
        $region24: #{rebnconv_pallas.3} parent=11 // pred_fallthru
          _
      $region12: #{rebnconv_pallas.3} parent=5 // pred_fallthru
        _
      %p197 = scmp.lt.s32.totalorder %s18, 2
      // Predicated region
      $region25: #{rebnconv_pallas.3} parent=5 // pred_check
        %p198 = pneg %p197
      $region26: #{rebnconv_pallas.3} parent=5 // pred_check_branch
        %200 = sbr.rel (%p198) target = $region28
      $region27: #{rebnconv_pallas.3} parent=5 // pred_region
        // Predicated region
        $region29: #{rebnconv_pallas.3} parent=27 // pred_check
          %p201 = pneg %p50
        $region30: #{rebnconv_pallas.3} parent=27 // pred_check_branch
          %203 = sbr.rel (%p201) target = $region32
        $region31: #{rebnconv_pallas.3} parent=27 // pred_region
          %s204 = sand.u32 %s40, 1
          %s205 = scalar_lea.sflag [#allocation3], %s204
          %s206 = sand.u32 %s40, 1
          %s207 = smul.addr %s206, 480
          %s208 = scalar_lea.vmem [#allocation2], %s207
          %s210 = ssub.s32 7680, 7680
          %211 = vsyncadd %s205, %s210
          %s212 = smul.addr %s25, 60
          %s213 = smul.addr %s212, 128
          %s214 = scalar_lea.hbm %s0, %s213
          %s215 = sshll.u32 %s208, 4
          %s216 = int_to_ptr.vmem [resolvable:$true] %s215
          %221 = dma.hbm_to_vmem [thread:$0]  %s214, 7680, %s216, %s205, 128, 128, 8
        $region32: #{rebnconv_pallas.3} parent=27 // pred_fallthru
          _
      $region28: #{rebnconv_pallas.3} parent=5 // pred_fallthru
        _
      %p222 = scmp.le.s32.totalorder 1, %s18
      %p223 = scmp.lt.s32.totalorder %s18, 3
      %p224 = pnand %p222, %p223
      %p225 = pneg %p224
      // Predicated region
      $region33: #{rebnconv_pallas.3} parent=5 // pred_check
        _
      $region34: #{rebnconv_pallas.3} parent=5 // pred_check_branch
        %227 = sbr.rel (%p224) target = $region36
      $region35: #{rebnconv_pallas.3} parent=5 // pred_region
        %s228 = ssub.s32 %s18, 1
        %s229 = sand.u32 %s43, 1
        %s230 = scalar_lea.sflag [#allocation3], %s229
        %s231 = sand.u32 %s43, 1
        %s232 = smul.addr %s231, 480
        %s233 = scalar_lea.vmem [#allocation2], %s232
        // Predicated region
        $region37: #{rebnconv_pallas.3} parent=35 // pred_check
          %p234 = pneg %p56
        $region38: #{rebnconv_pallas.3} parent=35 // pred_check_branch
          %236 = sbr.rel (%p234) target = $region40
        $region39: #{rebnconv_pallas.3} parent=35 // pred_region
          %237 = dma.done %s230, 7680
        $region40: #{rebnconv_pallas.3} parent=35 // pred_fallthru
          _
        // Predicated region
        $region41: #{rebnconv_pallas.3} parent=35 // pred_check
          %p238 = pneg %p77
        $region42: #{rebnconv_pallas.3} parent=35 // pred_check_branch
          %240 = sbr.rel (%p238) target = $region44
        $region43: #{rebnconv_pallas.3} parent=35 // pred_region
          %241 = dma.done [#allocation6], 576
        $region44: #{rebnconv_pallas.3} parent=35 // pred_fallthru
          _
        // Predicated region
        $region45: #{rebnconv_pallas.3} parent=35 // pred_check
          %p242 = pneg %p98
        $region46: #{rebnconv_pallas.3} parent=35 // pred_check_branch
          %244 = sbr.rel (%p242) target = $region48
        $region47: #{rebnconv_pallas.3} parent=35 // pred_region
          %245 = dma.done [#allocation6], 16
        $region48: #{rebnconv_pallas.3} parent=35 // pred_fallthru
          _
        // Predicated region
        $region49: #{rebnconv_pallas.3} parent=35 // pred_check
          %p246 = pneg %p119
        $region50: #{rebnconv_pallas.3} parent=35 // pred_check_branch
          %248 = sbr.rel (%p246) target = $region52
        $region51: #{rebnconv_pallas.3} parent=35 // pred_region
          %249 = dma.done [#allocation9], 16
        $region52: #{rebnconv_pallas.3} parent=35 // pred_fallthru
          _
        %s250 = sand.u32 %s43, 1
        %s251 = scalar_lea.sflag [#allocation3], %s250
        %s252 = sand.u32 %s43, 1
        %s253 = smul.addr %s252, 480
        %s254 = scalar_lea.vmem [#allocation2], %s253
        %p255 = pneg %p56
        %p256 = pneg %p53
        %p257 = pneg %p77
        %p258 = pneg %p74
        %p259 = pneg %p98
        %p260 = pneg %p95
        %p261 = pneg %p119
        %p262 = pneg %p116
        %p263 = pneg %p147
        %p264 = pneg %p144
        %s265 = sand.u32 %s134, 1
        %s266 = scalar_lea.sflag [#allocation4], %s265
        %s267 = sand.u32 %s134, 1
        %s268 = smul.addr %s267, 256
        %s269 = scalar_lea.vmem [#allocation10], %s268
        %s270 = smul.u32 16, %s28
        %v271 = vld [vmem:[%s233] sm:$0xff]
        %v272 = vld [vmem:[%s233 + $0x8] sm:$0xff]
        %v273 = vld [vmem:[%s233 + $0x18] sm:$0xff]
        %v274 = vld [vmem:[%s233 + $0x20] sm:$0xff]
        %v275 = vld [vmem:[%s233 + $0x30] sm:$0xff]
        %v276 = vld [vmem:[%s233 + $0x38] sm:$0xff]
        %v277 = vld [vmem:[%s233 + $0x48] sm:$0xff]
        %v278 = vld [vmem:[%s233 + $0x50] sm:$0xff]
        %v279 = vld [vmem:[%s233 + $0x60] sm:$0xff]
        %v280 = vld [vmem:[%s233 + $0x68] sm:$0xff]
        %v281 = vld [vmem:[%s233 + $0x78] sm:$0xff]
        %v282 = vld [vmem:[%s233 + $0x80] sm:$0xff]
        %v283 = vld [vmem:[%s233 + $0x90] sm:$0xff]
        %v284 = vld [vmem:[%s233 + $0x98] sm:$0xff]
        %v285 = vld [vmem:[%s233 + $0xa8] sm:$0xff]
        %v286 = vld [vmem:[%s233 + $0xb0] sm:$0xff]
        %v287 = vld [vmem:[%s233 + $0xc0] sm:$0xff]
        %v288 = vld [vmem:[%s233 + $0xc8] sm:$0xff]
        %v289 = vld [vmem:[%s233 + $0xd8] sm:$0xff]
        %v290 = vld [vmem:[%s233 + $0xe0] sm:$0xff]
        %v291 = vld [vmem:[%s233 + $0xf0] sm:$0xff]
        %v292 = vld [vmem:[%s233 + $0xf8] sm:$0xff]
        %v293 = vld [vmem:[%s233 + $0x108] sm:$0xff]
        %v294 = vld [vmem:[%s233 + $0x110] sm:$0xff]
        %v295 = vld [vmem:[%s233 + $0x120] sm:$0xff]
        %v296 = vld [vmem:[%s233 + $0x128] sm:$0xff]
        %v297 = vld [vmem:[%s233 + $0x138] sm:$0xff]
        %v298 = vld [vmem:[%s233 + $0x140] sm:$0xff]
        %v299 = vld [vmem:[%s233 + $0x150] sm:$0xff]
        %v300 = vld [vmem:[%s233 + $0x158] sm:$0xff]
        %v301 = vld [vmem:[%s233 + $0x168] sm:$0xff]
        %v302 = vld [vmem:[%s233 + $0x170] sm:$0xff]
        %v303 = vld [vmem:[#allocation5] sm:$0xf]
        %v304 = vld [vmem:[%s233 + $0x2] sm:$0xff]
        %v305 = vld [vmem:[%s233 + $0xa] sm:$0xff]
        %v306 = vld [vmem:[%s233 + $0x1a] sm:$0xff]
        %v307 = vld [vmem:[%s233 + $0x22] sm:$0xff]
        %v308 = vld [vmem:[%s233 + $0x32] sm:$0xff]
        %v309 = vld [vmem:[%s233 + $0x3a] sm:$0xff]
        %v310 = vld [vmem:[%s233 + $0x4a] sm:$0xff]
        %v311 = vld [vmem:[%s233 + $0x52] sm:$0xff]
        %v312 = vld [vmem:[%s233 + $0x62] sm:$0xff]
        %v313 = vld [vmem:[%s233 + $0x6a] sm:$0xff]
        %v314 = vld [vmem:[%s233 + $0x7a] sm:$0xff]
        %v315 = vld [vmem:[%s233 + $0x82] sm:$0xff]
        %v316 = vld [vmem:[%s233 + $0x92] sm:$0xff]
        %v317 = vld [vmem:[%s233 + $0x9a] sm:$0xff]
        %v318 = vld [vmem:[%s233 + $0xaa] sm:$0xff]
        %v319 = vld [vmem:[%s233 + $0xb2] sm:$0xff]
        %v320 = vld [vmem:[%s233 + $0xc2] sm:$0xff]
        %v321 = vld [vmem:[%s233 + $0xca] sm:$0xff]
        %v322 = vld [vmem:[%s233 + $0xda] sm:$0xff]
        %v323 = vld [vmem:[%s233 + $0xe2] sm:$0xff]
        %v324 = vld [vmem:[%s233 + $0xf2] sm:$0xff]
        %v325 = vld [vmem:[%s233 + $0xfa] sm:$0xff]
        %v326 = vld [vmem:[%s233 + $0x10a] sm:$0xff]
        %v327 = vld [vmem:[%s233 + $0x112] sm:$0xff]
        %v328 = vld [vmem:[%s233 + $0x122] sm:$0xff]
        %v329 = vld [vmem:[%s233 + $0x12a] sm:$0xff]
        %v330 = vld [vmem:[%s233 + $0x13a] sm:$0xff]
        %v331 = vld [vmem:[%s233 + $0x142] sm:$0xff]
        %v332 = vld [vmem:[%s233 + $0x152] sm:$0xff]
        %v333 = vld [vmem:[%s233 + $0x15a] sm:$0xff]
        %v334 = vld [vmem:[%s233 + $0x16a] sm:$0xff]
        %v335 = vld [vmem:[%s233 + $0x172] sm:$0xff]
        %s336 = scalar_lea.vmem [#allocation5], 4
        %v337 = vld [vmem:[%s336] sm:$0xf]
        %vm338 = vcmask 31744
        %v340 = vsel %vm338, %v304, 0
        %v343 = vsel %vm338, %v305, 0
        %v346 = vsel %vm338, %v306, 0
        %v349 = vsel %vm338, %v307, 0
        %v352 = vsel %vm338, %v308, 0
        %v355 = vsel %vm338, %v309, 0
        %v358 = vsel %vm338, %v310, 0
        %v361 = vsel %vm338, %v311, 0
        %v364 = vsel %vm338, %v312, 0
        %v367 = vsel %vm338, %v313, 0
        %v370 = vsel %vm338, %v314, 0
        %v373 = vsel %vm338, %v315, 0
        %v376 = vsel %vm338, %v316, 0
        %v379 = vsel %vm338, %v317, 0
        %v382 = vsel %vm338, %v318, 0
        %v385 = vsel %vm338, %v319, 0
        %v388 = vsel %vm338, %v320, 0
        %v391 = vsel %vm338, %v321, 0
        %v394 = vsel %vm338, %v322, 0
        %v397 = vsel %vm338, %v323, 0
        %v400 = vsel %vm338, %v324, 0
        %v403 = vsel %vm338, %v325, 0
        %v406 = vsel %vm338, %v326, 0
        %v409 = vsel %vm338, %v327, 0
        %v412 = vsel %vm338, %v328, 0
        %v415 = vsel %vm338, %v329, 0
        %v418 = vsel %vm338, %v330, 0
        %v421 = vsel %vm338, %v331, 0
        %v424 = vsel %vm338, %v332, 0
        %v427 = vsel %vm338, %v333, 0
        %v430 = vsel %vm338, %v334, 0
        %v433 = vsel %vm338, %v335, 0
        %vm435 = vcmask 1043456
        %v437 = vsel %vm435, %v337, 0
        %439 = vmatprep.subr.mxu0 0.0
        %440 = vmatpush1.msra.mxu0 %v437
        %441 = vmatprep.subr.mxu0 0.0
        %442 = vmatpush1.msra.mxu0 0.0
        %443 = vmatprep.subr.mxu0 0.0
        %444 = vmatpush1.msra.mxu0 0.0
        %445 = vmatprep.subr.mxu0 0.0
        %446 = vmatpush1.msra.mxu0 0.0
        %447 = vmatprep.subr.mxu0 0.0
        %448 = vmatpush1.msra.mxu0 0.0
        %449 = vmatprep.subr.mxu0 0.0
        %450 = vmatpush1.msra.mxu0 0.0
        %451 = vmatprep.subr.mxu0 0.0
        %452 = vmatpush1.msra.mxu0 0.0
        %453 = vmatprep.subr.mxu0 0.0
        %454 = vmatpush1.msra.mxu0 0.0
        %455 = vmatprep.subr.mxu0 0.0
        %456 = vmatpush1.msra.mxu0 0.0
        %457 = vmatprep.subr.mxu0 0.0
        %458 = vmatpush1.msra.mxu0 0.0
        %459 = vmatprep.subr.mxu0 0.0
        %460 = vmatpush1.msra.mxu0 0.0
        %461 = vmatprep.subr.mxu0 0.0
        %462 = vmatpush1.msra.mxu0 0.0
        %463 = vmatprep.subr.mxu0 0.0
        %464 = vmatpush1.msra.mxu0 0.0
        %465 = vmatprep.subr.mxu0 0.0
        %466 = vmatpush1.msra.mxu0 0.0
        %467 = vmatprep.subr.mxu0 0.0
        %468 = vmatpush1.msra.mxu0 0.0
        %469 = vmatprep.subr.mxu0 0.0
        %470 = vmatpush1.msra.mxu0 0.0
        %471 = vmatprep.subr.mxu0 0.0
        %472 = vmatpush1.msra.mxu0 0.0
        %473 = vmatprep.subr.mxu0 0.0
        %474 = vmatpush1.msra.mxu0 0.0
        %475 = vmatprep.subr.mxu0 0.0
        %476 = vmatpush1.msra.mxu0 0.0
        %477 = vmatprep.subr.mxu0 0.0
        %478 = vmatpush1.msra.mxu0 0.0
        %479 = vmatprep.subr.mxu0 0.0
        %480 = vmatpush1.msra.mxu0 0.0
        %481 = vmatprep.subr.mxu0 0.0
        %482 = vmatpush1.msra.mxu0 0.0
        %483 = vmatprep.subr.mxu0 0.0
        %484 = vmatpush1.msra.mxu0 0.0
        %485 = vmatprep.subr.mxu0 0.0
        %486 = vmatpush1.msra.mxu0 0.0
        %487 = vmatprep.subr.mxu0 0.0
        %488 = vmatpush1.msra.mxu0 0.0
        %489 = vmatprep.subr.mxu0 0.0
        %490 = vmatpush1.msra.mxu0 0.0
        %491 = vmatprep.subr.mxu0 0.0
        %492 = vmatpush1.msra.mxu0 0.0
        %493 = vmatprep.subr.mxu0 0.0
        %494 = vmatpush1.msra.mxu0 0.0
        %495 = vmatprep.subr.mxu0 0.0
        %496 = vmatpush1.msra.mxu0 0.0
        %497 = vmatprep.subr.mxu0 0.0
        %498 = vmatpush1.msra.mxu0 0.0
        %499 = vmatprep.subr.mxu0 0.0
        %500 = vmatpush1.msra.mxu0 0.0
        %501 = vmatprep.subr.mxu0 0.0
        %502 = vmatpush1.msra.mxu0 0.0
        %503 = vmatprep.mubr.f32.mxu0 0.0
        %504 = vmatmul.mubr.f32.gmra.mrb[0].mxu0 %v340
        %v505 = vpop.f32.mrb[0].mxu0
        %v506 = vadd.f32 0.0, %v505
        %v507 = vpop.f32.mrb[0].mxu0
        %508 = vmatprep.mubr.f32.mxu0 0.0
        %509 = vmatmul.mubr.f32.gmra.mrb[0].mxu0 %v343
        %v510 = vpop.f32.mrb[0].mxu0
        %v511 = vadd.f32 0.0, %v510
        %v512 = vpop.f32.mrb[0].mxu0
        %513 = vmatprep.mubr.f32.mxu0 0.0
        %514 = vmatmul.mubr.f32.gmra.mrb[0].mxu0 %v346
        %v515 = vpop.f32.mrb[0].mxu0
        %v516 = vadd.f32 0.0, %v515
        %v517 = vpop.f32.mrb[0].mxu0
        %518 = vmatprep.mubr.f32.mxu0 0.0
        %519 = vmatmul.mubr.f32.gmra.mrb[0].mxu0 %v349
        %v520 = vpop.f32.mrb[0].mxu0
        %v521 = vadd.f32 0.0, %v520
        %v522 = vpop.f32.mrb[0].mxu0
        %523 = vmatprep.mubr.f32.mxu0 0.0
        %524 = vmatmul.mubr.f32.gmra.mrb[0].mxu0 %v352
        %v525 = vpop.f32.mrb[0].mxu0
        %v526 = vadd.f32 0.0, %v525
        %v527 = vpop.f32.mrb[0].mxu0
        %528 = vmatprep.mubr.f32.mxu0 0.0
        %529 = vmatmul.mubr.f32.gmra.mrb[0].mxu0 %v355
        %v530 = vpop.f32.mrb[0].mxu0
        %v531 = vadd.f32 0.0, %v530
        %v532 = vpop.f32.mrb[0].mxu0
        %533 = vmatprep.mubr.f32.mxu0 0.0
        %534 = vmatmul.mubr.f32.gmra.mrb[0].mxu0 %v358
        %v535 = vpop.f32.mrb[0].mxu0
        %v536 = vadd.f32 0.0, %v535
        %v537 = vpop.f32.mrb[0].mxu0
        %538 = vmatprep.mubr.f32.mxu0 0.0
        %539 = vmatmul.mubr.f32.gmra.mrb[0].mxu0 %v361
        %v540 = vpop.f32.mrb[0].mxu0
        %v541 = vadd.f32 0.0, %v540
        %v542 = vpop.f32.mrb[0].mxu0
        %543 = vmatprep.mubr.f32.mxu0 0.0
        %544 = vmatmul.mubr.f32.gmra.mrb[0].mxu0 %v364
        %v545 = vpop.f32.mrb[0].mxu0
        %v546 = vadd.f32 0.0, %v545
        %v547 = vpop.f32.mrb[0].mxu0
        %548 = vmatprep.mubr.f32.mxu0 0.0
        %549 = vmatmul.mubr.f32.gmra.mrb[0].mxu0 %v367
        %v550 = vpop.f32.mrb[0].mxu0
        %v551 = vadd.f32 0.0, %v550
        %v552 = vpop.f32.mrb[0].mxu0
        %553 = vmatprep.mubr.f32.mxu0 0.0
        %554 = vmatmul.mubr.f32.gmra.mrb[0].mxu0 %v370
        %v555 = vpop.f32.mrb[0].mxu0
        %v556 = vadd.f32 0.0, %v555
        %v557 = vpop.f32.mrb[0].mxu0
        %558 = vmatprep.mubr.f32.mxu0 0.0
        %559 = vmatmul.mubr.f32.gmra.mrb[0].mxu0 %v373
        %v560 = vpop.f32.mrb[0].mxu0
        %v561 = vadd.f32 0.0, %v560
        %v562 = vpop.f32.mrb[0].mxu0
        %563 = vmatprep.mubr.f32.mxu0 0.0
        %564 = vmatmul.mubr.f32.gmra.mrb[0].mxu0 %v376
        %v565 = vpop.f32.mrb[0].mxu0
        %v566 = vadd.f32 0.0, %v565
        %v567 = vpop.f32.mrb[0].mxu0
        %568 = vmatprep.mubr.f32.mxu0 0.0
        %569 = vmatmul.mubr.f32.gmra.mrb[0].mxu0 %v379
        %v570 = vpop.f32.mrb[0].mxu0
        %v571 = vadd.f32 0.0, %v570
        %v572 = vpop.f32.mrb[0].mxu0
        %573 = vmatprep.mubr.f32.mxu0 0.0
        %574 = vmatmul.mubr.f32.gmra.mrb[0].mxu0 %v382
        %v575 = vpop.f32.mrb[0].mxu0
        %v576 = vadd.f32 0.0, %v575
        %v577 = vpop.f32.mrb[0].mxu0
        %578 = vmatprep.mubr.f32.mxu0 0.0
        %579 = vmatmul.mubr.f32.gmra.mrb[0].mxu0 %v385
        %v580 = vpop.f32.mrb[0].mxu0
        %v581 = vadd.f32 0.0, %v580
        %v582 = vpop.f32.mrb[0].mxu0
        %583 = vmatprep.mubr.f32.mxu0 0.0
        %584 = vmatmul.mubr.f32.gmra.mrb[0].mxu0 %v388
        %v585 = vpop.f32.mrb[0].mxu0
        %v586 = vadd.f32 0.0, %v585
        %v587 = vpop.f32.mrb[0].mxu0
        %588 = vmatprep.mubr.f32.mxu0 0.0
        %589 = vmatmul.mubr.f32.gmra.mrb[0].mxu0 %v391
        %v590 = vpop.f32.mrb[0].mxu0
        %v591 = vadd.f32 0.0, %v590
        %v592 = vpop.f32.mrb[0].mxu0
        %593 = vmatprep.mubr.f32.mxu0 0.0
        %594 = vmatmul.mubr.f32.gmra.mrb[0].mxu0 %v394
        %v595 = vpop.f32.mrb[0].mxu0
        %v596 = vadd.f32 0.0, %v595
        %v597 = vpop.f32.mrb[0].mxu0
        %598 = vmatprep.mubr.f32.mxu0 0.0
        %599 = vmatmul.mubr.f32.gmra.mrb[0].mxu0 %v397
        %v600 = vpop.f32.mrb[0].mxu0
        %v601 = vadd.f32 0.0, %v600
        %v602 = vpop.f32.mrb[0].mxu0
        %603 = vmatprep.mubr.f32.mxu0 0.0
        %604 = vmatmul.mubr.f32.gmra.mrb[0].mxu0 %v400
        %v605 = vpop.f32.mrb[0].mxu0
        %v606 = vadd.f32 0.0, %v605
        %v607 = vpop.f32.mrb[0].mxu0
        %608 = vmatprep.mubr.f32.mxu0 0.0
        %609 = vmatmul.mubr.f32.gmra.mrb[0].mxu0 %v403
        %v610 = vpop.f32.mrb[0].mxu0
        %v611 = vadd.f32 0.0, %v610
        %v612 = vpop.f32.mrb[0].mxu0
        %613 = vmatprep.mubr.f32.mxu0 0.0
        %614 = vmatmul.mubr.f32.gmra.mrb[0].mxu0 %v406
        %v615 = vpop.f32.mrb[0].mxu0
        %v616 = vadd.f32 0.0, %v615
        %v617 = vpop.f32.mrb[0].mxu0
        %618 = vmatprep.mubr.f32.mxu0 0.0
        %619 = vmatmul.mubr.f32.gmra.mrb[0].mxu0 %v409
        %v620 = vpop.f32.mrb[0].mxu0
        %v621 = vadd.f32 0.0, %v620
        %v622 = vpop.f32.mrb[0].mxu0
        %623 = vmatprep.mubr.f32.mxu0 0.0
        %624 = vmatmul.mubr.f32.gmra.mrb[0].mxu0 %v412
        %v625 = vpop.f32.mrb[0].mxu0
        %v626 = vadd.f32 0.0, %v625
        %v627 = vpop.f32.mrb[0].mxu0
        %628 = vmatprep.mubr.f32.mxu0 0.0
        %629 = vmatmul.mubr.f32.gmra.mrb[0].mxu0 %v415
        %v630 = vpop.f32.mrb[0].mxu0
        %v631 = vadd.f32 0.0, %v630
        %v632 = vpop.f32.mrb[0].mxu0
        %633 = vmatprep.mubr.f32.mxu0 0.0
        %634 = vmatmul.mubr.f32.gmra.mrb[0].mxu0 %v418
        %v635 = vpop.f32.mrb[0].mxu0
        %v636 = vadd.f32 0.0, %v635
        %v637 = vpop.f32.mrb[0].mxu0
        %638 = vmatprep.mubr.f32.mxu0 0.0
        %639 = vmatmul.mubr.f32.gmra.mrb[0].mxu0 %v421
        %v640 = vpop.f32.mrb[0].mxu0
        %v641 = vadd.f32 0.0, %v640
        %v642 = vpop.f32.mrb[0].mxu0
        %643 = vmatprep.mubr.f32.mxu0 0.0
        %644 = vmatmul.mubr.f32.gmra.mrb[0].mxu0 %v424
        %v645 = vpop.f32.mrb[0].mxu0
        %v646 = vadd.f32 0.0, %v645
        %v647 = vpop.f32.mrb[0].mxu0
        %648 = vmatprep.mubr.f32.mxu0 0.0
        %649 = vmatmul.mubr.f32.gmra.mrb[0].mxu0 %v427
        %v650 = vpop.f32.mrb[0].mxu0
        %v651 = vadd.f32 0.0, %v650
        %v652 = vpop.f32.mrb[0].mxu0
        %653 = vmatprep.mubr.f32.mxu0 0.0
        %654 = vmatmul.mubr.f32.gmra.mrb[0].mxu0 %v430
        %v655 = vpop.f32.mrb[0].mxu0
        %v656 = vadd.f32 0.0, %v655
        %v657 = vpop.f32.mrb[0].mxu0
        %658 = vmatprep.mubr.f32.mxu0 0.0
        %659 = vmatmul.mubr.f32.gmra.mrb[0].mxu0 %v433
        %v660 = vpop.f32.mrb[0].mxu0
        %v661 = vadd.f32 0.0, %v660
        %v662 = vpop.f32.mrb[0].mxu0
        %663 = vdwg.mxu0
        %v665 = vsel %vm338, %v271, 0
        %v668 = vsel %vm338, %v272, 0
        %v671 = vsel %vm338, %v273, 0
        %v674 = vsel %vm338, %v274, 0
        %v677 = vsel %vm338, %v275, 0
        %v680 = vsel %vm338, %v276, 0
        %v683 = vsel %vm338, %v277, 0
        %v686 = vsel %vm338, %v278, 0
        %v689 = vsel %vm338, %v279, 0
        %v692 = vsel %vm338, %v280, 0
        %v695 = vsel %vm338, %v281, 0
        %v698 = vsel %vm338, %v282, 0
        %v701 = vsel %vm338, %v283, 0
        %v704 = vsel %vm338, %v284, 0
        %v707 = vsel %vm338, %v285, 0
        %v710 = vsel %vm338, %v286, 0
        %v713 = vsel %vm338, %v287, 0
        %v716 = vsel %vm338, %v288, 0
        %v719 = vsel %vm338, %v289, 0
        %v722 = vsel %vm338, %v290, 0
        %v725 = vsel %vm338, %v291, 0
        %v728 = vsel %vm338, %v292, 0
        %v731 = vsel %vm338, %v293, 0
        %v734 = vsel %vm338, %v294, 0
        %v737 = vsel %vm338, %v295, 0
        %v740 = vsel %vm338, %v296, 0
        %v743 = vsel %vm338, %v297, 0
        %v746 = vsel %vm338, %v298, 0
        %v749 = vsel %vm338, %v299, 0
        %v752 = vsel %vm338, %v300, 0
        %v755 = vsel %vm338, %v301, 0
        %v758 = vsel %vm338, %v302, 0
        %v761 = vsel %vm435, %v303, 0
        %763 = vmatprep.subr.mxu0 0.0
        %764 = vmatpush1.msra.mxu0 %v761
        %765 = vmatprep.subr.mxu0 0.0
        %766 = vmatpush1.msra.mxu0 0.0
        %767 = vmatprep.subr.mxu0 0.0
        %768 = vmatpush1.msra.mxu0 0.0
        %769 = vmatprep.subr.mxu0 0.0
        %770 = vmatpush1.msra.mxu0 0.0
        %771 = vmatprep.subr.mxu0 0.0
        %772 = vmatpush1.msra.mxu0 0.0
        %773 = vmatprep.subr.mxu0 0.0
        %774 = vmatpush1.msra.mxu0 0.0
        %775 = vmatprep.subr.mxu0 0.0
        %776 = vmatpush1.msra.mxu0 0.0
        %777 = vmatprep.subr.mxu0 0.0
        %778 = vmatpush1.msra.mxu0 0.0
        %779 = vmatprep.subr.mxu0 0.0
        %780 = vmatpush1.msra.mxu0 0.0
        %781 = vmatprep.subr.mxu0 0.0
        %782 = vmatpush1.msra.mxu0 0.0
        %783 = vmatprep.subr.mxu0 0.0
        %784 = vmatpush1.msra.mxu0 0.0
        %785 = vmatprep.subr.mxu0 0.0
        %786 = vmatpush1.msra.mxu0 0.0
        %787 = vmatprep.subr.mxu0 0.0
        %788 = vmatpush1.msra.mxu0 0.0
        %789 = vmatprep.subr.mxu0 0.0
        %790 = vmatpush1.msra.mxu0 0.0
        %791 = vmatprep.subr.mxu0 0.0
        %792 = vmatpush1.msra.mxu0 0.0
        %793 = vmatprep.subr.mxu0 0.0
        %794 = vmatpush1.msra.mxu0 0.0
        %795 = vmatprep.subr.mxu0 0.0
        %796 = vmatpush1.msra.mxu0 0.0
        %797 = vmatprep.subr.mxu0 0.0
        %798 = vmatpush1.msra.mxu0 0.0
        %799 = vmatprep.subr.mxu0 0.0
        %800 = vmatpush1.msra.mxu0 0.0
        %801 = vmatprep.subr.mxu0 0.0
        %802 = vmatpush1.msra.mxu0 0.0
        %803 = vmatprep.subr.mxu0 0.0
        %804 = vmatpush1.msra.mxu0 0.0
        %805 = vmatprep.subr.mxu0 0.0
        %806 = vmatpush1.msra.mxu0 0.0
        %807 = vmatprep.subr.mxu0 0.0
        %808 = vmatpush1.msra.mxu0 0.0
        %809 = vmatprep.subr.mxu0 0.0
        %810 = vmatpush1.msra.mxu0 0.0
        %811 = vmatprep.subr.mxu0 0.0
        %812 = vmatpush1.msra.mxu0 0.0
        %813 = vmatprep.subr.mxu0 0.0
        %814 = vmatpush1.msra.mxu0 0.0
        %815 = vmatprep.subr.mxu0 0.0
        %816 = vmatpush1.msra.mxu0 0.0
        %817 = vmatprep.subr.mxu0 0.0
        %818 = vmatpush1.msra.mxu0 0.0
        %819 = vmatprep.subr.mxu0 0.0
        %820 = vmatpush1.msra.mxu0 0.0
        %821 = vmatprep.subr.mxu0 0.0
        %822 = vmatpush1.msra.mxu0 0.0
        %823 = vmatprep.subr.mxu0 0.0
        %824 = vmatpush1.msra.mxu0 0.0
        %825 = vmatprep.subr.mxu0 0.0
        %826 = vmatpush1.msra.mxu0 0.0
        %827 = vmatprep.mubr.f32.mxu0 0.0
        %828 = vmatmul.mubr.f32.gmra.mrb[0].mxu0 %v665
        %v829 = vpop.f32.mrb[0].mxu0
        %v830 = vadd.f32 %v506, %v829
        %v831 = vpop.f32.mrb[0].mxu0
        %832 = vmatprep.mubr.f32.mxu0 0.0
        %833 = vmatmul.mubr.f32.gmra.mrb[0].mxu0 %v668
        %v834 = vpop.f32.mrb[0].mxu0
        %v835 = vadd.f32 %v511, %v834
        %v836 = vpop.f32.mrb[0].mxu0
        %837 = vmatprep.mubr.f32.mxu0 0.0
        %838 = vmatmul.mubr.f32.gmra.mrb[0].mxu0 %v671
        %v839 = vpop.f32.mrb[0].mxu0
        %v840 = vadd.f32 %v516, %v839
        %v841 = vpop.f32.mrb[0].mxu0
        %842 = vmatprep.mubr.f32.mxu0 0.0
        %843 = vmatmul.mubr.f32.gmra.mrb[0].mxu0 %v674
        %v844 = vpop.f32.mrb[0].mxu0
        %v845 = vadd.f32 %v521, %v844
        %v846 = vpop.f32.mrb[0].mxu0
        %847 = vmatprep.mubr.f32.mxu0 0.0
        %848 = vmatmul.mubr.f32.gmra.mrb[0].mxu0 %v677
        %v849 = vpop.f32.mrb[0].mxu0
        %v850 = vadd.f32 %v526, %v849
        %v851 = vpop.f32.mrb[0].mxu0
        %852 = vmatprep.mubr.f32.mxu0 0.0
        %853 = vmatmul.mubr.f32.gmra.mrb[0].mxu0 %v680
        %v854 = vpop.f32.mrb[0].mxu0
        %v855 = vadd.f32 %v531, %v854
        %v856 = vpop.f32.mrb[0].mxu0
        %857 = vmatprep.mubr.f32.mxu0 0.0
        %858 = vmatmul.mubr.f32.gmra.mrb[0].mxu0 %v683
        %v859 = vpop.f32.mrb[0].mxu0
        %v860 = vadd.f32 %v536, %v859
        %v861 = vpop.f32.mrb[0].mxu0
        %862 = vmatprep.mubr.f32.mxu0 0.0
        %863 = vmatmul.mubr.f32.gmra.mrb[0].mxu0 %v686
        %v864 = vpop.f32.mrb[0].mxu0
        %v865 = vadd.f32 %v541, %v864
        %v866 = vpop.f32.mrb[0].mxu0
        %867 = vmatprep.mubr.f32.mxu0 0.0
        %868 = vmatmul.mubr.f32.gmra.mrb[0].mxu0 %v689
        %v869 = vpop.f32.mrb[0].mxu0
        %v870 = vadd.f32 %v546, %v869
        %v871 = vpop.f32.mrb[0].mxu0
        %872 = vmatprep.mubr.f32.mxu0 0.0
        %873 = vmatmul.mubr.f32.gmra.mrb[0].mxu0 %v692
        %v874 = vpop.f32.mrb[0].mxu0
        %v875 = vadd.f32 %v551, %v874
        %v876 = vpop.f32.mrb[0].mxu0
        %877 = vmatprep.mubr.f32.mxu0 0.0
        %878 = vmatmul.mubr.f32.gmra.mrb[0].mxu0 %v695
        %v879 = vpop.f32.mrb[0].mxu0
        %v880 = vadd.f32 %v556, %v879
        %v881 = vpop.f32.mrb[0].mxu0
        %882 = vmatprep.mubr.f32.mxu0 0.0
        %883 = vmatmul.mubr.f32.gmra.mrb[0].mxu0 %v698
        %v884 = vpop.f32.mrb[0].mxu0
        %v885 = vadd.f32 %v561, %v884
        %v886 = vpop.f32.mrb[0].mxu0
        %887 = vmatprep.mubr.f32.mxu0 0.0
        %888 = vmatmul.mubr.f32.gmra.mrb[0].mxu0 %v701
        %v889 = vpop.f32.mrb[0].mxu0
        %v890 = vadd.f32 %v566, %v889
        %v891 = vpop.f32.mrb[0].mxu0
        %892 = vmatprep.mubr.f32.mxu0 0.0
        %893 = vmatmul.mubr.f32.gmra.mrb[0].mxu0 %v704
        %v894 = vpop.f32.mrb[0].mxu0
        %v895 = vadd.f32 %v571, %v894
        %v896 = vpop.f32.mrb[0].mxu0
        %897 = vmatprep.mubr.f32.mxu0 0.0
        %898 = vmatmul.mubr.f32.gmra.mrb[0].mxu0 %v707
        %v899 = vpop.f32.mrb[0].mxu0
        %v900 = vadd.f32 %v576, %v899
        %v901 = vpop.f32.mrb[0].mxu0
        %902 = vmatprep.mubr.f32.mxu0 0.0
        %903 = vmatmul.mubr.f32.gmra.mrb[0].mxu0 %v710
        %v904 = vpop.f32.mrb[0].mxu0
        %v905 = vadd.f32 %v581, %v904
        %v906 = vpop.f32.mrb[0].mxu0
        %907 = vmatprep.mubr.f32.mxu0 0.0
        %908 = vmatmul.mubr.f32.gmra.mrb[0].mxu0 %v713
        %v909 = vpop.f32.mrb[0].mxu0
        %v910 = vadd.f32 %v586, %v909
        %v911 = vpop.f32.mrb[0].mxu0
        %912 = vmatprep.mubr.f32.mxu0 0.0
        %913 = vmatmul.mubr.f32.gmra.mrb[0].mxu0 %v716
        %v914 = vpop.f32.mrb[0].mxu0
        %v915 = vadd.f32 %v591, %v914
        %v916 = vpop.f32.mrb[0].mxu0
        %917 = vmatprep.mubr.f32.mxu0 0.0
        %918 = vmatmul.mubr.f32.gmra.mrb[0].mxu0 %v719
        %v919 = vpop.f32.mrb[0].mxu0
        %v920 = vadd.f32 %v596, %v919
        %v921 = vpop.f32.mrb[0].mxu0
        %922 = vmatprep.mubr.f32.mxu0 0.0
        %923 = vmatmul.mubr.f32.gmra.mrb[0].mxu0 %v722
        %v924 = vpop.f32.mrb[0].mxu0
        %v925 = vadd.f32 %v601, %v924
        %v926 = vpop.f32.mrb[0].mxu0
        %927 = vmatprep.mubr.f32.mxu0 0.0
        %928 = vmatmul.mubr.f32.gmra.mrb[0].mxu0 %v725
        %v929 = vpop.f32.mrb[0].mxu0
        %v930 = vadd.f32 %v606, %v929
        %v931 = vpop.f32.mrb[0].mxu0
        %932 = vmatprep.mubr.f32.mxu0 0.0
        %933 = vmatmul.mubr.f32.gmra.mrb[0].mxu0 %v728
        %v934 = vpop.f32.mrb[0].mxu0
        %v935 = vadd.f32 %v611, %v934
        %v936 = vpop.f32.mrb[0].mxu0
        %937 = vmatprep.mubr.f32.mxu0 0.0
        %938 = vmatmul.mubr.f32.gmra.mrb[0].mxu0 %v731
        %v939 = vpop.f32.mrb[0].mxu0
        %v940 = vadd.f32 %v616, %v939
        %v941 = vpop.f32.mrb[0].mxu0
        %942 = vmatprep.mubr.f32.mxu0 0.0
        %943 = vmatmul.mubr.f32.gmra.mrb[0].mxu0 %v734
        %v944 = vpop.f32.mrb[0].mxu0
        %v945 = vadd.f32 %v621, %v944
        %v946 = vpop.f32.mrb[0].mxu0
        %947 = vmatprep.mubr.f32.mxu0 0.0
        %948 = vmatmul.mubr.f32.gmra.mrb[0].mxu0 %v737
        %v949 = vpop.f32.mrb[0].mxu0
        %v950 = vadd.f32 %v626, %v949
        %v951 = vpop.f32.mrb[0].mxu0
        %952 = vmatprep.mubr.f32.mxu0 0.0
        %953 = vmatmul.mubr.f32.gmra.mrb[0].mxu0 %v740
        %v954 = vpop.f32.mrb[0].mxu0
        %v955 = vadd.f32 %v631, %v954
        %v956 = vpop.f32.mrb[0].mxu0
        %957 = vmatprep.mubr.f32.mxu0 0.0
        %958 = vmatmul.mubr.f32.gmra.mrb[0].mxu0 %v743
        %v959 = vpop.f32.mrb[0].mxu0
        %v960 = vadd.f32 %v636, %v959
        %v961 = vpop.f32.mrb[0].mxu0
        %962 = vmatprep.mubr.f32.mxu0 0.0
        %963 = vmatmul.mubr.f32.gmra.mrb[0].mxu0 %v746
        %v964 = vpop.f32.mrb[0].mxu0
        %v965 = vadd.f32 %v641, %v964
        %v966 = vpop.f32.mrb[0].mxu0
        %967 = vmatprep.mubr.f32.mxu0 0.0
        %968 = vmatmul.mubr.f32.gmra.mrb[0].mxu0 %v749
        %v969 = vpop.f32.mrb[0].mxu0
        %v970 = vadd.f32 %v646, %v969
        %v971 = vpop.f32.mrb[0].mxu0
        %972 = vmatprep.mubr.f32.mxu0 0.0
        %973 = vmatmul.mubr.f32.gmra.mrb[0].mxu0 %v752
        %v974 = vpop.f32.mrb[0].mxu0
        %v975 = vadd.f32 %v651, %v974
        %v976 = vpop.f32.mrb[0].mxu0
        %977 = vmatprep.mubr.f32.mxu0 0.0
        %978 = vmatmul.mubr.f32.gmra.mrb[0].mxu0 %v755
        %v979 = vpop.f32.mrb[0].mxu0
        %v980 = vadd.f32 %v656, %v979
        %v981 = vpop.f32.mrb[0].mxu0
        %982 = vmatprep.mubr.f32.mxu0 0.0
        %983 = vmatmul.mubr.f32.gmra.mrb[0].mxu0 %v758
        %v984 = vpop.f32.mrb[0].mxu0
        %v985 = vadd.f32 %v661, %v984
        %v986 = vpop.f32.mrb[0].mxu0
        %987 = vdwg.mxu0
        %v988 = vld [vmem:[%s233 + $0x4] sm:$0xff]
        %v989 = vld [vmem:[%s233 + $0xc] sm:$0xff]
        %v990 = vld [vmem:[%s233 + $0x1c] sm:$0xff]
        %v991 = vld [vmem:[%s233 + $0x24] sm:$0xff]
        %v992 = vld [vmem:[%s233 + $0x34] sm:$0xff]
        %v993 = vld [vmem:[%s233 + $0x3c] sm:$0xff]
        %v994 = vld [vmem:[%s233 + $0x4c] sm:$0xff]
        %v995 = vld [vmem:[%s233 + $0x54] sm:$0xff]
        %v996 = vld [vmem:[%s233 + $0x64] sm:$0xff]
        %v997 = vld [vmem:[%s233 + $0x6c] sm:$0xff]
        %v998 = vld [vmem:[%s233 + $0x7c] sm:$0xff]
        %v999 = vld [vmem:[%s233 + $0x84] sm:$0xff]
        %v1000 = vld [vmem:[%s233 + $0x94] sm:$0xff]
        %v1001 = vld [vmem:[%s233 + $0x9c] sm:$0xff]
        %v1002 = vld [vmem:[%s233 + $0xac] sm:$0xff]
        %v1003 = vld [vmem:[%s233 + $0xb4] sm:$0xff]
        %v1004 = vld [vmem:[%s233 + $0xc4] sm:$0xff]
        %v1005 = vld [vmem:[%s233 + $0xcc] sm:$0xff]
        %v1006 = vld [vmem:[%s233 + $0xdc] sm:$0xff]
        %v1007 = vld [vmem:[%s233 + $0xe4] sm:$0xff]
        %v1008 = vld [vmem:[%s233 + $0xf4] sm:$0xff]
        %v1009 = vld [vmem:[%s233 + $0xfc] sm:$0xff]
        %v1010 = vld [vmem:[%s233 + $0x10c] sm:$0xff]
        %v1011 = vld [vmem:[%s233 + $0x114] sm:$0xff]
        %v1012 = vld [vmem:[%s233 + $0x124] sm:$0xff]
        %v1013 = vld [vmem:[%s233 + $0x12c] sm:$0xff]
        %v1014 = vld [vmem:[%s233 + $0x13c] sm:$0xff]
        %v1015 = vld [vmem:[%s233 + $0x144] sm:$0xff]
        %v1016 = vld [vmem:[%s233 + $0x154] sm:$0xff]
        %v1017 = vld [vmem:[%s233 + $0x15c] sm:$0xff]
        %v1018 = vld [vmem:[%s233 + $0x16c] sm:$0xff]
        %v1019 = vld [vmem:[%s233 + $0x174] sm:$0xff]
        %s1020 = scalar_lea.vmem [#allocation5], 8
        %v1021 = vld [vmem:[%s1020] sm:$0xf]
        %v1023 = vsel %vm338, %v988, 0
        %v1026 = vsel %vm338, %v989, 0
        %v1029 = vsel %vm338, %v990, 0
        %v1032 = vsel %vm338, %v991, 0
        %v1035 = vsel %vm338, %v992, 0
        %v1038 = vsel %vm338, %v993, 0
        %v1041 = vsel %vm338, %v994, 0
        %v1044 = vsel %vm338, %v995, 0
        %v1047 = vsel %vm338, %v996, 0
        %v1050 = vsel %vm338, %v997, 0
        %v1053 = vsel %vm338, %v998, 0
        %v1056 = vsel %vm338, %v999, 0
        %v1059 = vsel %vm338, %v1000, 0
        %v1062 = vsel %vm338, %v1001, 0
        %v1065 = vsel %vm338, %v1002, 0
        %v1068 = vsel %vm338, %v1003, 0
        %v1071 = vsel %vm338, %v1004, 0
        %v1074 = vsel %vm338, %v1005, 0
        %v1077 = vsel %vm338, %v1006, 0
        %v1080 = vsel %vm338, %v1007, 0
        %v1083 = vsel %vm338, %v1008, 0
        %v1086 = vsel %vm338, %v1009, 0
        %v1089 = vsel %vm338, %v1010, 0
        %v1092 = vsel %vm338, %v1011, 0
        %v1095 = vsel %vm338, %v1012, 0
        %v1098 = vsel %vm338, %v1013, 0
        %v1101 = vsel %vm338, %v1014, 0
        %v1104 = vsel %vm338, %v1015, 0
        %v1107 = vsel %vm338, %v1016, 0
        %v1110 = vsel %vm338, %v1017, 0
        %v1113 = vsel %vm338, %v1018, 0
        %v1116 = vsel %vm338, %v1019, 0
        %v1119 = vsel %vm435, %v1021, 0
        %1121 = vmatprep.subr.mxu0 0.0
        %1122 = vmatpush1.msra.mxu0 %v1119
        %1123 = vmatprep.subr.mxu0 0.0
        %1124 = vmatpush1.msra.mxu0 0.0
        %1125 = vmatprep.subr.mxu0 0.0
        %1126 = vmatpush1.msra.mxu0 0.0
        %1127 = vmatprep.subr.mxu0 0.0
        %1128 = vmatpush1.msra.mxu0 0.0
        %1129 = vmatprep.subr.mxu0 0.0
        %1130 = vmatpush1.msra.mxu0 0.0
        %1131 = vmatprep.subr.mxu0 0.0
        %1132 = vmatpush1.msra.mxu0 0.0
        %1133 = vmatprep.subr.mxu0 0.0
        %1134 = vmatpush1.msra.mxu0 0.0
        %1135 = vmatprep.subr.mxu0 0.0
        %1136 = vmatpush1.msra.mxu0 0.0
        %1137 = vmatprep.subr.mxu0 0.0
        %1138 = vmatpush1.msra.mxu0 0.0
        %1139 = vmatprep.subr.mxu0 0.0
        %1140 = vmatpush1.msra.mxu0 0.0
        %1141 = vmatprep.subr.mxu0 0.0
        %1142 = vmatpush1.msra.mxu0 0.0
        %1143 = vmatprep.subr.mxu0 0.0
        %1144 = vmatpush1.msra.mxu0 0.0
        %1145 = vmatprep.subr.mxu0 0.0
        %1146 = vmatpush1.msra.mxu0 0.0
        %1147 = vmatprep.subr.mxu0 0.0
        %1148 = vmatpush1.msra.mxu0 0.0
        %1149 = vmatprep.subr.mxu0 0.0
        %1150 = vmatpush1.msra.mxu0 0.0
        %1151 = vmatprep.subr.mxu0 0.0
        %1152 = vmatpush1.msra.mxu0 0.0
        %1153 = vmatprep.subr.mxu0 0.0
        %1154 = vmatpush1.msra.mxu0 0.0
        %1155 = vmatprep.subr.mxu0 0.0
        %1156 = vmatpush1.msra.mxu0 0.0
        %1157 = vmatprep.subr.mxu0 0.0
        %1158 = vmatpush1.msra.mxu0 0.0
        %1159 = vmatprep.subr.mxu0 0.0
        %1160 = vmatpush1.msra.mxu0 0.0
        %1161 = vmatprep.subr.mxu0 0.0
        %1162 = vmatpush1.msra.mxu0 0.0
        %1163 = vmatprep.subr.mxu0 0.0
        %1164 = vmatpush1.msra.mxu0 0.0
        %1165 = vmatprep.subr.mxu0 0.0
        %1166 = vmatpush1.msra.mxu0 0.0
        %1167 = vmatprep.subr.mxu0 0.0
        %1168 = vmatpush1.msra.mxu0 0.0
        %1169 = vmatprep.subr.mxu0 0.0
        %1170 = vmatpush1.msra.mxu0 0.0
        %1171 = vmatprep.subr.mxu0 0.0
        %1172 = vmatpush1.msra.mxu0 0.0
        %1173 = vmatprep.subr.mxu0 0.0
        %1174 = vmatpush1.msra.mxu0 0.0
        %1175 = vmatprep.subr.mxu0 0.0
        %1176 = vmatpush1.msra.mxu0 0.0
        %1177 = vmatprep.subr.mxu0 0.0
        %1178 = vmatpush1.msra.mxu0 0.0
        %1179 = vmatprep.subr.mxu0 0.0
        %1180 = vmatpush1.msra.mxu0 0.0
        %1181 = vmatprep.subr.mxu0 0.0
        %1182 = vmatpush1.msra.mxu0 0.0
        %1183 = vmatprep.subr.mxu0 0.0
        %1184 = vmatpush1.msra.mxu0 0.0
        %1185 = vmatprep.mubr.f32.mxu0 0.0
        %1186 = vmatmul.mubr.f32.gmra.mrb[0].mxu0 %v1023
        %v1187 = vpop.f32.mrb[0].mxu0
        %v1188 = vadd.f32 0.0, %v1187
        %v1189 = vpop.f32.mrb[0].mxu0
        %1190 = vmatprep.mubr.f32.mxu0 0.0
        %1191 = vmatmul.mubr.f32.gmra.mrb[0].mxu0 %v1026
        %v1192 = vpop.f32.mrb[0].mxu0
        %v1193 = vadd.f32 0.0, %v1192
        %v1194 = vpop.f32.mrb[0].mxu0
        %1195 = vmatprep.mubr.f32.mxu0 0.0
        %1196 = vmatmul.mubr.f32.gmra.mrb[0].mxu0 %v1029
        %v1197 = vpop.f32.mrb[0].mxu0
        %v1198 = vadd.f32 0.0, %v1197
        %v1199 = vpop.f32.mrb[0].mxu0
        %1200 = vmatprep.mubr.f32.mxu0 0.0
        %1201 = vmatmul.mubr.f32.gmra.mrb[0].mxu0 %v1032
        %v1202 = vpop.f32.mrb[0].mxu0
        %v1203 = vadd.f32 0.0, %v1202
        %v1204 = vpop.f32.mrb[0].mxu0
        %1205 = vmatprep.mubr.f32.mxu0 0.0
        %1206 = vmatmul.mubr.f32.gmra.mrb[0].mxu0 %v1035
        %v1207 = vpop.f32.mrb[0].mxu0
        %v1208 = vadd.f32 0.0, %v1207
        %v1209 = vpop.f32.mrb[0].mxu0
        %1210 = vmatprep.mubr.f32.mxu0 0.0
        %1211 = vmatmul.mubr.f32.gmra.mrb[0].mxu0 %v1038
        %v1212 = vpop.f32.mrb[0].mxu0
        %v1213 = vadd.f32 0.0, %v1212
        %v1214 = vpop.f32.mrb[0].mxu0
        %1215 = vmatprep.mubr.f32.mxu0 0.0
        %1216 = vmatmul.mubr.f32.gmra.mrb[0].mxu0 %v1041
        %v1217 = vpop.f32.mrb[0].mxu0
        %v1218 = vadd.f32 0.0, %v1217
        %v1219 = vpop.f32.mrb[0].mxu0
        %1220 = vmatprep.mubr.f32.mxu0 0.0
        %1221 = vmatmul.mubr.f32.gmra.mrb[0].mxu0 %v1044
        %v1222 = vpop.f32.mrb[0].mxu0
        %v1223 = vadd.f32 0.0, %v1222
        %v1224 = vpop.f32.mrb[0].mxu0
        %1225 = vmatprep.mubr.f32.mxu0 0.0
        %1226 = vmatmul.mubr.f32.gmra.mrb[0].mxu0 %v1047
        %v1227 = vpop.f32.mrb[0].mxu0
        %v1228 = vadd.f32 0.0, %v1227
        %v1229 = vpop.f32.mrb[0].mxu0
        %1230 = vmatprep.mubr.f32.mxu0 0.0
        %1231 = vmatmul.mubr.f32.gmra.mrb[0].mxu0 %v1050
        %v1232 = vpop.f32.mrb[0].mxu0
        %v1233 = vadd.f32 0.0, %v1232
        %v1234 = vpop.f32.mrb[0].mxu0
        %1235 = vmatprep.mubr.f32.mxu0 0.0
        %1236 = vmatmul.mubr.f32.gmra.mrb[0].mxu0 %v1053
        %v1237 = vpop.f32.mrb[0].mxu0
        %v1238 = vadd.f32 0.0, %v1237
        %v1239 = vpop.f32.mrb[0].mxu0
        %1240 = vmatprep.mubr.f32.mxu0 0.0
        %1241 = vmatmul.mubr.f32.gmra.mrb[0].mxu0 %v1056
        %v1242 = vpop.f32.mrb[0].mxu0
        %v1243 = vadd.f32 0.0, %v1242
        %v1244 = vpop.f32.mrb[0].mxu0
        %1245 = vmatprep.mubr.f32.mxu0 0.0
        %1246 = vmatmul.mubr.f32.gmra.mrb[0].mxu0 %v1059
        %v1247 = vpop.f32.mrb[0].mxu0
        %v1248 = vadd.f32 0.0, %v1247
        %v1249 = vpop.f32.mrb[0].mxu0
        %1250 = vmatprep.mubr.f32.mxu0 0.0
        %1251 = vmatmul.mubr.f32.gmra.mrb[0].mxu0 %v1062
        %v1252 = vpop.f32.mrb[0].mxu0
        %v1253 = vadd.f32 0.0, %v1252
        %v1254 = vpop.f32.mrb[0].mxu0
        %1255 = vmatprep.mubr.f32.mxu0 0.0
        %1256 = vmatmul.mubr.f32.gmra.mrb[0].mxu0 %v1065
        %v1257 = vpop.f32.mrb[0].mxu0
        %v1258 = vadd.f32 0.0, %v1257
        %v1259 = vpop.f32.mrb[0].mxu0
        %1260 = vmatprep.mubr.f32.mxu0 0.0
        %1261 = vmatmul.mubr.f32.gmra.mrb[0].mxu0 %v1068
        %v1262 = vpop.f32.mrb[0].mxu0
        %v1263 = vadd.f32 0.0, %v1262
        %v1264 = vpop.f32.mrb[0].mxu0
        %1265 = vmatprep.mubr.f32.mxu0 0.0
        %1266 = vmatmul.mubr.f32.gmra.mrb[0].mxu0 %v1071
        %v1267 = vpop.f32.mrb[0].mxu0
        %v1268 = vadd.f32 0.0, %v1267
        %v1269 = vpop.f32.mrb[0].mxu0
        %1270 = vmatprep.mubr.f32.mxu0 0.0
        %1271 = vmatmul.mubr.f32.gmra.mrb[0].mxu0 %v1074
        %v1272 = vpop.f32.mrb[0].mxu0
        %v1273 = vadd.f32 0.0, %v1272
        %v1274 = vpop.f32.mrb[0].mxu0
        %1275 = vmatprep.mubr.f32.mxu0 0.0
        %1276 = vmatmul.mubr.f32.gmra.mrb[0].mxu0 %v1077
        %v1277 = vpop.f32.mrb[0].mxu0
        %v1278 = vadd.f32 0.0, %v1277
        %v1279 = vpop.f32.mrb[0].mxu0
        %1280 = vmatprep.mubr.f32.mxu0 0.0
        %1281 = vmatmul.mubr.f32.gmra.mrb[0].mxu0 %v1080
        %v1282 = vpop.f32.mrb[0].mxu0
        %v1283 = vadd.f32 0.0, %v1282
        %v1284 = vpop.f32.mrb[0].mxu0
        %1285 = vmatprep.mubr.f32.mxu0 0.0
        %1286 = vmatmul.mubr.f32.gmra.mrb[0].mxu0 %v1083
        %v1287 = vpop.f32.mrb[0].mxu0
        %v1288 = vadd.f32 0.0, %v1287
        %v1289 = vpop.f32.mrb[0].mxu0
        %1290 = vmatprep.mubr.f32.mxu0 0.0
        %1291 = vmatmul.mubr.f32.gmra.mrb[0].mxu0 %v1086
        %v1292 = vpop.f32.mrb[0].mxu0
        %v1293 = vadd.f32 0.0, %v1292
        %v1294 = vpop.f32.mrb[0].mxu0
        %1295 = vmatprep.mubr.f32.mxu0 0.0
        %1296 = vmatmul.mubr.f32.gmra.mrb[0].mxu0 %v1089
        %v1297 = vpop.f32.mrb[0].mxu0
        %v1298 = vadd.f32 0.0, %v1297
        %v1299 = vpop.f32.mrb[0].mxu0
        %1300 = vmatprep.mubr.f32.mxu0 0.0
        %1301 = vmatmul.mubr.f32.gmra.mrb[0].mxu0 %v1092
        %v1302 = vpop.f32.mrb[0].mxu0
        %v1303 = vadd.f32 0.0, %v1302
        %v1304 = vpop.f32.mrb[0].mxu0
        %1305 = vmatprep.mubr.f32.mxu0 0.0
        %1306 = vmatmul.mubr.f32.gmra.mrb[0].mxu0 %v1095
        %v1307 = vpop.f32.mrb[0].mxu0
        %v1308 = vadd.f32 0.0, %v1307
        %v1309 = vpop.f32.mrb[0].mxu0
        %1310 = vmatprep.mubr.f32.mxu0 0.0
        %1311 = vmatmul.mubr.f32.gmra.mrb[0].mxu0 %v1098
        %v1312 = vpop.f32.mrb[0].mxu0
        %v1313 = vadd.f32 0.0, %v1312
        %v1314 = vpop.f32.mrb[0].mxu0
        %1315 = vmatprep.mubr.f32.mxu0 0.0
        %1316 = vmatmul.mubr.f32.gmra.mrb[0].mxu0 %v1101
        %v1317 = vpop.f32.mrb[0].mxu0
        %v1318 = vadd.f32 0.0, %v1317
        %v1319 = vpop.f32.mrb[0].mxu0
        %1320 = vmatprep.mubr.f32.mxu0 0.0
        %1321 = vmatmul.mubr.f32.gmra.mrb[0].mxu0 %v1104
        %v1322 = vpop.f32.mrb[0].mxu0
        %v1323 = vadd.f32 0.0, %v1322
        %v1324 = vpop.f32.mrb[0].mxu0
        %1325 = vmatprep.mubr.f32.mxu0 0.0
        %1326 = vmatmul.mubr.f32.gmra.mrb[0].mxu0 %v1107
        %v1327 = vpop.f32.mrb[0].mxu0
        %v1328 = vadd.f32 0.0, %v1327
        %v1329 = vpop.f32.mrb[0].mxu0
        %1330 = vmatprep.mubr.f32.mxu0 0.0
        %1331 = vmatmul.mubr.f32.gmra.mrb[0].mxu0 %v1110
        %v1332 = vpop.f32.mrb[0].mxu0
        %v1333 = vadd.f32 0.0, %v1332
        %v1334 = vpop.f32.mrb[0].mxu0
        %1335 = vmatprep.mubr.f32.mxu0 0.0
        %1336 = vmatmul.mubr.f32.gmra.mrb[0].mxu0 %v1113
        %v1337 = vpop.f32.mrb[0].mxu0
        %v1338 = vadd.f32 0.0, %v1337
        %v1339 = vpop.f32.mrb[0].mxu0
        %1340 = vmatprep.mubr.f32.mxu0 0.0
        %1341 = vmatmul.mubr.f32.gmra.mrb[0].mxu0 %v1116
        %v1342 = vpop.f32.mrb[0].mxu0
        %v1343 = vadd.f32 0.0, %v1342
        %v1344 = vpop.f32.mrb[0].mxu0
        %1345 = vdwg.mxu0
        %v1346 = vadd.f32 %v830, %v1188
        %v1347 = vadd.f32 %v835, %v1193
        %v1348 = vadd.f32 %v840, %v1198
        %v1349 = vadd.f32 %v845, %v1203
        %v1350 = vadd.f32 %v850, %v1208
        %v1351 = vadd.f32 %v855, %v1213
        %v1352 = vadd.f32 %v860, %v1218
        %v1353 = vadd.f32 %v865, %v1223
        %v1354 = vadd.f32 %v870, %v1228
        %v1355 = vadd.f32 %v875, %v1233
        %v1356 = vadd.f32 %v880, %v1238
        %v1357 = vadd.f32 %v885, %v1243
        %v1358 = vadd.f32 %v890, %v1248
        %v1359 = vadd.f32 %v895, %v1253
        %v1360 = vadd.f32 %v900, %v1258
        %v1361 = vadd.f32 %v905, %v1263
        %v1362 = vadd.f32 %v910, %v1268
        %v1363 = vadd.f32 %v915, %v1273
        %v1364 = vadd.f32 %v920, %v1278
        %v1365 = vadd.f32 %v925, %v1283
        %v1366 = vadd.f32 %v930, %v1288
        %v1367 = vadd.f32 %v935, %v1293
        %v1368 = vadd.f32 %v940, %v1298
        %v1369 = vadd.f32 %v945, %v1303
        %v1370 = vadd.f32 %v950, %v1308
        %v1371 = vadd.f32 %v955, %v1313
        %v1372 = vadd.f32 %v960, %v1318
        %v1373 = vadd.f32 %v965, %v1323
        %v1374 = vadd.f32 %v970, %v1328
        %v1375 = vadd.f32 %v975, %v1333
        %v1376 = vadd.f32 %v980, %v1338
        %v1377 = vadd.f32 %v985, %v1343
        %s1378 = scalar_lea.vmem %s233, 48 [#allocation2]
        %v1379 = vld [vmem:[%s1378] sm:$0xff]
        %v1380 = vld [vmem:[%s1378 + $0x8] sm:$0xff]
        %v1381 = vld [vmem:[%s1378 + $0x18] sm:$0xff]
        %v1382 = vld [vmem:[%s1378 + $0x20] sm:$0xff]
        %v1383 = vld [vmem:[%s1378 + $0x30] sm:$0xff]
        %v1384 = vld [vmem:[%s1378 + $0x38] sm:$0xff]
        %v1385 = vld [vmem:[%s1378 + $0x48] sm:$0xff]
        %v1386 = vld [vmem:[%s1378 + $0x50] sm:$0xff]
        %v1387 = vld [vmem:[%s1378 + $0x60] sm:$0xff]
        %v1388 = vld [vmem:[%s1378 + $0x68] sm:$0xff]
        %v1389 = vld [vmem:[%s1378 + $0x78] sm:$0xff]
        %v1390 = vld [vmem:[%s1378 + $0x80] sm:$0xff]
        %v1391 = vld [vmem:[%s1378 + $0x90] sm:$0xff]
        %v1392 = vld [vmem:[%s1378 + $0x98] sm:$0xff]
        %v1393 = vld [vmem:[%s1378 + $0xa8] sm:$0xff]
        %v1394 = vld [vmem:[%s1378 + $0xb0] sm:$0xff]
        %v1395 = vld [vmem:[%s1378 + $0xc0] sm:$0xff]
        %v1396 = vld [vmem:[%s1378 + $0xc8] sm:$0xff]
        %v1397 = vld [vmem:[%s1378 + $0xd8] sm:$0xff]
        %v1398 = vld [vmem:[%s1378 + $0xe0] sm:$0xff]
        %v1399 = vld [vmem:[%s1378 + $0xf0] sm:$0xff]
        %v1400 = vld [vmem:[%s1378 + $0xf8] sm:$0xff]
        %v1401 = vld [vmem:[%s1378 + $0x108] sm:$0xff]
        %v1402 = vld [vmem:[%s1378 + $0x110] sm:$0xff]
        %v1403 = vld [vmem:[%s1378 + $0x120] sm:$0xff]
        %v1404 = vld [vmem:[%s1378 + $0x128] sm:$0xff]
        %v1405 = vld [vmem:[%s1378 + $0x138] sm:$0xff]
        %v1406 = vld [vmem:[%s1378 + $0x140] sm:$0xff]
        %v1407 = vld [vmem:[%s1378 + $0x150] sm:$0xff]
        %v1408 = vld [vmem:[%s1378 + $0x158] sm:$0xff]
        %v1409 = vld [vmem:[%s1378 + $0x168] sm:$0xff]
        %v1410 = vld [vmem:[%s1378 + $0x170] sm:$0xff]
        %s1411 = scalar_lea.vmem [#allocation5], 12
        %v1412 = vld [vmem:[%s1411] sm:$0xf]
        %v1414 = vsel %vm338, %v1379, 0
        %v1417 = vsel %vm338, %v1380, 0
        %v1420 = vsel %vm338, %v1381, 0
        %v1423 = vsel %vm338, %v1382, 0
        %v1426 = vsel %vm338, %v1383, 0
        %v1429 = vsel %vm338, %v1384, 0
        %v1432 = vsel %vm338, %v1385, 0
        %v1435 = vsel %vm338, %v1386, 0
        %v1438 = vsel %vm338, %v1387, 0
        %v1441 = vsel %vm338, %v1388, 0
        %v1444 = vsel %vm338, %v1389, 0
        %v1447 = vsel %vm338, %v1390, 0
        %v1450 = vsel %vm338, %v1391, 0
        %v1453 = vsel %vm338, %v1392, 0
        %v1456 = vsel %vm338, %v1393, 0
        %v1459 = vsel %vm338, %v1394, 0
        %v1462 = vsel %vm338, %v1395, 0
        %v1465 = vsel %vm338, %v1396, 0
        %v1468 = vsel %vm338, %v1397, 0
        %v1471 = vsel %vm338, %v1398, 0
        %v1474 = vsel %vm338, %v1399, 0
        %v1477 = vsel %vm338, %v1400, 0
        %v1480 = vsel %vm338, %v1401, 0
        %v1483 = vsel %vm338, %v1402, 0
        %v1486 = vsel %vm338, %v1403, 0
        %v1489 = vsel %vm338, %v1404, 0
        %v1492 = vsel %vm338, %v1405, 0
        %v1495 = vsel %vm338, %v1406, 0
        %v1498 = vsel %vm338, %v1407, 0
        %v1501 = vsel %vm338, %v1408, 0
        %v1504 = vsel %vm338, %v1409, 0
        %v1507 = vsel %vm338, %v1410, 0
        %v1510 = vsel %vm435, %v1412, 0
        %1512 = vmatprep.subr.mxu0 0.0
        %1513 = vmatpush1.msra.mxu0 %v1510
        %1514 = vmatprep.subr.mxu0 0.0
        %1515 = vmatpush1.msra.mxu0 0.0
        %1516 = vmatprep.subr.mxu0 0.0
        %1517 = vmatpush1.msra.mxu0 0.0
        %1518 = vmatprep.subr.mxu0 0.0
        %1519 = vmatpush1.msra.mxu0 0.0
        %1520 = vmatprep.subr.mxu0 0.0
        %1521 = vmatpush1.msra.mxu0 0.0
        %1522 = vmatprep.subr.mxu0 0.0
        %1523 = vmatpush1.msra.mxu0 0.0
        %1524 = vmatprep.subr.mxu0 0.0
        %1525 = vmatpush1.msra.mxu0 0.0
        %1526 = vmatprep.subr.mxu0 0.0
        %1527 = vmatpush1.msra.mxu0 0.0
        %1528 = vmatprep.subr.mxu0 0.0
        %1529 = vmatpush1.msra.mxu0 0.0
        %1530 = vmatprep.subr.mxu0 0.0
        %1531 = vmatpush1.msra.mxu0 0.0
        %1532 = vmatprep.subr.mxu0 0.0
        %1533 = vmatpush1.msra.mxu0 0.0
        %1534 = vmatprep.subr.mxu0 0.0
        %1535 = vmatpush1.msra.mxu0 0.0
        %1536 = vmatprep.subr.mxu0 0.0
        %1537 = vmatpush1.msra.mxu0 0.0
        %1538 = vmatprep.subr.mxu0 0.0
        %1539 = vmatpush1.msra.mxu0 0.0
        %1540 = vmatprep.subr.mxu0 0.0
        %1541 = vmatpush1.msra.mxu0 0.0
        %1542 = vmatprep.subr.mxu0 0.0
        %1543 = vmatpush1.msra.mxu0 0.0
        %1544 = vmatprep.subr.mxu0 0.0
        %1545 = vmatpush1.msra.mxu0 0.0
        %1546 = vmatprep.subr.mxu0 0.0
        %1547 = vmatpush1.msra.mxu0 0.0
        %1548 = vmatprep.subr.mxu0 0.0
        %1549 = vmatpush1.msra.mxu0 0.0
        %1550 = vmatprep.subr.mxu0 0.0
        %1551 = vmatpush1.msra.mxu0 0.0
        %1552 = vmatprep.subr.mxu0 0.0
        %1553 = vmatpush1.msra.mxu0 0.0
        %1554 = vmatprep.subr.mxu0 0.0
        %1555 = vmatpush1.msra.mxu0 0.0
        %1556 = vmatprep.subr.mxu0 0.0
        %1557 = vmatpush1.msra.mxu0 0.0
        %1558 = vmatprep.subr.mxu0 0.0
        %1559 = vmatpush1.msra.mxu0 0.0
        %1560 = vmatprep.subr.mxu0 0.0
        %1561 = vmatpush1.msra.mxu0 0.0
        %1562 = vmatprep.subr.mxu0 0.0
        %1563 = vmatpush1.msra.mxu0 0.0
        %1564 = vmatprep.subr.mxu0 0.0
        %1565 = vmatpush1.msra.mxu0 0.0
        %1566 = vmatprep.subr.mxu0 0.0
        %1567 = vmatpush1.msra.mxu0 0.0
        %1568 = vmatprep.subr.mxu0 0.0
        %1569 = vmatpush1.msra.mxu0 0.0
        %1570 = vmatprep.subr.mxu0 0.0
        %1571 = vmatpush1.msra.mxu0 0.0
        %1572 = vmatprep.subr.mxu0 0.0
        %1573 = vmatpush1.msra.mxu0 0.0
        %1574 = vmatprep.subr.mxu0 0.0
        %1575 = vmatpush1.msra.mxu0 0.0
        %1576 = vmatprep.mubr.f32.mxu0 0.0
        %1577 = vmatmul.mubr.f32.gmra.mrb[0].mxu0 %v1414
        %v1578 = vpop.f32.mrb[0].mxu0
        %v1579 = vadd.f32 0.0, %v1578
        %v1580 = vpop.f32.mrb[0].mxu0
        %1581 = vmatprep.mubr.f32.mxu0 0.0
        %1582 = vmatmul.mubr.f32.gmra.mrb[0].mxu0 %v1417
        %v1583 = vpop.f32.mrb[0].mxu0
        %v1584 = vadd.f32 0.0, %v1583
        %v1585 = vpop.f32.mrb[0].mxu0
        %1586 = vmatprep.mubr.f32.mxu0 0.0
        %1587 = vmatmul.mubr.f32.gmra.mrb[0].mxu0 %v1420
        %v1588 = vpop.f32.mrb[0].mxu0
        %v1589 = vadd.f32 0.0, %v1588
        %v1590 = vpop.f32.mrb[0].mxu0
        %1591 = vmatprep.mubr.f32.mxu0 0.0
        %1592 = vmatmul.mubr.f32.gmra.mrb[0].mxu0 %v1423
        %v1593 = vpop.f32.mrb[0].mxu0
        %v1594 = vadd.f32 0.0, %v1593
        %v1595 = vpop.f32.mrb[0].mxu0
        %1596 = vmatprep.mubr.f32.mxu0 0.0
        %1597 = vmatmul.mubr.f32.gmra.mrb[0].mxu0 %v1426
        %v1598 = vpop.f32.mrb[0].mxu0
        %v1599 = vadd.f32 0.0, %v1598
        %v1600 = vpop.f32.mrb[0].mxu0
        %1601 = vmatprep.mubr.f32.mxu0 0.0
        %1602 = vmatmul.mubr.f32.gmra.mrb[0].mxu0 %v1429
        %v1603 = vpop.f32.mrb[0].mxu0
        %v1604 = vadd.f32 0.0, %v1603
        %v1605 = vpop.f32.mrb[0].mxu0
        %1606 = vmatprep.mubr.f32.mxu0 0.0
        %1607 = vmatmul.mubr.f32.gmra.mrb[0].mxu0 %v1432
        %v1608 = vpop.f32.mrb[0].mxu0
        %v1609 = vadd.f32 0.0, %v1608
        %v1610 = vpop.f32.mrb[0].mxu0
        %1611 = vmatprep.mubr.f32.mxu0 0.0
        %1612 = vmatmul.mubr.f32.gmra.mrb[0].mxu0 %v1435
        %v1613 = vpop.f32.mrb[0].mxu0
        %v1614 = vadd.f32 0.0, %v1613
        %v1615 = vpop.f32.mrb[0].mxu0
        %1616 = vmatprep.mubr.f32.mxu0 0.0
        %1617 = vmatmul.mubr.f32.gmra.mrb[0].mxu0 %v1438
        %v1618 = vpop.f32.mrb[0].mxu0
        %v1619 = vadd.f32 0.0, %v1618
        %v1620 = vpop.f32.mrb[0].mxu0
        %1621 = vmatprep.mubr.f32.mxu0 0.0
        %1622 = vmatmul.mubr.f32.gmra.mrb[0].mxu0 %v1441
        %v1623 = vpop.f32.mrb[0].mxu0
        %v1624 = vadd.f32 0.0, %v1623
        %v1625 = vpop.f32.mrb[0].mxu0
        %1626 = vmatprep.mubr.f32.mxu0 0.0
        %1627 = vmatmul.mubr.f32.gmra.mrb[0].mxu0 %v1444
        %v1628 = vpop.f32.mrb[0].mxu0
        %v1629 = vadd.f32 0.0, %v1628
        %v1630 = vpop.f32.mrb[0].mxu0
        %1631 = vmatprep.mubr.f32.mxu0 0.0
        %1632 = vmatmul.mubr.f32.gmra.mrb[0].mxu0 %v1447
        %v1633 = vpop.f32.mrb[0].mxu0
        %v1634 = vadd.f32 0.0, %v1633
        %v1635 = vpop.f32.mrb[0].mxu0
        %1636 = vmatprep.mubr.f32.mxu0 0.0
        %1637 = vmatmul.mubr.f32.gmra.mrb[0].mxu0 %v1450
        %v1638 = vpop.f32.mrb[0].mxu0
        %v1639 = vadd.f32 0.0, %v1638
        %v1640 = vpop.f32.mrb[0].mxu0
        %1641 = vmatprep.mubr.f32.mxu0 0.0
        %1642 = vmatmul.mubr.f32.gmra.mrb[0].mxu0 %v1453
        %v1643 = vpop.f32.mrb[0].mxu0
        %v1644 = vadd.f32 0.0, %v1643
        %v1645 = vpop.f32.mrb[0].mxu0
        %1646 = vmatprep.mubr.f32.mxu0 0.0
        %1647 = vmatmul.mubr.f32.gmra.mrb[0].mxu0 %v1456
        %v1648 = vpop.f32.mrb[0].mxu0
        %v1649 = vadd.f32 0.0, %v1648
        %v1650 = vpop.f32.mrb[0].mxu0
        %1651 = vmatprep.mubr.f32.mxu0 0.0
        %1652 = vmatmul.mubr.f32.gmra.mrb[0].mxu0 %v1459
        %v1653 = vpop.f32.mrb[0].mxu0
        %v1654 = vadd.f32 0.0, %v1653
        %v1655 = vpop.f32.mrb[0].mxu0
        %1656 = vmatprep.mubr.f32.mxu0 0.0
        %1657 = vmatmul.mubr.f32.gmra.mrb[0].mxu0 %v1462
        %v1658 = vpop.f32.mrb[0].mxu0
        %v1659 = vadd.f32 0.0, %v1658
        %v1660 = vpop.f32.mrb[0].mxu0
        %1661 = vmatprep.mubr.f32.mxu0 0.0
        %1662 = vmatmul.mubr.f32.gmra.mrb[0].mxu0 %v1465
        %v1663 = vpop.f32.mrb[0].mxu0
        %v1664 = vadd.f32 0.0, %v1663
        %v1665 = vpop.f32.mrb[0].mxu0
        %1666 = vmatprep.mubr.f32.mxu0 0.0
        %1667 = vmatmul.mubr.f32.gmra.mrb[0].mxu0 %v1468
        %v1668 = vpop.f32.mrb[0].mxu0
        %v1669 = vadd.f32 0.0, %v1668
        %v1670 = vpop.f32.mrb[0].mxu0
        %1671 = vmatprep.mubr.f32.mxu0 0.0
        %1672 = vmatmul.mubr.f32.gmra.mrb[0].mxu0 %v1471
        %v1673 = vpop.f32.mrb[0].mxu0
        %v1674 = vadd.f32 0.0, %v1673
        %v1675 = vpop.f32.mrb[0].mxu0
        %1676 = vmatprep.mubr.f32.mxu0 0.0
        %1677 = vmatmul.mubr.f32.gmra.mrb[0].mxu0 %v1474
        %v1678 = vpop.f32.mrb[0].mxu0
        %v1679 = vadd.f32 0.0, %v1678
        %v1680 = vpop.f32.mrb[0].mxu0
        %1681 = vmatprep.mubr.f32.mxu0 0.0
        %1682 = vmatmul.mubr.f32.gmra.mrb[0].mxu0 %v1477
        %v1683 = vpop.f32.mrb[0].mxu0
        %v1684 = vadd.f32 0.0, %v1683
        %v1685 = vpop.f32.mrb[0].mxu0
        %1686 = vmatprep.mubr.f32.mxu0 0.0
        %1687 = vmatmul.mubr.f32.gmra.mrb[0].mxu0 %v1480
        %v1688 = vpop.f32.mrb[0].mxu0
        %v1689 = vadd.f32 0.0, %v1688
        %v1690 = vpop.f32.mrb[0].mxu0
        %1691 = vmatprep.mubr.f32.mxu0 0.0
        %1692 = vmatmul.mubr.f32.gmra.mrb[0].mxu0 %v1483
        %v1693 = vpop.f32.mrb[0].mxu0
        %v1694 = vadd.f32 0.0, %v1693
        %v1695 = vpop.f32.mrb[0].mxu0
        %1696 = vmatprep.mubr.f32.mxu0 0.0
        %1697 = vmatmul.mubr.f32.gmra.mrb[0].mxu0 %v1486
        %v1698 = vpop.f32.mrb[0].mxu0
        %v1699 = vadd.f32 0.0, %v1698
        %v1700 = vpop.f32.mrb[0].mxu0
        %1701 = vmatprep.mubr.f32.mxu0 0.0
        %1702 = vmatmul.mubr.f32.gmra.mrb[0].mxu0 %v1489
        %v1703 = vpop.f32.mrb[0].mxu0
        %v1704 = vadd.f32 0.0, %v1703
        %v1705 = vpop.f32.mrb[0].mxu0
        %1706 = vmatprep.mubr.f32.mxu0 0.0
        %1707 = vmatmul.mubr.f32.gmra.mrb[0].mxu0 %v1492
        %v1708 = vpop.f32.mrb[0].mxu0
        %v1709 = vadd.f32 0.0, %v1708
        %v1710 = vpop.f32.mrb[0].mxu0
        %1711 = vmatprep.mubr.f32.mxu0 0.0
        %1712 = vmatmul.mubr.f32.gmra.mrb[0].mxu0 %v1495
        %v1713 = vpop.f32.mrb[0].mxu0
        %v1714 = vadd.f32 0.0, %v1713
        %v1715 = vpop.f32.mrb[0].mxu0
        %1716 = vmatprep.mubr.f32.mxu0 0.0
        %1717 = vmatmul.mubr.f32.gmra.mrb[0].mxu0 %v1498
        %v1718 = vpop.f32.mrb[0].mxu0
        %v1719 = vadd.f32 0.0, %v1718
        %v1720 = vpop.f32.mrb[0].mxu0
        %1721 = vmatprep.mubr.f32.mxu0 0.0
        %1722 = vmatmul.mubr.f32.gmra.mrb[0].mxu0 %v1501
        %v1723 = vpop.f32.mrb[0].mxu0
        %v1724 = vadd.f32 0.0, %v1723
        %v1725 = vpop.f32.mrb[0].mxu0
        %1726 = vmatprep.mubr.f32.mxu0 0.0
        %1727 = vmatmul.mubr.f32.gmra.mrb[0].mxu0 %v1504
        %v1728 = vpop.f32.mrb[0].mxu0
        %v1729 = vadd.f32 0.0, %v1728
        %v1730 = vpop.f32.mrb[0].mxu0
        %1731 = vmatprep.mubr.f32.mxu0 0.0
        %1732 = vmatmul.mubr.f32.gmra.mrb[0].mxu0 %v1507
        %v1733 = vpop.f32.mrb[0].mxu0
        %v1734 = vadd.f32 0.0, %v1733
        %v1735 = vpop.f32.mrb[0].mxu0
        %1736 = vdwg.mxu0
        %v1737 = vadd.f32 %v1346, %v1579
        %v1738 = vadd.f32 %v1347, %v1584
        %v1739 = vadd.f32 %v1348, %v1589
        %v1740 = vadd.f32 %v1349, %v1594
        %v1741 = vadd.f32 %v1350, %v1599
        %v1742 = vadd.f32 %v1351, %v1604
        %v1743 = vadd.f32 %v1352, %v1609
        %v1744 = vadd.f32 %v1353, %v1614
        %v1745 = vadd.f32 %v1354, %v1619
        %v1746 = vadd.f32 %v1355, %v1624
        %v1747 = vadd.f32 %v1356, %v1629
        %v1748 = vadd.f32 %v1357, %v1634
        %v1749 = vadd.f32 %v1358, %v1639
        %v1750 = vadd.f32 %v1359, %v1644
        %v1751 = vadd.f32 %v1360, %v1649
        %v1752 = vadd.f32 %v1361, %v1654
        %v1753 = vadd.f32 %v1362, %v1659
        %v1754 = vadd.f32 %v1363, %v1664
        %v1755 = vadd.f32 %v1364, %v1669
        %v1756 = vadd.f32 %v1365, %v1674
        %v1757 = vadd.f32 %v1366, %v1679
        %v1758 = vadd.f32 %v1367, %v1684
        %v1759 = vadd.f32 %v1368, %v1689
        %v1760 = vadd.f32 %v1369, %v1694
        %v1761 = vadd.f32 %v1370, %v1699
        %v1762 = vadd.f32 %v1371, %v1704
        %v1763 = vadd.f32 %v1372, %v1709
        %v1764 = vadd.f32 %v1373, %v1714
        %v1765 = vadd.f32 %v1374, %v1719
        %v1766 = vadd.f32 %v1375, %v1724
        %v1767 = vadd.f32 %v1376, %v1729
        %v1768 = vadd.f32 %v1377, %v1734
        %v1769 = vld [vmem:[%s1378 + $0x2] sm:$0xff]
        %v1770 = vld [vmem:[%s1378 + $0xa] sm:$0xff]
        %v1771 = vld [vmem:[%s1378 + $0x1a] sm:$0xff]
        %v1772 = vld [vmem:[%s1378 + $0x22] sm:$0xff]
        %v1773 = vld [vmem:[%s1378 + $0x32] sm:$0xff]
        %v1774 = vld [vmem:[%s1378 + $0x3a] sm:$0xff]
        %v1775 = vld [vmem:[%s1378 + $0x4a] sm:$0xff]
        %v1776 = vld [vmem:[%s1378 + $0x52] sm:$0xff]
        %v1777 = vld [vmem:[%s1378 + $0x62] sm:$0xff]
        %v1778 = vld [vmem:[%s1378 + $0x6a] sm:$0xff]
        %v1779 = vld [vmem:[%s1378 + $0x7a] sm:$0xff]
        %v1780 = vld [vmem:[%s1378 + $0x82] sm:$0xff]
        %v1781 = vld [vmem:[%s1378 + $0x92] sm:$0xff]
        %v1782 = vld [vmem:[%s1378 + $0x9a] sm:$0xff]
        %v1783 = vld [vmem:[%s1378 + $0xaa] sm:$0xff]
        %v1784 = vld [vmem:[%s1378 + $0xb2] sm:$0xff]
        %v1785 = vld [vmem:[%s1378 + $0xc2] sm:$0xff]
        %v1786 = vld [vmem:[%s1378 + $0xca] sm:$0xff]
        %v1787 = vld [vmem:[%s1378 + $0xda] sm:$0xff]
        %v1788 = vld [vmem:[%s1378 + $0xe2] sm:$0xff]
        %v1789 = vld [vmem:[%s1378 + $0xf2] sm:$0xff]
        %v1790 = vld [vmem:[%s1378 + $0xfa] sm:$0xff]
        %v1791 = vld [vmem:[%s1378 + $0x10a] sm:$0xff]
        %v1792 = vld [vmem:[%s1378 + $0x112] sm:$0xff]
        %v1793 = vld [vmem:[%s1378 + $0x122] sm:$0xff]
        %v1794 = vld [vmem:[%s1378 + $0x12a] sm:$0xff]
        %v1795 = vld [vmem:[%s1378 + $0x13a] sm:$0xff]
        %v1796 = vld [vmem:[%s1378 + $0x142] sm:$0xff]
        %v1797 = vld [vmem:[%s1378 + $0x152] sm:$0xff]
        %v1798 = vld [vmem:[%s1378 + $0x15a] sm:$0xff]
        %v1799 = vld [vmem:[%s1378 + $0x16a] sm:$0xff]
        %v1800 = vld [vmem:[%s1378 + $0x172] sm:$0xff]
        %s1801 = scalar_lea.vmem [#allocation5], 16
        %v1802 = vld [vmem:[%s1801] sm:$0xf]
        %v1804 = vsel %vm338, %v1769, 0
        %v1807 = vsel %vm338, %v1770, 0
        %v1810 = vsel %vm338, %v1771, 0
        %v1813 = vsel %vm338, %v1772, 0
        %v1816 = vsel %vm338, %v1773, 0
        %v1819 = vsel %vm338, %v1774, 0
        %v1822 = vsel %vm338, %v1775, 0
        %v1825 = vsel %vm338, %v1776, 0
        %v1828 = vsel %vm338, %v1777, 0
        %v1831 = vsel %vm338, %v1778, 0
        %v1834 = vsel %vm338, %v1779, 0
        %v1837 = vsel %vm338, %v1780, 0
        %v1840 = vsel %vm338, %v1781, 0
        %v1843 = vsel %vm338, %v1782, 0
        %v1846 = vsel %vm338, %v1783, 0
        %v1849 = vsel %vm338, %v1784, 0
        %v1852 = vsel %vm338, %v1785, 0
        %v1855 = vsel %vm338, %v1786, 0
        %v1858 = vsel %vm338, %v1787, 0
        %v1861 = vsel %vm338, %v1788, 0
        %v1864 = vsel %vm338, %v1789, 0
        %v1867 = vsel %vm338, %v1790, 0
        %v1870 = vsel %vm338, %v1791, 0
        %v1873 = vsel %vm338, %v1792, 0
        %v1876 = vsel %vm338, %v1793, 0
        %v1879 = vsel %vm338, %v1794, 0
        %v1882 = vsel %vm338, %v1795, 0
        %v1885 = vsel %vm338, %v1796, 0
        %v1888 = vsel %vm338, %v1797, 0
        %v1891 = vsel %vm338, %v1798, 0
        %v1894 = vsel %vm338, %v1799, 0
        %v1897 = vsel %vm338, %v1800, 0
        %v1900 = vsel %vm435, %v1802, 0
        %1902 = vmatprep.subr.mxu0 0.0
        %1903 = vmatpush1.msra.mxu0 %v1900
        %1904 = vmatprep.subr.mxu0 0.0
        %1905 = vmatpush1.msra.mxu0 0.0
        %1906 = vmatprep.subr.mxu0 0.0
        %1907 = vmatpush1.msra.mxu0 0.0
        %1908 = vmatprep.subr.mxu0 0.0
        %1909 = vmatpush1.msra.mxu0 0.0
        %1910 = vmatprep.subr.mxu0 0.0
        %1911 = vmatpush1.msra.mxu0 0.0
        %1912 = vmatprep.subr.mxu0 0.0
        %1913 = vmatpush1.msra.mxu0 0.0
        %1914 = vmatprep.subr.mxu0 0.0
        %1915 = vmatpush1.msra.mxu0 0.0
        %1916 = vmatprep.subr.mxu0 0.0
        %1917 = vmatpush1.msra.mxu0 0.0
        %1918 = vmatprep.subr.mxu0 0.0
        %1919 = vmatpush1.msra.mxu0 0.0
        %1920 = vmatprep.subr.mxu0 0.0
        %1921 = vmatpush1.msra.mxu0 0.0
        %1922 = vmatprep.subr.mxu0 0.0
        %1923 = vmatpush1.msra.mxu0 0.0
        %1924 = vmatprep.subr.mxu0 0.0
        %1925 = vmatpush1.msra.mxu0 0.0
        %1926 = vmatprep.subr.mxu0 0.0
        %1927 = vmatpush1.msra.mxu0 0.0
        %1928 = vmatprep.subr.mxu0 0.0
        %1929 = vmatpush1.msra.mxu0 0.0
        %1930 = vmatprep.subr.mxu0 0.0
        %1931 = vmatpush1.msra.mxu0 0.0
        %1932 = vmatprep.subr.mxu0 0.0
        %1933 = vmatpush1.msra.mxu0 0.0
        %1934 = vmatprep.subr.mxu0 0.0
        %1935 = vmatpush1.msra.mxu0 0.0
        %1936 = vmatprep.subr.mxu0 0.0
        %1937 = vmatpush1.msra.mxu0 0.0
        %1938 = vmatprep.subr.mxu0 0.0
        %1939 = vmatpush1.msra.mxu0 0.0
        %1940 = vmatprep.subr.mxu0 0.0
        %1941 = vmatpush1.msra.mxu0 0.0
        %1942 = vmatprep.subr.mxu0 0.0
        %1943 = vmatpush1.msra.mxu0 0.0
        %1944 = vmatprep.subr.mxu0 0.0
        %1945 = vmatpush1.msra.mxu0 0.0
        %1946 = vmatprep.subr.mxu0 0.0
        %1947 = vmatpush1.msra.mxu0 0.0
        %1948 = vmatprep.subr.mxu0 0.0
        %1949 = vmatpush1.msra.mxu0 0.0
        %1950 = vmatprep.subr.mxu0 0.0
        %1951 = vmatpush1.msra.mxu0 0.0
        %1952 = vmatprep.subr.mxu0 0.0
        %1953 = vmatpush1.msra.mxu0 0.0
        %1954 = vmatprep.subr.mxu0 0.0
        %1955 = vmatpush1.msra.mxu0 0.0
        %1956 = vmatprep.subr.mxu0 0.0
        %1957 = vmatpush1.msra.mxu0 0.0
        %1958 = vmatprep.subr.mxu0 0.0
        %1959 = vmatpush1.msra.mxu0 0.0
        %1960 = vmatprep.subr.mxu0 0.0
        %1961 = vmatpush1.msra.mxu0 0.0
        %1962 = vmatprep.subr.mxu0 0.0
        %1963 = vmatpush1.msra.mxu0 0.0
        %1964 = vmatprep.subr.mxu0 0.0
        %1965 = vmatpush1.msra.mxu0 0.0
        %1966 = vmatprep.mubr.f32.mxu0 0.0
        %1967 = vmatmul.mubr.f32.gmra.mrb[0].mxu0 %v1804
        %v1968 = vpop.f32.mrb[0].mxu0
        %v1969 = vadd.f32 0.0, %v1968
        %v1970 = vpop.f32.mrb[0].mxu0
        %1971 = vmatprep.mubr.f32.mxu0 0.0
        %1972 = vmatmul.mubr.f32.gmra.mrb[0].mxu0 %v1807
        %v1973 = vpop.f32.mrb[0].mxu0
        %v1974 = vadd.f32 0.0, %v1973
        %v1975 = vpop.f32.mrb[0].mxu0
        %1976 = vmatprep.mubr.f32.mxu0 0.0
        %1977 = vmatmul.mubr.f32.gmra.mrb[0].mxu0 %v1810
        %v1978 = vpop.f32.mrb[0].mxu0
        %v1979 = vadd.f32 0.0, %v1978
        %v1980 = vpop.f32.mrb[0].mxu0
        %1981 = vmatprep.mubr.f32.mxu0 0.0
        %1982 = vmatmul.mubr.f32.gmra.mrb[0].mxu0 %v1813
        %v1983 = vpop.f32.mrb[0].mxu0
        %v1984 = vadd.f32 0.0, %v1983
        %v1985 = vpop.f32.mrb[0].mxu0
        %1986 = vmatprep.mubr.f32.mxu0 0.0
        %1987 = vmatmul.mubr.f32.gmra.mrb[0].mxu0 %v1816
        %v1988 = vpop.f32.mrb[0].mxu0
        %v1989 = vadd.f32 0.0, %v1988
        %v1990 = vpop.f32.mrb[0].mxu0
        %1991 = vmatprep.mubr.f32.mxu0 0.0
        %1992 = vmatmul.mubr.f32.gmra.mrb[0].mxu0 %v1819
        %v1993 = vpop.f32.mrb[0].mxu0
        %v1994 = vadd.f32 0.0, %v1993
        %v1995 = vpop.f32.mrb[0].mxu0
        %1996 = vmatprep.mubr.f32.mxu0 0.0
        %1997 = vmatmul.mubr.f32.gmra.mrb[0].mxu0 %v1822
        %v1998 = vpop.f32.mrb[0].mxu0
        %v1999 = vadd.f32 0.0, %v1998
        %v2000 = vpop.f32.mrb[0].mxu0
        %2001 = vmatprep.mubr.f32.mxu0 0.0
        %2002 = vmatmul.mubr.f32.gmra.mrb[0].mxu0 %v1825
        %v2003 = vpop.f32.mrb[0].mxu0
        %v2004 = vadd.f32 0.0, %v2003
        %v2005 = vpop.f32.mrb[0].mxu0
        %2006 = vmatprep.mubr.f32.mxu0 0.0
        %2007 = vmatmul.mubr.f32.gmra.mrb[0].mxu0 %v1828
        %v2008 = vpop.f32.mrb[0].mxu0
        %v2009 = vadd.f32 0.0, %v2008
        %v2010 = vpop.f32.mrb[0].mxu0
        %2011 = vmatprep.mubr.f32.mxu0 0.0
        %2012 = vmatmul.mubr.f32.gmra.mrb[0].mxu0 %v1831
        %v2013 = vpop.f32.mrb[0].mxu0
        %v2014 = vadd.f32 0.0, %v2013
        %v2015 = vpop.f32.mrb[0].mxu0
        %2016 = vmatprep.mubr.f32.mxu0 0.0
        %2017 = vmatmul.mubr.f32.gmra.mrb[0].mxu0 %v1834
        %v2018 = vpop.f32.mrb[0].mxu0
        %v2019 = vadd.f32 0.0, %v2018
        %v2020 = vpop.f32.mrb[0].mxu0
        %2021 = vmatprep.mubr.f32.mxu0 0.0
        %2022 = vmatmul.mubr.f32.gmra.mrb[0].mxu0 %v1837
        %v2023 = vpop.f32.mrb[0].mxu0
        %v2024 = vadd.f32 0.0, %v2023
        %v2025 = vpop.f32.mrb[0].mxu0
        %2026 = vmatprep.mubr.f32.mxu0 0.0
        %2027 = vmatmul.mubr.f32.gmra.mrb[0].mxu0 %v1840
        %v2028 = vpop.f32.mrb[0].mxu0
        %v2029 = vadd.f32 0.0, %v2028
        %v2030 = vpop.f32.mrb[0].mxu0
        %2031 = vmatprep.mubr.f32.mxu0 0.0
        %2032 = vmatmul.mubr.f32.gmra.mrb[0].mxu0 %v1843
        %v2033 = vpop.f32.mrb[0].mxu0
        %v2034 = vadd.f32 0.0, %v2033
        %v2035 = vpop.f32.mrb[0].mxu0
        %2036 = vmatprep.mubr.f32.mxu0 0.0
        %2037 = vmatmul.mubr.f32.gmra.mrb[0].mxu0 %v1846
        %v2038 = vpop.f32.mrb[0].mxu0
        %v2039 = vadd.f32 0.0, %v2038
        %v2040 = vpop.f32.mrb[0].mxu0
        %2041 = vmatprep.mubr.f32.mxu0 0.0
        %2042 = vmatmul.mubr.f32.gmra.mrb[0].mxu0 %v1849
        %v2043 = vpop.f32.mrb[0].mxu0
        %v2044 = vadd.f32 0.0, %v2043
        %v2045 = vpop.f32.mrb[0].mxu0
        %2046 = vmatprep.mubr.f32.mxu0 0.0
        %2047 = vmatmul.mubr.f32.gmra.mrb[0].mxu0 %v1852
        %v2048 = vpop.f32.mrb[0].mxu0
        %v2049 = vadd.f32 0.0, %v2048
        %v2050 = vpop.f32.mrb[0].mxu0
        %2051 = vmatprep.mubr.f32.mxu0 0.0
        %2052 = vmatmul.mubr.f32.gmra.mrb[0].mxu0 %v1855
        %v2053 = vpop.f32.mrb[0].mxu0
        %v2054 = vadd.f32 0.0, %v2053
        %v2055 = vpop.f32.mrb[0].mxu0
        %2056 = vmatprep.mubr.f32.mxu0 0.0
        %2057 = vmatmul.mubr.f32.gmra.mrb[0].mxu0 %v1858
        %v2058 = vpop.f32.mrb[0].mxu0
        %v2059 = vadd.f32 0.0, %v2058
        %v2060 = vpop.f32.mrb[0].mxu0
        %2061 = vmatprep.mubr.f32.mxu0 0.0
        %2062 = vmatmul.mubr.f32.gmra.mrb[0].mxu0 %v1861
        %v2063 = vpop.f32.mrb[0].mxu0
        %v2064 = vadd.f32 0.0, %v2063
        %v2065 = vpop.f32.mrb[0].mxu0
        %2066 = vmatprep.mubr.f32.mxu0 0.0
        %2067 = vmatmul.mubr.f32.gmra.mrb[0].mxu0 %v1864
        %v2068 = vpop.f32.mrb[0].mxu0
        %v2069 = vadd.f32 0.0, %v2068
        %v2070 = vpop.f32.mrb[0].mxu0
        %2071 = vmatprep.mubr.f32.mxu0 0.0
        %2072 = vmatmul.mubr.f32.gmra.mrb[0].mxu0 %v1867
        %v2073 = vpop.f32.mrb[0].mxu0
        %v2074 = vadd.f32 0.0, %v2073
        %v2075 = vpop.f32.mrb[0].mxu0
        %2076 = vmatprep.mubr.f32.mxu0 0.0
        %2077 = vmatmul.mubr.f32.gmra.mrb[0].mxu0 %v1870
        %v2078 = vpop.f32.mrb[0].mxu0
        %v2079 = vadd.f32 0.0, %v2078
        %v2080 = vpop.f32.mrb[0].mxu0
        %2081 = vmatprep.mubr.f32.mxu0 0.0
        %2082 = vmatmul.mubr.f32.gmra.mrb[0].mxu0 %v1873
        %v2083 = vpop.f32.mrb[0].mxu0
        %v2084 = vadd.f32 0.0, %v2083
        %v2085 = vpop.f32.mrb[0].mxu0
        %2086 = vmatprep.mubr.f32.mxu0 0.0
        %2087 = vmatmul.mubr.f32.gmra.mrb[0].mxu0 %v1876
        %v2088 = vpop.f32.mrb[0].mxu0
        %v2089 = vadd.f32 0.0, %v2088
        %v2090 = vpop.f32.mrb[0].mxu0
        %2091 = vmatprep.mubr.f32.mxu0 0.0
        %2092 = vmatmul.mubr.f32.gmra.mrb[0].mxu0 %v1879
        %v2093 = vpop.f32.mrb[0].mxu0
        %v2094 = vadd.f32 0.0, %v2093
        %v2095 = vpop.f32.mrb[0].mxu0
        %2096 = vmatprep.mubr.f32.mxu0 0.0
        %2097 = vmatmul.mubr.f32.gmra.mrb[0].mxu0 %v1882
        %v2098 = vpop.f32.mrb[0].mxu0
        %v2099 = vadd.f32 0.0, %v2098
        %v2100 = vpop.f32.mrb[0].mxu0
        %2101 = vmatprep.mubr.f32.mxu0 0.0
        %2102 = vmatmul.mubr.f32.gmra.mrb[0].mxu0 %v1885
        %v2103 = vpop.f32.mrb[0].mxu0
        %v2104 = vadd.f32 0.0, %v2103
        %v2105 = vpop.f32.mrb[0].mxu0
        %2106 = vmatprep.mubr.f32.mxu0 0.0
        %2107 = vmatmul.mubr.f32.gmra.mrb[0].mxu0 %v1888
        %v2108 = vpop.f32.mrb[0].mxu0
        %v2109 = vadd.f32 0.0, %v2108
        %v2110 = vpop.f32.mrb[0].mxu0
        %2111 = vmatprep.mubr.f32.mxu0 0.0
        %2112 = vmatmul.mubr.f32.gmra.mrb[0].mxu0 %v1891
        %v2113 = vpop.f32.mrb[0].mxu0
        %v2114 = vadd.f32 0.0, %v2113
        %v2115 = vpop.f32.mrb[0].mxu0
        %2116 = vmatprep.mubr.f32.mxu0 0.0
        %2117 = vmatmul.mubr.f32.gmra.mrb[0].mxu0 %v1894
        %v2118 = vpop.f32.mrb[0].mxu0
        %v2119 = vadd.f32 0.0, %v2118
        %v2120 = vpop.f32.mrb[0].mxu0
        %2121 = vmatprep.mubr.f32.mxu0 0.0
        %2122 = vmatmul.mubr.f32.gmra.mrb[0].mxu0 %v1897
        %v2123 = vpop.f32.mrb[0].mxu0
        %v2124 = vadd.f32 0.0, %v2123
        %v2125 = vpop.f32.mrb[0].mxu0
        %2126 = vdwg.mxu0
        %v2127 = vadd.f32 %v1737, %v1969
        %v2128 = vadd.f32 %v1738, %v1974
        %v2129 = vadd.f32 %v1739, %v1979
        %v2130 = vadd.f32 %v1740, %v1984
        %v2131 = vadd.f32 %v1741, %v1989
        %v2132 = vadd.f32 %v1742, %v1994
        %v2133 = vadd.f32 %v1743, %v1999
        %v2134 = vadd.f32 %v1744, %v2004
        %v2135 = vadd.f32 %v1745, %v2009
        %v2136 = vadd.f32 %v1746, %v2014
        %v2137 = vadd.f32 %v1747, %v2019
        %v2138 = vadd.f32 %v1748, %v2024
        %v2139 = vadd.f32 %v1749, %v2029
        %v2140 = vadd.f32 %v1750, %v2034
        %v2141 = vadd.f32 %v1751, %v2039
        %v2142 = vadd.f32 %v1752, %v2044
        %v2143 = vadd.f32 %v1753, %v2049
        %v2144 = vadd.f32 %v1754, %v2054
        %v2145 = vadd.f32 %v1755, %v2059
        %v2146 = vadd.f32 %v1756, %v2064
        %v2147 = vadd.f32 %v1757, %v2069
        %v2148 = vadd.f32 %v1758, %v2074
        %v2149 = vadd.f32 %v1759, %v2079
        %v2150 = vadd.f32 %v1760, %v2084
        %v2151 = vadd.f32 %v1761, %v2089
        %v2152 = vadd.f32 %v1762, %v2094
        %v2153 = vadd.f32 %v1763, %v2099
        %v2154 = vadd.f32 %v1764, %v2104
        %v2155 = vadd.f32 %v1765, %v2109
        %v2156 = vadd.f32 %v1766, %v2114
        %v2157 = vadd.f32 %v1767, %v2119
        %v2158 = vadd.f32 %v1768, %v2124
        %v2159 = vld [vmem:[%s1378 + $0x4] sm:$0xff]
        %v2160 = vld [vmem:[%s1378 + $0xc] sm:$0xff]
        %v2161 = vld [vmem:[%s1378 + $0x1c] sm:$0xff]
        %v2162 = vld [vmem:[%s1378 + $0x24] sm:$0xff]
        %v2163 = vld [vmem:[%s1378 + $0x34] sm:$0xff]
        %v2164 = vld [vmem:[%s1378 + $0x3c] sm:$0xff]
        %v2165 = vld [vmem:[%s1378 + $0x4c] sm:$0xff]
        %v2166 = vld [vmem:[%s1378 + $0x54] sm:$0xff]
        %v2167 = vld [vmem:[%s1378 + $0x64] sm:$0xff]
        %v2168 = vld [vmem:[%s1378 + $0x6c] sm:$0xff]
        %v2169 = vld [vmem:[%s1378 + $0x7c] sm:$0xff]
        %v2170 = vld [vmem:[%s1378 + $0x84] sm:$0xff]
        %v2171 = vld [vmem:[%s1378 + $0x94] sm:$0xff]
        %v2172 = vld [vmem:[%s1378 + $0x9c] sm:$0xff]
        %v2173 = vld [vmem:[%s1378 + $0xac] sm:$0xff]
        %v2174 = vld [vmem:[%s1378 + $0xb4] sm:$0xff]
        %v2175 = vld [vmem:[%s1378 + $0xc4] sm:$0xff]
        %v2176 = vld [vmem:[%s1378 + $0xcc] sm:$0xff]
        %v2177 = vld [vmem:[%s1378 + $0xdc] sm:$0xff]
        %v2178 = vld [vmem:[%s1378 + $0xe4] sm:$0xff]
        %v2179 = vld [vmem:[%s1378 + $0xf4] sm:$0xff]
        %v2180 = vld [vmem:[%s1378 + $0xfc] sm:$0xff]
        %v2181 = vld [vmem:[%s1378 + $0x10c] sm:$0xff]
        %v2182 = vld [vmem:[%s1378 + $0x114] sm:$0xff]
        %v2183 = vld [vmem:[%s1378 + $0x124] sm:$0xff]
        %v2184 = vld [vmem:[%s1378 + $0x12c] sm:$0xff]
        %v2185 = vld [vmem:[%s1378 + $0x13c] sm:$0xff]
        %v2186 = vld [vmem:[%s1378 + $0x144] sm:$0xff]
        %v2187 = vld [vmem:[%s1378 + $0x154] sm:$0xff]
        %v2188 = vld [vmem:[%s1378 + $0x15c] sm:$0xff]
        %v2189 = vld [vmem:[%s1378 + $0x16c] sm:$0xff]
        %v2190 = vld [vmem:[%s1378 + $0x174] sm:$0xff]
        %s2191 = scalar_lea.vmem [#allocation5], 20
        %v2192 = vld [vmem:[%s2191] sm:$0xf]
        %v2194 = vsel %vm338, %v2159, 0
        %v2197 = vsel %vm338, %v2160, 0
        %v2200 = vsel %vm338, %v2161, 0
        %v2203 = vsel %vm338, %v2162, 0
        %v2206 = vsel %vm338, %v2163, 0
        %v2209 = vsel %vm338, %v2164, 0
        %v2212 = vsel %vm338, %v2165, 0
        %v2215 = vsel %vm338, %v2166, 0
        %v2218 = vsel %vm338, %v2167, 0
        %v2221 = vsel %vm338, %v2168, 0
        %v2224 = vsel %vm338, %v2169, 0
        %v2227 = vsel %vm338, %v2170, 0
        %v2230 = vsel %vm338, %v2171, 0
        %v2233 = vsel %vm338, %v2172, 0
        %v2236 = vsel %vm338, %v2173, 0
        %v2239 = vsel %vm338, %v2174, 0
        %v2242 = vsel %vm338, %v2175, 0
        %v2245 = vsel %vm338, %v2176, 0
        %v2248 = vsel %vm338, %v2177, 0
        %v2251 = vsel %vm338, %v2178, 0
        %v2254 = vsel %vm338, %v2179, 0
        %v2257 = vsel %vm338, %v2180, 0
        %v2260 = vsel %vm338, %v2181, 0
        %v2263 = vsel %vm338, %v2182, 0
        %v2266 = vsel %vm338, %v2183, 0
        %v2269 = vsel %vm338, %v2184, 0
        %v2272 = vsel %vm338, %v2185, 0
        %v2275 = vsel %vm338, %v2186, 0
        %v2278 = vsel %vm338, %v2187, 0
        %v2281 = vsel %vm338, %v2188, 0
        %v2284 = vsel %vm338, %v2189, 0
        %v2287 = vsel %vm338, %v2190, 0
        %v2290 = vsel %vm435, %v2192, 0
        %2292 = vmatprep.subr.mxu0 0.0
        %2293 = vmatpush1.msra.mxu0 %v2290
        %2294 = vmatprep.subr.mxu0 0.0
        %2295 = vmatpush1.msra.mxu0 0.0
        %2296 = vmatprep.subr.mxu0 0.0
        %2297 = vmatpush1.msra.mxu0 0.0
        %2298 = vmatprep.subr.mxu0 0.0
        %2299 = vmatpush1.msra.mxu0 0.0
        %2300 = vmatprep.subr.mxu0 0.0
        %2301 = vmatpush1.msra.mxu0 0.0
        %2302 = vmatprep.subr.mxu0 0.0
        %2303 = vmatpush1.msra.mxu0 0.0
        %2304 = vmatprep.subr.mxu0 0.0
        %2305 = vmatpush1.msra.mxu0 0.0
        %2306 = vmatprep.subr.mxu0 0.0
        %2307 = vmatpush1.msra.mxu0 0.0
        %2308 = vmatprep.subr.mxu0 0.0
        %2309 = vmatpush1.msra.mxu0 0.0
        %2310 = vmatprep.subr.mxu0 0.0
        %2311 = vmatpush1.msra.mxu0 0.0
        %2312 = vmatprep.subr.mxu0 0.0
        %2313 = vmatpush1.msra.mxu0 0.0
        %2314 = vmatprep.subr.mxu0 0.0
        %2315 = vmatpush1.msra.mxu0 0.0
        %2316 = vmatprep.subr.mxu0 0.0
        %2317 = vmatpush1.msra.mxu0 0.0
        %2318 = vmatprep.subr.mxu0 0.0
        %2319 = vmatpush1.msra.mxu0 0.0
        %2320 = vmatprep.subr.mxu0 0.0
        %2321 = vmatpush1.msra.mxu0 0.0
        %2322 = vmatprep.subr.mxu0 0.0
        %2323 = vmatpush1.msra.mxu0 0.0
        %2324 = vmatprep.subr.mxu0 0.0
        %2325 = vmatpush1.msra.mxu0 0.0
        %2326 = vmatprep.subr.mxu0 0.0
        %2327 = vmatpush1.msra.mxu0 0.0
        %2328 = vmatprep.subr.mxu0 0.0
        %2329 = vmatpush1.msra.mxu0 0.0
        %2330 = vmatprep.subr.mxu0 0.0
        %2331 = vmatpush1.msra.mxu0 0.0
        %2332 = vmatprep.subr.mxu0 0.0
        %2333 = vmatpush1.msra.mxu0 0.0
        %2334 = vmatprep.subr.mxu0 0.0
        %2335 = vmatpush1.msra.mxu0 0.0
        %2336 = vmatprep.subr.mxu0 0.0
        %2337 = vmatpush1.msra.mxu0 0.0
        %2338 = vmatprep.subr.mxu0 0.0
        %2339 = vmatpush1.msra.mxu0 0.0
        %2340 = vmatprep.subr.mxu0 0.0
        %2341 = vmatpush1.msra.mxu0 0.0
        %2342 = vmatprep.subr.mxu0 0.0
        %2343 = vmatpush1.msra.mxu0 0.0
        %2344 = vmatprep.subr.mxu0 0.0
        %2345 = vmatpush1.msra.mxu0 0.0
        %2346 = vmatprep.subr.mxu0 0.0
        %2347 = vmatpush1.msra.mxu0 0.0
        %2348 = vmatprep.subr.mxu0 0.0
        %2349 = vmatpush1.msra.mxu0 0.0
        %2350 = vmatprep.subr.mxu0 0.0
        %2351 = vmatpush1.msra.mxu0 0.0
        %2352 = vmatprep.subr.mxu0 0.0
        %2353 = vmatpush1.msra.mxu0 0.0
        %2354 = vmatprep.subr.mxu0 0.0
        %2355 = vmatpush1.msra.mxu0 0.0
        %2356 = vmatprep.mubr.f32.mxu0 0.0
        %2357 = vmatmul.mubr.f32.gmra.mrb[0].mxu0 %v2194
        %v2358 = vpop.f32.mrb[0].mxu0
        %v2359 = vadd.f32 0.0, %v2358
        %v2360 = vpop.f32.mrb[0].mxu0
        %2361 = vmatprep.mubr.f32.mxu0 0.0
        %2362 = vmatmul.mubr.f32.gmra.mrb[0].mxu0 %v2197
        %v2363 = vpop.f32.mrb[0].mxu0
        %v2364 = vadd.f32 0.0, %v2363
        %v2365 = vpop.f32.mrb[0].mxu0
        %2366 = vmatprep.mubr.f32.mxu0 0.0
        %2367 = vmatmul.mubr.f32.gmra.mrb[0].mxu0 %v2200
        %v2368 = vpop.f32.mrb[0].mxu0
        %v2369 = vadd.f32 0.0, %v2368
        %v2370 = vpop.f32.mrb[0].mxu0
        %2371 = vmatprep.mubr.f32.mxu0 0.0
        %2372 = vmatmul.mubr.f32.gmra.mrb[0].mxu0 %v2203
        %v2373 = vpop.f32.mrb[0].mxu0
        %v2374 = vadd.f32 0.0, %v2373
        %v2375 = vpop.f32.mrb[0].mxu0
        %2376 = vmatprep.mubr.f32.mxu0 0.0
        %2377 = vmatmul.mubr.f32.gmra.mrb[0].mxu0 %v2206
        %v2378 = vpop.f32.mrb[0].mxu0
        %v2379 = vadd.f32 0.0, %v2378
        %v2380 = vpop.f32.mrb[0].mxu0
        %2381 = vmatprep.mubr.f32.mxu0 0.0
        %2382 = vmatmul.mubr.f32.gmra.mrb[0].mxu0 %v2209
        %v2383 = vpop.f32.mrb[0].mxu0
        %v2384 = vadd.f32 0.0, %v2383
        %v2385 = vpop.f32.mrb[0].mxu0
        %2386 = vmatprep.mubr.f32.mxu0 0.0
        %2387 = vmatmul.mubr.f32.gmra.mrb[0].mxu0 %v2212
        %v2388 = vpop.f32.mrb[0].mxu0
        %v2389 = vadd.f32 0.0, %v2388
        %v2390 = vpop.f32.mrb[0].mxu0
        %2391 = vmatprep.mubr.f32.mxu0 0.0
        %2392 = vmatmul.mubr.f32.gmra.mrb[0].mxu0 %v2215
        %v2393 = vpop.f32.mrb[0].mxu0
        %v2394 = vadd.f32 0.0, %v2393
        %v2395 = vpop.f32.mrb[0].mxu0
        %2396 = vmatprep.mubr.f32.mxu0 0.0
        %2397 = vmatmul.mubr.f32.gmra.mrb[0].mxu0 %v2218
        %v2398 = vpop.f32.mrb[0].mxu0
        %v2399 = vadd.f32 0.0, %v2398
        %v2400 = vpop.f32.mrb[0].mxu0
        %2401 = vmatprep.mubr.f32.mxu0 0.0
        %2402 = vmatmul.mubr.f32.gmra.mrb[0].mxu0 %v2221
        %v2403 = vpop.f32.mrb[0].mxu0
        %v2404 = vadd.f32 0.0, %v2403
        %v2405 = vpop.f32.mrb[0].mxu0
        %2406 = vmatprep.mubr.f32.mxu0 0.0
        %2407 = vmatmul.mubr.f32.gmra.mrb[0].mxu0 %v2224
        %v2408 = vpop.f32.mrb[0].mxu0
        %v2409 = vadd.f32 0.0, %v2408
        %v2410 = vpop.f32.mrb[0].mxu0
        %2411 = vmatprep.mubr.f32.mxu0 0.0
        %2412 = vmatmul.mubr.f32.gmra.mrb[0].mxu0 %v2227
        %v2413 = vpop.f32.mrb[0].mxu0
        %v2414 = vadd.f32 0.0, %v2413
        %v2415 = vpop.f32.mrb[0].mxu0
        %2416 = vmatprep.mubr.f32.mxu0 0.0
        %2417 = vmatmul.mubr.f32.gmra.mrb[0].mxu0 %v2230
        %v2418 = vpop.f32.mrb[0].mxu0
        %v2419 = vadd.f32 0.0, %v2418
        %v2420 = vpop.f32.mrb[0].mxu0
        %2421 = vmatprep.mubr.f32.mxu0 0.0
        %2422 = vmatmul.mubr.f32.gmra.mrb[0].mxu0 %v2233
        %v2423 = vpop.f32.mrb[0].mxu0
        %v2424 = vadd.f32 0.0, %v2423
        %v2425 = vpop.f32.mrb[0].mxu0
        %2426 = vmatprep.mubr.f32.mxu0 0.0
        %2427 = vmatmul.mubr.f32.gmra.mrb[0].mxu0 %v2236
        %v2428 = vpop.f32.mrb[0].mxu0
        %v2429 = vadd.f32 0.0, %v2428
        %v2430 = vpop.f32.mrb[0].mxu0
        %2431 = vmatprep.mubr.f32.mxu0 0.0
        %2432 = vmatmul.mubr.f32.gmra.mrb[0].mxu0 %v2239
        %v2433 = vpop.f32.mrb[0].mxu0
        %v2434 = vadd.f32 0.0, %v2433
        %v2435 = vpop.f32.mrb[0].mxu0
        %2436 = vmatprep.mubr.f32.mxu0 0.0
        %2437 = vmatmul.mubr.f32.gmra.mrb[0].mxu0 %v2242
        %v2438 = vpop.f32.mrb[0].mxu0
        %v2439 = vadd.f32 0.0, %v2438
        %v2440 = vpop.f32.mrb[0].mxu0
        %2441 = vmatprep.mubr.f32.mxu0 0.0
        %2442 = vmatmul.mubr.f32.gmra.mrb[0].mxu0 %v2245
        %v2443 = vpop.f32.mrb[0].mxu0
        %v2444 = vadd.f32 0.0, %v2443
        %v2445 = vpop.f32.mrb[0].mxu0
        %2446 = vmatprep.mubr.f32.mxu0 0.0
        %2447 = vmatmul.mubr.f32.gmra.mrb[0].mxu0 %v2248
        %v2448 = vpop.f32.mrb[0].mxu0
        %v2449 = vadd.f32 0.0, %v2448
        %v2450 = vpop.f32.mrb[0].mxu0
        %2451 = vmatprep.mubr.f32.mxu0 0.0
        %2452 = vmatmul.mubr.f32.gmra.mrb[0].mxu0 %v2251
        %v2453 = vpop.f32.mrb[0].mxu0
        %v2454 = vadd.f32 0.0, %v2453
        %v2455 = vpop.f32.mrb[0].mxu0
        %2456 = vmatprep.mubr.f32.mxu0 0.0
        %2457 = vmatmul.mubr.f32.gmra.mrb[0].mxu0 %v2254
        %v2458 = vpop.f32.mrb[0].mxu0
        %v2459 = vadd.f32 0.0, %v2458
        %v2460 = vpop.f32.mrb[0].mxu0
        %2461 = vmatprep.mubr.f32.mxu0 0.0
        %2462 = vmatmul.mubr.f32.gmra.mrb[0].mxu0 %v2257
        %v2463 = vpop.f32.mrb[0].mxu0
        %v2464 = vadd.f32 0.0, %v2463
        %v2465 = vpop.f32.mrb[0].mxu0
        %2466 = vmatprep.mubr.f32.mxu0 0.0
        %2467 = vmatmul.mubr.f32.gmra.mrb[0].mxu0 %v2260
        %v2468 = vpop.f32.mrb[0].mxu0
        %v2469 = vadd.f32 0.0, %v2468
        %v2470 = vpop.f32.mrb[0].mxu0
        %2471 = vmatprep.mubr.f32.mxu0 0.0
        %2472 = vmatmul.mubr.f32.gmra.mrb[0].mxu0 %v2263
        %v2473 = vpop.f32.mrb[0].mxu0
        %v2474 = vadd.f32 0.0, %v2473
        %v2475 = vpop.f32.mrb[0].mxu0
        %2476 = vmatprep.mubr.f32.mxu0 0.0
        %2477 = vmatmul.mubr.f32.gmra.mrb[0].mxu0 %v2266
        %v2478 = vpop.f32.mrb[0].mxu0
        %v2479 = vadd.f32 0.0, %v2478
        %v2480 = vpop.f32.mrb[0].mxu0
        %2481 = vmatprep.mubr.f32.mxu0 0.0
        %2482 = vmatmul.mubr.f32.gmra.mrb[0].mxu0 %v2269
        %v2483 = vpop.f32.mrb[0].mxu0
        %v2484 = vadd.f32 0.0, %v2483
        %v2485 = vpop.f32.mrb[0].mxu0
        %2486 = vmatprep.mubr.f32.mxu0 0.0
        %2487 = vmatmul.mubr.f32.gmra.mrb[0].mxu0 %v2272
        %v2488 = vpop.f32.mrb[0].mxu0
        %v2489 = vadd.f32 0.0, %v2488
        %v2490 = vpop.f32.mrb[0].mxu0
        %2491 = vmatprep.mubr.f32.mxu0 0.0
        %2492 = vmatmul.mubr.f32.gmra.mrb[0].mxu0 %v2275
        %v2493 = vpop.f32.mrb[0].mxu0
        %v2494 = vadd.f32 0.0, %v2493
        %v2495 = vpop.f32.mrb[0].mxu0
        %2496 = vmatprep.mubr.f32.mxu0 0.0
        %2497 = vmatmul.mubr.f32.gmra.mrb[0].mxu0 %v2278
        %v2498 = vpop.f32.mrb[0].mxu0
        %v2499 = vadd.f32 0.0, %v2498
        %v2500 = vpop.f32.mrb[0].mxu0
        %2501 = vmatprep.mubr.f32.mxu0 0.0
        %2502 = vmatmul.mubr.f32.gmra.mrb[0].mxu0 %v2281
        %v2503 = vpop.f32.mrb[0].mxu0
        %v2504 = vadd.f32 0.0, %v2503
        %v2505 = vpop.f32.mrb[0].mxu0
        %2506 = vmatprep.mubr.f32.mxu0 0.0
        %2507 = vmatmul.mubr.f32.gmra.mrb[0].mxu0 %v2284
        %v2508 = vpop.f32.mrb[0].mxu0
        %v2509 = vadd.f32 0.0, %v2508
        %v2510 = vpop.f32.mrb[0].mxu0
        %2511 = vmatprep.mubr.f32.mxu0 0.0
        %2512 = vmatmul.mubr.f32.gmra.mrb[0].mxu0 %v2287
        %v2513 = vpop.f32.mrb[0].mxu0
        %v2514 = vadd.f32 0.0, %v2513
        %v2515 = vpop.f32.mrb[0].mxu0
        %2516 = vdwg.mxu0
        %v2517 = vadd.f32 %v2127, %v2359
        %v2518 = vadd.f32 %v2128, %v2364
        %v2519 = vadd.f32 %v2129, %v2369
        %v2520 = vadd.f32 %v2130, %v2374
        %v2521 = vadd.f32 %v2131, %v2379
        %v2522 = vadd.f32 %v2132, %v2384
        %v2523 = vadd.f32 %v2133, %v2389
        %v2524 = vadd.f32 %v2134, %v2394
        %v2525 = vadd.f32 %v2135, %v2399
        %v2526 = vadd.f32 %v2136, %v2404
        %v2527 = vadd.f32 %v2137, %v2409
        %v2528 = vadd.f32 %v2138, %v2414
        %v2529 = vadd.f32 %v2139, %v2419
        %v2530 = vadd.f32 %v2140, %v2424
        %v2531 = vadd.f32 %v2141, %v2429
        %v2532 = vadd.f32 %v2142, %v2434
        %v2533 = vadd.f32 %v2143, %v2439
        %v2534 = vadd.f32 %v2144, %v2444
        %v2535 = vadd.f32 %v2145, %v2449
        %v2536 = vadd.f32 %v2146, %v2454
        %v2537 = vadd.f32 %v2147, %v2459
        %v2538 = vadd.f32 %v2148, %v2464
        %v2539 = vadd.f32 %v2149, %v2469
        %v2540 = vadd.f32 %v2150, %v2474
        %v2541 = vadd.f32 %v2151, %v2479
        %v2542 = vadd.f32 %v2152, %v2484
        %v2543 = vadd.f32 %v2153, %v2489
        %v2544 = vadd.f32 %v2154, %v2494
        %v2545 = vadd.f32 %v2155, %v2499
        %v2546 = vadd.f32 %v2156, %v2504
        %v2547 = vadd.f32 %v2157, %v2509
        %v2548 = vadd.f32 %v2158, %v2514
        %s2549 = scalar_lea.vmem %s233, 96 [#allocation2]
        %v2550 = vld [vmem:[%s2549] sm:$0xff]
        %v2551 = vld [vmem:[%s2549 + $0x8] sm:$0xff]
        %v2552 = vld [vmem:[%s2549 + $0x18] sm:$0xff]
        %v2553 = vld [vmem:[%s2549 + $0x20] sm:$0xff]
        %v2554 = vld [vmem:[%s2549 + $0x30] sm:$0xff]
        %v2555 = vld [vmem:[%s2549 + $0x38] sm:$0xff]
        %v2556 = vld [vmem:[%s2549 + $0x48] sm:$0xff]
        %v2557 = vld [vmem:[%s2549 + $0x50] sm:$0xff]
        %v2558 = vld [vmem:[%s2549 + $0x60] sm:$0xff]
        %v2559 = vld [vmem:[%s2549 + $0x68] sm:$0xff]
        %v2560 = vld [vmem:[%s2549 + $0x78] sm:$0xff]
        %v2561 = vld [vmem:[%s2549 + $0x80] sm:$0xff]
        %v2562 = vld [vmem:[%s2549 + $0x90] sm:$0xff]
        %v2563 = vld [vmem:[%s2549 + $0x98] sm:$0xff]
        %v2564 = vld [vmem:[%s2549 + $0xa8] sm:$0xff]
        %v2565 = vld [vmem:[%s2549 + $0xb0] sm:$0xff]
        %v2566 = vld [vmem:[%s2549 + $0xc0] sm:$0xff]
        %v2567 = vld [vmem:[%s2549 + $0xc8] sm:$0xff]
        %v2568 = vld [vmem:[%s2549 + $0xd8] sm:$0xff]
        %v2569 = vld [vmem:[%s2549 + $0xe0] sm:$0xff]
        %v2570 = vld [vmem:[%s2549 + $0xf0] sm:$0xff]
        %v2571 = vld [vmem:[%s2549 + $0xf8] sm:$0xff]
        %v2572 = vld [vmem:[%s2549 + $0x108] sm:$0xff]
        %v2573 = vld [vmem:[%s2549 + $0x110] sm:$0xff]
        %v2574 = vld [vmem:[%s2549 + $0x120] sm:$0xff]
        %v2575 = vld [vmem:[%s2549 + $0x128] sm:$0xff]
        %v2576 = vld [vmem:[%s2549 + $0x138] sm:$0xff]
        %v2577 = vld [vmem:[%s2549 + $0x140] sm:$0xff]
        %v2578 = vld [vmem:[%s2549 + $0x150] sm:$0xff]
        %v2579 = vld [vmem:[%s2549 + $0x158] sm:$0xff]
        %v2580 = vld [vmem:[%s2549 + $0x168] sm:$0xff]
        %v2581 = vld [vmem:[%s2549 + $0x170] sm:$0xff]
        %s2582 = scalar_lea.vmem [#allocation5], 24
        %v2583 = vld [vmem:[%s2582] sm:$0xf]
        %v2585 = vsel %vm338, %v2550, 0
        %v2588 = vsel %vm338, %v2551, 0
        %v2591 = vsel %vm338, %v2552, 0
        %v2594 = vsel %vm338, %v2553, 0
        %v2597 = vsel %vm338, %v2554, 0
        %v2600 = vsel %vm338, %v2555, 0
        %v2603 = vsel %vm338, %v2556, 0
        %v2606 = vsel %vm338, %v2557, 0
        %v2609 = vsel %vm338, %v2558, 0
        %v2612 = vsel %vm338, %v2559, 0
        %v2615 = vsel %vm338, %v2560, 0
        %v2618 = vsel %vm338, %v2561, 0
        %v2621 = vsel %vm338, %v2562, 0
        %v2624 = vsel %vm338, %v2563, 0
        %v2627 = vsel %vm338, %v2564, 0
        %v2630 = vsel %vm338, %v2565, 0
        %v2633 = vsel %vm338, %v2566, 0
        %v2636 = vsel %vm338, %v2567, 0
        %v2639 = vsel %vm338, %v2568, 0
        %v2642 = vsel %vm338, %v2569, 0
        %v2645 = vsel %vm338, %v2570, 0
        %v2648 = vsel %vm338, %v2571, 0
        %v2651 = vsel %vm338, %v2572, 0
        %v2654 = vsel %vm338, %v2573, 0
        %v2657 = vsel %vm338, %v2574, 0
        %v2660 = vsel %vm338, %v2575, 0
        %v2663 = vsel %vm338, %v2576, 0
        %v2666 = vsel %vm338, %v2577, 0
        %v2669 = vsel %vm338, %v2578, 0
        %v2672 = vsel %vm338, %v2579, 0
        %v2675 = vsel %vm338, %v2580, 0
        %v2678 = vsel %vm338, %v2581, 0
        %v2681 = vsel %vm435, %v2583, 0
        %2683 = vmatprep.subr.mxu0 0.0
        %2684 = vmatpush1.msra.mxu0 %v2681
        %2685 = vmatprep.subr.mxu0 0.0
        %2686 = vmatpush1.msra.mxu0 0.0
        %2687 = vmatprep.subr.mxu0 0.0
        %2688 = vmatpush1.msra.mxu0 0.0
        %2689 = vmatprep.subr.mxu0 0.0
        %2690 = vmatpush1.msra.mxu0 0.0
        %2691 = vmatprep.subr.mxu0 0.0
        %2692 = vmatpush1.msra.mxu0 0.0
        %2693 = vmatprep.subr.mxu0 0.0
        %2694 = vmatpush1.msra.mxu0 0.0
        %2695 = vmatprep.subr.mxu0 0.0
        %2696 = vmatpush1.msra.mxu0 0.0
        %2697 = vmatprep.subr.mxu0 0.0
        %2698 = vmatpush1.msra.mxu0 0.0
        %2699 = vmatprep.subr.mxu0 0.0
        %2700 = vmatpush1.msra.mxu0 0.0
        %2701 = vmatprep.subr.mxu0 0.0
        %2702 = vmatpush1.msra.mxu0 0.0
        %2703 = vmatprep.subr.mxu0 0.0
        %2704 = vmatpush1.msra.mxu0 0.0
        %2705 = vmatprep.subr.mxu0 0.0
        %2706 = vmatpush1.msra.mxu0 0.0
        %2707 = vmatprep.subr.mxu0 0.0
        %2708 = vmatpush1.msra.mxu0 0.0
        %2709 = vmatprep.subr.mxu0 0.0
        %2710 = vmatpush1.msra.mxu0 0.0
        %2711 = vmatprep.subr.mxu0 0.0
        %2712 = vmatpush1.msra.mxu0 0.0
        %2713 = vmatprep.subr.mxu0 0.0
        %2714 = vmatpush1.msra.mxu0 0.0
        %2715 = vmatprep.subr.mxu0 0.0
        %2716 = vmatpush1.msra.mxu0 0.0
        %2717 = vmatprep.subr.mxu0 0.0
        %2718 = vmatpush1.msra.mxu0 0.0
        %2719 = vmatprep.subr.mxu0 0.0
        %2720 = vmatpush1.msra.mxu0 0.0
        %2721 = vmatprep.subr.mxu0 0.0
        %2722 = vmatpush1.msra.mxu0 0.0
        %2723 = vmatprep.subr.mxu0 0.0
        %2724 = vmatpush1.msra.mxu0 0.0
        %2725 = vmatprep.subr.mxu0 0.0
        %2726 = vmatpush1.msra.mxu0 0.0
        %2727 = vmatprep.subr.mxu0 0.0
        %2728 = vmatpush1.msra.mxu0 0.0
        %2729 = vmatprep.subr.mxu0 0.0
        %2730 = vmatpush1.msra.mxu0 0.0
        %2731 = vmatprep.subr.mxu0 0.0
        %2732 = vmatpush1.msra.mxu0 0.0
        %2733 = vmatprep.subr.mxu0 0.0
        %2734 = vmatpush1.msra.mxu0 0.0
        %2735 = vmatprep.subr.mxu0 0.0
        %2736 = vmatpush1.msra.mxu0 0.0
        %2737 = vmatprep.subr.mxu0 0.0
        %2738 = vmatpush1.msra.mxu0 0.0
        %2739 = vmatprep.subr.mxu0 0.0
        %2740 = vmatpush1.msra.mxu0 0.0
        %2741 = vmatprep.subr.mxu0 0.0
        %2742 = vmatpush1.msra.mxu0 0.0
        %2743 = vmatprep.subr.mxu0 0.0
        %2744 = vmatpush1.msra.mxu0 0.0
        %2745 = vmatprep.subr.mxu0 0.0
        %2746 = vmatpush1.msra.mxu0 0.0
        %2747 = vmatprep.mubr.f32.mxu0 0.0
        %2748 = vmatmul.mubr.f32.gmra.mrb[0].mxu0 %v2585
        %v2749 = vpop.f32.mrb[0].mxu0
        %v2750 = vadd.f32 0.0, %v2749
        %v2751 = vpop.f32.mrb[0].mxu0
        %2752 = vmatprep.mubr.f32.mxu0 0.0
        %2753 = vmatmul.mubr.f32.gmra.mrb[0].mxu0 %v2588
        %v2754 = vpop.f32.mrb[0].mxu0
        %v2755 = vadd.f32 0.0, %v2754
        %v2756 = vpop.f32.mrb[0].mxu0
        %2757 = vmatprep.mubr.f32.mxu0 0.0
        %2758 = vmatmul.mubr.f32.gmra.mrb[0].mxu0 %v2591
        %v2759 = vpop.f32.mrb[0].mxu0
        %v2760 = vadd.f32 0.0, %v2759
        %v2761 = vpop.f32.mrb[0].mxu0
        %2762 = vmatprep.mubr.f32.mxu0 0.0
        %2763 = vmatmul.mubr.f32.gmra.mrb[0].mxu0 %v2594
        %v2764 = vpop.f32.mrb[0].mxu0
        %v2765 = vadd.f32 0.0, %v2764
        %v2766 = vpop.f32.mrb[0].mxu0
        %2767 = vmatprep.mubr.f32.mxu0 0.0
        %2768 = vmatmul.mubr.f32.gmra.mrb[0].mxu0 %v2597
        %v2769 = vpop.f32.mrb[0].mxu0
        %v2770 = vadd.f32 0.0, %v2769
        %v2771 = vpop.f32.mrb[0].mxu0
        %2772 = vmatprep.mubr.f32.mxu0 0.0
        %2773 = vmatmul.mubr.f32.gmra.mrb[0].mxu0 %v2600
        %v2774 = vpop.f32.mrb[0].mxu0
        %v2775 = vadd.f32 0.0, %v2774
        %v2776 = vpop.f32.mrb[0].mxu0
        %2777 = vmatprep.mubr.f32.mxu0 0.0
        %2778 = vmatmul.mubr.f32.gmra.mrb[0].mxu0 %v2603
        %v2779 = vpop.f32.mrb[0].mxu0
        %v2780 = vadd.f32 0.0, %v2779
        %v2781 = vpop.f32.mrb[0].mxu0
        %2782 = vmatprep.mubr.f32.mxu0 0.0
        %2783 = vmatmul.mubr.f32.gmra.mrb[0].mxu0 %v2606
        %v2784 = vpop.f32.mrb[0].mxu0
        %v2785 = vadd.f32 0.0, %v2784
        %v2786 = vpop.f32.mrb[0].mxu0
        %2787 = vmatprep.mubr.f32.mxu0 0.0
        %2788 = vmatmul.mubr.f32.gmra.mrb[0].mxu0 %v2609
        %v2789 = vpop.f32.mrb[0].mxu0
        %v2790 = vadd.f32 0.0, %v2789
        %v2791 = vpop.f32.mrb[0].mxu0
        %2792 = vmatprep.mubr.f32.mxu0 0.0
        %2793 = vmatmul.mubr.f32.gmra.mrb[0].mxu0 %v2612
        %v2794 = vpop.f32.mrb[0].mxu0
        %v2795 = vadd.f32 0.0, %v2794
        %v2796 = vpop.f32.mrb[0].mxu0
        %2797 = vmatprep.mubr.f32.mxu0 0.0
        %2798 = vmatmul.mubr.f32.gmra.mrb[0].mxu0 %v2615
        %v2799 = vpop.f32.mrb[0].mxu0
        %v2800 = vadd.f32 0.0, %v2799
        %v2801 = vpop.f32.mrb[0].mxu0
        %2802 = vmatprep.mubr.f32.mxu0 0.0
        %2803 = vmatmul.mubr.f32.gmra.mrb[0].mxu0 %v2618
        %v2804 = vpop.f32.mrb[0].mxu0
        %v2805 = vadd.f32 0.0, %v2804
        %v2806 = vpop.f32.mrb[0].mxu0
        %2807 = vmatprep.mubr.f32.mxu0 0.0
        %2808 = vmatmul.mubr.f32.gmra.mrb[0].mxu0 %v2621
        %v2809 = vpop.f32.mrb[0].mxu0
        %v2810 = vadd.f32 0.0, %v2809
        %v2811 = vpop.f32.mrb[0].mxu0
        %2812 = vmatprep.mubr.f32.mxu0 0.0
        %2813 = vmatmul.mubr.f32.gmra.mrb[0].mxu0 %v2624
        %v2814 = vpop.f32.mrb[0].mxu0
        %v2815 = vadd.f32 0.0, %v2814
        %v2816 = vpop.f32.mrb[0].mxu0
        %2817 = vmatprep.mubr.f32.mxu0 0.0
        %2818 = vmatmul.mubr.f32.gmra.mrb[0].mxu0 %v2627
        %v2819 = vpop.f32.mrb[0].mxu0
        %v2820 = vadd.f32 0.0, %v2819
        %v2821 = vpop.f32.mrb[0].mxu0
        %2822 = vmatprep.mubr.f32.mxu0 0.0
        %2823 = vmatmul.mubr.f32.gmra.mrb[0].mxu0 %v2630
        %v2824 = vpop.f32.mrb[0].mxu0
        %v2825 = vadd.f32 0.0, %v2824
        %v2826 = vpop.f32.mrb[0].mxu0
        %2827 = vmatprep.mubr.f32.mxu0 0.0
        %2828 = vmatmul.mubr.f32.gmra.mrb[0].mxu0 %v2633
        %v2829 = vpop.f32.mrb[0].mxu0
        %v2830 = vadd.f32 0.0, %v2829
        %v2831 = vpop.f32.mrb[0].mxu0
        %2832 = vmatprep.mubr.f32.mxu0 0.0
        %2833 = vmatmul.mubr.f32.gmra.mrb[0].mxu0 %v2636
        %v2834 = vpop.f32.mrb[0].mxu0
        %v2835 = vadd.f32 0.0, %v2834
        %v2836 = vpop.f32.mrb[0].mxu0
        %2837 = vmatprep.mubr.f32.mxu0 0.0
        %2838 = vmatmul.mubr.f32.gmra.mrb[0].mxu0 %v2639
        %v2839 = vpop.f32.mrb[0].mxu0
        %v2840 = vadd.f32 0.0, %v2839
        %v2841 = vpop.f32.mrb[0].mxu0
        %2842 = vmatprep.mubr.f32.mxu0 0.0
        %2843 = vmatmul.mubr.f32.gmra.mrb[0].mxu0 %v2642
        %v2844 = vpop.f32.mrb[0].mxu0
        %v2845 = vadd.f32 0.0, %v2844
        %v2846 = vpop.f32.mrb[0].mxu0
        %2847 = vmatprep.mubr.f32.mxu0 0.0
        %2848 = vmatmul.mubr.f32.gmra.mrb[0].mxu0 %v2645
        %v2849 = vpop.f32.mrb[0].mxu0
        %v2850 = vadd.f32 0.0, %v2849
        %v2851 = vpop.f32.mrb[0].mxu0
        %2852 = vmatprep.mubr.f32.mxu0 0.0
        %2853 = vmatmul.mubr.f32.gmra.mrb[0].mxu0 %v2648
        %v2854 = vpop.f32.mrb[0].mxu0
        %v2855 = vadd.f32 0.0, %v2854
        %v2856 = vpop.f32.mrb[0].mxu0
        %2857 = vmatprep.mubr.f32.mxu0 0.0
        %2858 = vmatmul.mubr.f32.gmra.mrb[0].mxu0 %v2651
        %v2859 = vpop.f32.mrb[0].mxu0
        %v2860 = vadd.f32 0.0, %v2859
        %v2861 = vpop.f32.mrb[0].mxu0
        %2862 = vmatprep.mubr.f32.mxu0 0.0
        %2863 = vmatmul.mubr.f32.gmra.mrb[0].mxu0 %v2654
        %v2864 = vpop.f32.mrb[0].mxu0
        %v2865 = vadd.f32 0.0, %v2864
        %v2866 = vpop.f32.mrb[0].mxu0
        %2867 = vmatprep.mubr.f32.mxu0 0.0
        %2868 = vmatmul.mubr.f32.gmra.mrb[0].mxu0 %v2657
        %v2869 = vpop.f32.mrb[0].mxu0
        %v2870 = vadd.f32 0.0, %v2869
        %v2871 = vpop.f32.mrb[0].mxu0
        %2872 = vmatprep.mubr.f32.mxu0 0.0
        %2873 = vmatmul.mubr.f32.gmra.mrb[0].mxu0 %v2660
        %v2874 = vpop.f32.mrb[0].mxu0
        %v2875 = vadd.f32 0.0, %v2874
        %v2876 = vpop.f32.mrb[0].mxu0
        %2877 = vmatprep.mubr.f32.mxu0 0.0
        %2878 = vmatmul.mubr.f32.gmra.mrb[0].mxu0 %v2663
        %v2879 = vpop.f32.mrb[0].mxu0
        %v2880 = vadd.f32 0.0, %v2879
        %v2881 = vpop.f32.mrb[0].mxu0
        %2882 = vmatprep.mubr.f32.mxu0 0.0
        %2883 = vmatmul.mubr.f32.gmra.mrb[0].mxu0 %v2666
        %v2884 = vpop.f32.mrb[0].mxu0
        %v2885 = vadd.f32 0.0, %v2884
        %v2886 = vpop.f32.mrb[0].mxu0
        %2887 = vmatprep.mubr.f32.mxu0 0.0
        %2888 = vmatmul.mubr.f32.gmra.mrb[0].mxu0 %v2669
        %v2889 = vpop.f32.mrb[0].mxu0
        %v2890 = vadd.f32 0.0, %v2889
        %v2891 = vpop.f32.mrb[0].mxu0
        %2892 = vmatprep.mubr.f32.mxu0 0.0
        %2893 = vmatmul.mubr.f32.gmra.mrb[0].mxu0 %v2672
        %v2894 = vpop.f32.mrb[0].mxu0
        %v2895 = vadd.f32 0.0, %v2894
        %v2896 = vpop.f32.mrb[0].mxu0
        %2897 = vmatprep.mubr.f32.mxu0 0.0
        %2898 = vmatmul.mubr.f32.gmra.mrb[0].mxu0 %v2675
        %v2899 = vpop.f32.mrb[0].mxu0
        %v2900 = vadd.f32 0.0, %v2899
        %v2901 = vpop.f32.mrb[0].mxu0
        %2902 = vmatprep.mubr.f32.mxu0 0.0
        %2903 = vmatmul.mubr.f32.gmra.mrb[0].mxu0 %v2678
        %v2904 = vpop.f32.mrb[0].mxu0
        %v2905 = vadd.f32 0.0, %v2904
        %v2906 = vpop.f32.mrb[0].mxu0
        %2907 = vdwg.mxu0
        %v2908 = vadd.f32 %v2517, %v2750
        %v2909 = vadd.f32 %v2518, %v2755
        %v2910 = vadd.f32 %v2519, %v2760
        %v2911 = vadd.f32 %v2520, %v2765
        %v2912 = vadd.f32 %v2521, %v2770
        %v2913 = vadd.f32 %v2522, %v2775
        %v2914 = vadd.f32 %v2523, %v2780
        %v2915 = vadd.f32 %v2524, %v2785
        %v2916 = vadd.f32 %v2525, %v2790
        %v2917 = vadd.f32 %v2526, %v2795
        %v2918 = vadd.f32 %v2527, %v2800
        %v2919 = vadd.f32 %v2528, %v2805
        %v2920 = vadd.f32 %v2529, %v2810
        %v2921 = vadd.f32 %v2530, %v2815
        %v2922 = vadd.f32 %v2531, %v2820
        %v2923 = vadd.f32 %v2532, %v2825
        %v2924 = vadd.f32 %v2533, %v2830
        %v2925 = vadd.f32 %v2534, %v2835
        %v2926 = vadd.f32 %v2535, %v2840
        %v2927 = vadd.f32 %v2536, %v2845
        %v2928 = vadd.f32 %v2537, %v2850
        %v2929 = vadd.f32 %v2538, %v2855
        %v2930 = vadd.f32 %v2539, %v2860
        %v2931 = vadd.f32 %v2540, %v2865
        %v2932 = vadd.f32 %v2541, %v2870
        %v2933 = vadd.f32 %v2542, %v2875
        %v2934 = vadd.f32 %v2543, %v2880
        %v2935 = vadd.f32 %v2544, %v2885
        %v2936 = vadd.f32 %v2545, %v2890
        %v2937 = vadd.f32 %v2546, %v2895
        %v2938 = vadd.f32 %v2547, %v2900
        %v2939 = vadd.f32 %v2548, %v2905
        %v2940 = vld [vmem:[%s2549 + $0x2] sm:$0xff]
        %v2941 = vld [vmem:[%s2549 + $0xa] sm:$0xff]
        %v2942 = vld [vmem:[%s2549 + $0x1a] sm:$0xff]
        %v2943 = vld [vmem:[%s2549 + $0x22] sm:$0xff]
        %v2944 = vld [vmem:[%s2549 + $0x32] sm:$0xff]
        %v2945 = vld [vmem:[%s2549 + $0x3a] sm:$0xff]
        %v2946 = vld [vmem:[%s2549 + $0x4a] sm:$0xff]
        %v2947 = vld [vmem:[%s2549 + $0x52] sm:$0xff]
        %v2948 = vld [vmem:[%s2549 + $0x62] sm:$0xff]
        %v2949 = vld [vmem:[%s2549 + $0x6a] sm:$0xff]
        %v2950 = vld [vmem:[%s2549 + $0x7a] sm:$0xff]
        %v2951 = vld [vmem:[%s2549 + $0x82] sm:$0xff]
        %v2952 = vld [vmem:[%s2549 + $0x92] sm:$0xff]
        %v2953 = vld [vmem:[%s2549 + $0x9a] sm:$0xff]
        %v2954 = vld [vmem:[%s2549 + $0xaa] sm:$0xff]
        %v2955 = vld [vmem:[%s2549 + $0xb2] sm:$0xff]
        %v2956 = vld [vmem:[%s2549 + $0xc2] sm:$0xff]
        %v2957 = vld [vmem:[%s2549 + $0xca] sm:$0xff]
        %v2958 = vld [vmem:[%s2549 + $0xda] sm:$0xff]
        %v2959 = vld [vmem:[%s2549 + $0xe2] sm:$0xff]
        %v2960 = vld [vmem:[%s2549 + $0xf2] sm:$0xff]
        %v2961 = vld [vmem:[%s2549 + $0xfa] sm:$0xff]
        %v2962 = vld [vmem:[%s2549 + $0x10a] sm:$0xff]
        %v2963 = vld [vmem:[%s2549 + $0x112] sm:$0xff]
        %v2964 = vld [vmem:[%s2549 + $0x122] sm:$0xff]
        %v2965 = vld [vmem:[%s2549 + $0x12a] sm:$0xff]
        %v2966 = vld [vmem:[%s2549 + $0x13a] sm:$0xff]
        %v2967 = vld [vmem:[%s2549 + $0x142] sm:$0xff]
        %v2968 = vld [vmem:[%s2549 + $0x152] sm:$0xff]
        %v2969 = vld [vmem:[%s2549 + $0x15a] sm:$0xff]
        %v2970 = vld [vmem:[%s2549 + $0x16a] sm:$0xff]
        %v2971 = vld [vmem:[%s2549 + $0x172] sm:$0xff]
        %s2972 = scalar_lea.vmem [#allocation5], 28
        %v2973 = vld [vmem:[%s2972] sm:$0xf]
        %v2975 = vsel %vm338, %v2940, 0
        %v2978 = vsel %vm338, %v2941, 0
        %v2981 = vsel %vm338, %v2942, 0
        %v2984 = vsel %vm338, %v2943, 0
        %v2987 = vsel %vm338, %v2944, 0
        %v2990 = vsel %vm338, %v2945, 0
        %v2993 = vsel %vm338, %v2946, 0
        %v2996 = vsel %vm338, %v2947, 0
        %v2999 = vsel %vm338, %v2948, 0
        %v3002 = vsel %vm338, %v2949, 0
        %v3005 = vsel %vm338, %v2950, 0
        %v3008 = vsel %vm338, %v2951, 0
        %v3011 = vsel %vm338, %v2952, 0
        %v3014 = vsel %vm338, %v2953, 0
        %v3017 = vsel %vm338, %v2954, 0
        %v3020 = vsel %vm338, %v2955, 0
        %v3023 = vsel %vm338, %v2956, 0
        %v3026 = vsel %vm338, %v2957, 0
        %v3029 = vsel %vm338, %v2958, 0
        %v3032 = vsel %vm338, %v2959, 0
        %v3035 = vsel %vm338, %v2960, 0
        %v3038 = vsel %vm338, %v2961, 0
        %v3041 = vsel %vm338, %v2962, 0
        %v3044 = vsel %vm338, %v2963, 0
        %v3047 = vsel %vm338, %v2964, 0
        %v3050 = vsel %vm338, %v2965, 0
        %v3053 = vsel %vm338, %v2966, 0
        %v3056 = vsel %vm338, %v2967, 0
        %v3059 = vsel %vm338, %v2968, 0
        %v3062 = vsel %vm338, %v2969, 0
        %v3065 = vsel %vm338, %v2970, 0
        %v3068 = vsel %vm338, %v2971, 0
        %v3071 = vsel %vm435, %v2973, 0
        %3073 = vmatprep.subr.mxu0 0.0
        %3074 = vmatpush1.msra.mxu0 %v3071
        %3075 = vmatprep.subr.mxu0 0.0
        %3076 = vmatpush1.msra.mxu0 0.0
        %3077 = vmatprep.subr.mxu0 0.0
        %3078 = vmatpush1.msra.mxu0 0.0
        %3079 = vmatprep.subr.mxu0 0.0
        %3080 = vmatpush1.msra.mxu0 0.0
        %3081 = vmatprep.subr.mxu0 0.0
        %3082 = vmatpush1.msra.mxu0 0.0
        %3083 = vmatprep.subr.mxu0 0.0
        %3084 = vmatpush1.msra.mxu0 0.0
        %3085 = vmatprep.subr.mxu0 0.0
        %3086 = vmatpush1.msra.mxu0 0.0
        %3087 = vmatprep.subr.mxu0 0.0
        %3088 = vmatpush1.msra.mxu0 0.0
        %3089 = vmatprep.subr.mxu0 0.0
        %3090 = vmatpush1.msra.mxu0 0.0
        %3091 = vmatprep.subr.mxu0 0.0
        %3092 = vmatpush1.msra.mxu0 0.0
        %3093 = vmatprep.subr.mxu0 0.0
        %3094 = vmatpush1.msra.mxu0 0.0
        %3095 = vmatprep.subr.mxu0 0.0
        %3096 = vmatpush1.msra.mxu0 0.0
        %3097 = vmatprep.subr.mxu0 0.0
        %3098 = vmatpush1.msra.mxu0 0.0
        %3099 = vmatprep.subr.mxu0 0.0
        %3100 = vmatpush1.msra.mxu0 0.0
        %3101 = vmatprep.subr.mxu0 0.0
        %3102 = vmatpush1.msra.mxu0 0.0
        %3103 = vmatprep.subr.mxu0 0.0
        %3104 = vmatpush1.msra.mxu0 0.0
        %3105 = vmatprep.subr.mxu0 0.0
        %3106 = vmatpush1.msra.mxu0 0.0
        %3107 = vmatprep.subr.mxu0 0.0
        %3108 = vmatpush1.msra.mxu0 0.0
        %3109 = vmatprep.subr.mxu0 0.0
        %3110 = vmatpush1.msra.mxu0 0.0
        %3111 = vmatprep.subr.mxu0 0.0
        %3112 = vmatpush1.msra.mxu0 0.0
        %3113 = vmatprep.subr.mxu0 0.0
        %3114 = vmatpush1.msra.mxu0 0.0
        %3115 = vmatprep.subr.mxu0 0.0
        %3116 = vmatpush1.msra.mxu0 0.0
        %3117 = vmatprep.subr.mxu0 0.0
        %3118 = vmatpush1.msra.mxu0 0.0
        %3119 = vmatprep.subr.mxu0 0.0
        %3120 = vmatpush1.msra.mxu0 0.0
        %3121 = vmatprep.subr.mxu0 0.0
        %3122 = vmatpush1.msra.mxu0 0.0
        %3123 = vmatprep.subr.mxu0 0.0
        %3124 = vmatpush1.msra.mxu0 0.0
        %3125 = vmatprep.subr.mxu0 0.0
        %3126 = vmatpush1.msra.mxu0 0.0
        %3127 = vmatprep.subr.mxu0 0.0
        %3128 = vmatpush1.msra.mxu0 0.0
        %3129 = vmatprep.subr.mxu0 0.0
        %3130 = vmatpush1.msra.mxu0 0.0
        %3131 = vmatprep.subr.mxu0 0.0
        %3132 = vmatpush1.msra.mxu0 0.0
        %3133 = vmatprep.subr.mxu0 0.0
        %3134 = vmatpush1.msra.mxu0 0.0
        %3135 = vmatprep.subr.mxu0 0.0
        %3136 = vmatpush1.msra.mxu0 0.0
        %3137 = vmatprep.mubr.f32.mxu0 0.0
        %3138 = vmatmul.mubr.f32.gmra.mrb[0].mxu0 %v2975
        %v3139 = vpop.f32.mrb[0].mxu0
        %v3140 = vadd.f32 0.0, %v3139
        %v3141 = vpop.f32.mrb[0].mxu0
        %3142 = vmatprep.mubr.f32.mxu0 0.0
        %3143 = vmatmul.mubr.f32.gmra.mrb[0].mxu0 %v2978
        %v3144 = vpop.f32.mrb[0].mxu0
        %v3145 = vadd.f32 0.0, %v3144
        %v3146 = vpop.f32.mrb[0].mxu0
        %3147 = vmatprep.mubr.f32.mxu0 0.0
        %3148 = vmatmul.mubr.f32.gmra.mrb[0].mxu0 %v2981
        %v3149 = vpop.f32.mrb[0].mxu0
        %v3150 = vadd.f32 0.0, %v3149
        %v3151 = vpop.f32.mrb[0].mxu0
        %3152 = vmatprep.mubr.f32.mxu0 0.0
        %3153 = vmatmul.mubr.f32.gmra.mrb[0].mxu0 %v2984
        %v3154 = vpop.f32.mrb[0].mxu0
        %v3155 = vadd.f32 0.0, %v3154
        %v3156 = vpop.f32.mrb[0].mxu0
        %3157 = vmatprep.mubr.f32.mxu0 0.0
        %3158 = vmatmul.mubr.f32.gmra.mrb[0].mxu0 %v2987
        %v3159 = vpop.f32.mrb[0].mxu0
        %v3160 = vadd.f32 0.0, %v3159
        %v3161 = vpop.f32.mrb[0].mxu0
        %3162 = vmatprep.mubr.f32.mxu0 0.0
        %3163 = vmatmul.mubr.f32.gmra.mrb[0].mxu0 %v2990
        %v3164 = vpop.f32.mrb[0].mxu0
        %v3165 = vadd.f32 0.0, %v3164
        %v3166 = vpop.f32.mrb[0].mxu0
        %3167 = vmatprep.mubr.f32.mxu0 0.0
        %3168 = vmatmul.mubr.f32.gmra.mrb[0].mxu0 %v2993
        %v3169 = vpop.f32.mrb[0].mxu0
        %v3170 = vadd.f32 0.0, %v3169
        %v3171 = vpop.f32.mrb[0].mxu0
        %3172 = vmatprep.mubr.f32.mxu0 0.0
        %3173 = vmatmul.mubr.f32.gmra.mrb[0].mxu0 %v2996
        %v3174 = vpop.f32.mrb[0].mxu0
        %v3175 = vadd.f32 0.0, %v3174
        %v3176 = vpop.f32.mrb[0].mxu0
        %3177 = vmatprep.mubr.f32.mxu0 0.0
        %3178 = vmatmul.mubr.f32.gmra.mrb[0].mxu0 %v2999
        %v3179 = vpop.f32.mrb[0].mxu0
        %v3180 = vadd.f32 0.0, %v3179
        %v3181 = vpop.f32.mrb[0].mxu0
        %3182 = vmatprep.mubr.f32.mxu0 0.0
        %3183 = vmatmul.mubr.f32.gmra.mrb[0].mxu0 %v3002
        %v3184 = vpop.f32.mrb[0].mxu0
        %v3185 = vadd.f32 0.0, %v3184
        %v3186 = vpop.f32.mrb[0].mxu0
        %3187 = vmatprep.mubr.f32.mxu0 0.0
        %3188 = vmatmul.mubr.f32.gmra.mrb[0].mxu0 %v3005
        %v3189 = vpop.f32.mrb[0].mxu0
        %v3190 = vadd.f32 0.0, %v3189
        %v3191 = vpop.f32.mrb[0].mxu0
        %3192 = vmatprep.mubr.f32.mxu0 0.0
        %3193 = vmatmul.mubr.f32.gmra.mrb[0].mxu0 %v3008
        %v3194 = vpop.f32.mrb[0].mxu0
        %v3195 = vadd.f32 0.0, %v3194
        %v3196 = vpop.f32.mrb[0].mxu0
        %3197 = vmatprep.mubr.f32.mxu0 0.0
        %3198 = vmatmul.mubr.f32.gmra.mrb[0].mxu0 %v3011
        %v3199 = vpop.f32.mrb[0].mxu0
        %v3200 = vadd.f32 0.0, %v3199
        %v3201 = vpop.f32.mrb[0].mxu0
        %3202 = vmatprep.mubr.f32.mxu0 0.0
        %3203 = vmatmul.mubr.f32.gmra.mrb[0].mxu0 %v3014
        %v3204 = vpop.f32.mrb[0].mxu0
        %v3205 = vadd.f32 0.0, %v3204
        %v3206 = vpop.f32.mrb[0].mxu0
        %3207 = vmatprep.mubr.f32.mxu0 0.0
        %3208 = vmatmul.mubr.f32.gmra.mrb[0].mxu0 %v3017
        %v3209 = vpop.f32.mrb[0].mxu0
        %v3210 = vadd.f32 0.0, %v3209
        %v3211 = vpop.f32.mrb[0].mxu0
        %3212 = vmatprep.mubr.f32.mxu0 0.0
        %3213 = vmatmul.mubr.f32.gmra.mrb[0].mxu0 %v3020
        %v3214 = vpop.f32.mrb[0].mxu0
        %v3215 = vadd.f32 0.0, %v3214
        %v3216 = vpop.f32.mrb[0].mxu0
        %3217 = vmatprep.mubr.f32.mxu0 0.0
        %3218 = vmatmul.mubr.f32.gmra.mrb[0].mxu0 %v3023
        %v3219 = vpop.f32.mrb[0].mxu0
        %v3220 = vadd.f32 0.0, %v3219
        %v3221 = vpop.f32.mrb[0].mxu0
        %3222 = vmatprep.mubr.f32.mxu0 0.0
        %3223 = vmatmul.mubr.f32.gmra.mrb[0].mxu0 %v3026
        %v3224 = vpop.f32.mrb[0].mxu0
        %v3225 = vadd.f32 0.0, %v3224
        %v3226 = vpop.f32.mrb[0].mxu0
        %3227 = vmatprep.mubr.f32.mxu0 0.0
        %3228 = vmatmul.mubr.f32.gmra.mrb[0].mxu0 %v3029
        %v3229 = vpop.f32.mrb[0].mxu0
        %v3230 = vadd.f32 0.0, %v3229
        %v3231 = vpop.f32.mrb[0].mxu0
        %3232 = vmatprep.mubr.f32.mxu0 0.0
        %3233 = vmatmul.mubr.f32.gmra.mrb[0].mxu0 %v3032
        %v3234 = vpop.f32.mrb[0].mxu0
        %v3235 = vadd.f32 0.0, %v3234
        %v3236 = vpop.f32.mrb[0].mxu0
        %3237 = vmatprep.mubr.f32.mxu0 0.0
        %3238 = vmatmul.mubr.f32.gmra.mrb[0].mxu0 %v3035
        %v3239 = vpop.f32.mrb[0].mxu0
        %v3240 = vadd.f32 0.0, %v3239
        %v3241 = vpop.f32.mrb[0].mxu0
        %3242 = vmatprep.mubr.f32.mxu0 0.0
        %3243 = vmatmul.mubr.f32.gmra.mrb[0].mxu0 %v3038
        %v3244 = vpop.f32.mrb[0].mxu0
        %v3245 = vadd.f32 0.0, %v3244
        %v3246 = vpop.f32.mrb[0].mxu0
        %3247 = vmatprep.mubr.f32.mxu0 0.0
        %3248 = vmatmul.mubr.f32.gmra.mrb[0].mxu0 %v3041
        %v3249 = vpop.f32.mrb[0].mxu0
        %v3250 = vadd.f32 0.0, %v3249
        %v3251 = vpop.f32.mrb[0].mxu0
        %3252 = vmatprep.mubr.f32.mxu0 0.0
        %3253 = vmatmul.mubr.f32.gmra.mrb[0].mxu0 %v3044
        %v3254 = vpop.f32.mrb[0].mxu0
        %v3255 = vadd.f32 0.0, %v3254
        %v3256 = vpop.f32.mrb[0].mxu0
        %3257 = vmatprep.mubr.f32.mxu0 0.0
        %3258 = vmatmul.mubr.f32.gmra.mrb[0].mxu0 %v3047
        %v3259 = vpop.f32.mrb[0].mxu0
        %v3260 = vadd.f32 0.0, %v3259
        %v3261 = vpop.f32.mrb[0].mxu0
        %3262 = vmatprep.mubr.f32.mxu0 0.0
        %3263 = vmatmul.mubr.f32.gmra.mrb[0].mxu0 %v3050
        %v3264 = vpop.f32.mrb[0].mxu0
        %v3265 = vadd.f32 0.0, %v3264
        %v3266 = vpop.f32.mrb[0].mxu0
        %3267 = vmatprep.mubr.f32.mxu0 0.0
        %3268 = vmatmul.mubr.f32.gmra.mrb[0].mxu0 %v3053
        %v3269 = vpop.f32.mrb[0].mxu0
        %v3270 = vadd.f32 0.0, %v3269
        %v3271 = vpop.f32.mrb[0].mxu0
        %3272 = vmatprep.mubr.f32.mxu0 0.0
        %3273 = vmatmul.mubr.f32.gmra.mrb[0].mxu0 %v3056
        %v3274 = vpop.f32.mrb[0].mxu0
        %v3275 = vadd.f32 0.0, %v3274
        %v3276 = vpop.f32.mrb[0].mxu0
        %3277 = vmatprep.mubr.f32.mxu0 0.0
        %3278 = vmatmul.mubr.f32.gmra.mrb[0].mxu0 %v3059
        %v3279 = vpop.f32.mrb[0].mxu0
        %v3280 = vadd.f32 0.0, %v3279
        %v3281 = vpop.f32.mrb[0].mxu0
        %3282 = vmatprep.mubr.f32.mxu0 0.0
        %3283 = vmatmul.mubr.f32.gmra.mrb[0].mxu0 %v3062
        %v3284 = vpop.f32.mrb[0].mxu0
        %v3285 = vadd.f32 0.0, %v3284
        %v3286 = vpop.f32.mrb[0].mxu0
        %3287 = vmatprep.mubr.f32.mxu0 0.0
        %3288 = vmatmul.mubr.f32.gmra.mrb[0].mxu0 %v3065
        %v3289 = vpop.f32.mrb[0].mxu0
        %v3290 = vadd.f32 0.0, %v3289
        %v3291 = vpop.f32.mrb[0].mxu0
        %3292 = vmatprep.mubr.f32.mxu0 0.0
        %3293 = vmatmul.mubr.f32.gmra.mrb[0].mxu0 %v3068
        %v3294 = vpop.f32.mrb[0].mxu0
        %v3295 = vadd.f32 0.0, %v3294
        %v3296 = vpop.f32.mrb[0].mxu0
        %3297 = vdwg.mxu0
        %v3298 = vadd.f32 %v2908, %v3140
        %v3299 = vadd.f32 %v2909, %v3145
        %v3300 = vadd.f32 %v2910, %v3150
        %v3301 = vadd.f32 %v2911, %v3155
        %v3302 = vadd.f32 %v2912, %v3160
        %v3303 = vadd.f32 %v2913, %v3165
        %v3304 = vadd.f32 %v2914, %v3170
        %v3305 = vadd.f32 %v2915, %v3175
        %v3306 = vadd.f32 %v2916, %v3180
        %v3307 = vadd.f32 %v2917, %v3185
        %v3308 = vadd.f32 %v2918, %v3190
        %v3309 = vadd.f32 %v2919, %v3195
        %v3310 = vadd.f32 %v2920, %v3200
        %v3311 = vadd.f32 %v2921, %v3205
        %v3312 = vadd.f32 %v2922, %v3210
        %v3313 = vadd.f32 %v2923, %v3215
        %v3314 = vadd.f32 %v2924, %v3220
        %v3315 = vadd.f32 %v2925, %v3225
        %v3316 = vadd.f32 %v2926, %v3230
        %v3317 = vadd.f32 %v2927, %v3235
        %v3318 = vadd.f32 %v2928, %v3240
        %v3319 = vadd.f32 %v2929, %v3245
        %v3320 = vadd.f32 %v2930, %v3250
        %v3321 = vadd.f32 %v2931, %v3255
        %v3322 = vadd.f32 %v2932, %v3260
        %v3323 = vadd.f32 %v2933, %v3265
        %v3324 = vadd.f32 %v2934, %v3270
        %v3325 = vadd.f32 %v2935, %v3275
        %v3326 = vadd.f32 %v2936, %v3280
        %v3327 = vadd.f32 %v2937, %v3285
        %v3328 = vadd.f32 %v2938, %v3290
        %v3329 = vadd.f32 %v2939, %v3295
        %v3330 = vld [vmem:[%s2549 + $0x4] sm:$0xff]
        %v3331 = vld [vmem:[%s2549 + $0xc] sm:$0xff]
        %v3332 = vld [vmem:[%s2549 + $0x1c] sm:$0xff]
        %v3333 = vld [vmem:[%s2549 + $0x24] sm:$0xff]
        %v3334 = vld [vmem:[%s2549 + $0x34] sm:$0xff]
        %v3335 = vld [vmem:[%s2549 + $0x3c] sm:$0xff]
        %v3336 = vld [vmem:[%s2549 + $0x4c] sm:$0xff]
        %v3337 = vld [vmem:[%s2549 + $0x54] sm:$0xff]
        %v3338 = vld [vmem:[%s2549 + $0x64] sm:$0xff]
        %v3339 = vld [vmem:[%s2549 + $0x6c] sm:$0xff]
        %v3340 = vld [vmem:[%s2549 + $0x7c] sm:$0xff]
        %v3341 = vld [vmem:[%s2549 + $0x84] sm:$0xff]
        %v3342 = vld [vmem:[%s2549 + $0x94] sm:$0xff]
        %v3343 = vld [vmem:[%s2549 + $0x9c] sm:$0xff]
        %v3344 = vld [vmem:[%s2549 + $0xac] sm:$0xff]
        %v3345 = vld [vmem:[%s2549 + $0xb4] sm:$0xff]
        %v3346 = vld [vmem:[%s2549 + $0xc4] sm:$0xff]
        %v3347 = vld [vmem:[%s2549 + $0xcc] sm:$0xff]
        %v3348 = vld [vmem:[%s2549 + $0xdc] sm:$0xff]
        %v3349 = vld [vmem:[%s2549 + $0xe4] sm:$0xff]
        %v3350 = vld [vmem:[%s2549 + $0xf4] sm:$0xff]
        %v3351 = vld [vmem:[%s2549 + $0xfc] sm:$0xff]
        %v3352 = vld [vmem:[%s2549 + $0x10c] sm:$0xff]
        %v3353 = vld [vmem:[%s2549 + $0x114] sm:$0xff]
        %v3354 = vld [vmem:[%s2549 + $0x124] sm:$0xff]
        %v3355 = vld [vmem:[%s2549 + $0x12c] sm:$0xff]
        %v3356 = vld [vmem:[%s2549 + $0x13c] sm:$0xff]
        %v3357 = vld [vmem:[%s2549 + $0x144] sm:$0xff]
        %v3358 = vld [vmem:[%s2549 + $0x154] sm:$0xff]
        %v3359 = vld [vmem:[%s2549 + $0x15c] sm:$0xff]
        %v3360 = vld [vmem:[%s2549 + $0x16c] sm:$0xff]
        %v3361 = vld [vmem:[%s2549 + $0x174] sm:$0xff]
        %s3362 = scalar_lea.vmem [#allocation5], 32
        %v3363 = vld [vmem:[%s3362] sm:$0xf]
        %v3365 = vsel %vm338, %v3330, 0
        %v3368 = vsel %vm338, %v3331, 0
        %v3371 = vsel %vm338, %v3332, 0
        %v3374 = vsel %vm338, %v3333, 0
        %v3377 = vsel %vm338, %v3334, 0
        %v3380 = vsel %vm338, %v3335, 0
        %v3383 = vsel %vm338, %v3336, 0
        %v3386 = vsel %vm338, %v3337, 0
        %v3389 = vsel %vm338, %v3338, 0
        %v3392 = vsel %vm338, %v3339, 0
        %v3395 = vsel %vm338, %v3340, 0
        %v3398 = vsel %vm338, %v3341, 0
        %v3401 = vsel %vm338, %v3342, 0
        %v3404 = vsel %vm338, %v3343, 0
        %v3407 = vsel %vm338, %v3344, 0
        %v3410 = vsel %vm338, %v3345, 0
        %v3413 = vsel %vm338, %v3346, 0
        %v3416 = vsel %vm338, %v3347, 0
        %v3419 = vsel %vm338, %v3348, 0
        %v3422 = vsel %vm338, %v3349, 0
        %v3425 = vsel %vm338, %v3350, 0
        %v3428 = vsel %vm338, %v3351, 0
        %v3431 = vsel %vm338, %v3352, 0
        %v3434 = vsel %vm338, %v3353, 0
        %v3437 = vsel %vm338, %v3354, 0
        %v3440 = vsel %vm338, %v3355, 0
        %v3443 = vsel %vm338, %v3356, 0
        %v3446 = vsel %vm338, %v3357, 0
        %v3449 = vsel %vm338, %v3358, 0
        %v3452 = vsel %vm338, %v3359, 0
        %v3455 = vsel %vm338, %v3360, 0
        %v3458 = vsel %vm338, %v3361, 0
        %v3461 = vsel %vm435, %v3363, 0
        %3463 = vmatprep.subr.mxu0 0.0
        %3464 = vmatpush1.msra.mxu0 %v3461
        %3465 = vmatprep.subr.mxu0 0.0
        %3466 = vmatpush1.msra.mxu0 0.0
        %3467 = vmatprep.subr.mxu0 0.0
        %3468 = vmatpush1.msra.mxu0 0.0
        %3469 = vmatprep.subr.mxu0 0.0
        %3470 = vmatpush1.msra.mxu0 0.0
        %3471 = vmatprep.subr.mxu0 0.0
        %3472 = vmatpush1.msra.mxu0 0.0
        %3473 = vmatprep.subr.mxu0 0.0
        %3474 = vmatpush1.msra.mxu0 0.0
        %3475 = vmatprep.subr.mxu0 0.0
        %3476 = vmatpush1.msra.mxu0 0.0
        %3477 = vmatprep.subr.mxu0 0.0
        %3478 = vmatpush1.msra.mxu0 0.0
        %3479 = vmatprep.subr.mxu0 0.0
        %3480 = vmatpush1.msra.mxu0 0.0
        %3481 = vmatprep.subr.mxu0 0.0
        %3482 = vmatpush1.msra.mxu0 0.0
        %3483 = vmatprep.subr.mxu0 0.0
        %3484 = vmatpush1.msra.mxu0 0.0
        %3485 = vmatprep.subr.mxu0 0.0
        %3486 = vmatpush1.msra.mxu0 0.0
        %3487 = vmatprep.subr.mxu0 0.0
        %3488 = vmatpush1.msra.mxu0 0.0
        %3489 = vmatprep.subr.mxu0 0.0
        %3490 = vmatpush1.msra.mxu0 0.0
        %3491 = vmatprep.subr.mxu0 0.0
        %3492 = vmatpush1.msra.mxu0 0.0
        %3493 = vmatprep.subr.mxu0 0.0
        %3494 = vmatpush1.msra.mxu0 0.0
        %3495 = vmatprep.subr.mxu0 0.0
        %3496 = vmatpush1.msra.mxu0 0.0
        %3497 = vmatprep.subr.mxu0 0.0
        %3498 = vmatpush1.msra.mxu0 0.0
        %3499 = vmatprep.subr.mxu0 0.0
        %3500 = vmatpush1.msra.mxu0 0.0
        %3501 = vmatprep.subr.mxu0 0.0
        %3502 = vmatpush1.msra.mxu0 0.0
        %3503 = vmatprep.subr.mxu0 0.0
        %3504 = vmatpush1.msra.mxu0 0.0
        %3505 = vmatprep.subr.mxu0 0.0
        %3506 = vmatpush1.msra.mxu0 0.0
        %3507 = vmatprep.subr.mxu0 0.0
        %3508 = vmatpush1.msra.mxu0 0.0
        %3509 = vmatprep.subr.mxu0 0.0
        %3510 = vmatpush1.msra.mxu0 0.0
        %3511 = vmatprep.subr.mxu0 0.0
        %3512 = vmatpush1.msra.mxu0 0.0
        %3513 = vmatprep.subr.mxu0 0.0
        %3514 = vmatpush1.msra.mxu0 0.0
        %3515 = vmatprep.subr.mxu0 0.0
        %3516 = vmatpush1.msra.mxu0 0.0
        %3517 = vmatprep.subr.mxu0 0.0
        %3518 = vmatpush1.msra.mxu0 0.0
        %3519 = vmatprep.subr.mxu0 0.0
        %3520 = vmatpush1.msra.mxu0 0.0
        %3521 = vmatprep.subr.mxu0 0.0
        %3522 = vmatpush1.msra.mxu0 0.0
        %3523 = vmatprep.subr.mxu0 0.0
        %3524 = vmatpush1.msra.mxu0 0.0
        %3525 = vmatprep.subr.mxu0 0.0
        %3526 = vmatpush1.msra.mxu0 0.0
        %3527 = vmatprep.mubr.f32.mxu0 0.0
        %3528 = vmatmul.mubr.f32.gmra.mrb[0].mxu0 %v3365
        %v3529 = vpop.f32.mrb[0].mxu0
        %v3530 = vadd.f32 0.0, %v3529
        %v3531 = vpop.f32.mrb[0].mxu0
        %3532 = vmatprep.mubr.f32.mxu0 0.0
        %3533 = vmatmul.mubr.f32.gmra.mrb[0].mxu0 %v3368
        %v3534 = vpop.f32.mrb[0].mxu0
        %v3535 = vadd.f32 0.0, %v3534
        %v3536 = vpop.f32.mrb[0].mxu0
        %3537 = vmatprep.mubr.f32.mxu0 0.0
        %3538 = vmatmul.mubr.f32.gmra.mrb[0].mxu0 %v3371
        %v3539 = vpop.f32.mrb[0].mxu0
        %v3540 = vadd.f32 0.0, %v3539
        %v3541 = vpop.f32.mrb[0].mxu0
        %3542 = vmatprep.mubr.f32.mxu0 0.0
        %3543 = vmatmul.mubr.f32.gmra.mrb[0].mxu0 %v3374
        %v3544 = vpop.f32.mrb[0].mxu0
        %v3545 = vadd.f32 0.0, %v3544
        %v3546 = vpop.f32.mrb[0].mxu0
        %3547 = vmatprep.mubr.f32.mxu0 0.0
        %3548 = vmatmul.mubr.f32.gmra.mrb[0].mxu0 %v3377
        %v3549 = vpop.f32.mrb[0].mxu0
        %v3550 = vadd.f32 0.0, %v3549
        %v3551 = vpop.f32.mrb[0].mxu0
        %3552 = vmatprep.mubr.f32.mxu0 0.0
        %3553 = vmatmul.mubr.f32.gmra.mrb[0].mxu0 %v3380
        %v3554 = vpop.f32.mrb[0].mxu0
        %v3555 = vadd.f32 0.0, %v3554
        %v3556 = vpop.f32.mrb[0].mxu0
        %3557 = vmatprep.mubr.f32.mxu0 0.0
        %3558 = vmatmul.mubr.f32.gmra.mrb[0].mxu0 %v3383
        %v3559 = vpop.f32.mrb[0].mxu0
        %v3560 = vadd.f32 0.0, %v3559
        %v3561 = vpop.f32.mrb[0].mxu0
        %3562 = vmatprep.mubr.f32.mxu0 0.0
        %3563 = vmatmul.mubr.f32.gmra.mrb[0].mxu0 %v3386
        %v3564 = vpop.f32.mrb[0].mxu0
        %v3565 = vadd.f32 0.0, %v3564
        %v3566 = vpop.f32.mrb[0].mxu0
        %3567 = vmatprep.mubr.f32.mxu0 0.0
        %3568 = vmatmul.mubr.f32.gmra.mrb[0].mxu0 %v3389
        %v3569 = vpop.f32.mrb[0].mxu0
        %v3570 = vadd.f32 0.0, %v3569
        %v3571 = vpop.f32.mrb[0].mxu0
        %3572 = vmatprep.mubr.f32.mxu0 0.0
        %3573 = vmatmul.mubr.f32.gmra.mrb[0].mxu0 %v3392
        %v3574 = vpop.f32.mrb[0].mxu0
        %v3575 = vadd.f32 0.0, %v3574
        %v3576 = vpop.f32.mrb[0].mxu0
        %3577 = vmatprep.mubr.f32.mxu0 0.0
        %3578 = vmatmul.mubr.f32.gmra.mrb[0].mxu0 %v3395
        %v3579 = vpop.f32.mrb[0].mxu0
        %v3580 = vadd.f32 0.0, %v3579
        %v3581 = vpop.f32.mrb[0].mxu0
        %3582 = vmatprep.mubr.f32.mxu0 0.0
        %3583 = vmatmul.mubr.f32.gmra.mrb[0].mxu0 %v3398
        %v3584 = vpop.f32.mrb[0].mxu0
        %v3585 = vadd.f32 0.0, %v3584
        %v3586 = vpop.f32.mrb[0].mxu0
        %3587 = vmatprep.mubr.f32.mxu0 0.0
        %3588 = vmatmul.mubr.f32.gmra.mrb[0].mxu0 %v3401
        %v3589 = vpop.f32.mrb[0].mxu0
        %v3590 = vadd.f32 0.0, %v3589
        %v3591 = vpop.f32.mrb[0].mxu0
        %3592 = vmatprep.mubr.f32.mxu0 0.0
        %3593 = vmatmul.mubr.f32.gmra.mrb[0].mxu0 %v3404
        %v3594 = vpop.f32.mrb[0].mxu0
        %v3595 = vadd.f32 0.0, %v3594
        %v3596 = vpop.f32.mrb[0].mxu0
        %3597 = vmatprep.mubr.f32.mxu0 0.0
        %3598 = vmatmul.mubr.f32.gmra.mrb[0].mxu0 %v3407
        %v3599 = vpop.f32.mrb[0].mxu0
        %v3600 = vadd.f32 0.0, %v3599
        %v3601 = vpop.f32.mrb[0].mxu0
        %3602 = vmatprep.mubr.f32.mxu0 0.0
        %3603 = vmatmul.mubr.f32.gmra.mrb[0].mxu0 %v3410
        %v3604 = vpop.f32.mrb[0].mxu0
        %v3605 = vadd.f32 0.0, %v3604
        %v3606 = vpop.f32.mrb[0].mxu0
        %3607 = vmatprep.mubr.f32.mxu0 0.0
        %3608 = vmatmul.mubr.f32.gmra.mrb[0].mxu0 %v3413
        %v3609 = vpop.f32.mrb[0].mxu0
        %v3610 = vadd.f32 0.0, %v3609
        %v3611 = vpop.f32.mrb[0].mxu0
        %3612 = vmatprep.mubr.f32.mxu0 0.0
        %3613 = vmatmul.mubr.f32.gmra.mrb[0].mxu0 %v3416
        %v3614 = vpop.f32.mrb[0].mxu0
        %v3615 = vadd.f32 0.0, %v3614
        %v3616 = vpop.f32.mrb[0].mxu0
        %3617 = vmatprep.mubr.f32.mxu0 0.0
        %3618 = vmatmul.mubr.f32.gmra.mrb[0].mxu0 %v3419
        %v3619 = vpop.f32.mrb[0].mxu0
        %v3620 = vadd.f32 0.0, %v3619
        %v3621 = vpop.f32.mrb[0].mxu0
        %3622 = vmatprep.mubr.f32.mxu0 0.0
        %3623 = vmatmul.mubr.f32.gmra.mrb[0].mxu0 %v3422
        %v3624 = vpop.f32.mrb[0].mxu0
        %v3625 = vadd.f32 0.0, %v3624
        %v3626 = vpop.f32.mrb[0].mxu0
        %3627 = vmatprep.mubr.f32.mxu0 0.0
        %3628 = vmatmul.mubr.f32.gmra.mrb[0].mxu0 %v3425
        %v3629 = vpop.f32.mrb[0].mxu0
        %v3630 = vadd.f32 0.0, %v3629
        %v3631 = vpop.f32.mrb[0].mxu0
        %3632 = vmatprep.mubr.f32.mxu0 0.0
        %3633 = vmatmul.mubr.f32.gmra.mrb[0].mxu0 %v3428
        %v3634 = vpop.f32.mrb[0].mxu0
        %v3635 = vadd.f32 0.0, %v3634
        %v3636 = vpop.f32.mrb[0].mxu0
        %3637 = vmatprep.mubr.f32.mxu0 0.0
        %3638 = vmatmul.mubr.f32.gmra.mrb[0].mxu0 %v3431
        %v3639 = vpop.f32.mrb[0].mxu0
        %v3640 = vadd.f32 0.0, %v3639
        %v3641 = vpop.f32.mrb[0].mxu0
        %3642 = vmatprep.mubr.f32.mxu0 0.0
        %3643 = vmatmul.mubr.f32.gmra.mrb[0].mxu0 %v3434
        %v3644 = vpop.f32.mrb[0].mxu0
        %v3645 = vadd.f32 0.0, %v3644
        %v3646 = vpop.f32.mrb[0].mxu0
        %3647 = vmatprep.mubr.f32.mxu0 0.0
        %3648 = vmatmul.mubr.f32.gmra.mrb[0].mxu0 %v3437
        %v3649 = vpop.f32.mrb[0].mxu0
        %v3650 = vadd.f32 0.0, %v3649
        %v3651 = vpop.f32.mrb[0].mxu0
        %3652 = vmatprep.mubr.f32.mxu0 0.0
        %3653 = vmatmul.mubr.f32.gmra.mrb[0].mxu0 %v3440
        %v3654 = vpop.f32.mrb[0].mxu0
        %v3655 = vadd.f32 0.0, %v3654
        %v3656 = vpop.f32.mrb[0].mxu0
        %3657 = vmatprep.mubr.f32.mxu0 0.0
        %3658 = vmatmul.mubr.f32.gmra.mrb[0].mxu0 %v3443
        %v3659 = vpop.f32.mrb[0].mxu0
        %v3660 = vadd.f32 0.0, %v3659
        %v3661 = vpop.f32.mrb[0].mxu0
        %3662 = vmatprep.mubr.f32.mxu0 0.0
        %3663 = vmatmul.mubr.f32.gmra.mrb[0].mxu0 %v3446
        %v3664 = vpop.f32.mrb[0].mxu0
        %v3665 = vadd.f32 0.0, %v3664
        %v3666 = vpop.f32.mrb[0].mxu0
        %3667 = vmatprep.mubr.f32.mxu0 0.0
        %3668 = vmatmul.mubr.f32.gmra.mrb[0].mxu0 %v3449
        %v3669 = vpop.f32.mrb[0].mxu0
        %v3670 = vadd.f32 0.0, %v3669
        %v3671 = vpop.f32.mrb[0].mxu0
        %3672 = vmatprep.mubr.f32.mxu0 0.0
        %3673 = vmatmul.mubr.f32.gmra.mrb[0].mxu0 %v3452
        %v3674 = vpop.f32.mrb[0].mxu0
        %v3675 = vadd.f32 0.0, %v3674
        %v3676 = vpop.f32.mrb[0].mxu0
        %3677 = vmatprep.mubr.f32.mxu0 0.0
        %3678 = vmatmul.mubr.f32.gmra.mrb[0].mxu0 %v3455
        %v3679 = vpop.f32.mrb[0].mxu0
        %v3680 = vadd.f32 0.0, %v3679
        %v3681 = vpop.f32.mrb[0].mxu0
        %3682 = vmatprep.mubr.f32.mxu0 0.0
        %3683 = vmatmul.mubr.f32.gmra.mrb[0].mxu0 %v3458
        %v3684 = vpop.f32.mrb[0].mxu0
        %v3685 = vadd.f32 0.0, %v3684
        %v3686 = vpop.f32.mrb[0].mxu0
        %3687 = vdwg.mxu0
        %v3688 = vadd.f32 %v3298, %v3530
        %v3689 = vadd.f32 %v3299, %v3535
        %v3690 = vadd.f32 %v3300, %v3540
        %v3691 = vadd.f32 %v3301, %v3545
        %v3692 = vadd.f32 %v3302, %v3550
        %v3693 = vadd.f32 %v3303, %v3555
        %v3694 = vadd.f32 %v3304, %v3560
        %v3695 = vadd.f32 %v3305, %v3565
        %v3696 = vadd.f32 %v3306, %v3570
        %v3697 = vadd.f32 %v3307, %v3575
        %v3698 = vadd.f32 %v3308, %v3580
        %v3699 = vadd.f32 %v3309, %v3585
        %v3700 = vadd.f32 %v3310, %v3590
        %v3701 = vadd.f32 %v3311, %v3595
        %v3702 = vadd.f32 %v3312, %v3600
        %v3703 = vadd.f32 %v3313, %v3605
        %v3704 = vadd.f32 %v3314, %v3610
        %v3705 = vadd.f32 %v3315, %v3615
        %v3706 = vadd.f32 %v3316, %v3620
        %v3707 = vadd.f32 %v3317, %v3625
        %v3708 = vadd.f32 %v3318, %v3630
        %v3709 = vadd.f32 %v3319, %v3635
        %v3710 = vadd.f32 %v3320, %v3640
        %v3711 = vadd.f32 %v3321, %v3645
        %v3712 = vadd.f32 %v3322, %v3650
        %v3713 = vadd.f32 %v3323, %v3655
        %v3714 = vadd.f32 %v3324, %v3660
        %v3715 = vadd.f32 %v3325, %v3665
        %v3716 = vadd.f32 %v3326, %v3670
        %v3717 = vadd.f32 %v3327, %v3675
        %v3718 = vadd.f32 %v3328, %v3680
        %v3719 = vadd.f32 %v3329, %v3685
        %v3720 = vld [vmem:[#allocation7] sm:$0x1]
        %v3722 = vlaneseq
        %v3723 = vshrl.u32 %v3722, 7
        %v3724 = vsub.s32 0, %v3723
        %v3725 = vrot.slane %v3720, %v3724
        %v3727 = vmul.f32 %v3688, %v3725
        %v3728 = vmul.f32 %v3689, %v3725
        %v3729 = vmul.f32 %v3690, %v3725
        %v3730 = vmul.f32 %v3691, %v3725
        %v3731 = vmul.f32 %v3692, %v3725
        %v3732 = vmul.f32 %v3693, %v3725
        %v3733 = vmul.f32 %v3694, %v3725
        %v3734 = vmul.f32 %v3695, %v3725
        %v3735 = vmul.f32 %v3696, %v3725
        %v3736 = vmul.f32 %v3697, %v3725
        %v3737 = vmul.f32 %v3698, %v3725
        %v3738 = vmul.f32 %v3699, %v3725
        %v3739 = vmul.f32 %v3700, %v3725
        %v3740 = vmul.f32 %v3701, %v3725
        %v3741 = vmul.f32 %v3702, %v3725
        %v3742 = vmul.f32 %v3703, %v3725
        %v3743 = vmul.f32 %v3704, %v3725
        %v3744 = vmul.f32 %v3705, %v3725
        %v3745 = vmul.f32 %v3706, %v3725
        %v3746 = vmul.f32 %v3707, %v3725
        %v3747 = vmul.f32 %v3708, %v3725
        %v3748 = vmul.f32 %v3709, %v3725
        %v3749 = vmul.f32 %v3710, %v3725
        %v3750 = vmul.f32 %v3711, %v3725
        %v3751 = vmul.f32 %v3712, %v3725
        %v3752 = vmul.f32 %v3713, %v3725
        %v3753 = vmul.f32 %v3714, %v3725
        %v3754 = vmul.f32 %v3715, %v3725
        %v3755 = vmul.f32 %v3716, %v3725
        %v3756 = vmul.f32 %v3717, %v3725
        %v3757 = vmul.f32 %v3718, %v3725
        %v3758 = vmul.f32 %v3719, %v3725
        %v3759 = vld [vmem:[#allocation8] sm:$0x1]
        %v3761 = vlaneseq
        %v3762 = vshrl.u32 %v3761, 7
        %v3763 = vsub.s32 0, %v3762
        %v3764 = vrot.slane %v3759, %v3763
        %v3766 = vadd.f32 %v3727, %v3764
        %v3767 = vadd.f32 %v3728, %v3764
        %v3768 = vadd.f32 %v3729, %v3764
        %v3769 = vadd.f32 %v3730, %v3764
        %v3770 = vadd.f32 %v3731, %v3764
        %v3771 = vadd.f32 %v3732, %v3764
        %v3772 = vadd.f32 %v3733, %v3764
        %v3773 = vadd.f32 %v3734, %v3764
        %v3774 = vadd.f32 %v3735, %v3764
        %v3775 = vadd.f32 %v3736, %v3764
        %v3776 = vadd.f32 %v3737, %v3764
        %v3777 = vadd.f32 %v3738, %v3764
        %v3778 = vadd.f32 %v3739, %v3764
        %v3779 = vadd.f32 %v3740, %v3764
        %v3780 = vadd.f32 %v3741, %v3764
        %v3781 = vadd.f32 %v3742, %v3764
        %v3782 = vadd.f32 %v3743, %v3764
        %v3783 = vadd.f32 %v3744, %v3764
        %v3784 = vadd.f32 %v3745, %v3764
        %v3785 = vadd.f32 %v3746, %v3764
        %v3786 = vadd.f32 %v3747, %v3764
        %v3787 = vadd.f32 %v3748, %v3764
        %v3788 = vadd.f32 %v3749, %v3764
        %v3789 = vadd.f32 %v3750, %v3764
        %v3790 = vadd.f32 %v3751, %v3764
        %v3791 = vadd.f32 %v3752, %v3764
        %v3792 = vadd.f32 %v3753, %v3764
        %v3793 = vadd.f32 %v3754, %v3764
        %v3794 = vadd.f32 %v3755, %v3764
        %v3795 = vadd.f32 %v3756, %v3764
        %v3796 = vadd.f32 %v3757, %v3764
        %v3797 = vadd.f32 %v3758, %v3764
        %v3798 = vmax.f32 %v3766, 0.0
        %v3799 = vmax.f32 %v3767, 0.0
        %v3800 = vmax.f32 %v3768, 0.0
        %v3801 = vmax.f32 %v3769, 0.0
        %v3802 = vmax.f32 %v3770, 0.0
        %v3803 = vmax.f32 %v3771, 0.0
        %v3804 = vmax.f32 %v3772, 0.0
        %v3805 = vmax.f32 %v3773, 0.0
        %v3806 = vmax.f32 %v3774, 0.0
        %v3807 = vmax.f32 %v3775, 0.0
        %v3808 = vmax.f32 %v3776, 0.0
        %v3809 = vmax.f32 %v3777, 0.0
        %v3810 = vmax.f32 %v3778, 0.0
        %v3811 = vmax.f32 %v3779, 0.0
        %v3812 = vmax.f32 %v3780, 0.0
        %v3813 = vmax.f32 %v3781, 0.0
        %v3814 = vmax.f32 %v3782, 0.0
        %v3815 = vmax.f32 %v3783, 0.0
        %v3816 = vmax.f32 %v3784, 0.0
        %v3817 = vmax.f32 %v3785, 0.0
        %v3818 = vmax.f32 %v3786, 0.0
        %v3819 = vmax.f32 %v3787, 0.0
        %v3820 = vmax.f32 %v3788, 0.0
        %v3821 = vmax.f32 %v3789, 0.0
        %v3822 = vmax.f32 %v3790, 0.0
        %v3823 = vmax.f32 %v3791, 0.0
        %v3824 = vmax.f32 %v3792, 0.0
        %v3825 = vmax.f32 %v3793, 0.0
        %v3826 = vmax.f32 %v3794, 0.0
        %v3827 = vmax.f32 %v3795, 0.0
        %v3828 = vmax.f32 %v3796, 0.0
        %v3829 = vmax.f32 %v3797, 0.0
        %vm3830 = vcmask 64512
        %3831 = vst.msk [vmem:[%s269] sm:$0xff] %vm3830, %v3798
        %3832 = vst.msk [vmem:[%s269 + $0x8] sm:$0xff] %vm3830, %v3799
        %3833 = vst.msk [vmem:[%s269 + $0x10] sm:$0xff] %vm3830, %v3800
        %3834 = vst.msk [vmem:[%s269 + $0x18] sm:$0xff] %vm3830, %v3801
        %3835 = vst.msk [vmem:[%s269 + $0x20] sm:$0xff] %vm3830, %v3802
        %3836 = vst.msk [vmem:[%s269 + $0x28] sm:$0xff] %vm3830, %v3803
        %3837 = vst.msk [vmem:[%s269 + $0x30] sm:$0xff] %vm3830, %v3804
        %3838 = vst.msk [vmem:[%s269 + $0x38] sm:$0xff] %vm3830, %v3805
        %3839 = vst.msk [vmem:[%s269 + $0x40] sm:$0xff] %vm3830, %v3806
        %3840 = vst.msk [vmem:[%s269 + $0x48] sm:$0xff] %vm3830, %v3807
        %3841 = vst.msk [vmem:[%s269 + $0x50] sm:$0xff] %vm3830, %v3808
        %3842 = vst.msk [vmem:[%s269 + $0x58] sm:$0xff] %vm3830, %v3809
        %3843 = vst.msk [vmem:[%s269 + $0x60] sm:$0xff] %vm3830, %v3810
        %3844 = vst.msk [vmem:[%s269 + $0x68] sm:$0xff] %vm3830, %v3811
        %3845 = vst.msk [vmem:[%s269 + $0x70] sm:$0xff] %vm3830, %v3812
        %3846 = vst.msk [vmem:[%s269 + $0x78] sm:$0xff] %vm3830, %v3813
        %3847 = vst.msk [vmem:[%s269 + $0x80] sm:$0xff] %vm3830, %v3814
        %3848 = vst.msk [vmem:[%s269 + $0x88] sm:$0xff] %vm3830, %v3815
        %3849 = vst.msk [vmem:[%s269 + $0x90] sm:$0xff] %vm3830, %v3816
        %3850 = vst.msk [vmem:[%s269 + $0x98] sm:$0xff] %vm3830, %v3817
        %3851 = vst.msk [vmem:[%s269 + $0xa0] sm:$0xff] %vm3830, %v3818
        %3852 = vst.msk [vmem:[%s269 + $0xa8] sm:$0xff] %vm3830, %v3819
        %3853 = vst.msk [vmem:[%s269 + $0xb0] sm:$0xff] %vm3830, %v3820
        %3854 = vst.msk [vmem:[%s269 + $0xb8] sm:$0xff] %vm3830, %v3821
        %3855 = vst.msk [vmem:[%s269 + $0xc0] sm:$0xff] %vm3830, %v3822
        %3856 = vst.msk [vmem:[%s269 + $0xc8] sm:$0xff] %vm3830, %v3823
        %3857 = vst.msk [vmem:[%s269 + $0xd0] sm:$0xff] %vm3830, %v3824
        %3858 = vst.msk [vmem:[%s269 + $0xd8] sm:$0xff] %vm3830, %v3825
        %3859 = vst.msk [vmem:[%s269 + $0xe0] sm:$0xff] %vm3830, %v3826
        %3860 = vst.msk [vmem:[%s269 + $0xe8] sm:$0xff] %vm3830, %v3827
        %3861 = vst.msk [vmem:[%s269 + $0xf0] sm:$0xff] %vm3830, %v3828
        %3862 = vst.msk [vmem:[%s269 + $0xf8] sm:$0xff] %vm3830, %v3829
        %s3863 = sand.u32 %s134, 1
        %s3864 = scalar_lea.sflag [#allocation4], %s3863
        %s3865 = sand.u32 %s134, 1
        %s3866 = smul.addr %s3865, 256
        %s3867 = scalar_lea.vmem [#allocation10], %s3866
        // Predicated region
        $region53: #{rebnconv_pallas.3} parent=35 // pred_check
          %p3868 = pneg %p144
        $region54: #{rebnconv_pallas.3} parent=35 // pred_check_branch
          %3870 = sbr.rel (%p3868) target = $region56
        $region55: #{rebnconv_pallas.3} parent=35 // pred_region
          %s3871 = smul.u32 16, %s28
          %s3873 = ssub.s32 4096, 4096
          %3874 = vsyncadd %s3864, %s3873
          %s3875 = smul.addr %s3871, 2
          %s3876 = smul.addr %s27, 32
          %s3877 = sadd.s32 %s3875, %s3876
          %s3878 = smul.addr %s3877, 128
          %s3879 = scalar_lea.hbm %s4, %s3878
          %s3880 = sshll.u32 %s3867, 4
          %s3881 = int_to_ptr.vmem [resolvable:$true] %s3880
          %3886 = dma.vmem_to_hbm [thread:$0]  %s3881, 4096, %s3879, %s3864, 128, 128, 8
        $region56: #{rebnconv_pallas.3} parent=35 // pred_fallthru
          _
      $region36: #{rebnconv_pallas.3} parent=5 // pred_fallthru
        _
      %p3887 = scmp.le.s32.totalorder 2, %s18
      // Predicated region
      $region57: #{rebnconv_pallas.3} parent=5 // pred_check
        %p3888 = pneg %p3887
      $region58: #{rebnconv_pallas.3} parent=5 // pred_check_branch
        %3890 = sbr.rel (%p3888) target = $region60
      $region59: #{rebnconv_pallas.3} parent=5 // pred_region
        %s3891 = ssub.s32 %s18, 2
        // Predicated region
        $region61: #{rebnconv_pallas.3} parent=59 // pred_check
          %p3892 = pneg %p150
        $region62: #{rebnconv_pallas.3} parent=59 // pred_check_branch
          %3894 = sbr.rel (%p3892) target = $region64
        $region63: #{rebnconv_pallas.3} parent=59 // pred_region
          %s3895 = sand.u32 %s135, 1
          %s3896 = scalar_lea.sflag [#allocation4], %s3895
          %s3897 = sand.u32 %s135, 1
          %s3898 = smul.addr %s3897, 256
          %s3899 = scalar_lea.vmem [#allocation10], %s3898
          %3900 = dma.done %s3896, 4096
        $region64: #{rebnconv_pallas.3} parent=59 // pred_fallthru
          _
      $region60: #{rebnconv_pallas.3} parent=5 // pred_fallthru
        _
    $region6: #{rebnconv_pallas.3} parent=1 // loop_footer
      %s22 = sadd.s32 1, %s18
    $region7: #{rebnconv_pallas.3} parent=1 // loop_footer_branch
      %17 = sbr.rel target = $region3
    $region8: #{rebnconv_pallas.3} parent=1 // loop_exit
      _
    %3901 = vsyncpa [#allocation3], 1
    %s3902 = scalar_lea.sflag [#allocation3], 1
    %3903 = vsyncpa %s3902, 1
    %3904 = vsyncpa [#allocation6], 1
    %3905 = vsyncpa [#allocation9], 1
    %3906 = vsyncpa [#allocation4], 1
    %s3907 = scalar_lea.sflag [#allocation4], 1
    %3908 = vsyncpa %s3907, 1

</llo_original>
